<compile_context>
chip_gen: v7x
topology: tpu7x:2x2x1
jax: 0.10.0
libtpu: 0.0.40
codegen_flags: <defaults>
</compile_context>

<pallas_src>
import jax
import jax.numpy as jnp
from jax import lax
from jax.experimental import pallas as pl
from jax.experimental.pallas import tpu as pltpu


# ----------------------------- packed per-row vector columns -----------------
_VEC = {
    "ch_w_avg": 0, "ch_w_max": 1, "ch_b": 2, "ch_s": 3, "ch_t": 4,
    "l1_w": 5, "l1_b": 6, "l2_b": 7, "l3_b": 8, "l4_b": 9,
    "lbn_s": 10, "lbn_t": 11, "l5_b": 12,
}
_NVEC = 13


def _choose_img_blk(N, C):
    """Pack several images into the 8-row sublane group when channels are few,
    but keep at least 2 grid steps when possible (dual-TC chips)."""
    blk = 1
    for b in (8, 4, 2):
        if N % b == 0 and b * C <= 8:
            blk = b
            break
    while blk > 1 and N // blk < 2:
        blk //= 2
    return blk


# ------------------------------ constant packing ------------------------------
def _build_constants(params, C, H, W, img_blk):
    """Fold border masks + per-channel weights into per-tap planes, build the
    block-diagonal channel-mixing matrices, and pack per-row vectors.
    Runs ONCE (outside the per-forward path)."""
    P = H * W
    R = img_blk * C
    f32 = jnp.float32

    hh = jnp.arange(P) // W
    ww = jnp.arange(P) % W

    def mask(dh, dw):
        m = jnp.ones((P,), f32)
        if dh > 0:
            m = m * (hh < H - dh)
        elif dh < 0:
            m = m * (hh >= -dh)
        if dw > 0:
            m = m * (ww < W - dw)
        elif dw < 0:
            m = m * (ww >= -dw)
        return m                                               # (P,)

    def tile_rows(v):                                          # (C,) -> (R,)
        return jnp.tile(v.astype(f32), img_blk)

    vec_cols = [
        tile_rows(params["ch_w"][0]), tile_rows(params["ch_w"][1]),
        tile_rows(params["ch_b"]), tile_rows(params["ch_s"]), tile_rows(params["ch_t"]),
        tile_rows(params["l1_w"]), tile_rows(params["l1_b"]),
        tile_rows(params["l2_b"]), tile_rows(params["l3_b"]), tile_rows(params["l4_b"]),
        tile_rows(params["lbn_s"]), tile_rows(params["lbn_t"]), tile_rows(params["l5_b"]),
    ]
    vecs = jnp.stack(vec_cols, axis=1)                         # (R, NVEC)

    # Depthwise tap planes: per-lane border mask x per-row (channel) weight.
    def dw_planes(w, K):                                       # w: (K, K, C)
        c = (K - 1) // 2
        planes = []
        for kh in range(K):
            for kw in range(K):
                m = mask(kh - c, kw - c)                       # (P,)
                wr = tile_rows(w[kh, kw])                      # (R,)
                planes.append(wr[:, None] * m[None, :])
        return jnp.stack(planes, axis=0)                       # (K*K, R, P)

    dw3 = dw_planes(params["l2_w"], 3)                         # (9,  R, P)
    dw7 = dw_planes(params["l3_w"], 7)                         # (49, R, P)

    # Spatial-attention 5x5 tap planes; rows = [avg_img0, max_img0, avg_img1, ...]
    sp_planes = []
    for kh in range(5):
        for kw in range(5):
            m = mask(kh - 2, kw - 2)
            wrow = jnp.tile(params["sp_w"][kh, kw].astype(f32), img_blk)   # (2*img_blk,)
            sp_planes.append(wrow[:, None] * m[None, :])
    spp = jnp.stack(sp_planes, axis=0)                         # (25, 2*img_blk, P)

    # Pure 3x3 border masks (for the full conv on z, whose weights go to the MXU).
    m3 = jnp.stack([mask(kh - 1, kw - 1)[None, :]
                    for kh in range(3) for kw in range(3)], axis=0)        # (9, 1, P)

    # Block-diagonal (over images) channel-mixing matrices: out-rows x in-cols.
    def block_diag(w_in_out):                                  # (C_in, C_out)
        blk = w_in_out.astype(f32).T                           # (C_out, C_in)
        out = jnp.zeros((R, R), f32)
        for i in range(img_blk):
            out = out.at[i * C:(i + 1) * C, i * C:(i + 1) * C].set(blk)
        return out

    w4 = jnp.stack([block_diag(params["l4_w"][b * C:(b + 1) * C, :])
                    for b in range(3)], axis=0)                # (3, R, R)
    w5 = jnp.stack([block_diag(params["l5_w"][kh, kw])
                    for kh in range(3) for kw in range(3)], axis=0)        # (9, R, R)

    sp_b = jnp.reshape(jnp.asarray(params["sp_b"], f32), (1,)) # SMEM scalar

    return vecs, dw7, dw3, spp, w4, w5, m3, sp_b


# ------------------------------------ kernel ----------------------------------
def _make_kernel(C, H, W, img_blk):
    P = H * W
    R = img_blk * C

    off7 = [(kh - 3, kw - 3) for kh in range(7) for kw in range(7)]
    off5 = [(kh - 2, kw - 2) for kh in range(5) for kw in range(5)]
    off3 = [(kh - 1, kw - 1) for kh in range(3) for kw in range(3)]
    idx3 = {o: i for i, o in enumerate(off3)}
    HI = lax.Precision.HIGHEST

    def kernel(x_ref, vec_ref, dw7_ref, dw3_ref, spp_ref, w4_ref, w5_ref,
               m3_ref, spb_ref, out_ref):
        x = x_ref[...]                                          # (R, P) f32

        def vec(name):                                          # per-row column
            i = _VEC[name]
            return vec_ref[:, i:i + 1]                          # (R, 1)

        def rolled(a, dh, dw):
            # b[..., h*W + w] = a[..., (h+dh)*W + (w+dw)] (wraps; masks folded
            # into the precomputed tap planes zero the wrapped positions).
            s = dh * W + dw
            if s == 0:
                return a
            return pltpu.roll(a, shift=(-s) % P, axis=1)

        # ------------------------ channel attention --------------------------
        avg_c = jnp.mean(x, axis=1, keepdims=True)              # (R, 1)
        max_c = jnp.max(x, axis=1, keepdims=True)
        ch = avg_c * vec("ch_w_avg") + max_c * vec("ch_w_max") + vec("ch_b")
        ch = jnp.maximum(ch * vec("ch_s") + vec("ch_t"), 0.0)   # (R, 1)

        # ------------------------ spatial attention ---------------------------
        # One stacked slab [avg_img, max_img]*img_blk so a single roll per 5x5
        # tap serves every spatial-attention input.
        sp_rows = []
        for i in range(img_blk):
            xi = x[i * C:(i + 1) * C, :]
            sp_rows.append(jnp.mean(xi, axis=0, keepdims=True))
            sp_rows.append(jnp.max(xi, axis=0, keepdims=True))
        sp_in = jnp.concatenate(sp_rows, axis=0)                # (2*img_blk, P)

        sp_acc = None
        for t, (dh, dw) in enumerate(off5):
            contrib = rolled(sp_in, dh, dw) * spp_ref[t]        # mask*weight folded
            sp_acc = contrib if sp_acc is None else sp_acc + contrib
        sp_b = spb_ref[0]

        att_rows = []
        for i in range(img_blk):
            sp_i = jnp.maximum(sp_acc[2 * i:2 * i + 1, :]
                               + sp_acc[2 * i + 1:2 * i + 2, :] + sp_b, 0.0)  # (1, P)
            att_rows.append(jnp.broadcast_to(sp_i, (C, P)))
        sp_full = jnp.concatenate(att_rows, axis=0)             # (R, P)
        att = jax.nn.sigmoid(ch * sp_full) * x

        # --------------------------- local branch -----------------------------
        y1 = x * vec("l1_w") + vec("l1_b")

        # depthwise 3x3 + 7x7: one roll per tap, shared between both convs.
        y2 = None
        y3 = None
        for t, (dh, dw) in enumerate(off7):
            xs = rolled(x, dh, dw)
            c7 = xs * dw7_ref[t]
            y3 = c7 if y3 is None else y3 + c7
            if (dh, dw) in idx3:
                c3 = xs * dw3_ref[idx3[(dh, dw)]]
                y2 = c3 if y2 is None else y2 + c3
        y2 = y2 + vec("l2_b")
        y3 = y3 + vec("l3_b")

        # 1x1 pointwise over concat([y1, y2, y3]) -> MXU (block-diag per image).
        z = (jnp.dot(w4_ref[0], y1, precision=HI, preferred_element_type=jnp.float32)
             + jnp.dot(w4_ref[1], y2, precision=HI, preferred_element_type=jnp.float32)
             + jnp.dot(w4_ref[2], y3, precision=HI, preferred_element_type=jnp.float32)
             + vec("l4_b"))
        z = jnp.maximum(z * vec("lbn_s") + vec("lbn_t"), 0.0)

        # full 3x3 conv (C -> C per image) -> 9 small MXU dots.
        local = None
        for t, (dh, dw) in enumerate(off3):
            if dh == 0 and dw == 0:
                zs = z
            else:
                zs = rolled(z, dh, dw) * m3_ref[t]              # (1,P) mask broadcast
            d = jnp.dot(w5_ref[t], zs, precision=HI,
                        preferred_element_type=jnp.float32)
            local = d if local is None else local + d
        local = local + vec("l5_b")

        out_ref[...] = (att + local).astype(out_ref.dtype)

    return kernel


# ------------------------------------ wrapper ----------------------------------
def make_global_local(params, N, C, H, W):
    """Pack parameters ONCE and return a jitted forward fn: (N,C,H,W)->(N,C,H,W)."""
    P = H * W
    img_blk = _choose_img_blk(N, C)
    G = N // img_blk
    R = img_blk * C
    SR = 2 * img_blk

    consts = _build_constants(params, C, H, W, img_blk)
    kernel = _make_kernel(C, H, W, img_blk)

    const_specs = [
        pl.BlockSpec((R, _NVEC), lambda n: (0, 0)),             # per-row vectors
        pl.BlockSpec((49, R, P), lambda n: (0, 0, 0)),          # 7x7 tap planes
        pl.BlockSpec((9, R, P), lambda n: (0, 0, 0)),           # 3x3 tap planes
        pl.BlockSpec((25, SR, P), lambda n: (0, 0, 0)),         # 5x5 spatial planes
        pl.BlockSpec((3, R, R), lambda n: (0, 0, 0)),           # l4 block-diag weights
        pl.BlockSpec((9, R, R), lambda n: (0, 0, 0)),           # l5 block-diag weights
        pl.BlockSpec((9, 1, P), lambda n: (0, 0, 0)),           # 3x3 border masks
        pl.BlockSpec(memory_space=pltpu.MemorySpace.SMEM),      # spatial bias scalar
    ]

    call = pl.pallas_call(
        kernel,
        out_shape=jax.ShapeDtypeStruct((G, R, P), jnp.float32),
        grid_spec=pltpu.PrefetchScalarGridSpec(
            num_scalar_prefetch=0,
            grid=(G,),
            in_specs=[pl.BlockSpec((None, R, P), lambda n: (n, 0, 0))] + const_specs,
            out_specs=pl.BlockSpec((None, R, P), lambda n: (n, 0, 0)),
        ),
        compiler_params=pltpu.CompilerParams(
            dimension_semantics=("parallel",)),
    )

    @jax.jit
    def forward(x):
        x_blk = x.astype(jnp.float32).reshape(G, R, P)          # free: no transpose
        out = call(x_blk, *consts)
        return out.reshape(N, C, H, W)

    return forward


# ------------------------------------ parameters --------------------------------
def init_params(key, C):
    ks = jax.random.split(key, 16)
    eps = 1e-5

    def w(k, shape, scale=0.25):
        return scale * jax.random.normal(k, shape, jnp.float32)

    def folded_bn(k):
        k1, k2, k3, k4 = jax.random.split(k, 4)
        gamma = 1.0 + 0.1 * jax.random.normal(k1, (C,), jnp.float32)
        beta = 0.1 * jax.random.normal(k2, (C,), jnp.float32)
        mean = 0.1 * jax.random.normal(k3, (C,), jnp.float32)
        var = 0.5 + jax.random.uniform(k4, (C,), jnp.float32)
        scale = gamma / jnp.sqrt(var + eps)
        shift = beta - mean * scale
        return scale, shift

    ch_s, ch_t = folded_bn(ks[0])
    lbn_s, lbn_t = folded_bn(ks[1])
    return {
        "ch_w": w(ks[2], (2, C)),          # channel_conv: row0 avg tap, row1 max tap
        "ch_b": w(ks[3], (C,)),
        "ch_s": ch_s, "ch_t": ch_t,        # folded channel_bn
        "sp_w": w(ks[4], (5, 5, 2)),       # spatial_conv (kh, kw, ic[avg, max])
        "sp_b": w(ks[5], ()),
        "l1_w": w(ks[6], (C,)),            # depthwise 1x1
        "l1_b": w(ks[7], (C,)),
        "l2_w": w(ks[8], (3, 3, C)),       # depthwise 3x3
        "l2_b": w(ks[9], (C,)),
        "l3_w": w(ks[10], (7, 7, C), 0.1), # depthwise 7x7
        "l3_b": w(ks[11], (C,)),
        "l4_w": w(ks[12], (3 * C, C)),     # 1x1 pointwise (in, out)
        "l4_b": w(ks[13], (C,)),
        "lbn_s": lbn_s, "lbn_t": lbn_t,    # folded local_bn
        "l5_w": w(ks[14], (3, 3, C, C)),   # full 3x3 conv (kh, kw, ci, co)
        "l5_b": w(ks[15], (C,)),
    }


# --------------------------------- pure-JAX reference ----------------------------
def global_local_reference(x, p):
    N, C, H, W = x.shape
    hi = lax.Precision.HIGHEST
    dn = ("NCHW", "HWIO", "NCHW")

    avg = jnp.mean(x, axis=(2, 3))                              # (N, C)
    mx = jnp.max(x, axis=(2, 3))                                # (N, C)
    ch = avg * p["ch_w"][0] + mx * p["ch_w"][1] + p["ch_b"]
    ch = jnp.maximum(ch * p["ch_s"] + p["ch_t"], 0.0)

    sp_in = jnp.concatenate([jnp.mean(x, axis=1, keepdims=True),
                             jnp.max(x, axis=1, keepdims=True)], axis=1)
    sp = lax.conv_general_dilated(sp_in, p["sp_w"][:, :, :, None], (1, 1), "SAME",
                                  dimension_numbers=dn, precision=hi) + p["sp_b"]
    sp = jnp.maximum(sp, 0.0)                                   # (N, 1, H, W)
    att = jax.nn.sigmoid(ch[:, :, None, None] * sp) * x

    def dw(inp, w, b):
        return lax.conv_general_dilated(inp, w[:, :, None, :], (1, 1), "SAME",
                                        dimension_numbers=dn,
                                        feature_group_count=C,
                                        precision=hi) + b[None, :, None, None]

    y1 = x * p["l1_w"][None, :, None, None] + p["l1_b"][None, :, None, None]
    y2 = dw(x, p["l2_w"], p["l2_b"])
    y3 = dw(x, p["l3_w"], p["l3_b"])
    cat = jnp.concatenate([y1, y2, y3], axis=1)
    z = jnp.einsum("nihw,io->nohw", cat, p["l4_w"], precision=hi) \
        + p["l4_b"][None, :, None, None]
    z = jnp.maximum(z * p["lbn_s"][None, :, None, None]
                    + p["lbn_t"][None, :, None, None], 0.0)
    local = lax.conv_general_dilated(z, p["l5_w"], (1, 1), "SAME",
                                     dimension_numbers=dn, precision=hi) \
        + p["l5_b"][None, :, None, None]
    return att + local


if __name__ == "__main__":
    key = jax.random.PRNGKey(0)
    kx, kp = jax.random.split(key)
    # N=4 so the 2-images-per-step sublane packing still leaves a 2-step
    # parallel grid (both TensorCores busy on dual-TC chips).
    N, C, H, W = 4, 4, 16, 16                                   # NCHW
    x = jax.random.normal(kx, (N, C, H, W), jnp.float32)
    params = init_params(kp, C)

    forward = make_global_local(params, N, C, H, W)             # packs params once
    out = jax.block_until_ready(forward(x))
    assert out.shape == (N, C, H, W)

    ref = global_local_reference(x, params)
    max_err = float(jnp.max(jnp.abs(out - ref)))
    if not (max_err < 1e-3):
        raise AssertionError(f"mismatch vs reference: max abs err = {max_err}")
    print("KERNEL_OK")
</pallas_src>

<mosaic_0001>
module attributes {stable_mosaic.version = 11 : i64} {
  func.func @kernel(%arg0: i32, %arg1: memref<1x8x256xf32, #tpu.memory_space<vmem>>, %arg2: memref<8x13xf32, #tpu.memory_space<vmem>>, %arg3: memref<49x8x256xf32, #tpu.memory_space<vmem>>, %arg4: memref<9x8x256xf32, #tpu.memory_space<vmem>>, %arg5: memref<25x4x256xf32, #tpu.memory_space<vmem>>, %arg6: memref<3x8x8xf32, #tpu.memory_space<vmem>>, %arg7: memref<9x8x8xf32, #tpu.memory_space<vmem>>, %arg8: memref<9x1x256xf32, #tpu.memory_space<vmem>>, %arg9: memref<1xf32, #tpu.memory_space<smem>>, %arg10: memref<1x8x256xf32, #tpu.memory_space<vmem>>) attributes {dimension_semantics = [#tpu.dimension_semantics<parallel>], iteration_bounds = array<i64: 2>, scalar_prefetch = 0 : i64, scratch_operands = 0 : i64, tpu.core_type = #tpu.core_type<tc>, window_params = [{transform_indices = @transform_0, window_bounds = array<i64: 1, 8, 256>}, {pipeline_mode = #tpu.pipeline_mode<synchronous>, transform_indices = @transform_1, window_bounds = array<i64: 8, 13>}, {pipeline_mode = #tpu.pipeline_mode<synchronous>, transform_indices = @transform_2, window_bounds = array<i64: 49, 8, 256>}, {pipeline_mode = #tpu.pipeline_mode<synchronous>, transform_indices = @transform_3, window_bounds = array<i64: 9, 8, 256>}, {pipeline_mode = #tpu.pipeline_mode<synchronous>, transform_indices = @transform_4, window_bounds = array<i64: 25, 4, 256>}, {pipeline_mode = #tpu.pipeline_mode<synchronous>, transform_indices = @transform_5, window_bounds = array<i64: 3, 8, 8>}, {pipeline_mode = #tpu.pipeline_mode<synchronous>, transform_indices = @transform_6, window_bounds = array<i64: 9, 8, 8>}, {pipeline_mode = #tpu.pipeline_mode<synchronous>, transform_indices = @transform_7, window_bounds = array<i64: 9, 1, 256>}, {transform_indices = @transform_8, window_bounds = array<i64: 1>}, {transform_indices = @transform_9, window_bounds = array<i64: 1, 8, 256>}]} {
    %c0 = arith.constant 0 : index
    %c0_0 = arith.constant 0 : index
    %c0_1 = arith.constant 0 : index
    %0 = vector.load %arg1[%c0, %c0_0, %c0_1] : memref<1x8x256xf32, #tpu.memory_space<vmem>>, vector<1x8x256xf32>
    %1 = vector.shape_cast %0 : vector<1x8x256xf32> to vector<8x256xf32>
    %cst = arith.constant dense<0.000000e+00> : vector<8xf32>
    %2 = vector.multi_reduction <add>, %1, %cst [1] : vector<8x256xf32> to vector<8xf32>
    %3 = vector.shape_cast %2 : vector<8xf32> to vector<8x1xf32>
    %cst_2 = arith.constant 2.560000e+02 : f32
    %4 = vector.broadcast %cst_2 : f32 to vector<8x1xf32>
    %5 = arith.divf %3, %4 : vector<8x1xf32>
    %cst_3 = arith.constant dense<0xFF800000> : vector<8xf32>
    %6 = vector.multi_reduction <maximumf>, %1, %cst_3 [1] : vector<8x256xf32> to vector<8xf32>
    %7 = vector.shape_cast %6 : vector<8xf32> to vector<8x1xf32>
    %c0_4 = arith.constant 0 : index
    %c0_5 = arith.constant 0 : index
    %8 = vector.load %arg2[%c0_4, %c0_5] : memref<8x13xf32, #tpu.memory_space<vmem>>, vector<8x1xf32>
    %9 = arith.mulf %5, %8 : vector<8x1xf32>
    %c0_6 = arith.constant 0 : index
    %c1 = arith.constant 1 : index
    %10 = vector.load %arg2[%c0_6, %c1] : memref<8x13xf32, #tpu.memory_space<vmem>>, vector<8x1xf32>
    %11 = arith.mulf %7, %10 : vector<8x1xf32>
    %12 = arith.addf %9, %11 : vector<8x1xf32>
    %c0_7 = arith.constant 0 : index
    %c2 = arith.constant 2 : index
    %13 = vector.load %arg2[%c0_7, %c2] : memref<8x13xf32, #tpu.memory_space<vmem>>, vector<8x1xf32>
    %14 = arith.addf %12, %13 : vector<8x1xf32>
    %c0_8 = arith.constant 0 : index
    %c3 = arith.constant 3 : index
    %15 = vector.load %arg2[%c0_8, %c3] : memref<8x13xf32, #tpu.memory_space<vmem>>, vector<8x1xf32>
    %16 = arith.mulf %14, %15 : vector<8x1xf32>
    %c0_9 = arith.constant 0 : index
    %c4 = arith.constant 4 : index
    %17 = vector.load %arg2[%c0_9, %c4] : memref<8x13xf32, #tpu.memory_space<vmem>>, vector<8x1xf32>
    %18 = arith.addf %16, %17 : vector<8x1xf32>
    %cst_10 = arith.constant 0.000000e+00 : f32
    %19 = vector.broadcast %cst_10 : f32 to vector<8x1xf32>
    %20 = arith.maximumf %18, %19 : vector<8x1xf32>
    %21 = vector.extract_strided_slice %1 {offsets = [0, 0], sizes = [4, 256], strides = [1, 1]} : vector<8x256xf32> to vector<4x256xf32>
    %cst_11 = arith.constant dense<0.000000e+00> : vector<256xf32>
    %22 = vector.multi_reduction <add>, %21, %cst_11 [0] : vector<4x256xf32> to vector<256xf32>
    %23 = vector.shape_cast %22 : vector<256xf32> to vector<1x256xf32>
    %cst_12 = arith.constant 4.000000e+00 : f32
    %24 = vector.broadcast %cst_12 : f32 to vector<1x256xf32>
    %25 = arith.divf %23, %24 : vector<1x256xf32>
    %cst_13 = arith.constant dense<0xFF800000> : vector<256xf32>
    %26 = vector.multi_reduction <maximumf>, %21, %cst_13 [0] : vector<4x256xf32> to vector<256xf32>
    %27 = vector.shape_cast %26 : vector<256xf32> to vector<1x256xf32>
    %28 = vector.extract_strided_slice %1 {offsets = [4, 0], sizes = [4, 256], strides = [1, 1]} : vector<8x256xf32> to vector<4x256xf32>
    %cst_14 = arith.constant dense<0.000000e+00> : vector<256xf32>
    %29 = vector.multi_reduction <add>, %28, %cst_14 [0] : vector<4x256xf32> to vector<256xf32>
    %30 = vector.shape_cast %29 : vector<256xf32> to vector<1x256xf32>
    %cst_15 = arith.constant 4.000000e+00 : f32
    %31 = vector.broadcast %cst_15 : f32 to vector<1x256xf32>
    %32 = arith.divf %30, %31 : vector<1x256xf32>
    %cst_16 = arith.constant dense<0xFF800000> : vector<256xf32>
    %33 = vector.multi_reduction <maximumf>, %28, %cst_16 [0] : vector<4x256xf32> to vector<256xf32>
    %34 = vector.shape_cast %33 : vector<256xf32> to vector<1x256xf32>
    %35 = tpu.concatenate %25, %27, %32, %34 in 0 : vector<1x256xf32>, vector<1x256xf32>, vector<1x256xf32>, vector<1x256xf32> -> vector<4x256xf32>
    %c34_i32 = arith.constant 34 : i32
    %36 = tpu.dynamic_rotate %35 by %c34_i32 dim 1 : vector<4x256xf32>, i32 -> vector<4x256xf32>
    %c0_17 = arith.constant 0 : index
    %c0_18 = arith.constant 0 : index
    %c0_19 = arith.constant 0 : index
    %37 = vector.load %arg5[%c0_17, %c0_18, %c0_19] : memref<25x4x256xf32, #tpu.memory_space<vmem>>, vector<1x4x256xf32>
    %38 = vector.shape_cast %37 : vector<1x4x256xf32> to vector<4x256xf32>
    %39 = arith.mulf %36, %38 : vector<4x256xf32>
    %c33_i32 = arith.constant 33 : i32
    %40 = tpu.dynamic_rotate %35 by %c33_i32 dim 1 : vector<4x256xf32>, i32 -> vector<4x256xf32>
    %c1_20 = arith.constant 1 : index
    %c0_21 = arith.constant 0 : index
    %c0_22 = arith.constant 0 : index
    %41 = vector.load %arg5[%c1_20, %c0_21, %c0_22] : memref<25x4x256xf32, #tpu.memory_space<vmem>>, vector<1x4x256xf32>
    %42 = vector.shape_cast %41 : vector<1x4x256xf32> to vector<4x256xf32>
    %43 = arith.mulf %40, %42 : vector<4x256xf32>
    %44 = arith.addf %39, %43 : vector<4x256xf32>
    %c32_i32 = arith.constant 32 : i32
    %45 = tpu.dynamic_rotate %35 by %c32_i32 dim 1 : vector<4x256xf32>, i32 -> vector<4x256xf32>
    %c2_23 = arith.constant 2 : index
    %c0_24 = arith.constant 0 : index
    %c0_25 = arith.constant 0 : index
    %46 = vector.load %arg5[%c2_23, %c0_24, %c0_25] : memref<25x4x256xf32, #tpu.memory_space<vmem>>, vector<1x4x256xf32>
    %47 = vector.shape_cast %46 : vector<1x4x256xf32> to vector<4x256xf32>
    %48 = arith.mulf %45, %47 : vector<4x256xf32>
    %49 = arith.addf %44, %48 : vector<4x256xf32>
    %c31_i32 = arith.constant 31 : i32
    %50 = tpu.dynamic_rotate %35 by %c31_i32 dim 1 : vector<4x256xf32>, i32 -> vector<4x256xf32>
    %c3_26 = arith.constant 3 : index
    %c0_27 = arith.constant 0 : index
    %c0_28 = arith.constant 0 : index
    %51 = vector.load %arg5[%c3_26, %c0_27, %c0_28] : memref<25x4x256xf32, #tpu.memory_space<vmem>>, vector<1x4x256xf32>
    %52 = vector.shape_cast %51 : vector<1x4x256xf32> to vector<4x256xf32>
    %53 = arith.mulf %50, %52 : vector<4x256xf32>
    %54 = arith.addf %49, %53 : vector<4x256xf32>
    %c30_i32 = arith.constant 30 : i32
    %55 = tpu.dynamic_rotate %35 by %c30_i32 dim 1 : vector<4x256xf32>, i32 -> vector<4x256xf32>
    %c4_29 = arith.constant 4 : index
    %c0_30 = arith.constant 0 : index
    %c0_31 = arith.constant 0 : index
    %56 = vector.load %arg5[%c4_29, %c0_30, %c0_31] : memref<25x4x256xf32, #tpu.memory_space<vmem>>, vector<1x4x256xf32>
    %57 = vector.shape_cast %56 : vector<1x4x256xf32> to vector<4x256xf32>
    %58 = arith.mulf %55, %57 : vector<4x256xf32>
    %59 = arith.addf %54, %58 : vector<4x256xf32>
    %c18_i32 = arith.constant 18 : i32
    %60 = tpu.dynamic_rotate %35 by %c18_i32 dim 1 : vector<4x256xf32>, i32 -> vector<4x256xf32>
    %c5 = arith.constant 5 : index
    %c0_32 = arith.constant 0 : index
    %c0_33 = arith.constant 0 : index
    %61 = vector.load %arg5[%c5, %c0_32, %c0_33] : memref<25x4x256xf32, #tpu.memory_space<vmem>>, vector<1x4x256xf32>
    %62 = vector.shape_cast %61 : vector<1x4x256xf32> to vector<4x256xf32>
    %63 = arith.mulf %60, %62 : vector<4x256xf32>
    %64 = arith.addf %59, %63 : vector<4x256xf32>
    %c17_i32 = arith.constant 17 : i32
    %65 = tpu.dynamic_rotate %35 by %c17_i32 dim 1 : vector<4x256xf32>, i32 -> vector<4x256xf32>
    %c6 = arith.constant 6 : index
    %c0_34 = arith.constant 0 : index
    %c0_35 = arith.constant 0 : index
    %66 = vector.load %arg5[%c6, %c0_34, %c0_35] : memref<25x4x256xf32, #tpu.memory_space<vmem>>, vector<1x4x256xf32>
    %67 = vector.shape_cast %66 : vector<1x4x256xf32> to vector<4x256xf32>
    %68 = arith.mulf %65, %67 : vector<4x256xf32>
    %69 = arith.addf %64, %68 : vector<4x256xf32>
    %c16_i32 = arith.constant 16 : i32
    %70 = tpu.dynamic_rotate %35 by %c16_i32 dim 1 : vector<4x256xf32>, i32 -> vector<4x256xf32>
    %c7 = arith.constant 7 : index
    %c0_36 = arith.constant 0 : index
    %c0_37 = arith.constant 0 : index
    %71 = vector.load %arg5[%c7, %c0_36, %c0_37] : memref<25x4x256xf32, #tpu.memory_space<vmem>>, vector<1x4x256xf32>
    %72 = vector.shape_cast %71 : vector<1x4x256xf32> to vector<4x256xf32>
    %73 = arith.mulf %70, %72 : vector<4x256xf32>
    %74 = arith.addf %69, %73 : vector<4x256xf32>
    %c15_i32 = arith.constant 15 : i32
    %75 = tpu.dynamic_rotate %35 by %c15_i32 dim 1 : vector<4x256xf32>, i32 -> vector<4x256xf32>
    %c8 = arith.constant 8 : index
    %c0_38 = arith.constant 0 : index
    %c0_39 = arith.constant 0 : index
    %76 = vector.load %arg5[%c8, %c0_38, %c0_39] : memref<25x4x256xf32, #tpu.memory_space<vmem>>, vector<1x4x256xf32>
    %77 = vector.shape_cast %76 : vector<1x4x256xf32> to vector<4x256xf32>
    %78 = arith.mulf %75, %77 : vector<4x256xf32>
    %79 = arith.addf %74, %78 : vector<4x256xf32>
    %c14_i32 = arith.constant 14 : i32
    %80 = tpu.dynamic_rotate %35 by %c14_i32 dim 1 : vector<4x256xf32>, i32 -> vector<4x256xf32>
    %c9 = arith.constant 9 : index
    %c0_40 = arith.constant 0 : index
    %c0_41 = arith.constant 0 : index
    %81 = vector.load %arg5[%c9, %c0_40, %c0_41] : memref<25x4x256xf32, #tpu.memory_space<vmem>>, vector<1x4x256xf32>
    %82 = vector.shape_cast %81 : vector<1x4x256xf32> to vector<4x256xf32>
    %83 = arith.mulf %80, %82 : vector<4x256xf32>
    %84 = arith.addf %79, %83 : vector<4x256xf32>
    %c2_i32 = arith.constant 2 : i32
    %85 = tpu.dynamic_rotate %35 by %c2_i32 dim 1 : vector<4x256xf32>, i32 -> vector<4x256xf32>
    %c10 = arith.constant 10 : index
    %c0_42 = arith.constant 0 : index
    %c0_43 = arith.constant 0 : index
    %86 = vector.load %arg5[%c10, %c0_42, %c0_43] : memref<25x4x256xf32, #tpu.memory_space<vmem>>, vector<1x4x256xf32>
    %87 = vector.shape_cast %86 : vector<1x4x256xf32> to vector<4x256xf32>
    %88 = arith.mulf %85, %87 : vector<4x256xf32>
    %89 = arith.addf %84, %88 : vector<4x256xf32>
    %c1_i32 = arith.constant 1 : i32
    %90 = tpu.dynamic_rotate %35 by %c1_i32 dim 1 : vector<4x256xf32>, i32 -> vector<4x256xf32>
    %c11 = arith.constant 11 : index
    %c0_44 = arith.constant 0 : index
    %c0_45 = arith.constant 0 : index
    %91 = vector.load %arg5[%c11, %c0_44, %c0_45] : memref<25x4x256xf32, #tpu.memory_space<vmem>>, vector<1x4x256xf32>
    %92 = vector.shape_cast %91 : vector<1x4x256xf32> to vector<4x256xf32>
    %93 = arith.mulf %90, %92 : vector<4x256xf32>
    %94 = arith.addf %89, %93 : vector<4x256xf32>
    %c12 = arith.constant 12 : index
    %c0_46 = arith.constant 0 : index
    %c0_47 = arith.constant 0 : index
    %95 = vector.load %arg5[%c12, %c0_46, %c0_47] : memref<25x4x256xf32, #tpu.memory_space<vmem>>, vector<1x4x256xf32>
    %96 = vector.shape_cast %95 : vector<1x4x256xf32> to vector<4x256xf32>
    %97 = arith.mulf %35, %96 : vector<4x256xf32>
    %98 = arith.addf %94, %97 : vector<4x256xf32>
    %c255_i32 = arith.constant 255 : i32
    %99 = tpu.dynamic_rotate %35 by %c255_i32 dim 1 : vector<4x256xf32>, i32 -> vector<4x256xf32>
    %c13 = arith.constant 13 : index
    %c0_48 = arith.constant 0 : index
    %c0_49 = arith.constant 0 : index
    %100 = vector.load %arg5[%c13, %c0_48, %c0_49] : memref<25x4x256xf32, #tpu.memory_space<vmem>>, vector<1x4x256xf32>
    %101 = vector.shape_cast %100 : vector<1x4x256xf32> to vector<4x256xf32>
    %102 = arith.mulf %99, %101 : vector<4x256xf32>
    %103 = arith.addf %98, %102 : vector<4x256xf32>
    %c254_i32 = arith.constant 254 : i32
    %104 = tpu.dynamic_rotate %35 by %c254_i32 dim 1 : vector<4x256xf32>, i32 -> vector<4x256xf32>
    %c14 = arith.constant 14 : index
    %c0_50 = arith.constant 0 : index
    %c0_51 = arith.constant 0 : index
    %105 = vector.load %arg5[%c14, %c0_50, %c0_51] : memref<25x4x256xf32, #tpu.memory_space<vmem>>, vector<1x4x256xf32>
    %106 = vector.shape_cast %105 : vector<1x4x256xf32> to vector<4x256xf32>
    %107 = arith.mulf %104, %106 : vector<4x256xf32>
    %108 = arith.addf %103, %107 : vector<4x256xf32>
    %c242_i32 = arith.constant 242 : i32
    %109 = tpu.dynamic_rotate %35 by %c242_i32 dim 1 : vector<4x256xf32>, i32 -> vector<4x256xf32>
    %c15 = arith.constant 15 : index
    %c0_52 = arith.constant 0 : index
    %c0_53 = arith.constant 0 : index
    %110 = vector.load %arg5[%c15, %c0_52, %c0_53] : memref<25x4x256xf32, #tpu.memory_space<vmem>>, vector<1x4x256xf32>
    %111 = vector.shape_cast %110 : vector<1x4x256xf32> to vector<4x256xf32>
    %112 = arith.mulf %109, %111 : vector<4x256xf32>
    %113 = arith.addf %108, %112 : vector<4x256xf32>
    %c241_i32 = arith.constant 241 : i32
    %114 = tpu.dynamic_rotate %35 by %c241_i32 dim 1 : vector<4x256xf32>, i32 -> vector<4x256xf32>
    %c16 = arith.constant 16 : index
    %c0_54 = arith.constant 0 : index
    %c0_55 = arith.constant 0 : index
    %115 = vector.load %arg5[%c16, %c0_54, %c0_55] : memref<25x4x256xf32, #tpu.memory_space<vmem>>, vector<1x4x256xf32>
    %116 = vector.shape_cast %115 : vector<1x4x256xf32> to vector<4x256xf32>
    %117 = arith.mulf %114, %116 : vector<4x256xf32>
    %118 = arith.addf %113, %117 : vector<4x256xf32>
    %c240_i32 = arith.constant 240 : i32
    %119 = tpu.dynamic_rotate %35 by %c240_i32 dim 1 : vector<4x256xf32>, i32 -> vector<4x256xf32>
    %c17 = arith.constant 17 : index
    %c0_56 = arith.constant 0 : index
    %c0_57 = arith.constant 0 : index
    %120 = vector.load %arg5[%c17, %c0_56, %c0_57] : memref<25x4x256xf32, #tpu.memory_space<vmem>>, vector<1x4x256xf32>
    %121 = vector.shape_cast %120 : vector<1x4x256xf32> to vector<4x256xf32>
    %122 = arith.mulf %119, %121 : vector<4x256xf32>
    %123 = arith.addf %118, %122 : vector<4x256xf32>
    %c239_i32 = arith.constant 239 : i32
    %124 = tpu.dynamic_rotate %35 by %c239_i32 dim 1 : vector<4x256xf32>, i32 -> vector<4x256xf32>
    %c18 = arith.constant 18 : index
    %c0_58 = arith.constant 0 : index
    %c0_59 = arith.constant 0 : index
    %125 = vector.load %arg5[%c18, %c0_58, %c0_59] : memref<25x4x256xf32, #tpu.memory_space<vmem>>, vector<1x4x256xf32>
    %126 = vector.shape_cast %125 : vector<1x4x256xf32> to vector<4x256xf32>
    %127 = arith.mulf %124, %126 : vector<4x256xf32>
    %128 = arith.addf %123, %127 : vector<4x256xf32>
    %c238_i32 = arith.constant 238 : i32
    %129 = tpu.dynamic_rotate %35 by %c238_i32 dim 1 : vector<4x256xf32>, i32 -> vector<4x256xf32>
    %c19 = arith.constant 19 : index
    %c0_60 = arith.constant 0 : index
    %c0_61 = arith.constant 0 : index
    %130 = vector.load %arg5[%c19, %c0_60, %c0_61] : memref<25x4x256xf32, #tpu.memory_space<vmem>>, vector<1x4x256xf32>
    %131 = vector.shape_cast %130 : vector<1x4x256xf32> to vector<4x256xf32>
    %132 = arith.mulf %129, %131 : vector<4x256xf32>
    %133 = arith.addf %128, %132 : vector<4x256xf32>
    %c226_i32 = arith.constant 226 : i32
    %134 = tpu.dynamic_rotate %35 by %c226_i32 dim 1 : vector<4x256xf32>, i32 -> vector<4x256xf32>
    %c20 = arith.constant 20 : index
    %c0_62 = arith.constant 0 : index
    %c0_63 = arith.constant 0 : index
    %135 = vector.load %arg5[%c20, %c0_62, %c0_63] : memref<25x4x256xf32, #tpu.memory_space<vmem>>, vector<1x4x256xf32>
    %136 = vector.shape_cast %135 : vector<1x4x256xf32> to vector<4x256xf32>
    %137 = arith.mulf %134, %136 : vector<4x256xf32>
    %138 = arith.addf %133, %137 : vector<4x256xf32>
    %c225_i32 = arith.constant 225 : i32
    %139 = tpu.dynamic_rotate %35 by %c225_i32 dim 1 : vector<4x256xf32>, i32 -> vector<4x256xf32>
    %c21 = arith.constant 21 : index
    %c0_64 = arith.constant 0 : index
    %c0_65 = arith.constant 0 : index
    %140 = vector.load %arg5[%c21, %c0_64, %c0_65] : memref<25x4x256xf32, #tpu.memory_space<vmem>>, vector<1x4x256xf32>
    %141 = vector.shape_cast %140 : vector<1x4x256xf32> to vector<4x256xf32>
    %142 = arith.mulf %139, %141 : vector<4x256xf32>
    %143 = arith.addf %138, %142 : vector<4x256xf32>
    %c224_i32 = arith.constant 224 : i32
    %144 = tpu.dynamic_rotate %35 by %c224_i32 dim 1 : vector<4x256xf32>, i32 -> vector<4x256xf32>
    %c22 = arith.constant 22 : index
    %c0_66 = arith.constant 0 : index
    %c0_67 = arith.constant 0 : index
    %145 = vector.load %arg5[%c22, %c0_66, %c0_67] : memref<25x4x256xf32, #tpu.memory_space<vmem>>, vector<1x4x256xf32>
    %146 = vector.shape_cast %145 : vector<1x4x256xf32> to vector<4x256xf32>
    %147 = arith.mulf %144, %146 : vector<4x256xf32>
    %148 = arith.addf %143, %147 : vector<4x256xf32>
    %c223_i32 = arith.constant 223 : i32
    %149 = tpu.dynamic_rotate %35 by %c223_i32 dim 1 : vector<4x256xf32>, i32 -> vector<4x256xf32>
    %c23 = arith.constant 23 : index
    %c0_68 = arith.constant 0 : index
    %c0_69 = arith.constant 0 : index
    %150 = vector.load %arg5[%c23, %c0_68, %c0_69] : memref<25x4x256xf32, #tpu.memory_space<vmem>>, vector<1x4x256xf32>
    %151 = vector.shape_cast %150 : vector<1x4x256xf32> to vector<4x256xf32>
    %152 = arith.mulf %149, %151 : vector<4x256xf32>
    %153 = arith.addf %148, %152 : vector<4x256xf32>
    %c222_i32 = arith.constant 222 : i32
    %154 = tpu.dynamic_rotate %35 by %c222_i32 dim 1 : vector<4x256xf32>, i32 -> vector<4x256xf32>
    %c24 = arith.constant 24 : index
    %c0_70 = arith.constant 0 : index
    %c0_71 = arith.constant 0 : index
    %155 = vector.load %arg5[%c24, %c0_70, %c0_71] : memref<25x4x256xf32, #tpu.memory_space<vmem>>, vector<1x4x256xf32>
    %156 = vector.shape_cast %155 : vector<1x4x256xf32> to vector<4x256xf32>
    %157 = arith.mulf %154, %156 : vector<4x256xf32>
    %158 = arith.addf %153, %157 : vector<4x256xf32>
    %c0_72 = arith.constant 0 : index
    %159 = memref.load %arg9[%c0_72] : memref<1xf32, #tpu.memory_space<smem>>
    %160 = vector.extract_strided_slice %158 {offsets = [0, 0], sizes = [1, 256], strides = [1, 1]} : vector<4x256xf32> to vector<1x256xf32>
    %161 = vector.extract_strided_slice %158 {offsets = [1, 0], sizes = [1, 256], strides = [1, 1]} : vector<4x256xf32> to vector<1x256xf32>
    %162 = arith.addf %160, %161 : vector<1x256xf32>
    %163 = vector.broadcast %159 : f32 to vector<1x256xf32>
    %164 = arith.addf %162, %163 : vector<1x256xf32>
    %cst_73 = arith.constant 0.000000e+00 : f32
    %165 = vector.broadcast %cst_73 : f32 to vector<1x256xf32>
    %166 = arith.maximumf %164, %165 : vector<1x256xf32>
    %167 = vector.shape_cast %166 : vector<1x256xf32> to vector<1x256xf32>
    %168 = vector.broadcast %167 : vector<1x256xf32> to vector<4x256xf32>
    %169 = vector.extract_strided_slice %158 {offsets = [2, 0], sizes = [1, 256], strides = [1, 1]} : vector<4x256xf32> to vector<1x256xf32>
    %170 = vector.extract_strided_slice %158 {offsets = [3, 0], sizes = [1, 256], strides = [1, 1]} : vector<4x256xf32> to vector<1x256xf32>
    %171 = arith.addf %169, %170 : vector<1x256xf32>
    %172 = vector.broadcast %159 : f32 to vector<1x256xf32>
    %173 = arith.addf %171, %172 : vector<1x256xf32>
    %cst_74 = arith.constant 0.000000e+00 : f32
    %174 = vector.broadcast %cst_74 : f32 to vector<1x256xf32>
    %175 = arith.maximumf %173, %174 : vector<1x256xf32>
    %176 = vector.shape_cast %175 : vector<1x256xf32> to vector<1x256xf32>
    %177 = vector.broadcast %176 : vector<1x256xf32> to vector<4x256xf32>
    %178 = tpu.concatenate %168, %177 in 0 : vector<4x256xf32>, vector<4x256xf32> -> vector<8x256xf32>
    %179 = vector.broadcast %20 : vector<8x1xf32> to vector<8x256xf32>
    %180 = arith.mulf %179, %178 : vector<8x256xf32>
    %181 = arith.negf %180 : vector<8x256xf32>
    %182 = math.exp %181 : vector<8x256xf32>
    %cst_75 = arith.constant 1.000000e+00 : f32
    %183 = vector.broadcast %cst_75 : f32 to vector<8x256xf32>
    %184 = arith.addf %183, %182 : vector<8x256xf32>
    %185 = arith.divf %183, %184 : vector<8x256xf32>
    %186 = arith.mulf %185, %1 : vector<8x256xf32>
    %c0_76 = arith.constant 0 : index
    %c5_77 = arith.constant 5 : index
    %187 = vector.load %arg2[%c0_76, %c5_77] : memref<8x13xf32, #tpu.memory_space<vmem>>, vector<8x1xf32>
    %188 = vector.broadcast %187 : vector<8x1xf32> to vector<8x256xf32>
    %189 = arith.mulf %1, %188 : vector<8x256xf32>
    %c0_78 = arith.constant 0 : index
    %c6_79 = arith.constant 6 : index
    %190 = vector.load %arg2[%c0_78, %c6_79] : memref<8x13xf32, #tpu.memory_space<vmem>>, vector<8x1xf32>
    %191 = vector.broadcast %190 : vector<8x1xf32> to vector<8x256xf32>
    %192 = arith.addf %189, %191 : vector<8x256xf32>
    %c51_i32 = arith.constant 51 : i32
    %193 = tpu.dynamic_rotate %1 by %c51_i32 dim 1 : vector<8x256xf32>, i32 -> vector<8x256xf32>
    %c0_80 = arith.constant 0 : index
    %c0_81 = arith.constant 0 : index
    %c0_82 = arith.constant 0 : index
    %194 = vector.load %arg3[%c0_80, %c0_81, %c0_82] : memref<49x8x256xf32, #tpu.memory_space<vmem>>, vector<1x8x256xf32>
    %195 = vector.shape_cast %194 : vector<1x8x256xf32> to vector<8x256xf32>
    %196 = arith.mulf %193, %195 : vector<8x256xf32>
    %c50_i32 = arith.constant 50 : i32
    %197 = tpu.dynamic_rotate %1 by %c50_i32 dim 1 : vector<8x256xf32>, i32 -> vector<8x256xf32>
    %c1_83 = arith.constant 1 : index
    %c0_84 = arith.constant 0 : index
    %c0_85 = arith.constant 0 : index
    %198 = vector.load %arg3[%c1_83, %c0_84, %c0_85] : memref<49x8x256xf32, #tpu.memory_space<vmem>>, vector<1x8x256xf32>
    %199 = vector.shape_cast %198 : vector<1x8x256xf32> to vector<8x256xf32>
    %200 = arith.mulf %197, %199 : vector<8x256xf32>
    %201 = arith.addf %196, %200 : vector<8x256xf32>
    %c49_i32 = arith.constant 49 : i32
    %202 = tpu.dynamic_rotate %1 by %c49_i32 dim 1 : vector<8x256xf32>, i32 -> vector<8x256xf32>
    %c2_86 = arith.constant 2 : index
    %c0_87 = arith.constant 0 : index
    %c0_88 = arith.constant 0 : index
    %203 = vector.load %arg3[%c2_86, %c0_87, %c0_88] : memref<49x8x256xf32, #tpu.memory_space<vmem>>, vector<1x8x256xf32>
    %204 = vector.shape_cast %203 : vector<1x8x256xf32> to vector<8x256xf32>
    %205 = arith.mulf %202, %204 : vector<8x256xf32>
    %206 = arith.addf %201, %205 : vector<8x256xf32>
    %c48_i32 = arith.constant 48 : i32
    %207 = tpu.dynamic_rotate %1 by %c48_i32 dim 1 : vector<8x256xf32>, i32 -> vector<8x256xf32>
    %c3_89 = arith.constant 3 : index
    %c0_90 = arith.constant 0 : index
    %c0_91 = arith.constant 0 : index
    %208 = vector.load %arg3[%c3_89, %c0_90, %c0_91] : memref<49x8x256xf32, #tpu.memory_space<vmem>>, vector<1x8x256xf32>
    %209 = vector.shape_cast %208 : vector<1x8x256xf32> to vector<8x256xf32>
    %210 = arith.mulf %207, %209 : vector<8x256xf32>
    %211 = arith.addf %206, %210 : vector<8x256xf32>
    %c47_i32 = arith.constant 47 : i32
    %212 = tpu.dynamic_rotate %1 by %c47_i32 dim 1 : vector<8x256xf32>, i32 -> vector<8x256xf32>
    %c4_92 = arith.constant 4 : index
    %c0_93 = arith.constant 0 : index
    %c0_94 = arith.constant 0 : index
    %213 = vector.load %arg3[%c4_92, %c0_93, %c0_94] : memref<49x8x256xf32, #tpu.memory_space<vmem>>, vector<1x8x256xf32>
    %214 = vector.shape_cast %213 : vector<1x8x256xf32> to vector<8x256xf32>
    %215 = arith.mulf %212, %214 : vector<8x256xf32>
    %216 = arith.addf %211, %215 : vector<8x256xf32>
    %c46_i32 = arith.constant 46 : i32
    %217 = tpu.dynamic_rotate %1 by %c46_i32 dim 1 : vector<8x256xf32>, i32 -> vector<8x256xf32>
    %c5_95 = arith.constant 5 : index
    %c0_96 = arith.constant 0 : index
    %c0_97 = arith.constant 0 : index
    %218 = vector.load %arg3[%c5_95, %c0_96, %c0_97] : memref<49x8x256xf32, #tpu.memory_space<vmem>>, vector<1x8x256xf32>
    %219 = vector.shape_cast %218 : vector<1x8x256xf32> to vector<8x256xf32>
    %220 = arith.mulf %217, %219 : vector<8x256xf32>
    %221 = arith.addf %216, %220 : vector<8x256xf32>
    %c45_i32 = arith.constant 45 : i32
    %222 = tpu.dynamic_rotate %1 by %c45_i32 dim 1 : vector<8x256xf32>, i32 -> vector<8x256xf32>
    %c6_98 = arith.constant 6 : index
    %c0_99 = arith.constant 0 : index
    %c0_100 = arith.constant 0 : index
    %223 = vector.load %arg3[%c6_98, %c0_99, %c0_100] : memref<49x8x256xf32, #tpu.memory_space<vmem>>, vector<1x8x256xf32>
    %224 = vector.shape_cast %223 : vector<1x8x256xf32> to vector<8x256xf32>
    %225 = arith.mulf %222, %224 : vector<8x256xf32>
    %226 = arith.addf %221, %225 : vector<8x256xf32>
    %c35_i32 = arith.constant 35 : i32
    %227 = tpu.dynamic_rotate %1 by %c35_i32 dim 1 : vector<8x256xf32>, i32 -> vector<8x256xf32>
    %c7_101 = arith.constant 7 : index
    %c0_102 = arith.constant 0 : index
    %c0_103 = arith.constant 0 : index
    %228 = vector.load %arg3[%c7_101, %c0_102, %c0_103] : memref<49x8x256xf32, #tpu.memory_space<vmem>>, vector<1x8x256xf32>
    %229 = vector.shape_cast %228 : vector<1x8x256xf32> to vector<8x256xf32>
    %230 = arith.mulf %227, %229 : vector<8x256xf32>
    %231 = arith.addf %226, %230 : vector<8x256xf32>
    %c34_i32_104 = arith.constant 34 : i32
    %232 = tpu.dynamic_rotate %1 by %c34_i32_104 dim 1 : vector<8x256xf32>, i32 -> vector<8x256xf32>
    %c8_105 = arith.constant 8 : index
    %c0_106 = arith.constant 0 : index
    %c0_107 = arith.constant 0 : index
    %233 = vector.load %arg3[%c8_105, %c0_106, %c0_107] : memref<49x8x256xf32, #tpu.memory_space<vmem>>, vector<1x8x256xf32>
    %234 = vector.shape_cast %233 : vector<1x8x256xf32> to vector<8x256xf32>
    %235 = arith.mulf %232, %234 : vector<8x256xf32>
    %236 = arith.addf %231, %235 : vector<8x256xf32>
    %c33_i32_108 = arith.constant 33 : i32
    %237 = tpu.dynamic_rotate %1 by %c33_i32_108 dim 1 : vector<8x256xf32>, i32 -> vector<8x256xf32>
    %c9_109 = arith.constant 9 : index
    %c0_110 = arith.constant 0 : index
    %c0_111 = arith.constant 0 : index
    %238 = vector.load %arg3[%c9_109, %c0_110, %c0_111] : memref<49x8x256xf32, #tpu.memory_space<vmem>>, vector<1x8x256xf32>
    %239 = vector.shape_cast %238 : vector<1x8x256xf32> to vector<8x256xf32>
    %240 = arith.mulf %237, %239 : vector<8x256xf32>
    %241 = arith.addf %236, %240 : vector<8x256xf32>
    %c32_i32_112 = arith.constant 32 : i32
    %242 = tpu.dynamic_rotate %1 by %c32_i32_112 dim 1 : vector<8x256xf32>, i32 -> vector<8x256xf32>
    %c10_113 = arith.constant 10 : index
    %c0_114 = arith.constant 0 : index
    %c0_115 = arith.constant 0 : index
    %243 = vector.load %arg3[%c10_113, %c0_114, %c0_115] : memref<49x8x256xf32, #tpu.memory_space<vmem>>, vector<1x8x256xf32>
    %244 = vector.shape_cast %243 : vector<1x8x256xf32> to vector<8x256xf32>
    %245 = arith.mulf %242, %244 : vector<8x256xf32>
    %246 = arith.addf %241, %245 : vector<8x256xf32>
    %c31_i32_116 = arith.constant 31 : i32
    %247 = tpu.dynamic_rotate %1 by %c31_i32_116 dim 1 : vector<8x256xf32>, i32 -> vector<8x256xf32>
    %c11_117 = arith.constant 11 : index
    %c0_118 = arith.constant 0 : index
    %c0_119 = arith.constant 0 : index
    %248 = vector.load %arg3[%c11_117, %c0_118, %c0_119] : memref<49x8x256xf32, #tpu.memory_space<vmem>>, vector<1x8x256xf32>
    %249 = vector.shape_cast %248 : vector<1x8x256xf32> to vector<8x256xf32>
    %250 = arith.mulf %247, %249 : vector<8x256xf32>
    %251 = arith.addf %246, %250 : vector<8x256xf32>
    %c30_i32_120 = arith.constant 30 : i32
    %252 = tpu.dynamic_rotate %1 by %c30_i32_120 dim 1 : vector<8x256xf32>, i32 -> vector<8x256xf32>
    %c12_121 = arith.constant 12 : index
    %c0_122 = arith.constant 0 : index
    %c0_123 = arith.constant 0 : index
    %253 = vector.load %arg3[%c12_121, %c0_122, %c0_123] : memref<49x8x256xf32, #tpu.memory_space<vmem>>, vector<1x8x256xf32>
    %254 = vector.shape_cast %253 : vector<1x8x256xf32> to vector<8x256xf32>
    %255 = arith.mulf %252, %254 : vector<8x256xf32>
    %256 = arith.addf %251, %255 : vector<8x256xf32>
    %c29_i32 = arith.constant 29 : i32
    %257 = tpu.dynamic_rotate %1 by %c29_i32 dim 1 : vector<8x256xf32>, i32 -> vector<8x256xf32>
    %c13_124 = arith.constant 13 : index
    %c0_125 = arith.constant 0 : index
    %c0_126 = arith.constant 0 : index
    %258 = vector.load %arg3[%c13_124, %c0_125, %c0_126] : memref<49x8x256xf32, #tpu.memory_space<vmem>>, vector<1x8x256xf32>
    %259 = vector.shape_cast %258 : vector<1x8x256xf32> to vector<8x256xf32>
    %260 = arith.mulf %257, %259 : vector<8x256xf32>
    %261 = arith.addf %256, %260 : vector<8x256xf32>
    %c19_i32 = arith.constant 19 : i32
    %262 = tpu.dynamic_rotate %1 by %c19_i32 dim 1 : vector<8x256xf32>, i32 -> vector<8x256xf32>
    %c14_127 = arith.constant 14 : index
    %c0_128 = arith.constant 0 : index
    %c0_129 = arith.constant 0 : index
    %263 = vector.load %arg3[%c14_127, %c0_128, %c0_129] : memref<49x8x256xf32, #tpu.memory_space<vmem>>, vector<1x8x256xf32>
    %264 = vector.shape_cast %263 : vector<1x8x256xf32> to vector<8x256xf32>
    %265 = arith.mulf %262, %264 : vector<8x256xf32>
    %266 = arith.addf %261, %265 : vector<8x256xf32>
    %c18_i32_130 = arith.constant 18 : i32
    %267 = tpu.dynamic_rotate %1 by %c18_i32_130 dim 1 : vector<8x256xf32>, i32 -> vector<8x256xf32>
    %c15_131 = arith.constant 15 : index
    %c0_132 = arith.constant 0 : index
    %c0_133 = arith.constant 0 : index
    %268 = vector.load %arg3[%c15_131, %c0_132, %c0_133] : memref<49x8x256xf32, #tpu.memory_space<vmem>>, vector<1x8x256xf32>
    %269 = vector.shape_cast %268 : vector<1x8x256xf32> to vector<8x256xf32>
    %270 = arith.mulf %267, %269 : vector<8x256xf32>
    %271 = arith.addf %266, %270 : vector<8x256xf32>
    %c17_i32_134 = arith.constant 17 : i32
    %272 = tpu.dynamic_rotate %1 by %c17_i32_134 dim 1 : vector<8x256xf32>, i32 -> vector<8x256xf32>
    %c16_135 = arith.constant 16 : index
    %c0_136 = arith.constant 0 : index
    %c0_137 = arith.constant 0 : index
    %273 = vector.load %arg3[%c16_135, %c0_136, %c0_137] : memref<49x8x256xf32, #tpu.memory_space<vmem>>, vector<1x8x256xf32>
    %274 = vector.shape_cast %273 : vector<1x8x256xf32> to vector<8x256xf32>
    %275 = arith.mulf %272, %274 : vector<8x256xf32>
    %276 = arith.addf %271, %275 : vector<8x256xf32>
    %c0_138 = arith.constant 0 : index
    %c0_139 = arith.constant 0 : index
    %c0_140 = arith.constant 0 : index
    %277 = vector.load %arg4[%c0_138, %c0_139, %c0_140] : memref<9x8x256xf32, #tpu.memory_space<vmem>>, vector<1x8x256xf32>
    %278 = vector.shape_cast %277 : vector<1x8x256xf32> to vector<8x256xf32>
    %279 = arith.mulf %272, %278 : vector<8x256xf32>
    %c16_i32_141 = arith.constant 16 : i32
    %280 = tpu.dynamic_rotate %1 by %c16_i32_141 dim 1 : vector<8x256xf32>, i32 -> vector<8x256xf32>
    %c17_142 = arith.constant 17 : index
    %c0_143 = arith.constant 0 : index
    %c0_144 = arith.constant 0 : index
    %281 = vector.load %arg3[%c17_142, %c0_143, %c0_144] : memref<49x8x256xf32, #tpu.memory_space<vmem>>, vector<1x8x256xf32>
    %282 = vector.shape_cast %281 : vector<1x8x256xf32> to vector<8x256xf32>
    %283 = arith.mulf %280, %282 : vector<8x256xf32>
    %284 = arith.addf %276, %283 : vector<8x256xf32>
    %c1_145 = arith.constant 1 : index
    %c0_146 = arith.constant 0 : index
    %c0_147 = arith.constant 0 : index
    %285 = vector.load %arg4[%c1_145, %c0_146, %c0_147] : memref<9x8x256xf32, #tpu.memory_space<vmem>>, vector<1x8x256xf32>
    %286 = vector.shape_cast %285 : vector<1x8x256xf32> to vector<8x256xf32>
    %287 = arith.mulf %280, %286 : vector<8x256xf32>
    %288 = arith.addf %279, %287 : vector<8x256xf32>
    %c15_i32_148 = arith.constant 15 : i32
    %289 = tpu.dynamic_rotate %1 by %c15_i32_148 dim 1 : vector<8x256xf32>, i32 -> vector<8x256xf32>
    %c18_149 = arith.constant 18 : index
    %c0_150 = arith.constant 0 : index
    %c0_151 = arith.constant 0 : index
    %290 = vector.load %arg3[%c18_149, %c0_150, %c0_151] : memref<49x8x256xf32, #tpu.memory_space<vmem>>, vector<1x8x256xf32>
    %291 = vector.shape_cast %290 : vector<1x8x256xf32> to vector<8x256xf32>
    %292 = arith.mulf %289, %291 : vector<8x256xf32>
    %293 = arith.addf %284, %292 : vector<8x256xf32>
    %c2_152 = arith.constant 2 : index
    %c0_153 = arith.constant 0 : index
    %c0_154 = arith.constant 0 : index
    %294 = vector.load %arg4[%c2_152, %c0_153, %c0_154] : memref<9x8x256xf32, #tpu.memory_space<vmem>>, vector<1x8x256xf32>
    %295 = vector.shape_cast %294 : vector<1x8x256xf32> to vector<8x256xf32>
    %296 = arith.mulf %289, %295 : vector<8x256xf32>
    %297 = arith.addf %288, %296 : vector<8x256xf32>
    %c14_i32_155 = arith.constant 14 : i32
    %298 = tpu.dynamic_rotate %1 by %c14_i32_155 dim 1 : vector<8x256xf32>, i32 -> vector<8x256xf32>
    %c19_156 = arith.constant 19 : index
    %c0_157 = arith.constant 0 : index
    %c0_158 = arith.constant 0 : index
    %299 = vector.load %arg3[%c19_156, %c0_157, %c0_158] : memref<49x8x256xf32, #tpu.memory_space<vmem>>, vector<1x8x256xf32>
    %300 = vector.shape_cast %299 : vector<1x8x256xf32> to vector<8x256xf32>
    %301 = arith.mulf %298, %300 : vector<8x256xf32>
    %302 = arith.addf %293, %301 : vector<8x256xf32>
    %c13_i32 = arith.constant 13 : i32
    %303 = tpu.dynamic_rotate %1 by %c13_i32 dim 1 : vector<8x256xf32>, i32 -> vector<8x256xf32>
    %c20_159 = arith.constant 20 : index
    %c0_160 = arith.constant 0 : index
    %c0_161 = arith.constant 0 : index
    %304 = vector.load %arg3[%c20_159, %c0_160, %c0_161] : memref<49x8x256xf32, #tpu.memory_space<vmem>>, vector<1x8x256xf32>
    %305 = vector.shape_cast %304 : vector<1x8x256xf32> to vector<8x256xf32>
    %306 = arith.mulf %303, %305 : vector<8x256xf32>
    %307 = arith.addf %302, %306 : vector<8x256xf32>
    %c3_i32 = arith.constant 3 : i32
    %308 = tpu.dynamic_rotate %1 by %c3_i32 dim 1 : vector<8x256xf32>, i32 -> vector<8x256xf32>
    %c21_162 = arith.constant 21 : index
    %c0_163 = arith.constant 0 : index
    %c0_164 = arith.constant 0 : index
    %309 = vector.load %arg3[%c21_162, %c0_163, %c0_164] : memref<49x8x256xf32, #tpu.memory_space<vmem>>, vector<1x8x256xf32>
    %310 = vector.shape_cast %309 : vector<1x8x256xf32> to vector<8x256xf32>
    %311 = arith.mulf %308, %310 : vector<8x256xf32>
    %312 = arith.addf %307, %311 : vector<8x256xf32>
    %c2_i32_165 = arith.constant 2 : i32
    %313 = tpu.dynamic_rotate %1 by %c2_i32_165 dim 1 : vector<8x256xf32>, i32 -> vector<8x256xf32>
    %c22_166 = arith.constant 22 : index
    %c0_167 = arith.constant 0 : index
    %c0_168 = arith.constant 0 : index
    %314 = vector.load %arg3[%c22_166, %c0_167, %c0_168] : memref<49x8x256xf32, #tpu.memory_space<vmem>>, vector<1x8x256xf32>
    %315 = vector.shape_cast %314 : vector<1x8x256xf32> to vector<8x256xf32>
    %316 = arith.mulf %313, %315 : vector<8x256xf32>
    %317 = arith.addf %312, %316 : vector<8x256xf32>
    %c1_i32_169 = arith.constant 1 : i32
    %318 = tpu.dynamic_rotate %1 by %c1_i32_169 dim 1 : vector<8x256xf32>, i32 -> vector<8x256xf32>
    %c23_170 = arith.constant 23 : index
    %c0_171 = arith.constant 0 : index
    %c0_172 = arith.constant 0 : index
    %319 = vector.load %arg3[%c23_170, %c0_171, %c0_172] : memref<49x8x256xf32, #tpu.memory_space<vmem>>, vector<1x8x256xf32>
    %320 = vector.shape_cast %319 : vector<1x8x256xf32> to vector<8x256xf32>
    %321 = arith.mulf %318, %320 : vector<8x256xf32>
    %322 = arith.addf %317, %321 : vector<8x256xf32>
    %c3_173 = arith.constant 3 : index
    %c0_174 = arith.constant 0 : index
    %c0_175 = arith.constant 0 : index
    %323 = vector.load %arg4[%c3_173, %c0_174, %c0_175] : memref<9x8x256xf32, #tpu.memory_space<vmem>>, vector<1x8x256xf32>
    %324 = vector.shape_cast %323 : vector<1x8x256xf32> to vector<8x256xf32>
    %325 = arith.mulf %318, %324 : vector<8x256xf32>
    %326 = arith.addf %297, %325 : vector<8x256xf32>
    %c24_176 = arith.constant 24 : index
    %c0_177 = arith.constant 0 : index
    %c0_178 = arith.constant 0 : index
    %327 = vector.load %arg3[%c24_176, %c0_177, %c0_178] : memref<49x8x256xf32, #tpu.memory_space<vmem>>, vector<1x8x256xf32>
    %328 = vector.shape_cast %327 : vector<1x8x256xf32> to vector<8x256xf32>
    %329 = arith.mulf %1, %328 : vector<8x256xf32>
    %330 = arith.addf %322, %329 : vector<8x256xf32>
    %c4_179 = arith.constant 4 : index
    %c0_180 = arith.constant 0 : index
    %c0_181 = arith.constant 0 : index
    %331 = vector.load %arg4[%c4_179, %c0_180, %c0_181] : memref<9x8x256xf32, #tpu.memory_space<vmem>>, vector<1x8x256xf32>
    %332 = vector.shape_cast %331 : vector<1x8x256xf32> to vector<8x256xf32>
    %333 = arith.mulf %1, %332 : vector<8x256xf32>
    %334 = arith.addf %326, %333 : vector<8x256xf32>
    %c255_i32_182 = arith.constant 255 : i32
    %335 = tpu.dynamic_rotate %1 by %c255_i32_182 dim 1 : vector<8x256xf32>, i32 -> vector<8x256xf32>
    %c25 = arith.constant 25 : index
    %c0_183 = arith.constant 0 : index
    %c0_184 = arith.constant 0 : index
    %336 = vector.load %arg3[%c25, %c0_183, %c0_184] : memref<49x8x256xf32, #tpu.memory_space<vmem>>, vector<1x8x256xf32>
    %337 = vector.shape_cast %336 : vector<1x8x256xf32> to vector<8x256xf32>
    %338 = arith.mulf %335, %337 : vector<8x256xf32>
    %339 = arith.addf %330, %338 : vector<8x256xf32>
    %c5_185 = arith.constant 5 : index
    %c0_186 = arith.constant 0 : index
    %c0_187 = arith.constant 0 : index
    %340 = vector.load %arg4[%c5_185, %c0_186, %c0_187] : memref<9x8x256xf32, #tpu.memory_space<vmem>>, vector<1x8x256xf32>
    %341 = vector.shape_cast %340 : vector<1x8x256xf32> to vector<8x256xf32>
    %342 = arith.mulf %335, %341 : vector<8x256xf32>
    %343 = arith.addf %334, %342 : vector<8x256xf32>
    %c254_i32_188 = arith.constant 254 : i32
    %344 = tpu.dynamic_rotate %1 by %c254_i32_188 dim 1 : vector<8x256xf32>, i32 -> vector<8x256xf32>
    %c26 = arith.constant 26 : index
    %c0_189 = arith.constant 0 : index
    %c0_190 = arith.constant 0 : index
    %345 = vector.load %arg3[%c26, %c0_189, %c0_190] : memref<49x8x256xf32, #tpu.memory_space<vmem>>, vector<1x8x256xf32>
    %346 = vector.shape_cast %345 : vector<1x8x256xf32> to vector<8x256xf32>
    %347 = arith.mulf %344, %346 : vector<8x256xf32>
    %348 = arith.addf %339, %347 : vector<8x256xf32>
    %c253_i32 = arith.constant 253 : i32
    %349 = tpu.dynamic_rotate %1 by %c253_i32 dim 1 : vector<8x256xf32>, i32 -> vector<8x256xf32>
    %c27 = arith.constant 27 : index
    %c0_191 = arith.constant 0 : index
    %c0_192 = arith.constant 0 : index
    %350 = vector.load %arg3[%c27, %c0_191, %c0_192] : memref<49x8x256xf32, #tpu.memory_space<vmem>>, vector<1x8x256xf32>
    %351 = vector.shape_cast %350 : vector<1x8x256xf32> to vector<8x256xf32>
    %352 = arith.mulf %349, %351 : vector<8x256xf32>
    %353 = arith.addf %348, %352 : vector<8x256xf32>
    %c243_i32 = arith.constant 243 : i32
    %354 = tpu.dynamic_rotate %1 by %c243_i32 dim 1 : vector<8x256xf32>, i32 -> vector<8x256xf32>
    %c28 = arith.constant 28 : index
    %c0_193 = arith.constant 0 : index
    %c0_194 = arith.constant 0 : index
    %355 = vector.load %arg3[%c28, %c0_193, %c0_194] : memref<49x8x256xf32, #tpu.memory_space<vmem>>, vector<1x8x256xf32>
    %356 = vector.shape_cast %355 : vector<1x8x256xf32> to vector<8x256xf32>
    %357 = arith.mulf %354, %356 : vector<8x256xf32>
    %358 = arith.addf %353, %357 : vector<8x256xf32>
    %c242_i32_195 = arith.constant 242 : i32
    %359 = tpu.dynamic_rotate %1 by %c242_i32_195 dim 1 : vector<8x256xf32>, i32 -> vector<8x256xf32>
    %c29 = arith.constant 29 : index
    %c0_196 = arith.constant 0 : index
    %c0_197 = arith.constant 0 : index
    %360 = vector.load %arg3[%c29, %c0_196, %c0_197] : memref<49x8x256xf32, #tpu.memory_space<vmem>>, vector<1x8x256xf32>
    %361 = vector.shape_cast %360 : vector<1x8x256xf32> to vector<8x256xf32>
    %362 = arith.mulf %359, %361 : vector<8x256xf32>
    %363 = arith.addf %358, %362 : vector<8x256xf32>
    %c241_i32_198 = arith.constant 241 : i32
    %364 = tpu.dynamic_rotate %1 by %c241_i32_198 dim 1 : vector<8x256xf32>, i32 -> vector<8x256xf32>
    %c30 = arith.constant 30 : index
    %c0_199 = arith.constant 0 : index
    %c0_200 = arith.constant 0 : index
    %365 = vector.load %arg3[%c30, %c0_199, %c0_200] : memref<49x8x256xf32, #tpu.memory_space<vmem>>, vector<1x8x256xf32>
    %366 = vector.shape_cast %365 : vector<1x8x256xf32> to vector<8x256xf32>
    %367 = arith.mulf %364, %366 : vector<8x256xf32>
    %368 = arith.addf %363, %367 : vector<8x256xf32>
    %c6_201 = arith.constant 6 : index
    %c0_202 = arith.constant 0 : index
    %c0_203 = arith.constant 0 : index
    %369 = vector.load %arg4[%c6_201, %c0_202, %c0_203] : memref<9x8x256xf32, #tpu.memory_space<vmem>>, vector<1x8x256xf32>
    %370 = vector.shape_cast %369 : vector<1x8x256xf32> to vector<8x256xf32>
    %371 = arith.mulf %364, %370 : vector<8x256xf32>
    %372 = arith.addf %343, %371 : vector<8x256xf32>
    %c240_i32_204 = arith.constant 240 : i32
    %373 = tpu.dynamic_rotate %1 by %c240_i32_204 dim 1 : vector<8x256xf32>, i32 -> vector<8x256xf32>
    %c31 = arith.constant 31 : index
    %c0_205 = arith.constant 0 : index
    %c0_206 = arith.constant 0 : index
    %374 = vector.load %arg3[%c31, %c0_205, %c0_206] : memref<49x8x256xf32, #tpu.memory_space<vmem>>, vector<1x8x256xf32>
    %375 = vector.shape_cast %374 : vector<1x8x256xf32> to vector<8x256xf32>
    %376 = arith.mulf %373, %375 : vector<8x256xf32>
    %377 = arith.addf %368, %376 : vector<8x256xf32>
    %c7_207 = arith.constant 7 : index
    %c0_208 = arith.constant 0 : index
    %c0_209 = arith.constant 0 : index
    %378 = vector.load %arg4[%c7_207, %c0_208, %c0_209] : memref<9x8x256xf32, #tpu.memory_space<vmem>>, vector<1x8x256xf32>
    %379 = vector.shape_cast %378 : vector<1x8x256xf32> to vector<8x256xf32>
    %380 = arith.mulf %373, %379 : vector<8x256xf32>
    %381 = arith.addf %372, %380 : vector<8x256xf32>
    %c239_i32_210 = arith.constant 239 : i32
    %382 = tpu.dynamic_rotate %1 by %c239_i32_210 dim 1 : vector<8x256xf32>, i32 -> vector<8x256xf32>
    %c32 = arith.constant 32 : index
    %c0_211 = arith.constant 0 : index
    %c0_212 = arith.constant 0 : index
    %383 = vector.load %arg3[%c32, %c0_211, %c0_212] : memref<49x8x256xf32, #tpu.memory_space<vmem>>, vector<1x8x256xf32>
    %384 = vector.shape_cast %383 : vector<1x8x256xf32> to vector<8x256xf32>
    %385 = arith.mulf %382, %384 : vector<8x256xf32>
    %386 = arith.addf %377, %385 : vector<8x256xf32>
    %c8_213 = arith.constant 8 : index
    %c0_214 = arith.constant 0 : index
    %c0_215 = arith.constant 0 : index
    %387 = vector.load %arg4[%c8_213, %c0_214, %c0_215] : memref<9x8x256xf32, #tpu.memory_space<vmem>>, vector<1x8x256xf32>
    %388 = vector.shape_cast %387 : vector<1x8x256xf32> to vector<8x256xf32>
    %389 = arith.mulf %382, %388 : vector<8x256xf32>
    %390 = arith.addf %381, %389 : vector<8x256xf32>
    %c238_i32_216 = arith.constant 238 : i32
    %391 = tpu.dynamic_rotate %1 by %c238_i32_216 dim 1 : vector<8x256xf32>, i32 -> vector<8x256xf32>
    %c33 = arith.constant 33 : index
    %c0_217 = arith.constant 0 : index
    %c0_218 = arith.constant 0 : index
    %392 = vector.load %arg3[%c33, %c0_217, %c0_218] : memref<49x8x256xf32, #tpu.memory_space<vmem>>, vector<1x8x256xf32>
    %393 = vector.shape_cast %392 : vector<1x8x256xf32> to vector<8x256xf32>
    %394 = arith.mulf %391, %393 : vector<8x256xf32>
    %395 = arith.addf %386, %394 : vector<8x256xf32>
    %c237_i32 = arith.constant 237 : i32
    %396 = tpu.dynamic_rotate %1 by %c237_i32 dim 1 : vector<8x256xf32>, i32 -> vector<8x256xf32>
    %c34 = arith.constant 34 : index
    %c0_219 = arith.constant 0 : index
    %c0_220 = arith.constant 0 : index
    %397 = vector.load %arg3[%c34, %c0_219, %c0_220] : memref<49x8x256xf32, #tpu.memory_space<vmem>>, vector<1x8x256xf32>
    %398 = vector.shape_cast %397 : vector<1x8x256xf32> to vector<8x256xf32>
    %399 = arith.mulf %396, %398 : vector<8x256xf32>
    %400 = arith.addf %395, %399 : vector<8x256xf32>
    %c227_i32 = arith.constant 227 : i32
    %401 = tpu.dynamic_rotate %1 by %c227_i32 dim 1 : vector<8x256xf32>, i32 -> vector<8x256xf32>
    %c35 = arith.constant 35 : index
    %c0_221 = arith.constant 0 : index
    %c0_222 = arith.constant 0 : index
    %402 = vector.load %arg3[%c35, %c0_221, %c0_222] : memref<49x8x256xf32, #tpu.memory_space<vmem>>, vector<1x8x256xf32>
    %403 = vector.shape_cast %402 : vector<1x8x256xf32> to vector<8x256xf32>
    %404 = arith.mulf %401, %403 : vector<8x256xf32>
    %405 = arith.addf %400, %404 : vector<8x256xf32>
    %c226_i32_223 = arith.constant 226 : i32
    %406 = tpu.dynamic_rotate %1 by %c226_i32_223 dim 1 : vector<8x256xf32>, i32 -> vector<8x256xf32>
    %c36 = arith.constant 36 : index
    %c0_224 = arith.constant 0 : index
    %c0_225 = arith.constant 0 : index
    %407 = vector.load %arg3[%c36, %c0_224, %c0_225] : memref<49x8x256xf32, #tpu.memory_space<vmem>>, vector<1x8x256xf32>
    %408 = vector.shape_cast %407 : vector<1x8x256xf32> to vector<8x256xf32>
    %409 = arith.mulf %406, %408 : vector<8x256xf32>
    %410 = arith.addf %405, %409 : vector<8x256xf32>
    %c225_i32_226 = arith.constant 225 : i32
    %411 = tpu.dynamic_rotate %1 by %c225_i32_226 dim 1 : vector<8x256xf32>, i32 -> vector<8x256xf32>
    %c37 = arith.constant 37 : index
    %c0_227 = arith.constant 0 : index
    %c0_228 = arith.constant 0 : index
    %412 = vector.load %arg3[%c37, %c0_227, %c0_228] : memref<49x8x256xf32, #tpu.memory_space<vmem>>, vector<1x8x256xf32>
    %413 = vector.shape_cast %412 : vector<1x8x256xf32> to vector<8x256xf32>
    %414 = arith.mulf %411, %413 : vector<8x256xf32>
    %415 = arith.addf %410, %414 : vector<8x256xf32>
    %c224_i32_229 = arith.constant 224 : i32
    %416 = tpu.dynamic_rotate %1 by %c224_i32_229 dim 1 : vector<8x256xf32>, i32 -> vector<8x256xf32>
    %c38 = arith.constant 38 : index
    %c0_230 = arith.constant 0 : index
    %c0_231 = arith.constant 0 : index
    %417 = vector.load %arg3[%c38, %c0_230, %c0_231] : memref<49x8x256xf32, #tpu.memory_space<vmem>>, vector<1x8x256xf32>
    %418 = vector.shape_cast %417 : vector<1x8x256xf32> to vector<8x256xf32>
    %419 = arith.mulf %416, %418 : vector<8x256xf32>
    %420 = arith.addf %415, %419 : vector<8x256xf32>
    %c223_i32_232 = arith.constant 223 : i32
    %421 = tpu.dynamic_rotate %1 by %c223_i32_232 dim 1 : vector<8x256xf32>, i32 -> vector<8x256xf32>
    %c39 = arith.constant 39 : index
    %c0_233 = arith.constant 0 : index
    %c0_234 = arith.constant 0 : index
    %422 = vector.load %arg3[%c39, %c0_233, %c0_234] : memref<49x8x256xf32, #tpu.memory_space<vmem>>, vector<1x8x256xf32>
    %423 = vector.shape_cast %422 : vector<1x8x256xf32> to vector<8x256xf32>
    %424 = arith.mulf %421, %423 : vector<8x256xf32>
    %425 = arith.addf %420, %424 : vector<8x256xf32>
    %c222_i32_235 = arith.constant 222 : i32
    %426 = tpu.dynamic_rotate %1 by %c222_i32_235 dim 1 : vector<8x256xf32>, i32 -> vector<8x256xf32>
    %c40 = arith.constant 40 : index
    %c0_236 = arith.constant 0 : index
    %c0_237 = arith.constant 0 : index
    %427 = vector.load %arg3[%c40, %c0_236, %c0_237] : memref<49x8x256xf32, #tpu.memory_space<vmem>>, vector<1x8x256xf32>
    %428 = vector.shape_cast %427 : vector<1x8x256xf32> to vector<8x256xf32>
    %429 = arith.mulf %426, %428 : vector<8x256xf32>
    %430 = arith.addf %425, %429 : vector<8x256xf32>
    %c221_i32 = arith.constant 221 : i32
    %431 = tpu.dynamic_rotate %1 by %c221_i32 dim 1 : vector<8x256xf32>, i32 -> vector<8x256xf32>
    %c41 = arith.constant 41 : index
    %c0_238 = arith.constant 0 : index
    %c0_239 = arith.constant 0 : index
    %432 = vector.load %arg3[%c41, %c0_238, %c0_239] : memref<49x8x256xf32, #tpu.memory_space<vmem>>, vector<1x8x256xf32>
    %433 = vector.shape_cast %432 : vector<1x8x256xf32> to vector<8x256xf32>
    %434 = arith.mulf %431, %433 : vector<8x256xf32>
    %435 = arith.addf %430, %434 : vector<8x256xf32>
    %c211_i32 = arith.constant 211 : i32
    %436 = tpu.dynamic_rotate %1 by %c211_i32 dim 1 : vector<8x256xf32>, i32 -> vector<8x256xf32>
    %c42 = arith.constant 42 : index
    %c0_240 = arith.constant 0 : index
    %c0_241 = arith.constant 0 : index
    %437 = vector.load %arg3[%c42, %c0_240, %c0_241] : memref<49x8x256xf32, #tpu.memory_space<vmem>>, vector<1x8x256xf32>
    %438 = vector.shape_cast %437 : vector<1x8x256xf32> to vector<8x256xf32>
    %439 = arith.mulf %436, %438 : vector<8x256xf32>
    %440 = arith.addf %435, %439 : vector<8x256xf32>
    %c210_i32 = arith.constant 210 : i32
    %441 = tpu.dynamic_rotate %1 by %c210_i32 dim 1 : vector<8x256xf32>, i32 -> vector<8x256xf32>
    %c43 = arith.constant 43 : index
    %c0_242 = arith.constant 0 : index
    %c0_243 = arith.constant 0 : index
    %442 = vector.load %arg3[%c43, %c0_242, %c0_243] : memref<49x8x256xf32, #tpu.memory_space<vmem>>, vector<1x8x256xf32>
    %443 = vector.shape_cast %442 : vector<1x8x256xf32> to vector<8x256xf32>
    %444 = arith.mulf %441, %443 : vector<8x256xf32>
    %445 = arith.addf %440, %444 : vector<8x256xf32>
    %c209_i32 = arith.constant 209 : i32
    %446 = tpu.dynamic_rotate %1 by %c209_i32 dim 1 : vector<8x256xf32>, i32 -> vector<8x256xf32>
    %c44 = arith.constant 44 : index
    %c0_244 = arith.constant 0 : index
    %c0_245 = arith.constant 0 : index
    %447 = vector.load %arg3[%c44, %c0_244, %c0_245] : memref<49x8x256xf32, #tpu.memory_space<vmem>>, vector<1x8x256xf32>
    %448 = vector.shape_cast %447 : vector<1x8x256xf32> to vector<8x256xf32>
    %449 = arith.mulf %446, %448 : vector<8x256xf32>
    %450 = arith.addf %445, %449 : vector<8x256xf32>
    %c208_i32 = arith.constant 208 : i32
    %451 = tpu.dynamic_rotate %1 by %c208_i32 dim 1 : vector<8x256xf32>, i32 -> vector<8x256xf32>
    %c45 = arith.constant 45 : index
    %c0_246 = arith.constant 0 : index
    %c0_247 = arith.constant 0 : index
    %452 = vector.load %arg3[%c45, %c0_246, %c0_247] : memref<49x8x256xf32, #tpu.memory_space<vmem>>, vector<1x8x256xf32>
    %453 = vector.shape_cast %452 : vector<1x8x256xf32> to vector<8x256xf32>
    %454 = arith.mulf %451, %453 : vector<8x256xf32>
    %455 = arith.addf %450, %454 : vector<8x256xf32>
    %c207_i32 = arith.constant 207 : i32
    %456 = tpu.dynamic_rotate %1 by %c207_i32 dim 1 : vector<8x256xf32>, i32 -> vector<8x256xf32>
    %c46 = arith.constant 46 : index
    %c0_248 = arith.constant 0 : index
    %c0_249 = arith.constant 0 : index
    %457 = vector.load %arg3[%c46, %c0_248, %c0_249] : memref<49x8x256xf32, #tpu.memory_space<vmem>>, vector<1x8x256xf32>
    %458 = vector.shape_cast %457 : vector<1x8x256xf32> to vector<8x256xf32>
    %459 = arith.mulf %456, %458 : vector<8x256xf32>
    %460 = arith.addf %455, %459 : vector<8x256xf32>
    %c206_i32 = arith.constant 206 : i32
    %461 = tpu.dynamic_rotate %1 by %c206_i32 dim 1 : vector<8x256xf32>, i32 -> vector<8x256xf32>
    %c47 = arith.constant 47 : index
    %c0_250 = arith.constant 0 : index
    %c0_251 = arith.constant 0 : index
    %462 = vector.load %arg3[%c47, %c0_250, %c0_251] : memref<49x8x256xf32, #tpu.memory_space<vmem>>, vector<1x8x256xf32>
    %463 = vector.shape_cast %462 : vector<1x8x256xf32> to vector<8x256xf32>
    %464 = arith.mulf %461, %463 : vector<8x256xf32>
    %465 = arith.addf %460, %464 : vector<8x256xf32>
    %c205_i32 = arith.constant 205 : i32
    %466 = tpu.dynamic_rotate %1 by %c205_i32 dim 1 : vector<8x256xf32>, i32 -> vector<8x256xf32>
    %c48 = arith.constant 48 : index
    %c0_252 = arith.constant 0 : index
    %c0_253 = arith.constant 0 : index
    %467 = vector.load %arg3[%c48, %c0_252, %c0_253] : memref<49x8x256xf32, #tpu.memory_space<vmem>>, vector<1x8x256xf32>
    %468 = vector.shape_cast %467 : vector<1x8x256xf32> to vector<8x256xf32>
    %469 = arith.mulf %466, %468 : vector<8x256xf32>
    %470 = arith.addf %465, %469 : vector<8x256xf32>
    %c0_254 = arith.constant 0 : index
    %c7_255 = arith.constant 7 : index
    %471 = vector.load %arg2[%c0_254, %c7_255] : memref<8x13xf32, #tpu.memory_space<vmem>>, vector<8x1xf32>
    %472 = vector.broadcast %471 : vector<8x1xf32> to vector<8x256xf32>
    %473 = arith.addf %390, %472 : vector<8x256xf32>
    %c0_256 = arith.constant 0 : index
    %c8_257 = arith.constant 8 : index
    %474 = vector.load %arg2[%c0_256, %c8_257] : memref<8x13xf32, #tpu.memory_space<vmem>>, vector<8x1xf32>
    %475 = vector.broadcast %474 : vector<8x1xf32> to vector<8x256xf32>
    %476 = arith.addf %470, %475 : vector<8x256xf32>
    %c0_258 = arith.constant 0 : index
    %c0_259 = arith.constant 0 : index
    %c0_260 = arith.constant 0 : index
    %477 = vector.load %arg6[%c0_258, %c0_259, %c0_260] : memref<3x8x8xf32, #tpu.memory_space<vmem>>, vector<1x8x8xf32>
    %478 = vector.shape_cast %477 : vector<1x8x8xf32> to vector<8x8xf32>
    %cst_261 = arith.constant dense<0.000000e+00> : vector<8x256xf32>
    %479 = tpu.matmul %478, %192, %cst_261 {dimension_numbers = #tpu.dot_dimension_numbers<[1], [0], [0], [1], [0, 0, 1, 1], [], []>, precision = #tpu.contract_precision<fp32>} : vector<8x8xf32>, vector<8x256xf32>, vector<8x256xf32> -> vector<8x256xf32>
    %c1_262 = arith.constant 1 : index
    %c0_263 = arith.constant 0 : index
    %c0_264 = arith.constant 0 : index
    %480 = vector.load %arg6[%c1_262, %c0_263, %c0_264] : memref<3x8x8xf32, #tpu.memory_space<vmem>>, vector<1x8x8xf32>
    %481 = vector.shape_cast %480 : vector<1x8x8xf32> to vector<8x8xf32>
    %cst_265 = arith.constant dense<0.000000e+00> : vector<8x256xf32>
    %482 = tpu.matmul %481, %473, %cst_265 {dimension_numbers = #tpu.dot_dimension_numbers<[1], [0], [0], [1], [0, 0, 1, 1], [], []>, precision = #tpu.contract_precision<fp32>} : vector<8x8xf32>, vector<8x256xf32>, vector<8x256xf32> -> vector<8x256xf32>
    %483 = arith.addf %479, %482 : vector<8x256xf32>
    %c2_266 = arith.constant 2 : index
    %c0_267 = arith.constant 0 : index
    %c0_268 = arith.constant 0 : index
    %484 = vector.load %arg6[%c2_266, %c0_267, %c0_268] : memref<3x8x8xf32, #tpu.memory_space<vmem>>, vector<1x8x8xf32>
    %485 = vector.shape_cast %484 : vector<1x8x8xf32> to vector<8x8xf32>
    %cst_269 = arith.constant dense<0.000000e+00> : vector<8x256xf32>
    %486 = tpu.matmul %485, %476, %cst_269 {dimension_numbers = #tpu.dot_dimension_numbers<[1], [0], [0], [1], [0, 0, 1, 1], [], []>, precision = #tpu.contract_precision<fp32>} : vector<8x8xf32>, vector<8x256xf32>, vector<8x256xf32> -> vector<8x256xf32>
    %487 = arith.addf %483, %486 : vector<8x256xf32>
    %c0_270 = arith.constant 0 : index
    %c9_271 = arith.constant 9 : index
    %488 = vector.load %arg2[%c0_270, %c9_271] : memref<8x13xf32, #tpu.memory_space<vmem>>, vector<8x1xf32>
    %489 = vector.broadcast %488 : vector<8x1xf32> to vector<8x256xf32>
    %490 = arith.addf %487, %489 : vector<8x256xf32>
    %c0_272 = arith.constant 0 : index
    %c10_273 = arith.constant 10 : index
    %491 = vector.load %arg2[%c0_272, %c10_273] : memref<8x13xf32, #tpu.memory_space<vmem>>, vector<8x1xf32>
    %492 = vector.broadcast %491 : vector<8x1xf32> to vector<8x256xf32>
    %493 = arith.mulf %490, %492 : vector<8x256xf32>
    %c0_274 = arith.constant 0 : index
    %c11_275 = arith.constant 11 : index
    %494 = vector.load %arg2[%c0_274, %c11_275] : memref<8x13xf32, #tpu.memory_space<vmem>>, vector<8x1xf32>
    %495 = vector.broadcast %494 : vector<8x1xf32> to vector<8x256xf32>
    %496 = arith.addf %493, %495 : vector<8x256xf32>
    %cst_276 = arith.constant 0.000000e+00 : f32
    %497 = vector.broadcast %cst_276 : f32 to vector<8x256xf32>
    %498 = arith.maximumf %496, %497 : vector<8x256xf32>
    %c17_i32_277 = arith.constant 17 : i32
    %499 = tpu.dynamic_rotate %498 by %c17_i32_277 dim 1 : vector<8x256xf32>, i32 -> vector<8x256xf32>
    %c0_278 = arith.constant 0 : index
    %c0_279 = arith.constant 0 : index
    %c0_280 = arith.constant 0 : index
    %500 = vector.load %arg8[%c0_278, %c0_279, %c0_280] : memref<9x1x256xf32, #tpu.memory_space<vmem>>, vector<1x1x256xf32>
    %501 = vector.shape_cast %500 : vector<1x1x256xf32> to vector<1x256xf32>
    %502 = vector.broadcast %501 : vector<1x256xf32> to vector<8x256xf32>
    %503 = arith.mulf %499, %502 : vector<8x256xf32>
    %c0_281 = arith.constant 0 : index
    %c0_282 = arith.constant 0 : index
    %c0_283 = arith.constant 0 : index
    %504 = vector.load %arg7[%c0_281, %c0_282, %c0_283] : memref<9x8x8xf32, #tpu.memory_space<vmem>>, vector<1x8x8xf32>
    %505 = vector.shape_cast %504 : vector<1x8x8xf32> to vector<8x8xf32>
    %cst_284 = arith.constant dense<0.000000e+00> : vector<8x256xf32>
    %506 = tpu.matmul %505, %503, %cst_284 {dimension_numbers = #tpu.dot_dimension_numbers<[1], [0], [0], [1], [0, 0, 1, 1], [], []>, precision = #tpu.contract_precision<fp32>} : vector<8x8xf32>, vector<8x256xf32>, vector<8x256xf32> -> vector<8x256xf32>
    %c16_i32_285 = arith.constant 16 : i32
    %507 = tpu.dynamic_rotate %498 by %c16_i32_285 dim 1 : vector<8x256xf32>, i32 -> vector<8x256xf32>
    %c1_286 = arith.constant 1 : index
    %c0_287 = arith.constant 0 : index
    %c0_288 = arith.constant 0 : index
    %508 = vector.load %arg8[%c1_286, %c0_287, %c0_288] : memref<9x1x256xf32, #tpu.memory_space<vmem>>, vector<1x1x256xf32>
    %509 = vector.shape_cast %508 : vector<1x1x256xf32> to vector<1x256xf32>
    %510 = vector.broadcast %509 : vector<1x256xf32> to vector<8x256xf32>
    %511 = arith.mulf %507, %510 : vector<8x256xf32>
    %c1_289 = arith.constant 1 : index
    %c0_290 = arith.constant 0 : index
    %c0_291 = arith.constant 0 : index
    %512 = vector.load %arg7[%c1_289, %c0_290, %c0_291] : memref<9x8x8xf32, #tpu.memory_space<vmem>>, vector<1x8x8xf32>
    %513 = vector.shape_cast %512 : vector<1x8x8xf32> to vector<8x8xf32>
    %cst_292 = arith.constant dense<0.000000e+00> : vector<8x256xf32>
    %514 = tpu.matmul %513, %511, %cst_292 {dimension_numbers = #tpu.dot_dimension_numbers<[1], [0], [0], [1], [0, 0, 1, 1], [], []>, precision = #tpu.contract_precision<fp32>} : vector<8x8xf32>, vector<8x256xf32>, vector<8x256xf32> -> vector<8x256xf32>
    %515 = arith.addf %506, %514 : vector<8x256xf32>
    %c15_i32_293 = arith.constant 15 : i32
    %516 = tpu.dynamic_rotate %498 by %c15_i32_293 dim 1 : vector<8x256xf32>, i32 -> vector<8x256xf32>
    %c2_294 = arith.constant 2 : index
    %c0_295 = arith.constant 0 : index
    %c0_296 = arith.constant 0 : index
    %517 = vector.load %arg8[%c2_294, %c0_295, %c0_296] : memref<9x1x256xf32, #tpu.memory_space<vmem>>, vector<1x1x256xf32>
    %518 = vector.shape_cast %517 : vector<1x1x256xf32> to vector<1x256xf32>
    %519 = vector.broadcast %518 : vector<1x256xf32> to vector<8x256xf32>
    %520 = arith.mulf %516, %519 : vector<8x256xf32>
    %c2_297 = arith.constant 2 : index
    %c0_298 = arith.constant 0 : index
    %c0_299 = arith.constant 0 : index
    %521 = vector.load %arg7[%c2_297, %c0_298, %c0_299] : memref<9x8x8xf32, #tpu.memory_space<vmem>>, vector<1x8x8xf32>
    %522 = vector.shape_cast %521 : vector<1x8x8xf32> to vector<8x8xf32>
    %cst_300 = arith.constant dense<0.000000e+00> : vector<8x256xf32>
    %523 = tpu.matmul %522, %520, %cst_300 {dimension_numbers = #tpu.dot_dimension_numbers<[1], [0], [0], [1], [0, 0, 1, 1], [], []>, precision = #tpu.contract_precision<fp32>} : vector<8x8xf32>, vector<8x256xf32>, vector<8x256xf32> -> vector<8x256xf32>
    %524 = arith.addf %515, %523 : vector<8x256xf32>
    %c1_i32_301 = arith.constant 1 : i32
    %525 = tpu.dynamic_rotate %498 by %c1_i32_301 dim 1 : vector<8x256xf32>, i32 -> vector<8x256xf32>
    %c3_302 = arith.constant 3 : index
    %c0_303 = arith.constant 0 : index
    %c0_304 = arith.constant 0 : index
    %526 = vector.load %arg8[%c3_302, %c0_303, %c0_304] : memref<9x1x256xf32, #tpu.memory_space<vmem>>, vector<1x1x256xf32>
    %527 = vector.shape_cast %526 : vector<1x1x256xf32> to vector<1x256xf32>
    %528 = vector.broadcast %527 : vector<1x256xf32> to vector<8x256xf32>
    %529 = arith.mulf %525, %528 : vector<8x256xf32>
    %c3_305 = arith.constant 3 : index
    %c0_306 = arith.constant 0 : index
    %c0_307 = arith.constant 0 : index
    %530 = vector.load %arg7[%c3_305, %c0_306, %c0_307] : memref<9x8x8xf32, #tpu.memory_space<vmem>>, vector<1x8x8xf32>
    %531 = vector.shape_cast %530 : vector<1x8x8xf32> to vector<8x8xf32>
    %cst_308 = arith.constant dense<0.000000e+00> : vector<8x256xf32>
    %532 = tpu.matmul %531, %529, %cst_308 {dimension_numbers = #tpu.dot_dimension_numbers<[1], [0], [0], [1], [0, 0, 1, 1], [], []>, precision = #tpu.contract_precision<fp32>} : vector<8x8xf32>, vector<8x256xf32>, vector<8x256xf32> -> vector<8x256xf32>
    %533 = arith.addf %524, %532 : vector<8x256xf32>
    %c4_309 = arith.constant 4 : index
    %c0_310 = arith.constant 0 : index
    %c0_311 = arith.constant 0 : index
    %534 = vector.load %arg7[%c4_309, %c0_310, %c0_311] : memref<9x8x8xf32, #tpu.memory_space<vmem>>, vector<1x8x8xf32>
    %535 = vector.shape_cast %534 : vector<1x8x8xf32> to vector<8x8xf32>
    %cst_312 = arith.constant dense<0.000000e+00> : vector<8x256xf32>
    %536 = tpu.matmul %535, %498, %cst_312 {dimension_numbers = #tpu.dot_dimension_numbers<[1], [0], [0], [1], [0, 0, 1, 1], [], []>, precision = #tpu.contract_precision<fp32>} : vector<8x8xf32>, vector<8x256xf32>, vector<8x256xf32> -> vector<8x256xf32>
    %537 = arith.addf %533, %536 : vector<8x256xf32>
    %c255_i32_313 = arith.constant 255 : i32
    %538 = tpu.dynamic_rotate %498 by %c255_i32_313 dim 1 : vector<8x256xf32>, i32 -> vector<8x256xf32>
    %c5_314 = arith.constant 5 : index
    %c0_315 = arith.constant 0 : index
    %c0_316 = arith.constant 0 : index
    %539 = vector.load %arg8[%c5_314, %c0_315, %c0_316] : memref<9x1x256xf32, #tpu.memory_space<vmem>>, vector<1x1x256xf32>
    %540 = vector.shape_cast %539 : vector<1x1x256xf32> to vector<1x256xf32>
    %541 = vector.broadcast %540 : vector<1x256xf32> to vector<8x256xf32>
    %542 = arith.mulf %538, %541 : vector<8x256xf32>
    %c5_317 = arith.constant 5 : index
    %c0_318 = arith.constant 0 : index
    %c0_319 = arith.constant 0 : index
    %543 = vector.load %arg7[%c5_317, %c0_318, %c0_319] : memref<9x8x8xf32, #tpu.memory_space<vmem>>, vector<1x8x8xf32>
    %544 = vector.shape_cast %543 : vector<1x8x8xf32> to vector<8x8xf32>
    %cst_320 = arith.constant dense<0.000000e+00> : vector<8x256xf32>
    %545 = tpu.matmul %544, %542, %cst_320 {dimension_numbers = #tpu.dot_dimension_numbers<[1], [0], [0], [1], [0, 0, 1, 1], [], []>, precision = #tpu.contract_precision<fp32>} : vector<8x8xf32>, vector<8x256xf32>, vector<8x256xf32> -> vector<8x256xf32>
    %546 = arith.addf %537, %545 : vector<8x256xf32>
    %c241_i32_321 = arith.constant 241 : i32
    %547 = tpu.dynamic_rotate %498 by %c241_i32_321 dim 1 : vector<8x256xf32>, i32 -> vector<8x256xf32>
    %c6_322 = arith.constant 6 : index
    %c0_323 = arith.constant 0 : index
    %c0_324 = arith.constant 0 : index
    %548 = vector.load %arg8[%c6_322, %c0_323, %c0_324] : memref<9x1x256xf32, #tpu.memory_space<vmem>>, vector<1x1x256xf32>
    %549 = vector.shape_cast %548 : vector<1x1x256xf32> to vector<1x256xf32>
    %550 = vector.broadcast %549 : vector<1x256xf32> to vector<8x256xf32>
    %551 = arith.mulf %547, %550 : vector<8x256xf32>
    %c6_325 = arith.constant 6 : index
    %c0_326 = arith.constant 0 : index
    %c0_327 = arith.constant 0 : index
    %552 = vector.load %arg7[%c6_325, %c0_326, %c0_327] : memref<9x8x8xf32, #tpu.memory_space<vmem>>, vector<1x8x8xf32>
    %553 = vector.shape_cast %552 : vector<1x8x8xf32> to vector<8x8xf32>
    %cst_328 = arith.constant dense<0.000000e+00> : vector<8x256xf32>
    %554 = tpu.matmul %553, %551, %cst_328 {dimension_numbers = #tpu.dot_dimension_numbers<[1], [0], [0], [1], [0, 0, 1, 1], [], []>, precision = #tpu.contract_precision<fp32>} : vector<8x8xf32>, vector<8x256xf32>, vector<8x256xf32> -> vector<8x256xf32>
    %555 = arith.addf %546, %554 : vector<8x256xf32>
    %c240_i32_329 = arith.constant 240 : i32
    %556 = tpu.dynamic_rotate %498 by %c240_i32_329 dim 1 : vector<8x256xf32>, i32 -> vector<8x256xf32>
    %c7_330 = arith.constant 7 : index
    %c0_331 = arith.constant 0 : index
    %c0_332 = arith.constant 0 : index
    %557 = vector.load %arg8[%c7_330, %c0_331, %c0_332] : memref<9x1x256xf32, #tpu.memory_space<vmem>>, vector<1x1x256xf32>
    %558 = vector.shape_cast %557 : vector<1x1x256xf32> to vector<1x256xf32>
    %559 = vector.broadcast %558 : vector<1x256xf32> to vector<8x256xf32>
    %560 = arith.mulf %556, %559 : vector<8x256xf32>
    %c7_333 = arith.constant 7 : index
    %c0_334 = arith.constant 0 : index
    %c0_335 = arith.constant 0 : index
    %561 = vector.load %arg7[%c7_333, %c0_334, %c0_335] : memref<9x8x8xf32, #tpu.memory_space<vmem>>, vector<1x8x8xf32>
    %562 = vector.shape_cast %561 : vector<1x8x8xf32> to vector<8x8xf32>
    %cst_336 = arith.constant dense<0.000000e+00> : vector<8x256xf32>
    %563 = tpu.matmul %562, %560, %cst_336 {dimension_numbers = #tpu.dot_dimension_numbers<[1], [0], [0], [1], [0, 0, 1, 1], [], []>, precision = #tpu.contract_precision<fp32>} : vector<8x8xf32>, vector<8x256xf32>, vector<8x256xf32> -> vector<8x256xf32>
    %564 = arith.addf %555, %563 : vector<8x256xf32>
    %c239_i32_337 = arith.constant 239 : i32
    %565 = tpu.dynamic_rotate %498 by %c239_i32_337 dim 1 : vector<8x256xf32>, i32 -> vector<8x256xf32>
    %c8_338 = arith.constant 8 : index
    %c0_339 = arith.constant 0 : index
    %c0_340 = arith.constant 0 : index
    %566 = vector.load %arg8[%c8_338, %c0_339, %c0_340] : memref<9x1x256xf32, #tpu.memory_space<vmem>>, vector<1x1x256xf32>
    %567 = vector.shape_cast %566 : vector<1x1x256xf32> to vector<1x256xf32>
    %568 = vector.broadcast %567 : vector<1x256xf32> to vector<8x256xf32>
    %569 = arith.mulf %565, %568 : vector<8x256xf32>
    %c8_341 = arith.constant 8 : index
    %c0_342 = arith.constant 0 : index
    %c0_343 = arith.constant 0 : index
    %570 = vector.load %arg7[%c8_341, %c0_342, %c0_343] : memref<9x8x8xf32, #tpu.memory_space<vmem>>, vector<1x8x8xf32>
    %571 = vector.shape_cast %570 : vector<1x8x8xf32> to vector<8x8xf32>
    %cst_344 = arith.constant dense<0.000000e+00> : vector<8x256xf32>
    %572 = tpu.matmul %571, %569, %cst_344 {dimension_numbers = #tpu.dot_dimension_numbers<[1], [0], [0], [1], [0, 0, 1, 1], [], []>, precision = #tpu.contract_precision<fp32>} : vector<8x8xf32>, vector<8x256xf32>, vector<8x256xf32> -> vector<8x256xf32>
    %573 = arith.addf %564, %572 : vector<8x256xf32>
    %c0_345 = arith.constant 0 : index
    %c12_346 = arith.constant 12 : index
    %574 = vector.load %arg2[%c0_345, %c12_346] : memref<8x13xf32, #tpu.memory_space<vmem>>, vector<8x1xf32>
    %575 = vector.broadcast %574 : vector<8x1xf32> to vector<8x256xf32>
    %576 = arith.addf %573, %575 : vector<8x256xf32>
    %577 = arith.addf %186, %576 : vector<8x256xf32>
    %c0_347 = arith.constant 0 : index
    %c0_348 = arith.constant 0 : index
    %c0_349 = arith.constant 0 : index
    %578 = vector.load %arg10[%c0_347, %c0_348, %c0_349] : memref<1x8x256xf32, #tpu.memory_space<vmem>>, vector<1x8x256xf32>
    %579 = vector.shape_cast %578 : vector<1x8x256xf32> to vector<8x256xf32>
    %580 = vector.shape_cast %577 : vector<8x256xf32> to vector<1x8x256xf32>
    tpu.vector_store %arg10[%c0_347, %c0_348, %c0_349], %580 {strides = array<i32>} : memref<1x8x256xf32, #tpu.memory_space<vmem>>, vector<1x8x256xf32>,
    return
  }
  func.func @transform_0(%arg0: i32) -> (i32, i32, i32) {
    %c0_i32 = arith.constant 0 : i32
    %c0_i32_0 = arith.constant 0 : i32
    %c0_i32_1 = arith.constant 0 : i32
    return %arg0, %c0_i32, %c0_i32_0 : i32, i32, i32
  }
  func.func @transform_1(%arg0: i32) -> (i32, i32) {
    %c0_i32 = arith.constant 0 : i32
    %c0_i32_0 = arith.constant 0 : i32
    %c0_i32_1 = arith.constant 0 : i32
    return %c0_i32, %c0_i32_0 : i32, i32
  }
  func.func @transform_2(%arg0: i32) -> (i32, i32, i32) {
    %c0_i32 = arith.constant 0 : i32
    %c0_i32_0 = arith.constant 0 : i32
    %c0_i32_1 = arith.constant 0 : i32
    %c0_i32_2 = arith.constant 0 : i32
    return %c0_i32, %c0_i32_0, %c0_i32_1 : i32, i32, i32
  }
  func.func @transform_3(%arg0: i32) -> (i32, i32, i32) {
    %c0_i32 = arith.constant 0 : i32
    %c0_i32_0 = arith.constant 0 : i32
    %c0_i32_1 = arith.constant 0 : i32
    %c0_i32_2 = arith.constant 0 : i32
    return %c0_i32, %c0_i32_0, %c0_i32_1 : i32, i32, i32
  }
  func.func @transform_4(%arg0: i32) -> (i32, i32, i32) {
    %c0_i32 = arith.constant 0 : i32
    %c0_i32_0 = arith.constant 0 : i32
    %c0_i32_1 = arith.constant 0 : i32
    %c0_i32_2 = arith.constant 0 : i32
    return %c0_i32, %c0_i32_0, %c0_i32_1 : i32, i32, i32
  }
  func.func @transform_5(%arg0: i32) -> (i32, i32, i32) {
    %c0_i32 = arith.constant 0 : i32
    %c0_i32_0 = arith.constant 0 : i32
    %c0_i32_1 = arith.constant 0 : i32
    %c0_i32_2 = arith.constant 0 : i32
    return %c0_i32, %c0_i32_0, %c0_i32_1 : i32, i32, i32
  }
  func.func @transform_6(%arg0: i32) -> (i32, i32, i32) {
    %c0_i32 = arith.constant 0 : i32
    %c0_i32_0 = arith.constant 0 : i32
    %c0_i32_1 = arith.constant 0 : i32
    %c0_i32_2 = arith.constant 0 : i32
    return %c0_i32, %c0_i32_0, %c0_i32_1 : i32, i32, i32
  }
  func.func @transform_7(%arg0: i32) -> (i32, i32, i32) {
    %c0_i32 = arith.constant 0 : i32
    %c0_i32_0 = arith.constant 0 : i32
    %c0_i32_1 = arith.constant 0 : i32
    %c0_i32_2 = arith.constant 0 : i32
    return %c0_i32, %c0_i32_0, %c0_i32_1 : i32, i32, i32
  }
  func.func @transform_8(%arg0: i32) -> i32 {
    %c0_i32 = arith.constant 0 : i32
    %c0_i32_0 = arith.constant 0 : i32
    return %c0_i32 : i32
  }
  func.func @transform_9(%arg0: i32) -> (i32, i32, i32) {
    %c0_i32 = arith.constant 0 : i32
    %c0_i32_0 = arith.constant 0 : i32
    %c0_i32_1 = arith.constant 0 : i32
    return %arg0, %c0_i32, %c0_i32_0 : i32, i32, i32
  }
}

</mosaic_0001>

<llo_original>
// kernel: forward.1
$region0: #{forward.1}
  #allocation0 [shape = 'u32[]', space=smem, size = 0x4, offset = 0x4, fixed_abs, tag = 'smem constant byte address 0x4 - core index']
  #allocation1 [shape = 'u32[144,128]{1,0:T(1,128)}', space=vmem, size = 0x12000, scoped, tag = 'internal scratch']
  #allocation2 [shape = 'f32[1]{0:T(128)S(6)}', space=smem, size = 0x200, scoped, tag = 'scoped memory for forward.1']
  %s0 = inlined_call_operand.vmem [shape: f32[2,8,256], index: 0, kind: input, shape index: {}]
  %s1 = inlined_call_operand.hbm [shape: f32[8,13], index: 1, kind: input, shape index: {}]
  %s2 = inlined_call_operand.hbm [shape: f32[49,8,256], index: 2, kind: input, shape index: {}]
  %s3 = inlined_call_operand.hbm [shape: f32[9,8,256], index: 3, kind: input, shape index: {}]
  %s4 = inlined_call_operand.vmem [shape: f32[25,4,256], index: 4, kind: input, shape index: {}]
  %s5 = inlined_call_operand.vmem [shape: f32[3,8,8], index: 5, kind: input, shape index: {}]
  %s6 = inlined_call_operand.vmem [shape: f32[9,8,8], index: 6, kind: input, shape index: {}]
  %s7 = inlined_call_operand.vmem [shape: f32[9,1,256], index: 7, kind: input, shape index: {}]
  %s8 = inlined_call_operand.<no memory space> [shape: f32[1], index: 8, kind: input, shape index: {}]
  %s9 = inlined_call_operand.vmem [shape: f32[2,8,256], index: 9, kind: output, shape index: {}]
  %s10 = sld [smem:[#allocation0]]
  $region81: #{forward.1} parent=0
    _
  %s12 = ssub.s32 1, %s10
  %s13 = scalar_select 0, %s12, %s10
  %14 = sst [smem:[#allocation2]] %s8
  $region1: #{forward.1} parent=0
    #allocation3 [shape = 'u8[4096]{0}', space=vmem, size = 0x1000, scoped, tag = 'input window, operand 1, single buffered']
    #allocation4 [shape = 's32[2]{0}', space=sflag, size = 0x8, scoped, tag = 'scoped memory for forward.1']
    #allocation5 [shape = 'u8[401408]{0}', space=vmem, size = 0x62000, scoped, tag = 'input window, operand 2, single buffered']
    #allocation6 [shape = 's32[1]{0}', space=sflag, size = 0x4, scoped, tag = 'scoped memory for forward.1']
    #allocation7 [shape = 'u8[73728]{0}', space=vmem, size = 0x12000, scoped, tag = 'input window, operand 3, single buffered']
    %15 = vsyncpa [#allocation4], 0
    %16 = vsyncpa [#allocation6], 0
    loop: start=0, step=1, limit=4
    $region2: #{forward.1} parent=1 // loop_pre_header
      _
    $region3: #{forward.1} parent=1 // loop_header
      %s18 = sphi 0, %s22
      %p19 = scmp.ge.s32.totalorder %s18, 4
      %s28 = sphi 0, %s30
      %s31 = sphi 0, %s28
      %s32 = sphi 0, %s31
      %s48 = sphi 0, %s32
      %s52 = sphi 0, %s52
      %s54 = sphi 0, %s52
      %s55 = sphi 0, %s54
      %s69 = sphi 0, %s55
      %s73 = sphi 0, %s73
      %s75 = sphi 0, %s73
      %s76 = sphi 0, %s75
      %s90 = sphi 0, %s76
      %s94 = sphi 0, %s94
      %s96 = sphi 0, %s94
      %s97 = sphi 0, %s96
      %s111 = sphi 0, %s97
      %s115 = sphi 0, %s115
      %s117 = sphi 0, %s115
      %s118 = sphi 0, %s117
      %s132 = sphi 0, %s118
      %s136 = sphi 0, %s136
      %s138 = sphi 0, %s136
      %s139 = sphi 0, %s138
      %s153 = sphi 0, %s139
      %s157 = sphi 0, %s157
      %s159 = sphi 0, %s157
      %s160 = sphi 0, %s159
      %s174 = sphi 0, %s160
      %s178 = sphi 0, %s178
      %s180 = sphi 0, %s178
      %s181 = sphi 0, %s180
      %s195 = sphi 0, %s181
      %s199 = sphi 0, %s199
      %s201 = sphi 0, %s199
      %s202 = sphi 0, %s201
      %s216 = sphi 0, %s202
      %s222 = sphi 0, %s224
      %s225 = sphi 0, %s222
      %s226 = sphi 0, %s225
      %s242 = sphi 0, %s226
    $region4: #{forward.1} parent=1 // loop_header_branch
      %21 = sbr.rel (%p19) target = $region8
    $region5: #{forward.1} parent=1 // loop_body
      %s23 = ssub.s32 %s18, 1
      %s24 = ssub.s32 %s18, 2
      %s25 = sadd.s32 %s18, 1
      %s26 = ssub.s32 %s18, %s25
      %p27 = scmp.eq.s32.totalorder %s26, 0
      %s29 = sadd.s32 %s28, 1
      %s30 = scalar_select %p27, %s28, %s29
      %p33 = pneg %p27
      %p34 = scmp.eq.s32.totalorder %s18, 1
      %p35 = por %p33, %p34
      %p36 = scmp.ne.s32.totalorder %s28, %s31
      %p37 = scmp.eq.s32.totalorder %s18, 0
      %p38 = por %p36, %p37
      %p39 = scmp.ne.s32.totalorder %s28, %s31
      %p40 = scmp.eq.s32.totalorder %s23, 1
      %p41 = por %p39, %p40
      %p42 = scmp.ne.s32.totalorder %s31, %s32
      %p43 = scmp.eq.s32.totalorder %s23, 0
      %p44 = por %p42, %p43
      %p45 = scmp.ne.s32.totalorder %s31, %s32
      %p46 = scmp.eq.s32.totalorder %s24, 1
      %p47 = por %p45, %p46
      %p49 = scmp.ne.s32.totalorder %s32, %s48
      %p50 = scmp.eq.s32.totalorder %s24, 0
      %p51 = por %p49, %p50
      %s53 = sadd.s32 %s52, 1
      %p56 = scmp.eq.s32.totalorder %s18, 1
      %p57 = scmp.ne.s32.totalorder %s52, %s54
      %p58 = scmp.eq.s32.totalorder %s18, 0
      %p59 = por %p57, %p58
      %p60 = scmp.ne.s32.totalorder %s52, %s54
      %p61 = scmp.eq.s32.totalorder %s23, 1
      %p62 = por %p60, %p61
      %p63 = scmp.ne.s32.totalorder %s54, %s55
      %p64 = scmp.eq.s32.totalorder %s23, 0
      %p65 = por %p63, %p64
      %p66 = scmp.ne.s32.totalorder %s54, %s55
      %p67 = scmp.eq.s32.totalorder %s24, 1
      %p68 = por %p66, %p67
      %p70 = scmp.ne.s32.totalorder %s55, %s69
      %p71 = scmp.eq.s32.totalorder %s24, 0
      %p72 = por %p70, %p71
      %s74 = sadd.s32 %s73, 1
      %p77 = scmp.eq.s32.totalorder %s18, 1
      %p78 = scmp.ne.s32.totalorder %s73, %s75
      %p79 = scmp.eq.s32.totalorder %s18, 0
      %p80 = por %p78, %p79
      %p81 = scmp.ne.s32.totalorder %s73, %s75
      %p82 = scmp.eq.s32.totalorder %s23, 1
      %p83 = por %p81, %p82
      %p84 = scmp.ne.s32.totalorder %s75, %s76
      %p85 = scmp.eq.s32.totalorder %s23, 0
      %p86 = por %p84, %p85
      %p87 = scmp.ne.s32.totalorder %s75, %s76
      %p88 = scmp.eq.s32.totalorder %s24, 1
      %p89 = por %p87, %p88
      %p91 = scmp.ne.s32.totalorder %s76, %s90
      %p92 = scmp.eq.s32.totalorder %s24, 0
      %p93 = por %p91, %p92
      %s95 = sadd.s32 %s94, 1
      %p98 = scmp.eq.s32.totalorder %s18, 1
      %p99 = scmp.ne.s32.totalorder %s94, %s96
      %p100 = scmp.eq.s32.totalorder %s18, 0
      %p101 = por %p99, %p100
      %p102 = scmp.ne.s32.totalorder %s94, %s96
      %p103 = scmp.eq.s32.totalorder %s23, 1
      %p104 = por %p102, %p103
      %p105 = scmp.ne.s32.totalorder %s96, %s97
      %p106 = scmp.eq.s32.totalorder %s23, 0
      %p107 = por %p105, %p106
      %p108 = scmp.ne.s32.totalorder %s96, %s97
      %p109 = scmp.eq.s32.totalorder %s24, 1
      %p110 = por %p108, %p109
      %p112 = scmp.ne.s32.totalorder %s97, %s111
      %p113 = scmp.eq.s32.totalorder %s24, 0
      %p114 = por %p112, %p113
      %s116 = sadd.s32 %s115, 1
      %p119 = scmp.eq.s32.totalorder %s18, 1
      %p120 = scmp.ne.s32.totalorder %s115, %s117
      %p121 = scmp.eq.s32.totalorder %s18, 0
      %p122 = por %p120, %p121
      %p123 = scmp.ne.s32.totalorder %s115, %s117
      %p124 = scmp.eq.s32.totalorder %s23, 1
      %p125 = por %p123, %p124
      %p126 = scmp.ne.s32.totalorder %s117, %s118
      %p127 = scmp.eq.s32.totalorder %s23, 0
      %p128 = por %p126, %p127
      %p129 = scmp.ne.s32.totalorder %s117, %s118
      %p130 = scmp.eq.s32.totalorder %s24, 1
      %p131 = por %p129, %p130
      %p133 = scmp.ne.s32.totalorder %s118, %s132
      %p134 = scmp.eq.s32.totalorder %s24, 0
      %p135 = por %p133, %p134
      %s137 = sadd.s32 %s136, 1
      %p140 = scmp.eq.s32.totalorder %s18, 1
      %p141 = scmp.ne.s32.totalorder %s136, %s138
      %p142 = scmp.eq.s32.totalorder %s18, 0
      %p143 = por %p141, %p142
      %p144 = scmp.ne.s32.totalorder %s136, %s138
      %p145 = scmp.eq.s32.totalorder %s23, 1
      %p146 = por %p144, %p145
      %p147 = scmp.ne.s32.totalorder %s138, %s139
      %p148 = scmp.eq.s32.totalorder %s23, 0
      %p149 = por %p147, %p148
      %p150 = scmp.ne.s32.totalorder %s138, %s139
      %p151 = scmp.eq.s32.totalorder %s24, 1
      %p152 = por %p150, %p151
      %p154 = scmp.ne.s32.totalorder %s139, %s153
      %p155 = scmp.eq.s32.totalorder %s24, 0
      %p156 = por %p154, %p155
      %s158 = sadd.s32 %s157, 1
      %p161 = scmp.eq.s32.totalorder %s18, 1
      %p162 = scmp.ne.s32.totalorder %s157, %s159
      %p163 = scmp.eq.s32.totalorder %s18, 0
      %p164 = por %p162, %p163
      %p165 = scmp.ne.s32.totalorder %s157, %s159
      %p166 = scmp.eq.s32.totalorder %s23, 1
      %p167 = por %p165, %p166
      %p168 = scmp.ne.s32.totalorder %s159, %s160
      %p169 = scmp.eq.s32.totalorder %s23, 0
      %p170 = por %p168, %p169
      %p171 = scmp.ne.s32.totalorder %s159, %s160
      %p172 = scmp.eq.s32.totalorder %s24, 1
      %p173 = por %p171, %p172
      %p175 = scmp.ne.s32.totalorder %s160, %s174
      %p176 = scmp.eq.s32.totalorder %s24, 0
      %p177 = por %p175, %p176
      %s179 = sadd.s32 %s178, 1
      %p182 = scmp.eq.s32.totalorder %s18, 1
      %p183 = scmp.ne.s32.totalorder %s178, %s180
      %p184 = scmp.eq.s32.totalorder %s18, 0
      %p185 = por %p183, %p184
      %p186 = scmp.ne.s32.totalorder %s178, %s180
      %p187 = scmp.eq.s32.totalorder %s23, 1
      %p188 = por %p186, %p187
      %p189 = scmp.ne.s32.totalorder %s180, %s181
      %p190 = scmp.eq.s32.totalorder %s23, 0
      %p191 = por %p189, %p190
      %p192 = scmp.ne.s32.totalorder %s180, %s181
      %p193 = scmp.eq.s32.totalorder %s24, 1
      %p194 = por %p192, %p193
      %p196 = scmp.ne.s32.totalorder %s181, %s195
      %p197 = scmp.eq.s32.totalorder %s24, 0
      %p198 = por %p196, %p197
      %s200 = sadd.s32 %s199, 1
      %p203 = scmp.eq.s32.totalorder %s18, 1
      %p204 = scmp.ne.s32.totalorder %s199, %s201
      %p205 = scmp.eq.s32.totalorder %s18, 0
      %p206 = por %p204, %p205
      %p207 = scmp.ne.s32.totalorder %s199, %s201
      %p208 = scmp.eq.s32.totalorder %s23, 1
      %p209 = por %p207, %p208
      %p210 = scmp.ne.s32.totalorder %s201, %s202
      %p211 = scmp.eq.s32.totalorder %s23, 0
      %p212 = por %p210, %p211
      %p213 = scmp.ne.s32.totalorder %s201, %s202
      %p214 = scmp.eq.s32.totalorder %s24, 1
      %p215 = por %p213, %p214
      %p217 = scmp.ne.s32.totalorder %s202, %s216
      %p218 = scmp.eq.s32.totalorder %s24, 0
      %p219 = por %p217, %p218
      %s220 = ssub.s32 %s18, %s25
      %p221 = scmp.eq.s32.totalorder %s220, 0
      %s223 = sadd.s32 %s222, 1
      %s224 = scalar_select %p221, %s222, %s223
      %p227 = pneg %p221
      %p228 = scmp.eq.s32.totalorder %s18, 1
      %p229 = por %p227, %p228
      %p230 = scmp.ne.s32.totalorder %s222, %s225
      %p231 = scmp.eq.s32.totalorder %s18, 0
      %p232 = por %p230, %p231
      %p233 = scmp.ne.s32.totalorder %s222, %s225
      %p234 = scmp.eq.s32.totalorder %s23, 1
      %p235 = por %p233, %p234
      %p236 = scmp.ne.s32.totalorder %s225, %s226
      %p237 = scmp.eq.s32.totalorder %s23, 0
      %p238 = por %p236, %p237
      %p239 = scmp.ne.s32.totalorder %s225, %s226
      %p240 = scmp.eq.s32.totalorder %s24, 1
      %p241 = por %p239, %p240
      %p243 = scmp.ne.s32.totalorder %s226, %s242
      %p244 = scmp.eq.s32.totalorder %s24, 0
      %p245 = por %p243, %p244
      %p246 = scmp.le.s32.totalorder 1, %s18
      %p247 = scmp.lt.s32.totalorder %s18, 3
      %p248 = pnand %p246, %p247
      %p249 = pneg %p248
      // Predicated region
      $region9: #{forward.1} parent=5 // pred_check
        _
      $region10: #{forward.1} parent=5 // pred_check_branch
        %251 = sbr.rel (%p248) target = $region12
      $region11: #{forward.1} parent=5 // pred_region
        %s252 = ssub.s32 %s18, 1
        // Predicated region
        $region13: #{forward.1} parent=11 // pred_check
          %p253 = pneg %p65
        $region14: #{forward.1} parent=11 // pred_check_branch
          %255 = sbr.rel (%p253) target = $region16
        $region15: #{forward.1} parent=11 // pred_region
          %s257 = ssub.s32 128, 128
          %258 = vsyncadd [#allocation4], %s257
          %s260 = sshll.u32 [#allocation3], 4
          %s261 = int_to_ptr.vmem [resolvable:$true] %s260
          %263 = dma.hbm_to_vmem [thread:$0]  %s1, 128, %s261, [#allocation4]
        $region16: #{forward.1} parent=11 // pred_fallthru
          _
        // Predicated region
        $region17: #{forward.1} parent=11 // pred_check
          %p264 = pneg %p86
        $region18: #{forward.1} parent=11 // pred_check_branch
          %266 = sbr.rel (%p264) target = $region20
        $region19: #{forward.1} parent=11 // pred_region
          %s268 = ssub.s32 12544, 12544
          %269 = vsyncadd [#allocation6], %s268
          %s270 = sshll.u32 [#allocation5], 4
          %s271 = int_to_ptr.vmem [resolvable:$true] %s270
          %276 = dma.hbm_to_vmem [thread:$0]  %s2, 12544, %s271, [#allocation6], 256, 256, 16
        $region20: #{forward.1} parent=11 // pred_fallthru
          _
        // Predicated region
        $region21: #{forward.1} parent=11 // pred_check
          %p277 = pneg %p107
        $region22: #{forward.1} parent=11 // pred_check_branch
          %279 = sbr.rel (%p277) target = $region24
        $region23: #{forward.1} parent=11 // pred_region
          %s281 = ssub.s32 2304, 2304
          %282 = vsyncadd [#allocation6], %s281
          %s283 = sshll.u32 [#allocation7], 4
          %s284 = int_to_ptr.vmem [resolvable:$true] %s283
          %289 = dma.hbm_to_vmem [thread:$0]  %s3, 2304, %s284, [#allocation6], 256, 256, 16
        $region24: #{forward.1} parent=11 // pred_fallthru
          _
        // Predicated region
        $region25: #{forward.1} parent=11 // pred_check
          %p290 = pneg %p128
        $region26: #{forward.1} parent=11 // pred_check_branch
          %292 = sbr.rel (%p290) target = $region28
        $region27: #{forward.1} parent=11 // pred_region
          _
        $region28: #{forward.1} parent=11 // pred_fallthru
          _
        // Predicated region
        $region29: #{forward.1} parent=11 // pred_check
          %p293 = pneg %p149
        $region30: #{forward.1} parent=11 // pred_check_branch
          %295 = sbr.rel (%p293) target = $region32
        $region31: #{forward.1} parent=11 // pred_region
          _
        $region32: #{forward.1} parent=11 // pred_fallthru
          _
        // Predicated region
        $region33: #{forward.1} parent=11 // pred_check
          %p296 = pneg %p170
        $region34: #{forward.1} parent=11 // pred_check_branch
          %298 = sbr.rel (%p296) target = $region36
        $region35: #{forward.1} parent=11 // pred_region
          _
        $region36: #{forward.1} parent=11 // pred_fallthru
          _
        // Predicated region
        $region37: #{forward.1} parent=11 // pred_check
          %p299 = pneg %p191
        $region38: #{forward.1} parent=11 // pred_check_branch
          %301 = sbr.rel (%p299) target = $region40
        $region39: #{forward.1} parent=11 // pred_region
          _
        $region40: #{forward.1} parent=11 // pred_fallthru
          _
        // Predicated region
        $region41: #{forward.1} parent=11 // pred_check
          %p302 = pneg %p212
        $region42: #{forward.1} parent=11 // pred_check_branch
          %304 = sbr.rel (%p302) target = $region44
        $region43: #{forward.1} parent=11 // pred_region
          _
        $region44: #{forward.1} parent=11 // pred_fallthru
          _
      $region12: #{forward.1} parent=5 // pred_fallthru
        _
      %p305 = scmp.lt.s32.totalorder %s18, 2
      // Predicated region
      $region45: #{forward.1} parent=5 // pred_check
        %p306 = pneg %p305
      $region46: #{forward.1} parent=5 // pred_check_branch
        %308 = sbr.rel (%p306) target = $region48
      $region47: #{forward.1} parent=5 // pred_region
        // Predicated region
        $region49: #{forward.1} parent=47 // pred_check
          %p309 = pneg %p38
        $region50: #{forward.1} parent=47 // pred_check_branch
          %311 = sbr.rel (%p309) target = $region52
        $region51: #{forward.1} parent=47 // pred_region
          %p312 = scmp.lt.s32.totalorder %s18, 1
          %s313 = scalar_select %p312, %s18, 1
          %s314 = smul.addr %s313, 2
          %s315 = smul.addr %s314, 8
          %s316 = scalar_lea.vmem %s0, %s315
        $region52: #{forward.1} parent=47 // pred_fallthru
          _
      $region48: #{forward.1} parent=5 // pred_fallthru
        _
      %p317 = scmp.le.s32.totalorder 1, %s18
      %p318 = scmp.lt.s32.totalorder %s18, 3
      %p319 = pnand %p317, %p318
      %p320 = pneg %p319
      // Predicated region
      $region53: #{forward.1} parent=5 // pred_check
        _
      $region54: #{forward.1} parent=5 // pred_check_branch
        %322 = sbr.rel (%p319) target = $region56
      $region55: #{forward.1} parent=5 // pred_region
        %s323 = ssub.s32 %s18, 1
        // Predicated region
        $region57: #{forward.1} parent=55 // pred_check
          %p324 = pneg %p65
        $region58: #{forward.1} parent=55 // pred_check_branch
          %326 = sbr.rel (%p324) target = $region60
        $region59: #{forward.1} parent=55 // pred_region
          %327 = dma.done [#allocation4], 128
        $region60: #{forward.1} parent=55 // pred_fallthru
          _
        // Predicated region
        $region61: #{forward.1} parent=55 // pred_check
          %p328 = pneg %p86
        $region62: #{forward.1} parent=55 // pred_check_branch
          %330 = sbr.rel (%p328) target = $region64
        $region63: #{forward.1} parent=55 // pred_region
          %331 = dma.done [#allocation6], 12544
        $region64: #{forward.1} parent=55 // pred_fallthru
          _
        // Predicated region
        $region65: #{forward.1} parent=55 // pred_check
          %p332 = pneg %p107
        $region66: #{forward.1} parent=55 // pred_check_branch
          %334 = sbr.rel (%p332) target = $region68
        $region67: #{forward.1} parent=55 // pred_region
          %335 = dma.done [#allocation6], 2304
        $region68: #{forward.1} parent=55 // pred_fallthru
          _
        %p336 = scmp.lt.s32.totalorder %s23, 1
        %s337 = scalar_select %p336, %s23, 1
        %s338 = smul.addr %s337, 2
        %s339 = smul.addr %s338, 8
        %s340 = scalar_lea.vmem %s0, %s339
        %p341 = pneg %p44
        %p342 = pneg %p41
        %p343 = pneg %p65
        %p344 = pneg %p62
        %p345 = pneg %p86
        %p346 = pneg %p83
        %p347 = pneg %p107
        %p348 = pneg %p104
        %p349 = pneg %p128
        %p350 = pneg %p125
        %p351 = pneg %p149
        %p352 = pneg %p146
        %p353 = pneg %p170
        %p354 = pneg %p167
        %p355 = pneg %p191
        %p356 = pneg %p188
        %p357 = pneg %p212
        %p358 = pneg %p209
        %p359 = pneg %p238
        %p360 = pneg %p235
        %p361 = scmp.lt.s32.totalorder %s23, 1
        %s362 = scalar_select %p361, %s23, 1
        %s363 = smul.addr %s362, 2
        %s364 = smul.addr %s363, 8
        %s365 = scalar_lea.vmem %s9, %s364
        %p366 = scmp.lt.s32.totalorder %s23, 1
        %s367 = scalar_select %p366, %s23, 1
        %s368 = smul.addr %s367, 2
        %s369 = smul.addr %s368, 8
        %s370 = scalar_lea.vmem %s0, %s369
        %p371 = scmp.lt.s32.totalorder %s23, 1
        %s372 = scalar_select %p371, %s23, 1
        %s373 = smul.addr %s372, 2
        %s374 = smul.addr %s373, 8
        %s375 = scalar_lea.vmem %s9, %s374
        %v376 = vld [vmem:[%s370] sm:$0xff]
        %v377 = vld [vmem:[%s370 + $0x8] sm:$0xff]
        %v378 = vadd.f32 %v376, %v377
        %379 = vadd.xlane.f32.xlu0 %v378
        %v380 = vpop.xlane.xlu0 %379
        %v381 = vrcp.pop 256.0
        %v382 = vmul.f32 %v380, %v381
        %v383 = vmax.f32 %v376, %v377
        %384 = vmax.xlane.f32.xlu0 %v383
        %v385 = vpop.xlane.xlu0 %384
        %v386 = vld [vmem:[#allocation3] sm:$0xff]
        %v387 = vmul.f32 %v382, %v386
        %v388 = vmul.f32 %v385, %v386
        %390 = vrot.lane.b32.xlu0 %v388, 127
        %v391 = vpop.permute.xlu0 %390
        %v393 = vadd.f32 %v387, %v391
        %395 = vrot.lane.b32.xlu0 %v386, 126
        %v396 = vpop.permute.xlu0 %395
        %v398 = vadd.f32 %v393, %v396
        %399 = vrot.lane.b32.xlu0 %v386, 125
        %v400 = vpop.permute.xlu0 %399
        %v402 = vmul.f32 %v398, %v400
        %403 = vrot.lane.b32.xlu0 %v386, 124
        %v404 = vpop.permute.xlu0 %403
        %v406 = vadd.f32 %v402, %v404
        %v407 = vmax.f32 %v406, 0.0
        %vm408 = vcmask 1043456
        %v409 = vsel %vm408, %v376, 0.0
        %v410 = vrot.slane %v409, 4
        %v411 = vadd.f32 %v409, %v410
        %v412 = vrot.slane %v411, 2
        %v413 = vadd.f32 %v411, %v412
        %v414 = vrot.slane %v413, 1
        %v415 = vadd.f32 %v413, %v414
        %v416 = vsel %vm408, %v377, 0.0
        %v417 = vrot.slane %v416, 4
        %v418 = vadd.f32 %v416, %v417
        %v419 = vrot.slane %v418, 2
        %v420 = vadd.f32 %v418, %v419
        %v421 = vrot.slane %v420, 1
        %v422 = vadd.f32 %v420, %v421
        %v423 = vrcp.pop 4.0
        %v424 = vmul.f32 %v415, %v423
        %v425 = vmul.f32 %v422, %v423
        %v426 = vsel %vm408, %v376, -inf
        %v427 = vrot.slane %v426, 4
        %v428 = vmax.f32 %v426, %v427
        %v429 = vrot.slane %v428, 2
        %v430 = vmax.f32 %v428, %v429
        %v431 = vrot.slane %v430, 1
        %v432 = vmax.f32 %v430, %v431
        %v433 = vsel %vm408, %v377, -inf
        %v434 = vrot.slane %v433, 4
        %v435 = vmax.f32 %v433, %v434
        %v436 = vrot.slane %v435, 2
        %v437 = vmax.f32 %v435, %v436
        %v438 = vrot.slane %v437, 1
        %v439 = vmax.f32 %v437, %v438
        %v442 = vrot.slane %v376, 4
        %v443 = vrot.slane %v377, 4
        %v446 = vsel %vm408, %v442, 0.0
        %v447 = vrot.slane %v446, 4
        %v448 = vadd.f32 %v446, %v447
        %v449 = vrot.slane %v448, 2
        %v450 = vadd.f32 %v448, %v449
        %v451 = vrot.slane %v450, 1
        %v452 = vadd.f32 %v450, %v451
        %v453 = vsel %vm408, %v443, 0.0
        %v454 = vrot.slane %v453, 4
        %v455 = vadd.f32 %v453, %v454
        %v456 = vrot.slane %v455, 2
        %v457 = vadd.f32 %v455, %v456
        %v458 = vrot.slane %v457, 1
        %v459 = vadd.f32 %v457, %v458
        %v460 = vmul.f32 %v452, %v423
        %v461 = vmul.f32 %v459, %v423
        %vm462 = vcmask 1047556
        %v463 = vsel %vm462, %v376, -inf
        %v464 = vrot.slane %v463, 4
        %v465 = vmax.f32 %v463, %v464
        %v466 = vrot.slane %v465, 2
        %v467 = vmax.f32 %v465, %v466
        %v468 = vrot.slane %v467, 1
        %v469 = vmax.f32 %v467, %v468
        %v470 = vsel %vm462, %v377, -inf
        %v471 = vrot.slane %v470, 4
        %v472 = vmax.f32 %v470, %v471
        %v473 = vrot.slane %v472, 2
        %v474 = vmax.f32 %v472, %v473
        %v475 = vrot.slane %v474, 1
        %v476 = vmax.f32 %v474, %v475
        %vm477 = vcmask 1040384
        %v478 = vsel %vm477, %v424, %v432
        %v479 = vsel %vm477, %v425, %v439
        %vm480 = vcmask 1041408
        %v481 = vsel %vm480, %v478, %v460
        %v482 = vsel %vm480, %v479, %v461
        %vm483 = vcmask 1042432
        %v484 = vsel %vm483, %v481, %v469
        %v485 = vsel %vm483, %v482, %v476
        %486 = vrot.lane.b32.xlu0 %v484, 34
        %v487 = vpop.permute.xlu0 %486
        %488 = vrot.lane.b32.xlu0 %v485, 34
        %v489 = vpop.permute.xlu0 %488
        %v490 = vlaneseq
        %v491 = vand.u32 %v490, 127
        %vm492 = vcmp.lt.s32.totalorder %v491, 34
        %v493 = vsel %vm492, %v487, %v489
        %v494 = vsel %vm492, %v489, %v487
        %v495 = vld [vmem:[%s4] sm:$0xff]
        %v497 = vcombine.high %v495, %v495
        %v499 = vmul.f32 %v494, %v495
        %v500 = vmul.f32 %v493, %v497
        %501 = vrot.lane.b32.xlu0 %v484, 33
        %v502 = vpop.permute.xlu0 %501
        %503 = vrot.lane.b32.xlu0 %v485, 33
        %v504 = vpop.permute.xlu0 %503
        %vm505 = vcmp.lt.s32.totalorder %v491, 33
        %v506 = vsel %vm505, %v502, %v504
        %v507 = vsel %vm505, %v504, %v502
        %s508 = scalar_lea.vmem %s4, 8
        %v509 = vld [vmem:[%s508] sm:$0xff]
        %v511 = vcombine.high %v509, %v509
        %v513 = vmul.f32 %v507, %v509
        %v514 = vmul.f32 %v506, %v511
        %v515 = vadd.f32 %v499, %v513
        %v516 = vadd.f32 %v500, %v514
        %517 = vrot.lane.b32.xlu0 %v484, 32
        %v518 = vpop.permute.xlu0 %517
        %519 = vrot.lane.b32.xlu0 %v485, 32
        %v520 = vpop.permute.xlu0 %519
        %vm521 = vcmp.lt.s32.totalorder %v491, 32
        %v522 = vsel %vm521, %v518, %v520
        %v523 = vsel %vm521, %v520, %v518
        %s524 = scalar_lea.vmem %s4, 16
        %v525 = vld [vmem:[%s524] sm:$0xff]
        %v527 = vcombine.high %v525, %v525
        %v529 = vmul.f32 %v523, %v525
        %v530 = vmul.f32 %v522, %v527
        %v531 = vadd.f32 %v515, %v529
        %v532 = vadd.f32 %v516, %v530
        %533 = vrot.lane.b32.xlu0 %v484, 31
        %v534 = vpop.permute.xlu0 %533
        %535 = vrot.lane.b32.xlu0 %v485, 31
        %v536 = vpop.permute.xlu0 %535
        %vm537 = vcmp.lt.s32.totalorder %v491, 31
        %v538 = vsel %vm537, %v534, %v536
        %v539 = vsel %vm537, %v536, %v534
        %s540 = scalar_lea.vmem %s4, 24
        %v541 = vld [vmem:[%s540] sm:$0xff]
        %v543 = vcombine.high %v541, %v541
        %v545 = vmul.f32 %v539, %v541
        %v546 = vmul.f32 %v538, %v543
        %v547 = vadd.f32 %v531, %v545
        %v548 = vadd.f32 %v532, %v546
        %549 = vrot.lane.b32.xlu0 %v484, 30
        %v550 = vpop.permute.xlu0 %549
        %551 = vrot.lane.b32.xlu0 %v485, 30
        %v552 = vpop.permute.xlu0 %551
        %vm553 = vcmp.lt.s32.totalorder %v491, 30
        %v554 = vsel %vm553, %v550, %v552
        %v555 = vsel %vm553, %v552, %v550
        %s556 = scalar_lea.vmem %s4, 32
        %v557 = vld [vmem:[%s556] sm:$0xff]
        %v559 = vcombine.high %v557, %v557
        %v561 = vmul.f32 %v555, %v557
        %v562 = vmul.f32 %v554, %v559
        %v563 = vadd.f32 %v547, %v561
        %v564 = vadd.f32 %v548, %v562
        %565 = vrot.lane.b32.xlu0 %v484, 18
        %v566 = vpop.permute.xlu0 %565
        %567 = vrot.lane.b32.xlu0 %v485, 18
        %v568 = vpop.permute.xlu0 %567
        %vm569 = vcmp.lt.s32.totalorder %v491, 18
        %v570 = vsel %vm569, %v566, %v568
        %v571 = vsel %vm569, %v568, %v566
        %s572 = scalar_lea.vmem %s4, 40
        %v573 = vld [vmem:[%s572] sm:$0xff]
        %v575 = vcombine.high %v573, %v573
        %v577 = vmul.f32 %v571, %v573
        %v578 = vmul.f32 %v570, %v575
        %v579 = vadd.f32 %v563, %v577
        %v580 = vadd.f32 %v564, %v578
        %581 = vrot.lane.b32.xlu0 %v484, 17
        %v582 = vpop.permute.xlu0 %581
        %583 = vrot.lane.b32.xlu0 %v485, 17
        %v584 = vpop.permute.xlu0 %583
        %vm585 = vcmp.lt.s32.totalorder %v491, 17
        %v586 = vsel %vm585, %v582, %v584
        %v587 = vsel %vm585, %v584, %v582
        %s588 = scalar_lea.vmem %s4, 48
        %v589 = vld [vmem:[%s588] sm:$0xff]
        %v591 = vcombine.high %v589, %v589
        %v593 = vmul.f32 %v587, %v589
        %v594 = vmul.f32 %v586, %v591
        %v595 = vadd.f32 %v579, %v593
        %v596 = vadd.f32 %v580, %v594
        %597 = vrot.lane.b32.xlu0 %v484, 16
        %v598 = vpop.permute.xlu0 %597
        %599 = vrot.lane.b32.xlu0 %v485, 16
        %v600 = vpop.permute.xlu0 %599
        %vm601 = vcmp.lt.s32.totalorder %v491, 16
        %v602 = vsel %vm601, %v598, %v600
        %v603 = vsel %vm601, %v600, %v598
        %s604 = scalar_lea.vmem %s4, 56
        %v605 = vld [vmem:[%s604] sm:$0xff]
        %v607 = vcombine.high %v605, %v605
        %v609 = vmul.f32 %v603, %v605
        %v610 = vmul.f32 %v602, %v607
        %v611 = vadd.f32 %v595, %v609
        %v612 = vadd.f32 %v596, %v610
        %613 = vrot.lane.b32.xlu0 %v484, 15
        %v614 = vpop.permute.xlu0 %613
        %615 = vrot.lane.b32.xlu0 %v485, 15
        %v616 = vpop.permute.xlu0 %615
        %vm617 = vcmp.lt.s32.totalorder %v491, 15
        %v618 = vsel %vm617, %v614, %v616
        %v619 = vsel %vm617, %v616, %v614
        %s620 = scalar_lea.vmem %s4, 64
        %v621 = vld [vmem:[%s620] sm:$0xff]
        %v623 = vcombine.high %v621, %v621
        %v625 = vmul.f32 %v619, %v621
        %v626 = vmul.f32 %v618, %v623
        %v627 = vadd.f32 %v611, %v625
        %v628 = vadd.f32 %v612, %v626
        %629 = vrot.lane.b32.xlu0 %v484, 14
        %v630 = vpop.permute.xlu0 %629
        %631 = vrot.lane.b32.xlu0 %v485, 14
        %v632 = vpop.permute.xlu0 %631
        %vm633 = vcmp.lt.s32.totalorder %v491, 14
        %v634 = vsel %vm633, %v630, %v632
        %v635 = vsel %vm633, %v632, %v630
        %s636 = scalar_lea.vmem %s4, 72
        %v637 = vld [vmem:[%s636] sm:$0xff]
        %v639 = vcombine.high %v637, %v637
        %v641 = vmul.f32 %v635, %v637
        %v642 = vmul.f32 %v634, %v639
        %v643 = vadd.f32 %v627, %v641
        %v644 = vadd.f32 %v628, %v642
        %645 = vrot.lane.b32.xlu0 %v484, 2
        %v646 = vpop.permute.xlu0 %645
        %647 = vrot.lane.b32.xlu0 %v485, 2
        %v648 = vpop.permute.xlu0 %647
        %vm649 = vcmp.lt.s32.totalorder %v491, 2
        %v650 = vsel %vm649, %v646, %v648
        %v651 = vsel %vm649, %v648, %v646
        %s652 = scalar_lea.vmem %s4, 80
        %v653 = vld [vmem:[%s652] sm:$0xff]
        %v655 = vcombine.high %v653, %v653
        %v657 = vmul.f32 %v651, %v653
        %v658 = vmul.f32 %v650, %v655
        %v659 = vadd.f32 %v643, %v657
        %v660 = vadd.f32 %v644, %v658
        %661 = vrot.lane.b32.xlu0 %v484, 1
        %v662 = vpop.permute.xlu0 %661
        %663 = vrot.lane.b32.xlu0 %v485, 1
        %v664 = vpop.permute.xlu0 %663
        %vm665 = vcmp.lt.s32.totalorder %v491, 1
        %v666 = vsel %vm665, %v662, %v664
        %v667 = vsel %vm665, %v664, %v662
        %s668 = scalar_lea.vmem %s4, 88
        %v669 = vld [vmem:[%s668] sm:$0xff]
        %v671 = vcombine.high %v669, %v669
        %v673 = vmul.f32 %v667, %v669
        %v674 = vmul.f32 %v666, %v671
        %v675 = vadd.f32 %v659, %v673
        %v676 = vadd.f32 %v660, %v674
        %s677 = scalar_lea.vmem %s4, 96
        %v678 = vld [vmem:[%s677] sm:$0xff]
        %v680 = vcombine.high %v678, %v678
        %v682 = vmul.f32 %v484, %v678
        %v683 = vmul.f32 %v485, %v680
        %v684 = vadd.f32 %v675, %v682
        %v685 = vadd.f32 %v676, %v683
        %686 = vrot.lane.b32.xlu0 %v484, 127
        %v687 = vpop.permute.xlu0 %686
        %688 = vrot.lane.b32.xlu0 %v485, 127
        %v689 = vpop.permute.xlu0 %688
        %vm690 = vcmp.lt.s32.totalorder %v491, 127
        %v691 = vsel %vm690, %v687, %v689
        %v692 = vsel %vm690, %v689, %v687
        %s693 = scalar_lea.vmem %s4, 104
        %v694 = vld [vmem:[%s693] sm:$0xff]
        %v696 = vcombine.high %v694, %v694
        %v698 = vmul.f32 %v691, %v694
        %v699 = vmul.f32 %v692, %v696
        %v700 = vadd.f32 %v684, %v698
        %v701 = vadd.f32 %v685, %v699
        %702 = vrot.lane.b32.xlu0 %v484, 126
        %v703 = vpop.permute.xlu0 %702
        %704 = vrot.lane.b32.xlu0 %v485, 126
        %v705 = vpop.permute.xlu0 %704
        %vm706 = vcmp.lt.s32.totalorder %v491, 126
        %v707 = vsel %vm706, %v703, %v705
        %v708 = vsel %vm706, %v705, %v703
        %s709 = scalar_lea.vmem %s4, 112
        %v710 = vld [vmem:[%s709] sm:$0xff]
        %v712 = vcombine.high %v710, %v710
        %v714 = vmul.f32 %v707, %v710
        %v715 = vmul.f32 %v708, %v712
        %v716 = vadd.f32 %v700, %v714
        %v717 = vadd.f32 %v701, %v715
        %718 = vrot.lane.b32.xlu0 %v484, 114
        %v719 = vpop.permute.xlu0 %718
        %720 = vrot.lane.b32.xlu0 %v485, 114
        %v721 = vpop.permute.xlu0 %720
        %vm722 = vcmp.lt.s32.totalorder %v491, 114
        %v723 = vsel %vm722, %v719, %v721
        %v724 = vsel %vm722, %v721, %v719
        %s725 = scalar_lea.vmem %s4, 120
        %v726 = vld [vmem:[%s725] sm:$0xff]
        %v728 = vcombine.high %v726, %v726
        %v730 = vmul.f32 %v723, %v726
        %v731 = vmul.f32 %v724, %v728
        %v732 = vadd.f32 %v716, %v730
        %v733 = vadd.f32 %v717, %v731
        %734 = vrot.lane.b32.xlu0 %v484, 113
        %v735 = vpop.permute.xlu0 %734
        %736 = vrot.lane.b32.xlu0 %v485, 113
        %v737 = vpop.permute.xlu0 %736
        %vm738 = vcmp.lt.s32.totalorder %v491, 113
        %v739 = vsel %vm738, %v735, %v737
        %v740 = vsel %vm738, %v737, %v735
        %s741 = scalar_lea.vmem %s4, 128
        %v742 = vld [vmem:[%s741] sm:$0xff]
        %v744 = vcombine.high %v742, %v742
        %v746 = vmul.f32 %v739, %v742
        %v747 = vmul.f32 %v740, %v744
        %v748 = vadd.f32 %v732, %v746
        %v749 = vadd.f32 %v733, %v747
        %750 = vrot.lane.b32.xlu0 %v484, 112
        %v751 = vpop.permute.xlu0 %750
        %752 = vrot.lane.b32.xlu0 %v485, 112
        %v753 = vpop.permute.xlu0 %752
        %vm754 = vcmp.lt.s32.totalorder %v491, 112
        %v755 = vsel %vm754, %v751, %v753
        %v756 = vsel %vm754, %v753, %v751
        %s757 = scalar_lea.vmem %s4, 136
        %v758 = vld [vmem:[%s757] sm:$0xff]
        %v760 = vcombine.high %v758, %v758
        %v762 = vmul.f32 %v755, %v758
        %v763 = vmul.f32 %v756, %v760
        %v764 = vadd.f32 %v748, %v762
        %v765 = vadd.f32 %v749, %v763
        %766 = vrot.lane.b32.xlu0 %v484, 111
        %v767 = vpop.permute.xlu0 %766
        %768 = vrot.lane.b32.xlu0 %v485, 111
        %v769 = vpop.permute.xlu0 %768
        %vm770 = vcmp.lt.s32.totalorder %v491, 111
        %v771 = vsel %vm770, %v767, %v769
        %v772 = vsel %vm770, %v769, %v767
        %s773 = scalar_lea.vmem %s4, 144
        %v774 = vld [vmem:[%s773] sm:$0xff]
        %v776 = vcombine.high %v774, %v774
        %v778 = vmul.f32 %v771, %v774
        %v779 = vmul.f32 %v772, %v776
        %v780 = vadd.f32 %v764, %v778
        %v781 = vadd.f32 %v765, %v779
        %782 = vrot.lane.b32.xlu0 %v484, 110
        %v783 = vpop.permute.xlu0 %782
        %784 = vrot.lane.b32.xlu0 %v485, 110
        %v785 = vpop.permute.xlu0 %784
        %vm786 = vcmp.lt.s32.totalorder %v491, 110
        %v787 = vsel %vm786, %v783, %v785
        %v788 = vsel %vm786, %v785, %v783
        %s789 = scalar_lea.vmem %s4, 152
        %v790 = vld [vmem:[%s789] sm:$0xff]
        %v792 = vcombine.high %v790, %v790
        %v794 = vmul.f32 %v787, %v790
        %v795 = vmul.f32 %v788, %v792
        %v796 = vadd.f32 %v780, %v794
        %v797 = vadd.f32 %v781, %v795
        %798 = vrot.lane.b32.xlu0 %v484, 98
        %v799 = vpop.permute.xlu0 %798
        %800 = vrot.lane.b32.xlu0 %v485, 98
        %v801 = vpop.permute.xlu0 %800
        %vm802 = vcmp.lt.s32.totalorder %v491, 98
        %v803 = vsel %vm802, %v799, %v801
        %v804 = vsel %vm802, %v801, %v799
        %s805 = scalar_lea.vmem %s4, 160
        %v806 = vld [vmem:[%s805] sm:$0xff]
        %v808 = vcombine.high %v806, %v806
        %v810 = vmul.f32 %v803, %v806
        %v811 = vmul.f32 %v804, %v808
        %v812 = vadd.f32 %v796, %v810
        %v813 = vadd.f32 %v797, %v811
        %814 = vrot.lane.b32.xlu0 %v484, 97
        %v815 = vpop.permute.xlu0 %814
        %816 = vrot.lane.b32.xlu0 %v485, 97
        %v817 = vpop.permute.xlu0 %816
        %vm818 = vcmp.lt.s32.totalorder %v491, 97
        %v819 = vsel %vm818, %v815, %v817
        %v820 = vsel %vm818, %v817, %v815
        %s821 = scalar_lea.vmem %s4, 168
        %v822 = vld [vmem:[%s821] sm:$0xff]
        %v824 = vcombine.high %v822, %v822
        %v826 = vmul.f32 %v819, %v822
        %v827 = vmul.f32 %v820, %v824
        %v828 = vadd.f32 %v812, %v826
        %v829 = vadd.f32 %v813, %v827
        %830 = vrot.lane.b32.xlu0 %v484, 96
        %v831 = vpop.permute.xlu0 %830
        %832 = vrot.lane.b32.xlu0 %v485, 96
        %v833 = vpop.permute.xlu0 %832
        %vm834 = vcmp.lt.s32.totalorder %v491, 96
        %v835 = vsel %vm834, %v831, %v833
        %v836 = vsel %vm834, %v833, %v831
        %s837 = scalar_lea.vmem %s4, 176
        %v838 = vld [vmem:[%s837] sm:$0xff]
        %v840 = vcombine.high %v838, %v838
        %v842 = vmul.f32 %v835, %v838
        %v843 = vmul.f32 %v836, %v840
        %v844 = vadd.f32 %v828, %v842
        %v845 = vadd.f32 %v829, %v843
        %846 = vrot.lane.b32.xlu0 %v484, 95
        %v847 = vpop.permute.xlu0 %846
        %848 = vrot.lane.b32.xlu0 %v485, 95
        %v849 = vpop.permute.xlu0 %848
        %vm850 = vcmp.lt.s32.totalorder %v491, 95
        %v851 = vsel %vm850, %v847, %v849
        %v852 = vsel %vm850, %v849, %v847
        %s853 = scalar_lea.vmem %s4, 184
        %v854 = vld [vmem:[%s853] sm:$0xff]
        %v856 = vcombine.high %v854, %v854
        %v858 = vmul.f32 %v851, %v854
        %v859 = vmul.f32 %v852, %v856
        %v860 = vadd.f32 %v844, %v858
        %v861 = vadd.f32 %v845, %v859
        %862 = vrot.lane.b32.xlu0 %v484, 94
        %v863 = vpop.permute.xlu0 %862
        %864 = vrot.lane.b32.xlu0 %v485, 94
        %v865 = vpop.permute.xlu0 %864
        %vm866 = vcmp.lt.s32.totalorder %v491, 94
        %v867 = vsel %vm866, %v863, %v865
        %v868 = vsel %vm866, %v865, %v863
        %s869 = scalar_lea.vmem %s4, 192
        %v870 = vld [vmem:[%s869] sm:$0xff]
        %v872 = vcombine.high %v870, %v870
        %v874 = vmul.f32 %v867, %v870
        %v875 = vmul.f32 %v868, %v872
        %v876 = vadd.f32 %v860, %v874
        %v877 = vadd.f32 %v861, %v875
        %s878 = sld [smem:[#allocation2]]
        %v881 = vrot.slane %v876, 1
        %v882 = vrot.slane %v877, 1
        %v885 = vadd.f32 %v876, %v881
        %v886 = vadd.f32 %v877, %v882
        %v887 = vstv %s878
        %v888 = vadd.f32 %v885, %v887
        %v889 = vadd.f32 %v886, %v887
        %v890 = vmax.f32 %v888, 0.0
        %v891 = vmax.f32 %v889, 0.0
        %v892 = vlaneseq
        %v893 = vshrl.u32 %v892, 7
        %v894 = vsub.s32 0, %v893
        %v895 = vrot.slane %v890, %v894
        %v896 = vlaneseq
        %v897 = vshrl.u32 %v896, 7
        %v898 = vsub.s32 0, %v897
        %v899 = vrot.slane %v891, %v898
        %v900 = vlaneseq
        %v901 = vshrl.u32 %v900, 7
        %v902 = vsub.s32 2, %v901
        %v903 = vrot.slane %v890, %v902
        %v904 = vlaneseq
        %v905 = vshrl.u32 %v904, 7
        %v906 = vsub.s32 2, %v905
        %v907 = vrot.slane %v891, %v906
        %v908 = vsel %vm408, %v895, %v903
        %v909 = vsel %vm408, %v899, %v907
        %911 = vset.pattern.permute.xlu0 0
        %912 = vperm.xlu0 %911, %v407
        %v913 = vpop.permute.xlu0 %912
        %v915 = vmul.f32 %v913, %v908
        %v916 = vmul.f32 %v913, %v909
        %v917 = vxor.u32 %v915, 2147483648
        %v918 = vxor.u32 %v916, 2147483648
        %v919 = vmul.f32 %v917, 1.442695
        %v920 = vpow.pop %v919
        %v921 = vmul.f32 %v918, 1.442695
        %v922 = vpow.pop %v921
        %v923 = vadd.f32 %v920, 1.0
        %v924 = vadd.f32 %v922, 1.0
        %v925 = vrcp.pop %v923
        %v926 = vmul.f32 1.0, %v925
        %v927 = vrcp.pop %v924
        %v928 = vmul.f32 1.0, %v927
        %v929 = vmul.f32 %v926, %v376
        %v930 = vmul.f32 %v928, %v377
        %v931 = vld [vmem:[#allocation3] sm:$0xff]
        %933 = vset.pattern.permute.xlu0 5
        %934 = vperm.xlu0 %933, %v931
        %v935 = vpop.permute.xlu0 %934
        %v937 = vmul.f32 %v376, %v935
        %v938 = vmul.f32 %v377, %v935
        %939 = vset.pattern.permute.xlu0 6
        %940 = vperm.xlu0 %939, %v931
        %v941 = vpop.permute.xlu0 %940
        %v943 = vadd.f32 %v937, %v941
        %v944 = vadd.f32 %v938, %v941
        %945 = vrot.lane.b32.xlu0 %v376, 51
        %v946 = vpop.permute.xlu0 %945
        %947 = vrot.lane.b32.xlu0 %v377, 51
        %v948 = vpop.permute.xlu0 %947
        %vm949 = vcmp.lt.s32.totalorder %v491, 51
        %v950 = vsel %vm949, %v946, %v948
        %v951 = vsel %vm949, %v948, %v946
        %v952 = vld [vmem:[#allocation5] sm:$0xff]
        %v953 = vld [vmem:[#allocation5 + $0x8] sm:$0xff]
        %v954 = vmul.f32 %v951, %v952
        %v955 = vmul.f32 %v950, %v953
        %956 = vrot.lane.b32.xlu0 %v376, 50
        %v957 = vpop.permute.xlu0 %956
        %958 = vrot.lane.b32.xlu0 %v377, 50
        %v959 = vpop.permute.xlu0 %958
        %vm960 = vcmp.lt.s32.totalorder %v491, 50
        %v961 = vsel %vm960, %v957, %v959
        %v962 = vsel %vm960, %v959, %v957
        %s963 = scalar_lea.vmem [#allocation5], 16
        %v964 = vld [vmem:[%s963] sm:$0xff]
        %v965 = vld [vmem:[%s963 + $0x8] sm:$0xff]
        %v966 = vmul.f32 %v962, %v964
        %v967 = vmul.f32 %v961, %v965
        %v968 = vadd.f32 %v954, %v966
        %v969 = vadd.f32 %v955, %v967
        %970 = vrot.lane.b32.xlu0 %v376, 49
        %v971 = vpop.permute.xlu0 %970
        %972 = vrot.lane.b32.xlu0 %v377, 49
        %v973 = vpop.permute.xlu0 %972
        %vm974 = vcmp.lt.s32.totalorder %v491, 49
        %v975 = vsel %vm974, %v971, %v973
        %v976 = vsel %vm974, %v973, %v971
        %s977 = scalar_lea.vmem [#allocation5], 32
        %v978 = vld [vmem:[%s977] sm:$0xff]
        %v979 = vld [vmem:[%s977 + $0x8] sm:$0xff]
        %v980 = vmul.f32 %v976, %v978
        %v981 = vmul.f32 %v975, %v979
        %v982 = vadd.f32 %v968, %v980
        %v983 = vadd.f32 %v969, %v981
        %984 = vrot.lane.b32.xlu0 %v376, 48
        %v985 = vpop.permute.xlu0 %984
        %986 = vrot.lane.b32.xlu0 %v377, 48
        %v987 = vpop.permute.xlu0 %986
        %vm988 = vcmp.lt.s32.totalorder %v491, 48
        %v989 = vsel %vm988, %v985, %v987
        %v990 = vsel %vm988, %v987, %v985
        %s991 = scalar_lea.vmem [#allocation5], 48
        %v992 = vld [vmem:[%s991] sm:$0xff]
        %v993 = vld [vmem:[%s991 + $0x8] sm:$0xff]
        %v994 = vmul.f32 %v990, %v992
        %v995 = vmul.f32 %v989, %v993
        %v996 = vadd.f32 %v982, %v994
        %v997 = vadd.f32 %v983, %v995
        %998 = vrot.lane.b32.xlu0 %v376, 47
        %v999 = vpop.permute.xlu0 %998
        %1000 = vrot.lane.b32.xlu0 %v377, 47
        %v1001 = vpop.permute.xlu0 %1000
        %vm1002 = vcmp.lt.s32.totalorder %v491, 47
        %v1003 = vsel %vm1002, %v999, %v1001
        %v1004 = vsel %vm1002, %v1001, %v999
        %s1005 = scalar_lea.vmem [#allocation5], 64
        %v1006 = vld [vmem:[%s1005] sm:$0xff]
        %v1007 = vld [vmem:[%s1005 + $0x8] sm:$0xff]
        %v1008 = vmul.f32 %v1004, %v1006
        %v1009 = vmul.f32 %v1003, %v1007
        %v1010 = vadd.f32 %v996, %v1008
        %v1011 = vadd.f32 %v997, %v1009
        %1012 = vrot.lane.b32.xlu0 %v376, 46
        %v1013 = vpop.permute.xlu0 %1012
        %1014 = vrot.lane.b32.xlu0 %v377, 46
        %v1015 = vpop.permute.xlu0 %1014
        %vm1016 = vcmp.lt.s32.totalorder %v491, 46
        %v1017 = vsel %vm1016, %v1013, %v1015
        %v1018 = vsel %vm1016, %v1015, %v1013
        %s1019 = scalar_lea.vmem [#allocation5], 80
        %v1020 = vld [vmem:[%s1019] sm:$0xff]
        %v1021 = vld [vmem:[%s1019 + $0x8] sm:$0xff]
        %v1022 = vmul.f32 %v1018, %v1020
        %v1023 = vmul.f32 %v1017, %v1021
        %v1024 = vadd.f32 %v1010, %v1022
        %v1025 = vadd.f32 %v1011, %v1023
        %1026 = vrot.lane.b32.xlu0 %v376, 45
        %v1027 = vpop.permute.xlu0 %1026
        %1028 = vrot.lane.b32.xlu0 %v377, 45
        %v1029 = vpop.permute.xlu0 %1028
        %vm1030 = vcmp.lt.s32.totalorder %v491, 45
        %v1031 = vsel %vm1030, %v1027, %v1029
        %v1032 = vsel %vm1030, %v1029, %v1027
        %s1033 = scalar_lea.vmem [#allocation5], 96
        %v1034 = vld [vmem:[%s1033] sm:$0xff]
        %v1035 = vld [vmem:[%s1033 + $0x8] sm:$0xff]
        %v1036 = vmul.f32 %v1032, %v1034
        %v1037 = vmul.f32 %v1031, %v1035
        %v1038 = vadd.f32 %v1024, %v1036
        %v1039 = vadd.f32 %v1025, %v1037
        %1040 = vrot.lane.b32.xlu0 %v376, 35
        %v1041 = vpop.permute.xlu0 %1040
        %1042 = vrot.lane.b32.xlu0 %v377, 35
        %v1043 = vpop.permute.xlu0 %1042
        %vm1044 = vcmp.lt.s32.totalorder %v491, 35
        %v1045 = vsel %vm1044, %v1041, %v1043
        %v1046 = vsel %vm1044, %v1043, %v1041
        %s1047 = scalar_lea.vmem [#allocation5], 112
        %v1048 = vld [vmem:[%s1047] sm:$0xff]
        %v1049 = vld [vmem:[%s1047 + $0x8] sm:$0xff]
        %v1050 = vmul.f32 %v1046, %v1048
        %v1051 = vmul.f32 %v1045, %v1049
        %v1052 = vadd.f32 %v1038, %v1050
        %v1053 = vadd.f32 %v1039, %v1051
        %1054 = vrot.lane.b32.xlu0 %v376, 34
        %v1055 = vpop.permute.xlu0 %1054
        %1056 = vrot.lane.b32.xlu0 %v377, 34
        %v1057 = vpop.permute.xlu0 %1056
        %v1058 = vsel %vm492, %v1055, %v1057
        %v1059 = vsel %vm492, %v1057, %v1055
        %s1060 = scalar_lea.vmem [#allocation5], 128
        %v1061 = vld [vmem:[%s1060] sm:$0xff]
        %v1062 = vld [vmem:[%s1060 + $0x8] sm:$0xff]
        %v1063 = vmul.f32 %v1059, %v1061
        %v1064 = vmul.f32 %v1058, %v1062
        %v1065 = vadd.f32 %v1052, %v1063
        %v1066 = vadd.f32 %v1053, %v1064
        %1067 = vrot.lane.b32.xlu0 %v376, 33
        %v1068 = vpop.permute.xlu0 %1067
        %1069 = vrot.lane.b32.xlu0 %v377, 33
        %v1070 = vpop.permute.xlu0 %1069
        %v1071 = vsel %vm505, %v1068, %v1070
        %v1072 = vsel %vm505, %v1070, %v1068
        %s1073 = scalar_lea.vmem [#allocation5], 144
        %v1074 = vld [vmem:[%s1073] sm:$0xff]
        %v1075 = vld [vmem:[%s1073 + $0x8] sm:$0xff]
        %v1076 = vmul.f32 %v1072, %v1074
        %v1077 = vmul.f32 %v1071, %v1075
        %v1078 = vadd.f32 %v1065, %v1076
        %v1079 = vadd.f32 %v1066, %v1077
        %1080 = vrot.lane.b32.xlu0 %v376, 32
        %v1081 = vpop.permute.xlu0 %1080
        %1082 = vrot.lane.b32.xlu0 %v377, 32
        %v1083 = vpop.permute.xlu0 %1082
        %v1084 = vsel %vm521, %v1081, %v1083
        %v1085 = vsel %vm521, %v1083, %v1081
        %s1086 = scalar_lea.vmem [#allocation5], 160
        %v1087 = vld [vmem:[%s1086] sm:$0xff]
        %v1088 = vld [vmem:[%s1086 + $0x8] sm:$0xff]
        %v1089 = vmul.f32 %v1085, %v1087
        %v1090 = vmul.f32 %v1084, %v1088
        %v1091 = vadd.f32 %v1078, %v1089
        %v1092 = vadd.f32 %v1079, %v1090
        %1093 = vrot.lane.b32.xlu0 %v376, 31
        %v1094 = vpop.permute.xlu0 %1093
        %1095 = vrot.lane.b32.xlu0 %v377, 31
        %v1096 = vpop.permute.xlu0 %1095
        %v1097 = vsel %vm537, %v1094, %v1096
        %v1098 = vsel %vm537, %v1096, %v1094
        %s1099 = scalar_lea.vmem [#allocation5], 176
        %v1100 = vld [vmem:[%s1099] sm:$0xff]
        %v1101 = vld [vmem:[%s1099 + $0x8] sm:$0xff]
        %v1102 = vmul.f32 %v1098, %v1100
        %v1103 = vmul.f32 %v1097, %v1101
        %v1104 = vadd.f32 %v1091, %v1102
        %v1105 = vadd.f32 %v1092, %v1103
        %1106 = vrot.lane.b32.xlu0 %v376, 30
        %v1107 = vpop.permute.xlu0 %1106
        %1108 = vrot.lane.b32.xlu0 %v377, 30
        %v1109 = vpop.permute.xlu0 %1108
        %v1110 = vsel %vm553, %v1107, %v1109
        %v1111 = vsel %vm553, %v1109, %v1107
        %s1112 = scalar_lea.vmem [#allocation5], 192
        %v1113 = vld [vmem:[%s1112] sm:$0xff]
        %v1114 = vld [vmem:[%s1112 + $0x8] sm:$0xff]
        %v1115 = vmul.f32 %v1111, %v1113
        %v1116 = vmul.f32 %v1110, %v1114
        %v1117 = vadd.f32 %v1104, %v1115
        %v1118 = vadd.f32 %v1105, %v1116
        %1119 = vrot.lane.b32.xlu0 %v376, 29
        %v1120 = vpop.permute.xlu0 %1119
        %1121 = vrot.lane.b32.xlu0 %v377, 29
        %v1122 = vpop.permute.xlu0 %1121
        %vm1123 = vcmp.lt.s32.totalorder %v491, 29
        %v1124 = vsel %vm1123, %v1120, %v1122
        %v1125 = vsel %vm1123, %v1122, %v1120
        %s1126 = scalar_lea.vmem [#allocation5], 208
        %v1127 = vld [vmem:[%s1126] sm:$0xff]
        %v1128 = vld [vmem:[%s1126 + $0x8] sm:$0xff]
        %v1129 = vmul.f32 %v1125, %v1127
        %v1130 = vmul.f32 %v1124, %v1128
        %v1131 = vadd.f32 %v1117, %v1129
        %v1132 = vadd.f32 %v1118, %v1130
        %1133 = vrot.lane.b32.xlu0 %v376, 19
        %v1134 = vpop.permute.xlu0 %1133
        %1135 = vrot.lane.b32.xlu0 %v377, 19
        %v1136 = vpop.permute.xlu0 %1135
        %vm1137 = vcmp.lt.s32.totalorder %v491, 19
        %v1138 = vsel %vm1137, %v1134, %v1136
        %v1139 = vsel %vm1137, %v1136, %v1134
        %s1140 = scalar_lea.vmem [#allocation5], 224
        %v1141 = vld [vmem:[%s1140] sm:$0xff]
        %v1142 = vld [vmem:[%s1140 + $0x8] sm:$0xff]
        %v1143 = vmul.f32 %v1139, %v1141
        %v1144 = vmul.f32 %v1138, %v1142
        %v1145 = vadd.f32 %v1131, %v1143
        %v1146 = vadd.f32 %v1132, %v1144
        %1147 = vrot.lane.b32.xlu0 %v376, 18
        %v1148 = vpop.permute.xlu0 %1147
        %1149 = vrot.lane.b32.xlu0 %v377, 18
        %v1150 = vpop.permute.xlu0 %1149
        %v1151 = vsel %vm569, %v1148, %v1150
        %v1152 = vsel %vm569, %v1150, %v1148
        %s1153 = scalar_lea.vmem [#allocation5], 240
        %v1154 = vld [vmem:[%s1153] sm:$0xff]
        %v1155 = vld [vmem:[%s1153 + $0x8] sm:$0xff]
        %v1156 = vmul.f32 %v1152, %v1154
        %v1157 = vmul.f32 %v1151, %v1155
        %v1158 = vadd.f32 %v1145, %v1156
        %v1159 = vadd.f32 %v1146, %v1157
        %1160 = vrot.lane.b32.xlu0 %v376, 17
        %v1161 = vpop.permute.xlu0 %1160
        %1162 = vrot.lane.b32.xlu0 %v377, 17
        %v1163 = vpop.permute.xlu0 %1162
        %v1164 = vsel %vm585, %v1161, %v1163
        %v1165 = vsel %vm585, %v1163, %v1161
        %s1166 = scalar_lea.vmem [#allocation5], 256
        %v1167 = vld [vmem:[%s1166] sm:$0xff]
        %v1168 = vld [vmem:[%s1166 + $0x8] sm:$0xff]
        %v1169 = vmul.f32 %v1165, %v1167
        %v1170 = vmul.f32 %v1164, %v1168
        %v1171 = vadd.f32 %v1158, %v1169
        %v1172 = vadd.f32 %v1159, %v1170
        %v1173 = vld [vmem:[#allocation7] sm:$0xff]
        %v1174 = vld [vmem:[#allocation7 + $0x8] sm:$0xff]
        %v1175 = vmul.f32 %v1165, %v1173
        %v1176 = vmul.f32 %v1164, %v1174
        %1177 = vrot.lane.b32.xlu0 %v376, 16
        %v1178 = vpop.permute.xlu0 %1177
        %1179 = vrot.lane.b32.xlu0 %v377, 16
        %v1180 = vpop.permute.xlu0 %1179
        %v1181 = vsel %vm601, %v1178, %v1180
        %v1182 = vsel %vm601, %v1180, %v1178
        %s1183 = scalar_lea.vmem [#allocation5], 272
        %v1184 = vld [vmem:[%s1183] sm:$0xff]
        %v1185 = vld [vmem:[%s1183 + $0x8] sm:$0xff]
        %v1186 = vmul.f32 %v1182, %v1184
        %v1187 = vmul.f32 %v1181, %v1185
        %v1188 = vadd.f32 %v1171, %v1186
        %v1189 = vadd.f32 %v1172, %v1187
        %s1190 = scalar_lea.vmem [#allocation7], 16
        %v1191 = vld [vmem:[%s1190] sm:$0xff]
        %v1192 = vld [vmem:[%s1190 + $0x8] sm:$0xff]
        %v1193 = vmul.f32 %v1182, %v1191
        %v1194 = vmul.f32 %v1181, %v1192
        %v1195 = vadd.f32 %v1175, %v1193
        %v1196 = vadd.f32 %v1176, %v1194
        %1197 = vrot.lane.b32.xlu0 %v376, 15
        %v1198 = vpop.permute.xlu0 %1197
        %1199 = vrot.lane.b32.xlu0 %v377, 15
        %v1200 = vpop.permute.xlu0 %1199
        %v1201 = vsel %vm617, %v1198, %v1200
        %v1202 = vsel %vm617, %v1200, %v1198
        %s1203 = scalar_lea.vmem [#allocation5], 288
        %v1204 = vld [vmem:[%s1203] sm:$0xff]
        %v1205 = vld [vmem:[%s1203 + $0x8] sm:$0xff]
        %v1206 = vmul.f32 %v1202, %v1204
        %v1207 = vmul.f32 %v1201, %v1205
        %v1208 = vadd.f32 %v1188, %v1206
        %v1209 = vadd.f32 %v1189, %v1207
        %s1210 = scalar_lea.vmem [#allocation7], 32
        %v1211 = vld [vmem:[%s1210] sm:$0xff]
        %v1212 = vld [vmem:[%s1210 + $0x8] sm:$0xff]
        %v1213 = vmul.f32 %v1202, %v1211
        %v1214 = vmul.f32 %v1201, %v1212
        %v1215 = vadd.f32 %v1195, %v1213
        %v1216 = vadd.f32 %v1196, %v1214
        %1217 = vrot.lane.b32.xlu0 %v376, 14
        %v1218 = vpop.permute.xlu0 %1217
        %1219 = vrot.lane.b32.xlu0 %v377, 14
        %v1220 = vpop.permute.xlu0 %1219
        %v1221 = vsel %vm633, %v1218, %v1220
        %v1222 = vsel %vm633, %v1220, %v1218
        %s1223 = scalar_lea.vmem [#allocation5], 304
        %v1224 = vld [vmem:[%s1223] sm:$0xff]
        %v1225 = vld [vmem:[%s1223 + $0x8] sm:$0xff]
        %v1226 = vmul.f32 %v1222, %v1224
        %v1227 = vmul.f32 %v1221, %v1225
        %v1228 = vadd.f32 %v1208, %v1226
        %v1229 = vadd.f32 %v1209, %v1227
        %1230 = vrot.lane.b32.xlu0 %v376, 13
        %v1231 = vpop.permute.xlu0 %1230
        %1232 = vrot.lane.b32.xlu0 %v377, 13
        %v1233 = vpop.permute.xlu0 %1232
        %vm1234 = vcmp.lt.s32.totalorder %v491, 13
        %v1235 = vsel %vm1234, %v1231, %v1233
        %v1236 = vsel %vm1234, %v1233, %v1231
        %s1237 = scalar_lea.vmem [#allocation5], 320
        %v1238 = vld [vmem:[%s1237] sm:$0xff]
        %v1239 = vld [vmem:[%s1237 + $0x8] sm:$0xff]
        %v1240 = vmul.f32 %v1236, %v1238
        %v1241 = vmul.f32 %v1235, %v1239
        %v1242 = vadd.f32 %v1228, %v1240
        %v1243 = vadd.f32 %v1229, %v1241
        %1244 = vrot.lane.b32.xlu0 %v376, 3
        %v1245 = vpop.permute.xlu0 %1244
        %1246 = vrot.lane.b32.xlu0 %v377, 3
        %v1247 = vpop.permute.xlu0 %1246
        %vm1248 = vcmp.lt.s32.totalorder %v491, 3
        %v1249 = vsel %vm1248, %v1245, %v1247
        %v1250 = vsel %vm1248, %v1247, %v1245
        %s1251 = scalar_lea.vmem [#allocation5], 336
        %v1252 = vld [vmem:[%s1251] sm:$0xff]
        %v1253 = vld [vmem:[%s1251 + $0x8] sm:$0xff]
        %v1254 = vmul.f32 %v1250, %v1252
        %v1255 = vmul.f32 %v1249, %v1253
        %v1256 = vadd.f32 %v1242, %v1254
        %v1257 = vadd.f32 %v1243, %v1255
        %1258 = vrot.lane.b32.xlu0 %v376, 2
        %v1259 = vpop.permute.xlu0 %1258
        %1260 = vrot.lane.b32.xlu0 %v377, 2
        %v1261 = vpop.permute.xlu0 %1260
        %v1262 = vsel %vm649, %v1259, %v1261
        %v1263 = vsel %vm649, %v1261, %v1259
        %s1264 = scalar_lea.vmem [#allocation5], 352
        %v1265 = vld [vmem:[%s1264] sm:$0xff]
        %v1266 = vld [vmem:[%s1264 + $0x8] sm:$0xff]
        %v1267 = vmul.f32 %v1263, %v1265
        %v1268 = vmul.f32 %v1262, %v1266
        %v1269 = vadd.f32 %v1256, %v1267
        %v1270 = vadd.f32 %v1257, %v1268
        %1271 = vrot.lane.b32.xlu0 %v376, 1
        %v1272 = vpop.permute.xlu0 %1271
        %1273 = vrot.lane.b32.xlu0 %v377, 1
        %v1274 = vpop.permute.xlu0 %1273
        %v1275 = vsel %vm665, %v1272, %v1274
        %v1276 = vsel %vm665, %v1274, %v1272
        %s1277 = scalar_lea.vmem [#allocation5], 368
        %v1278 = vld [vmem:[%s1277] sm:$0xff]
        %v1279 = vld [vmem:[%s1277 + $0x8] sm:$0xff]
        %v1280 = vmul.f32 %v1276, %v1278
        %v1281 = vmul.f32 %v1275, %v1279
        %v1282 = vadd.f32 %v1269, %v1280
        %v1283 = vadd.f32 %v1270, %v1281
        %s1284 = scalar_lea.vmem [#allocation7], 48
        %v1285 = vld [vmem:[%s1284] sm:$0xff]
        %v1286 = vld [vmem:[%s1284 + $0x8] sm:$0xff]
        %v1287 = vmul.f32 %v1276, %v1285
        %v1288 = vmul.f32 %v1275, %v1286
        %v1289 = vadd.f32 %v1215, %v1287
        %v1290 = vadd.f32 %v1216, %v1288
        %s1291 = scalar_lea.vmem [#allocation5], 384
        %v1292 = vld [vmem:[%s1291] sm:$0xff]
        %v1293 = vld [vmem:[%s1291 + $0x8] sm:$0xff]
        %v1294 = vmul.f32 %v376, %v1292
        %v1295 = vmul.f32 %v377, %v1293
        %v1296 = vadd.f32 %v1282, %v1294
        %v1297 = vadd.f32 %v1283, %v1295
        %s1298 = scalar_lea.vmem [#allocation7], 64
        %v1299 = vld [vmem:[%s1298] sm:$0xff]
        %v1300 = vld [vmem:[%s1298 + $0x8] sm:$0xff]
        %v1301 = vmul.f32 %v376, %v1299
        %v1302 = vmul.f32 %v377, %v1300
        %v1303 = vadd.f32 %v1289, %v1301
        %v1304 = vadd.f32 %v1290, %v1302
        %1305 = vrot.lane.b32.xlu0 %v376, 127
        %v1306 = vpop.permute.xlu0 %1305
        %1307 = vrot.lane.b32.xlu0 %v377, 127
        %v1308 = vpop.permute.xlu0 %1307
        %v1309 = vsel %vm690, %v1306, %v1308
        %v1310 = vsel %vm690, %v1308, %v1306
        %s1311 = scalar_lea.vmem [#allocation5], 400
        %v1312 = vld [vmem:[%s1311] sm:$0xff]
        %v1313 = vld [vmem:[%s1311 + $0x8] sm:$0xff]
        %v1314 = vmul.f32 %v1309, %v1312
        %v1315 = vmul.f32 %v1310, %v1313
        %v1316 = vadd.f32 %v1296, %v1314
        %v1317 = vadd.f32 %v1297, %v1315
        %s1318 = scalar_lea.vmem [#allocation7], 80
        %v1319 = vld [vmem:[%s1318] sm:$0xff]
        %v1320 = vld [vmem:[%s1318 + $0x8] sm:$0xff]
        %v1321 = vmul.f32 %v1309, %v1319
        %v1322 = vmul.f32 %v1310, %v1320
        %v1323 = vadd.f32 %v1303, %v1321
        %v1324 = vadd.f32 %v1304, %v1322
        %1325 = vrot.lane.b32.xlu0 %v376, 126
        %v1326 = vpop.permute.xlu0 %1325
        %1327 = vrot.lane.b32.xlu0 %v377, 126
        %v1328 = vpop.permute.xlu0 %1327
        %v1329 = vsel %vm706, %v1326, %v1328
        %v1330 = vsel %vm706, %v1328, %v1326
        %s1331 = scalar_lea.vmem [#allocation5], 416
        %v1332 = vld [vmem:[%s1331] sm:$0xff]
        %v1333 = vld [vmem:[%s1331 + $0x8] sm:$0xff]
        %v1334 = vmul.f32 %v1329, %v1332
        %v1335 = vmul.f32 %v1330, %v1333
        %v1336 = vadd.f32 %v1316, %v1334
        %v1337 = vadd.f32 %v1317, %v1335
        %1338 = vrot.lane.b32.xlu0 %v376, 125
        %v1339 = vpop.permute.xlu0 %1338
        %1340 = vrot.lane.b32.xlu0 %v377, 125
        %v1341 = vpop.permute.xlu0 %1340
        %vm1342 = vcmp.lt.s32.totalorder %v491, 125
        %v1343 = vsel %vm1342, %v1339, %v1341
        %v1344 = vsel %vm1342, %v1341, %v1339
        %s1345 = scalar_lea.vmem [#allocation5], 432
        %v1346 = vld [vmem:[%s1345] sm:$0xff]
        %v1347 = vld [vmem:[%s1345 + $0x8] sm:$0xff]
        %v1348 = vmul.f32 %v1343, %v1346
        %v1349 = vmul.f32 %v1344, %v1347
        %v1350 = vadd.f32 %v1336, %v1348
        %v1351 = vadd.f32 %v1337, %v1349
        %1352 = vrot.lane.b32.xlu0 %v376, 115
        %v1353 = vpop.permute.xlu0 %1352
        %1354 = vrot.lane.b32.xlu0 %v377, 115
        %v1355 = vpop.permute.xlu0 %1354
        %vm1356 = vcmp.lt.s32.totalorder %v491, 115
        %v1357 = vsel %vm1356, %v1353, %v1355
        %v1358 = vsel %vm1356, %v1355, %v1353
        %s1359 = scalar_lea.vmem [#allocation5], 448
        %v1360 = vld [vmem:[%s1359] sm:$0xff]
        %v1361 = vld [vmem:[%s1359 + $0x8] sm:$0xff]
        %v1362 = vmul.f32 %v1357, %v1360
        %v1363 = vmul.f32 %v1358, %v1361
        %v1364 = vadd.f32 %v1350, %v1362
        %v1365 = vadd.f32 %v1351, %v1363
        %1366 = vrot.lane.b32.xlu0 %v376, 114
        %v1367 = vpop.permute.xlu0 %1366
        %1368 = vrot.lane.b32.xlu0 %v377, 114
        %v1369 = vpop.permute.xlu0 %1368
        %v1370 = vsel %vm722, %v1367, %v1369
        %v1371 = vsel %vm722, %v1369, %v1367
        %s1372 = scalar_lea.vmem [#allocation5], 464
        %v1373 = vld [vmem:[%s1372] sm:$0xff]
        %v1374 = vld [vmem:[%s1372 + $0x8] sm:$0xff]
        %v1375 = vmul.f32 %v1370, %v1373
        %v1376 = vmul.f32 %v1371, %v1374
        %v1377 = vadd.f32 %v1364, %v1375
        %v1378 = vadd.f32 %v1365, %v1376
        %1379 = vrot.lane.b32.xlu0 %v376, 113
        %v1380 = vpop.permute.xlu0 %1379
        %1381 = vrot.lane.b32.xlu0 %v377, 113
        %v1382 = vpop.permute.xlu0 %1381
        %v1383 = vsel %vm738, %v1380, %v1382
        %v1384 = vsel %vm738, %v1382, %v1380
        %s1385 = scalar_lea.vmem [#allocation5], 480
        %v1386 = vld [vmem:[%s1385] sm:$0xff]
        %v1387 = vld [vmem:[%s1385 + $0x8] sm:$0xff]
        %v1388 = vmul.f32 %v1383, %v1386
        %v1389 = vmul.f32 %v1384, %v1387
        %v1390 = vadd.f32 %v1377, %v1388
        %v1391 = vadd.f32 %v1378, %v1389
        %s1392 = scalar_lea.vmem [#allocation7], 96
        %v1393 = vld [vmem:[%s1392] sm:$0xff]
        %v1394 = vld [vmem:[%s1392 + $0x8] sm:$0xff]
        %v1395 = vmul.f32 %v1383, %v1393
        %v1396 = vmul.f32 %v1384, %v1394
        %v1397 = vadd.f32 %v1323, %v1395
        %v1398 = vadd.f32 %v1324, %v1396
        %1399 = vrot.lane.b32.xlu0 %v376, 112
        %v1400 = vpop.permute.xlu0 %1399
        %1401 = vrot.lane.b32.xlu0 %v377, 112
        %v1402 = vpop.permute.xlu0 %1401
        %v1403 = vsel %vm754, %v1400, %v1402
        %v1404 = vsel %vm754, %v1402, %v1400
        %s1405 = scalar_lea.vmem [#allocation5], 496
        %v1406 = vld [vmem:[%s1405] sm:$0xff]
        %v1407 = vld [vmem:[%s1405 + $0x8] sm:$0xff]
        %v1408 = vmul.f32 %v1403, %v1406
        %v1409 = vmul.f32 %v1404, %v1407
        %v1410 = vadd.f32 %v1390, %v1408
        %v1411 = vadd.f32 %v1391, %v1409
        %s1412 = scalar_lea.vmem [#allocation7], 112
        %v1413 = vld [vmem:[%s1412] sm:$0xff]
        %v1414 = vld [vmem:[%s1412 + $0x8] sm:$0xff]
        %v1415 = vmul.f32 %v1403, %v1413
        %v1416 = vmul.f32 %v1404, %v1414
        %v1417 = vadd.f32 %v1397, %v1415
        %v1418 = vadd.f32 %v1398, %v1416
        %1419 = vrot.lane.b32.xlu0 %v376, 111
        %v1420 = vpop.permute.xlu0 %1419
        %1421 = vrot.lane.b32.xlu0 %v377, 111
        %v1422 = vpop.permute.xlu0 %1421
        %v1423 = vsel %vm770, %v1420, %v1422
        %v1424 = vsel %vm770, %v1422, %v1420
        %s1425 = scalar_lea.vmem [#allocation5], 512
        %v1426 = vld [vmem:[%s1425] sm:$0xff]
        %v1427 = vld [vmem:[%s1425 + $0x8] sm:$0xff]
        %v1428 = vmul.f32 %v1423, %v1426
        %v1429 = vmul.f32 %v1424, %v1427
        %v1430 = vadd.f32 %v1410, %v1428
        %v1431 = vadd.f32 %v1411, %v1429
        %s1432 = scalar_lea.vmem [#allocation7], 128
        %v1433 = vld [vmem:[%s1432] sm:$0xff]
        %v1434 = vld [vmem:[%s1432 + $0x8] sm:$0xff]
        %v1435 = vmul.f32 %v1423, %v1433
        %v1436 = vmul.f32 %v1424, %v1434
        %v1437 = vadd.f32 %v1417, %v1435
        %v1438 = vadd.f32 %v1418, %v1436
        %1439 = vrot.lane.b32.xlu0 %v376, 110
        %v1440 = vpop.permute.xlu0 %1439
        %1441 = vrot.lane.b32.xlu0 %v377, 110
        %v1442 = vpop.permute.xlu0 %1441
        %v1443 = vsel %vm786, %v1440, %v1442
        %v1444 = vsel %vm786, %v1442, %v1440
        %s1445 = scalar_lea.vmem [#allocation5], 528
        %v1446 = vld [vmem:[%s1445] sm:$0xff]
        %v1447 = vld [vmem:[%s1445 + $0x8] sm:$0xff]
        %v1448 = vmul.f32 %v1443, %v1446
        %v1449 = vmul.f32 %v1444, %v1447
        %v1450 = vadd.f32 %v1430, %v1448
        %v1451 = vadd.f32 %v1431, %v1449
        %1452 = vrot.lane.b32.xlu0 %v376, 109
        %v1453 = vpop.permute.xlu0 %1452
        %1454 = vrot.lane.b32.xlu0 %v377, 109
        %v1455 = vpop.permute.xlu0 %1454
        %vm1456 = vcmp.lt.s32.totalorder %v491, 109
        %v1457 = vsel %vm1456, %v1453, %v1455
        %v1458 = vsel %vm1456, %v1455, %v1453
        %s1459 = scalar_lea.vmem [#allocation5], 544
        %v1460 = vld [vmem:[%s1459] sm:$0xff]
        %v1461 = vld [vmem:[%s1459 + $0x8] sm:$0xff]
        %v1462 = vmul.f32 %v1457, %v1460
        %v1463 = vmul.f32 %v1458, %v1461
        %v1464 = vadd.f32 %v1450, %v1462
        %v1465 = vadd.f32 %v1451, %v1463
        %1466 = vrot.lane.b32.xlu0 %v376, 99
        %v1467 = vpop.permute.xlu0 %1466
        %1468 = vrot.lane.b32.xlu0 %v377, 99
        %v1469 = vpop.permute.xlu0 %1468
        %vm1470 = vcmp.lt.s32.totalorder %v491, 99
        %v1471 = vsel %vm1470, %v1467, %v1469
        %v1472 = vsel %vm1470, %v1469, %v1467
        %s1473 = scalar_lea.vmem [#allocation5], 560
        %v1474 = vld [vmem:[%s1473] sm:$0xff]
        %v1475 = vld [vmem:[%s1473 + $0x8] sm:$0xff]
        %v1476 = vmul.f32 %v1471, %v1474
        %v1477 = vmul.f32 %v1472, %v1475
        %v1478 = vadd.f32 %v1464, %v1476
        %v1479 = vadd.f32 %v1465, %v1477
        %1480 = vrot.lane.b32.xlu0 %v376, 98
        %v1481 = vpop.permute.xlu0 %1480
        %1482 = vrot.lane.b32.xlu0 %v377, 98
        %v1483 = vpop.permute.xlu0 %1482
        %v1484 = vsel %vm802, %v1481, %v1483
        %v1485 = vsel %vm802, %v1483, %v1481
        %s1486 = scalar_lea.vmem [#allocation5], 576
        %v1487 = vld [vmem:[%s1486] sm:$0xff]
        %v1488 = vld [vmem:[%s1486 + $0x8] sm:$0xff]
        %v1489 = vmul.f32 %v1484, %v1487
        %v1490 = vmul.f32 %v1485, %v1488
        %v1491 = vadd.f32 %v1478, %v1489
        %v1492 = vadd.f32 %v1479, %v1490
        %1493 = vrot.lane.b32.xlu0 %v376, 97
        %v1494 = vpop.permute.xlu0 %1493
        %1495 = vrot.lane.b32.xlu0 %v377, 97
        %v1496 = vpop.permute.xlu0 %1495
        %v1497 = vsel %vm818, %v1494, %v1496
        %v1498 = vsel %vm818, %v1496, %v1494
        %s1499 = scalar_lea.vmem [#allocation5], 592
        %v1500 = vld [vmem:[%s1499] sm:$0xff]
        %v1501 = vld [vmem:[%s1499 + $0x8] sm:$0xff]
        %v1502 = vmul.f32 %v1497, %v1500
        %v1503 = vmul.f32 %v1498, %v1501
        %v1504 = vadd.f32 %v1491, %v1502
        %v1505 = vadd.f32 %v1492, %v1503
        %1506 = vrot.lane.b32.xlu0 %v376, 96
        %v1507 = vpop.permute.xlu0 %1506
        %1508 = vrot.lane.b32.xlu0 %v377, 96
        %v1509 = vpop.permute.xlu0 %1508
        %v1510 = vsel %vm834, %v1507, %v1509
        %v1511 = vsel %vm834, %v1509, %v1507
        %s1512 = scalar_lea.vmem [#allocation5], 608
        %v1513 = vld [vmem:[%s1512] sm:$0xff]
        %v1514 = vld [vmem:[%s1512 + $0x8] sm:$0xff]
        %v1515 = vmul.f32 %v1510, %v1513
        %v1516 = vmul.f32 %v1511, %v1514
        %v1517 = vadd.f32 %v1504, %v1515
        %v1518 = vadd.f32 %v1505, %v1516
        %1519 = vrot.lane.b32.xlu0 %v376, 95
        %v1520 = vpop.permute.xlu0 %1519
        %1521 = vrot.lane.b32.xlu0 %v377, 95
        %v1522 = vpop.permute.xlu0 %1521
        %v1523 = vsel %vm850, %v1520, %v1522
        %v1524 = vsel %vm850, %v1522, %v1520
        %s1525 = scalar_lea.vmem [#allocation5], 624
        %v1526 = vld [vmem:[%s1525] sm:$0xff]
        %v1527 = vld [vmem:[%s1525 + $0x8] sm:$0xff]
        %v1528 = vmul.f32 %v1523, %v1526
        %v1529 = vmul.f32 %v1524, %v1527
        %v1530 = vadd.f32 %v1517, %v1528
        %v1531 = vadd.f32 %v1518, %v1529
        %1532 = vrot.lane.b32.xlu0 %v376, 94
        %v1533 = vpop.permute.xlu0 %1532
        %1534 = vrot.lane.b32.xlu0 %v377, 94
        %v1535 = vpop.permute.xlu0 %1534
        %v1536 = vsel %vm866, %v1533, %v1535
        %v1537 = vsel %vm866, %v1535, %v1533
        %s1538 = scalar_lea.vmem [#allocation5], 640
        %v1539 = vld [vmem:[%s1538] sm:$0xff]
        %v1540 = vld [vmem:[%s1538 + $0x8] sm:$0xff]
        %v1541 = vmul.f32 %v1536, %v1539
        %v1542 = vmul.f32 %v1537, %v1540
        %v1543 = vadd.f32 %v1530, %v1541
        %v1544 = vadd.f32 %v1531, %v1542
        %1545 = vrot.lane.b32.xlu0 %v376, 93
        %v1546 = vpop.permute.xlu0 %1545
        %1547 = vrot.lane.b32.xlu0 %v377, 93
        %v1548 = vpop.permute.xlu0 %1547
        %vm1549 = vcmp.lt.s32.totalorder %v491, 93
        %v1550 = vsel %vm1549, %v1546, %v1548
        %v1551 = vsel %vm1549, %v1548, %v1546
        %s1552 = scalar_lea.vmem [#allocation5], 656
        %v1553 = vld [vmem:[%s1552] sm:$0xff]
        %v1554 = vld [vmem:[%s1552 + $0x8] sm:$0xff]
        %v1555 = vmul.f32 %v1550, %v1553
        %v1556 = vmul.f32 %v1551, %v1554
        %v1557 = vadd.f32 %v1543, %v1555
        %v1558 = vadd.f32 %v1544, %v1556
        %1559 = vrot.lane.b32.xlu0 %v376, 83
        %v1560 = vpop.permute.xlu0 %1559
        %1561 = vrot.lane.b32.xlu0 %v377, 83
        %v1562 = vpop.permute.xlu0 %1561
        %vm1563 = vcmp.lt.s32.totalorder %v491, 83
        %v1564 = vsel %vm1563, %v1560, %v1562
        %v1565 = vsel %vm1563, %v1562, %v1560
        %s1566 = scalar_lea.vmem [#allocation5], 672
        %v1567 = vld [vmem:[%s1566] sm:$0xff]
        %v1568 = vld [vmem:[%s1566 + $0x8] sm:$0xff]
        %v1569 = vmul.f32 %v1564, %v1567
        %v1570 = vmul.f32 %v1565, %v1568
        %v1571 = vadd.f32 %v1557, %v1569
        %v1572 = vadd.f32 %v1558, %v1570
        %1573 = vrot.lane.b32.xlu0 %v376, 82
        %v1574 = vpop.permute.xlu0 %1573
        %1575 = vrot.lane.b32.xlu0 %v377, 82
        %v1576 = vpop.permute.xlu0 %1575
        %vm1577 = vcmp.lt.s32.totalorder %v491, 82
        %v1578 = vsel %vm1577, %v1574, %v1576
        %v1579 = vsel %vm1577, %v1576, %v1574
        %s1580 = scalar_lea.vmem [#allocation5], 688
        %v1581 = vld [vmem:[%s1580] sm:$0xff]
        %v1582 = vld [vmem:[%s1580 + $0x8] sm:$0xff]
        %v1583 = vmul.f32 %v1578, %v1581
        %v1584 = vmul.f32 %v1579, %v1582
        %v1585 = vadd.f32 %v1571, %v1583
        %v1586 = vadd.f32 %v1572, %v1584
        %1587 = vrot.lane.b32.xlu0 %v376, 81
        %v1588 = vpop.permute.xlu0 %1587
        %1589 = vrot.lane.b32.xlu0 %v377, 81
        %v1590 = vpop.permute.xlu0 %1589
        %vm1591 = vcmp.lt.s32.totalorder %v491, 81
        %v1592 = vsel %vm1591, %v1588, %v1590
        %v1593 = vsel %vm1591, %v1590, %v1588
        %s1594 = scalar_lea.vmem [#allocation5], 704
        %v1595 = vld [vmem:[%s1594] sm:$0xff]
        %v1596 = vld [vmem:[%s1594 + $0x8] sm:$0xff]
        %v1597 = vmul.f32 %v1592, %v1595
        %v1598 = vmul.f32 %v1593, %v1596
        %v1599 = vadd.f32 %v1585, %v1597
        %v1600 = vadd.f32 %v1586, %v1598
        %1601 = vrot.lane.b32.xlu0 %v376, 80
        %v1602 = vpop.permute.xlu0 %1601
        %1603 = vrot.lane.b32.xlu0 %v377, 80
        %v1604 = vpop.permute.xlu0 %1603
        %vm1605 = vcmp.lt.s32.totalorder %v491, 80
        %v1606 = vsel %vm1605, %v1602, %v1604
        %v1607 = vsel %vm1605, %v1604, %v1602
        %s1608 = scalar_lea.vmem [#allocation5], 720
        %v1609 = vld [vmem:[%s1608] sm:$0xff]
        %v1610 = vld [vmem:[%s1608 + $0x8] sm:$0xff]
        %v1611 = vmul.f32 %v1606, %v1609
        %v1612 = vmul.f32 %v1607, %v1610
        %v1613 = vadd.f32 %v1599, %v1611
        %v1614 = vadd.f32 %v1600, %v1612
        %1615 = vrot.lane.b32.xlu0 %v376, 79
        %v1616 = vpop.permute.xlu0 %1615
        %1617 = vrot.lane.b32.xlu0 %v377, 79
        %v1618 = vpop.permute.xlu0 %1617
        %vm1619 = vcmp.lt.s32.totalorder %v491, 79
        %v1620 = vsel %vm1619, %v1616, %v1618
        %v1621 = vsel %vm1619, %v1618, %v1616
        %s1622 = scalar_lea.vmem [#allocation5], 736
        %v1623 = vld [vmem:[%s1622] sm:$0xff]
        %v1624 = vld [vmem:[%s1622 + $0x8] sm:$0xff]
        %v1625 = vmul.f32 %v1620, %v1623
        %v1626 = vmul.f32 %v1621, %v1624
        %v1627 = vadd.f32 %v1613, %v1625
        %v1628 = vadd.f32 %v1614, %v1626
        %1629 = vrot.lane.b32.xlu0 %v376, 78
        %v1630 = vpop.permute.xlu0 %1629
        %1631 = vrot.lane.b32.xlu0 %v377, 78
        %v1632 = vpop.permute.xlu0 %1631
        %vm1633 = vcmp.lt.s32.totalorder %v491, 78
        %v1634 = vsel %vm1633, %v1630, %v1632
        %v1635 = vsel %vm1633, %v1632, %v1630
        %s1636 = scalar_lea.vmem [#allocation5], 752
        %v1637 = vld [vmem:[%s1636] sm:$0xff]
        %v1638 = vld [vmem:[%s1636 + $0x8] sm:$0xff]
        %v1639 = vmul.f32 %v1634, %v1637
        %v1640 = vmul.f32 %v1635, %v1638
        %v1641 = vadd.f32 %v1627, %v1639
        %v1642 = vadd.f32 %v1628, %v1640
        %1643 = vrot.lane.b32.xlu0 %v376, 77
        %v1644 = vpop.permute.xlu0 %1643
        %1645 = vrot.lane.b32.xlu0 %v377, 77
        %v1646 = vpop.permute.xlu0 %1645
        %vm1647 = vcmp.lt.s32.totalorder %v491, 77
        %v1648 = vsel %vm1647, %v1644, %v1646
        %v1649 = vsel %vm1647, %v1646, %v1644
        %s1650 = scalar_lea.vmem [#allocation5], 768
        %v1651 = vld [vmem:[%s1650] sm:$0xff]
        %v1652 = vld [vmem:[%s1650 + $0x8] sm:$0xff]
        %v1653 = vmul.f32 %v1648, %v1651
        %v1654 = vmul.f32 %v1649, %v1652
        %v1655 = vadd.f32 %v1641, %v1653
        %v1656 = vadd.f32 %v1642, %v1654
        %1657 = vset.pattern.permute.xlu0 7
        %1658 = vperm.xlu0 %1657, %v931
        %v1659 = vpop.permute.xlu0 %1658
        %v1661 = vadd.f32 %v1437, %v1659
        %v1662 = vadd.f32 %v1438, %v1659
        %1663 = vset.pattern.permute.xlu0 8
        %1664 = vperm.xlu0 %1663, %v931
        %v1665 = vpop.permute.xlu0 %1664
        %v1667 = vadd.f32 %v1655, %v1665
        %v1668 = vadd.f32 %v1656, %v1665
        %v1669 = vld [vmem:[%s5] sm:$0xff]
        %s1670 = scalar_lea.vmem %s5, 8
        %v1671 = vld [vmem:[%s1670] sm:$0xff]
        %vm1672 = vcmask 64512
        %v1674 = vsel %vm1672, %v1671, 0
        %v1676 = vand.u32 %v1662, 4294901760
        %1677 = vmatprep.subr.mxu0 %v1676
        %v1678 = vand.u32 %v1661, 4294901760
        %1679 = vmatpush1.msra.mxu0 %v1678
        %1680 = vmatprep.subr.mxu0 0.0
        %1681 = vmatpush1.msra.mxu0 0.0
        %1682 = vmatprep.subr.mxu0 0.0
        %1683 = vmatpush1.msra.mxu0 0.0
        %1684 = vmatprep.subr.mxu0 0.0
        %1685 = vmatpush1.msra.mxu0 0.0
        %1686 = vmatprep.subr.mxu0 0.0
        %1687 = vmatpush1.msra.mxu0 0.0
        %1688 = vmatprep.subr.mxu0 0.0
        %1689 = vmatpush1.msra.mxu0 0.0
        %1690 = vmatprep.subr.mxu0 0.0
        %1691 = vmatpush1.msra.mxu0 0.0
        %1692 = vmatprep.subr.mxu0 0.0
        %1693 = vmatpush1.msra.mxu0 0.0
        %1694 = vmatprep.subr.mxu0 0.0
        %1695 = vmatpush1.msra.mxu0 0.0
        %1696 = vmatprep.subr.mxu0 0.0
        %1697 = vmatpush1.msra.mxu0 0.0
        %1698 = vmatprep.subr.mxu0 0.0
        %1699 = vmatpush1.msra.mxu0 0.0
        %1700 = vmatprep.subr.mxu0 0.0
        %1701 = vmatpush1.msra.mxu0 0.0
        %1702 = vmatprep.subr.mxu0 0.0
        %1703 = vmatpush1.msra.mxu0 0.0
        %1704 = vmatprep.subr.mxu0 0.0
        %1705 = vmatpush1.msra.mxu0 0.0
        %1706 = vmatprep.subr.mxu0 0.0
        %1707 = vmatpush1.msra.mxu0 0.0
        %1708 = vmatprep.subr.mxu0 0.0
        %1709 = vmatpush1.msra.mxu0 0.0
        %1710 = vmatprep.subr.mxu0 0.0
        %1711 = vmatpush1.msra.mxu0 0.0
        %1712 = vmatprep.subr.mxu0 0.0
        %1713 = vmatpush1.msra.mxu0 0.0
        %1714 = vmatprep.subr.mxu0 0.0
        %1715 = vmatpush1.msra.mxu0 0.0
        %1716 = vmatprep.subr.mxu0 0.0
        %1717 = vmatpush1.msra.mxu0 0.0
        %1718 = vmatprep.subr.mxu0 0.0
        %1719 = vmatpush1.msra.mxu0 0.0
        %1720 = vmatprep.subr.mxu0 0.0
        %1721 = vmatpush1.msra.mxu0 0.0
        %1722 = vmatprep.subr.mxu0 0.0
        %1723 = vmatpush1.msra.mxu0 0.0
        %1724 = vmatprep.subr.mxu0 0.0
        %1725 = vmatpush1.msra.mxu0 0.0
        %1726 = vmatprep.subr.mxu0 0.0
        %1727 = vmatpush1.msra.mxu0 0.0
        %1728 = vmatprep.subr.mxu0 0.0
        %1729 = vmatpush1.msra.mxu0 0.0
        %1730 = vmatprep.subr.mxu0 0.0
        %1731 = vmatpush1.msra.mxu0 0.0
        %1732 = vmatprep.subr.mxu0 0.0
        %1733 = vmatpush1.msra.mxu0 0.0
        %1734 = vmatprep.subr.mxu0 0.0
        %1735 = vmatpush1.msra.mxu0 0.0
        %1736 = vmatprep.subr.mxu0 0.0
        %1737 = vmatpush1.msra.mxu0 0.0
        %1738 = vmatprep.subr.mxu0 0.0
        %1739 = vmatpush1.msra.mxu0 0.0
        %1740 = vmatprep.subr.mxu0 0.0
        %1741 = vmatpush1.msra.mxu0 0.0
        %1742 = vmatprep.mubr.f32.mxu0 0.0
        %v1743 = vand.u32 %v1674, 4294901760
        %v1744 = vsub.f32 %v1674, %v1743
        %v1745 = vand.u32 %v1744, 4294901760
        %v1746 = vsub.f32 %v1744, %v1745
        %v1747 = vand.u32 %v1746, 4294901760
        %1748 = vmatmul.mubr.f32.gmra.mrb[0].mxu0 %v1747
        %v1749 = vpop.f32.mrb[0].mxu0
        %v1750 = vadd.f32 0.0, %v1749
        %v1751 = vpop.f32.mrb[0].mxu0
        %v1752 = vadd.f32 0.0, %v1751
        %1753 = vdwg.mxu0
        %v1754 = vand.u32 %v1662, 4294901760
        %v1755 = vsub.f32 %v1662, %v1754
        %v1756 = vand.u32 %v1755, 4294901760
        %v1757 = vsub.f32 %v1755, %v1756
        %v1758 = vand.u32 %v1757, 4294901760
        %1759 = vmatprep.subr.mxu0 %v1758
        %v1760 = vand.u32 %v1661, 4294901760
        %v1761 = vsub.f32 %v1661, %v1760
        %v1762 = vand.u32 %v1761, 4294901760
        %v1763 = vsub.f32 %v1761, %v1762
        %v1764 = vand.u32 %v1763, 4294901760
        %1765 = vmatpush1.msra.mxu0 %v1764
        %1766 = vmatprep.subr.mxu0 0.0
        %1767 = vmatpush1.msra.mxu0 0.0
        %1768 = vmatprep.subr.mxu0 0.0
        %1769 = vmatpush1.msra.mxu0 0.0
        %1770 = vmatprep.subr.mxu0 0.0
        %1771 = vmatpush1.msra.mxu0 0.0
        %1772 = vmatprep.subr.mxu0 0.0
        %1773 = vmatpush1.msra.mxu0 0.0
        %1774 = vmatprep.subr.mxu0 0.0
        %1775 = vmatpush1.msra.mxu0 0.0
        %1776 = vmatprep.subr.mxu0 0.0
        %1777 = vmatpush1.msra.mxu0 0.0
        %1778 = vmatprep.subr.mxu0 0.0
        %1779 = vmatpush1.msra.mxu0 0.0
        %1780 = vmatprep.subr.mxu0 0.0
        %1781 = vmatpush1.msra.mxu0 0.0
        %1782 = vmatprep.subr.mxu0 0.0
        %1783 = vmatpush1.msra.mxu0 0.0
        %1784 = vmatprep.subr.mxu0 0.0
        %1785 = vmatpush1.msra.mxu0 0.0
        %1786 = vmatprep.subr.mxu0 0.0
        %1787 = vmatpush1.msra.mxu0 0.0
        %1788 = vmatprep.subr.mxu0 0.0
        %1789 = vmatpush1.msra.mxu0 0.0
        %1790 = vmatprep.subr.mxu0 0.0
        %1791 = vmatpush1.msra.mxu0 0.0
        %1792 = vmatprep.subr.mxu0 0.0
        %1793 = vmatpush1.msra.mxu0 0.0
        %1794 = vmatprep.subr.mxu0 0.0
        %1795 = vmatpush1.msra.mxu0 0.0
        %1796 = vmatprep.subr.mxu0 0.0
        %1797 = vmatpush1.msra.mxu0 0.0
        %1798 = vmatprep.subr.mxu0 0.0
        %1799 = vmatpush1.msra.mxu0 0.0
        %1800 = vmatprep.subr.mxu0 0.0
        %1801 = vmatpush1.msra.mxu0 0.0
        %1802 = vmatprep.subr.mxu0 0.0
        %1803 = vmatpush1.msra.mxu0 0.0
        %1804 = vmatprep.subr.mxu0 0.0
        %1805 = vmatpush1.msra.mxu0 0.0
        %1806 = vmatprep.subr.mxu0 0.0
        %1807 = vmatpush1.msra.mxu0 0.0
        %1808 = vmatprep.subr.mxu0 0.0
        %1809 = vmatpush1.msra.mxu0 0.0
        %1810 = vmatprep.subr.mxu0 0.0
        %1811 = vmatpush1.msra.mxu0 0.0
        %1812 = vmatprep.subr.mxu0 0.0
        %1813 = vmatpush1.msra.mxu0 0.0
        %1814 = vmatprep.subr.mxu0 0.0
        %1815 = vmatpush1.msra.mxu0 0.0
        %1816 = vmatprep.subr.mxu0 0.0
        %1817 = vmatpush1.msra.mxu0 0.0
        %1818 = vmatprep.subr.mxu0 0.0
        %1819 = vmatpush1.msra.mxu0 0.0
        %1820 = vmatprep.subr.mxu0 0.0
        %1821 = vmatpush1.msra.mxu0 0.0
        %1822 = vmatprep.subr.mxu0 0.0
        %1823 = vmatpush1.msra.mxu0 0.0
        %1824 = vmatprep.subr.mxu0 0.0
        %1825 = vmatpush1.msra.mxu0 0.0
        %1826 = vmatprep.subr.mxu0 0.0
        %1827 = vmatpush1.msra.mxu0 0.0
        %1828 = vmatprep.mubr.f32.mxu0 0.0
        %v1829 = vand.u32 %v1674, 4294901760
        %1830 = vmatmul.mubr.f32.gmra.mrb[0].mxu0 %v1829
        %v1831 = vpop.f32.mrb[0].mxu0
        %v1832 = vadd.f32 %v1750, %v1831
        %v1833 = vpop.f32.mrb[0].mxu0
        %v1834 = vadd.f32 %v1752, %v1833
        %1835 = vdwg.mxu0
        %v1836 = vand.u32 %v1662, 4294901760
        %v1837 = vsub.f32 %v1662, %v1836
        %1838 = vmatprep.subr.mxu0 %v1837
        %v1839 = vand.u32 %v1661, 4294901760
        %v1840 = vsub.f32 %v1661, %v1839
        %1841 = vmatpush1.msra.mxu0 %v1840
        %1842 = vmatprep.subr.mxu0 0.0
        %1843 = vmatpush1.msra.mxu0 0.0
        %1844 = vmatprep.subr.mxu0 0.0
        %1845 = vmatpush1.msra.mxu0 0.0
        %1846 = vmatprep.subr.mxu0 0.0
        %1847 = vmatpush1.msra.mxu0 0.0
        %1848 = vmatprep.subr.mxu0 0.0
        %1849 = vmatpush1.msra.mxu0 0.0
        %1850 = vmatprep.subr.mxu0 0.0
        %1851 = vmatpush1.msra.mxu0 0.0
        %1852 = vmatprep.subr.mxu0 0.0
        %1853 = vmatpush1.msra.mxu0 0.0
        %1854 = vmatprep.subr.mxu0 0.0
        %1855 = vmatpush1.msra.mxu0 0.0
        %1856 = vmatprep.subr.mxu0 0.0
        %1857 = vmatpush1.msra.mxu0 0.0
        %1858 = vmatprep.subr.mxu0 0.0
        %1859 = vmatpush1.msra.mxu0 0.0
        %1860 = vmatprep.subr.mxu0 0.0
        %1861 = vmatpush1.msra.mxu0 0.0
        %1862 = vmatprep.subr.mxu0 0.0
        %1863 = vmatpush1.msra.mxu0 0.0
        %1864 = vmatprep.subr.mxu0 0.0
        %1865 = vmatpush1.msra.mxu0 0.0
        %1866 = vmatprep.subr.mxu0 0.0
        %1867 = vmatpush1.msra.mxu0 0.0
        %1868 = vmatprep.subr.mxu0 0.0
        %1869 = vmatpush1.msra.mxu0 0.0
        %1870 = vmatprep.subr.mxu0 0.0
        %1871 = vmatpush1.msra.mxu0 0.0
        %1872 = vmatprep.subr.mxu0 0.0
        %1873 = vmatpush1.msra.mxu0 0.0
        %1874 = vmatprep.subr.mxu0 0.0
        %1875 = vmatpush1.msra.mxu0 0.0
        %1876 = vmatprep.subr.mxu0 0.0
        %1877 = vmatpush1.msra.mxu0 0.0
        %1878 = vmatprep.subr.mxu0 0.0
        %1879 = vmatpush1.msra.mxu0 0.0
        %1880 = vmatprep.subr.mxu0 0.0
        %1881 = vmatpush1.msra.mxu0 0.0
        %1882 = vmatprep.subr.mxu0 0.0
        %1883 = vmatpush1.msra.mxu0 0.0
        %1884 = vmatprep.subr.mxu0 0.0
        %1885 = vmatpush1.msra.mxu0 0.0
        %1886 = vmatprep.subr.mxu0 0.0
        %1887 = vmatpush1.msra.mxu0 0.0
        %1888 = vmatprep.subr.mxu0 0.0
        %1889 = vmatpush1.msra.mxu0 0.0
        %1890 = vmatprep.subr.mxu0 0.0
        %1891 = vmatpush1.msra.mxu0 0.0
        %1892 = vmatprep.subr.mxu0 0.0
        %1893 = vmatpush1.msra.mxu0 0.0
        %1894 = vmatprep.subr.mxu0 0.0
        %1895 = vmatpush1.msra.mxu0 0.0
        %1896 = vmatprep.subr.mxu0 0.0
        %1897 = vmatpush1.msra.mxu0 0.0
        %1898 = vmatprep.subr.mxu0 0.0
        %1899 = vmatpush1.msra.mxu0 0.0
        %1900 = vmatprep.subr.mxu0 0.0
        %1901 = vmatpush1.msra.mxu0 0.0
        %1902 = vmatprep.subr.mxu0 0.0
        %1903 = vmatpush1.msra.mxu0 0.0
        %1904 = vmatprep.mubr.f32.mxu0 0.0
        %v1905 = vand.u32 %v1674, 4294901760
        %v1906 = vsub.f32 %v1674, %v1905
        %1907 = vmatmul.mubr.f32.gmra.mrb[0].mxu0 %v1906
        %v1908 = vpop.f32.mrb[0].mxu0
        %v1909 = vadd.f32 %v1832, %v1908
        %v1910 = vpop.f32.mrb[0].mxu0
        %v1911 = vadd.f32 %v1834, %v1910
        %1912 = vdwg.mxu0
        %v1913 = vand.u32 %v1662, 4294901760
        %1914 = vmatprep.subr.mxu0 %v1913
        %v1915 = vand.u32 %v1661, 4294901760
        %1916 = vmatpush1.msra.mxu0 %v1915
        %1917 = vmatprep.subr.mxu0 0.0
        %1918 = vmatpush1.msra.mxu0 0.0
        %1919 = vmatprep.subr.mxu0 0.0
        %1920 = vmatpush1.msra.mxu0 0.0
        %1921 = vmatprep.subr.mxu0 0.0
        %1922 = vmatpush1.msra.mxu0 0.0
        %1923 = vmatprep.subr.mxu0 0.0
        %1924 = vmatpush1.msra.mxu0 0.0
        %1925 = vmatprep.subr.mxu0 0.0
        %1926 = vmatpush1.msra.mxu0 0.0
        %1927 = vmatprep.subr.mxu0 0.0
        %1928 = vmatpush1.msra.mxu0 0.0
        %1929 = vmatprep.subr.mxu0 0.0
        %1930 = vmatpush1.msra.mxu0 0.0
        %1931 = vmatprep.subr.mxu0 0.0
        %1932 = vmatpush1.msra.mxu0 0.0
        %1933 = vmatprep.subr.mxu0 0.0
        %1934 = vmatpush1.msra.mxu0 0.0
        %1935 = vmatprep.subr.mxu0 0.0
        %1936 = vmatpush1.msra.mxu0 0.0
        %1937 = vmatprep.subr.mxu0 0.0
        %1938 = vmatpush1.msra.mxu0 0.0
        %1939 = vmatprep.subr.mxu0 0.0
        %1940 = vmatpush1.msra.mxu0 0.0
        %1941 = vmatprep.subr.mxu0 0.0
        %1942 = vmatpush1.msra.mxu0 0.0
        %1943 = vmatprep.subr.mxu0 0.0
        %1944 = vmatpush1.msra.mxu0 0.0
        %1945 = vmatprep.subr.mxu0 0.0
        %1946 = vmatpush1.msra.mxu0 0.0
        %1947 = vmatprep.subr.mxu0 0.0
        %1948 = vmatpush1.msra.mxu0 0.0
        %1949 = vmatprep.subr.mxu0 0.0
        %1950 = vmatpush1.msra.mxu0 0.0
        %1951 = vmatprep.subr.mxu0 0.0
        %1952 = vmatpush1.msra.mxu0 0.0
        %1953 = vmatprep.subr.mxu0 0.0
        %1954 = vmatpush1.msra.mxu0 0.0
        %1955 = vmatprep.subr.mxu0 0.0
        %1956 = vmatpush1.msra.mxu0 0.0
        %1957 = vmatprep.subr.mxu0 0.0
        %1958 = vmatpush1.msra.mxu0 0.0
        %1959 = vmatprep.subr.mxu0 0.0
        %1960 = vmatpush1.msra.mxu0 0.0
        %1961 = vmatprep.subr.mxu0 0.0
        %1962 = vmatpush1.msra.mxu0 0.0
        %1963 = vmatprep.subr.mxu0 0.0
        %1964 = vmatpush1.msra.mxu0 0.0
        %1965 = vmatprep.subr.mxu0 0.0
        %1966 = vmatpush1.msra.mxu0 0.0
        %1967 = vmatprep.subr.mxu0 0.0
        %1968 = vmatpush1.msra.mxu0 0.0
        %1969 = vmatprep.subr.mxu0 0.0
        %1970 = vmatpush1.msra.mxu0 0.0
        %1971 = vmatprep.subr.mxu0 0.0
        %1972 = vmatpush1.msra.mxu0 0.0
        %1973 = vmatprep.subr.mxu0 0.0
        %1974 = vmatpush1.msra.mxu0 0.0
        %1975 = vmatprep.subr.mxu0 0.0
        %1976 = vmatpush1.msra.mxu0 0.0
        %1977 = vmatprep.subr.mxu0 0.0
        %1978 = vmatpush1.msra.mxu0 0.0
        %1979 = vmatprep.mubr.f32.mxu0 0.0
        %v1980 = vand.u32 %v1674, 4294901760
        %v1981 = vsub.f32 %v1674, %v1980
        %v1982 = vand.u32 %v1981, 4294901760
        %1983 = vmatmul.mubr.f32.gmra.mrb[0].mxu0 %v1982
        %v1984 = vpop.f32.mrb[0].mxu0
        %v1985 = vadd.f32 %v1909, %v1984
        %v1986 = vpop.f32.mrb[0].mxu0
        %v1987 = vadd.f32 %v1911, %v1986
        %1988 = vdwg.mxu0
        %v1989 = vand.u32 %v1662, 4294901760
        %v1990 = vsub.f32 %v1662, %v1989
        %v1991 = vand.u32 %v1990, 4294901760
        %1992 = vmatprep.subr.mxu0 %v1991
        %v1993 = vand.u32 %v1661, 4294901760
        %v1994 = vsub.f32 %v1661, %v1993
        %v1995 = vand.u32 %v1994, 4294901760
        %1996 = vmatpush1.msra.mxu0 %v1995
        %1997 = vmatprep.subr.mxu0 0.0
        %1998 = vmatpush1.msra.mxu0 0.0
        %1999 = vmatprep.subr.mxu0 0.0
        %2000 = vmatpush1.msra.mxu0 0.0
        %2001 = vmatprep.subr.mxu0 0.0
        %2002 = vmatpush1.msra.mxu0 0.0
        %2003 = vmatprep.subr.mxu0 0.0
        %2004 = vmatpush1.msra.mxu0 0.0
        %2005 = vmatprep.subr.mxu0 0.0
        %2006 = vmatpush1.msra.mxu0 0.0
        %2007 = vmatprep.subr.mxu0 0.0
        %2008 = vmatpush1.msra.mxu0 0.0
        %2009 = vmatprep.subr.mxu0 0.0
        %2010 = vmatpush1.msra.mxu0 0.0
        %2011 = vmatprep.subr.mxu0 0.0
        %2012 = vmatpush1.msra.mxu0 0.0
        %2013 = vmatprep.subr.mxu0 0.0
        %2014 = vmatpush1.msra.mxu0 0.0
        %2015 = vmatprep.subr.mxu0 0.0
        %2016 = vmatpush1.msra.mxu0 0.0
        %2017 = vmatprep.subr.mxu0 0.0
        %2018 = vmatpush1.msra.mxu0 0.0
        %2019 = vmatprep.subr.mxu0 0.0
        %2020 = vmatpush1.msra.mxu0 0.0
        %2021 = vmatprep.subr.mxu0 0.0
        %2022 = vmatpush1.msra.mxu0 0.0
        %2023 = vmatprep.subr.mxu0 0.0
        %2024 = vmatpush1.msra.mxu0 0.0
        %2025 = vmatprep.subr.mxu0 0.0
        %2026 = vmatpush1.msra.mxu0 0.0
        %2027 = vmatprep.subr.mxu0 0.0
        %2028 = vmatpush1.msra.mxu0 0.0
        %2029 = vmatprep.subr.mxu0 0.0
        %2030 = vmatpush1.msra.mxu0 0.0
        %2031 = vmatprep.subr.mxu0 0.0
        %2032 = vmatpush1.msra.mxu0 0.0
        %2033 = vmatprep.subr.mxu0 0.0
        %2034 = vmatpush1.msra.mxu0 0.0
        %2035 = vmatprep.subr.mxu0 0.0
        %2036 = vmatpush1.msra.mxu0 0.0
        %2037 = vmatprep.subr.mxu0 0.0
        %2038 = vmatpush1.msra.mxu0 0.0
        %2039 = vmatprep.subr.mxu0 0.0
        %2040 = vmatpush1.msra.mxu0 0.0
        %2041 = vmatprep.subr.mxu0 0.0
        %2042 = vmatpush1.msra.mxu0 0.0
        %2043 = vmatprep.subr.mxu0 0.0
        %2044 = vmatpush1.msra.mxu0 0.0
        %2045 = vmatprep.subr.mxu0 0.0
        %2046 = vmatpush1.msra.mxu0 0.0
        %2047 = vmatprep.subr.mxu0 0.0
        %2048 = vmatpush1.msra.mxu0 0.0
        %2049 = vmatprep.subr.mxu0 0.0
        %2050 = vmatpush1.msra.mxu0 0.0
        %2051 = vmatprep.subr.mxu0 0.0
        %2052 = vmatpush1.msra.mxu0 0.0
        %2053 = vmatprep.subr.mxu0 0.0
        %2054 = vmatpush1.msra.mxu0 0.0
        %2055 = vmatprep.subr.mxu0 0.0
        %2056 = vmatpush1.msra.mxu0 0.0
        %2057 = vmatprep.subr.mxu0 0.0
        %2058 = vmatpush1.msra.mxu0 0.0
        %2059 = vmatprep.mubr.f32.mxu0 0.0
        %v2060 = vand.u32 %v1674, 4294901760
        %2061 = vmatmul.mubr.f32.gmra.mrb[0].mxu0 %v2060
        %v2062 = vpop.f32.mrb[0].mxu0
        %v2063 = vadd.f32 %v1985, %v2062
        %v2064 = vpop.f32.mrb[0].mxu0
        %v2065 = vadd.f32 %v1987, %v2064
        %2066 = vdwg.mxu0
        %v2067 = vand.u32 %v1662, 4294901760
        %2068 = vmatprep.subr.mxu0 %v2067
        %v2069 = vand.u32 %v1661, 4294901760
        %2070 = vmatpush1.msra.mxu0 %v2069
        %2071 = vmatprep.subr.mxu0 0.0
        %2072 = vmatpush1.msra.mxu0 0.0
        %2073 = vmatprep.subr.mxu0 0.0
        %2074 = vmatpush1.msra.mxu0 0.0
        %2075 = vmatprep.subr.mxu0 0.0
        %2076 = vmatpush1.msra.mxu0 0.0
        %2077 = vmatprep.subr.mxu0 0.0
        %2078 = vmatpush1.msra.mxu0 0.0
        %2079 = vmatprep.subr.mxu0 0.0
        %2080 = vmatpush1.msra.mxu0 0.0
        %2081 = vmatprep.subr.mxu0 0.0
        %2082 = vmatpush1.msra.mxu0 0.0
        %2083 = vmatprep.subr.mxu0 0.0
        %2084 = vmatpush1.msra.mxu0 0.0
        %2085 = vmatprep.subr.mxu0 0.0
        %2086 = vmatpush1.msra.mxu0 0.0
        %2087 = vmatprep.subr.mxu0 0.0
        %2088 = vmatpush1.msra.mxu0 0.0
        %2089 = vmatprep.subr.mxu0 0.0
        %2090 = vmatpush1.msra.mxu0 0.0
        %2091 = vmatprep.subr.mxu0 0.0
        %2092 = vmatpush1.msra.mxu0 0.0
        %2093 = vmatprep.subr.mxu0 0.0
        %2094 = vmatpush1.msra.mxu0 0.0
        %2095 = vmatprep.subr.mxu0 0.0
        %2096 = vmatpush1.msra.mxu0 0.0
        %2097 = vmatprep.subr.mxu0 0.0
        %2098 = vmatpush1.msra.mxu0 0.0
        %2099 = vmatprep.subr.mxu0 0.0
        %2100 = vmatpush1.msra.mxu0 0.0
        %2101 = vmatprep.subr.mxu0 0.0
        %2102 = vmatpush1.msra.mxu0 0.0
        %2103 = vmatprep.subr.mxu0 0.0
        %2104 = vmatpush1.msra.mxu0 0.0
        %2105 = vmatprep.subr.mxu0 0.0
        %2106 = vmatpush1.msra.mxu0 0.0
        %2107 = vmatprep.subr.mxu0 0.0
        %2108 = vmatpush1.msra.mxu0 0.0
        %2109 = vmatprep.subr.mxu0 0.0
        %2110 = vmatpush1.msra.mxu0 0.0
        %2111 = vmatprep.subr.mxu0 0.0
        %2112 = vmatpush1.msra.mxu0 0.0
        %2113 = vmatprep.subr.mxu0 0.0
        %2114 = vmatpush1.msra.mxu0 0.0
        %2115 = vmatprep.subr.mxu0 0.0
        %2116 = vmatpush1.msra.mxu0 0.0
        %2117 = vmatprep.subr.mxu0 0.0
        %2118 = vmatpush1.msra.mxu0 0.0
        %2119 = vmatprep.subr.mxu0 0.0
        %2120 = vmatpush1.msra.mxu0 0.0
        %2121 = vmatprep.subr.mxu0 0.0
        %2122 = vmatpush1.msra.mxu0 0.0
        %2123 = vmatprep.subr.mxu0 0.0
        %2124 = vmatpush1.msra.mxu0 0.0
        %2125 = vmatprep.subr.mxu0 0.0
        %2126 = vmatpush1.msra.mxu0 0.0
        %2127 = vmatprep.subr.mxu0 0.0
        %2128 = vmatpush1.msra.mxu0 0.0
        %2129 = vmatprep.subr.mxu0 0.0
        %2130 = vmatpush1.msra.mxu0 0.0
        %2131 = vmatprep.subr.mxu0 0.0
        %2132 = vmatpush1.msra.mxu0 0.0
        %2133 = vmatprep.mubr.f32.mxu0 0.0
        %v2134 = vand.u32 %v1674, 4294901760
        %2135 = vmatmul.mubr.f32.gmra.mrb[0].mxu0 %v2134
        %v2136 = vpop.f32.mrb[0].mxu0
        %v2137 = vadd.f32 %v2063, %v2136
        %v2138 = vpop.f32.mrb[0].mxu0
        %v2139 = vadd.f32 %v2065, %v2138
        %2140 = vdwg.mxu0
        %v2142 = vsel %vm1672, %v1669, 0
        %v2144 = vand.u32 %v944, 4294901760
        %2145 = vmatprep.subr.mxu0 %v2144
        %v2146 = vand.u32 %v943, 4294901760
        %2147 = vmatpush1.msra.mxu0 %v2146
        %2148 = vmatprep.subr.mxu0 0.0
        %2149 = vmatpush1.msra.mxu0 0.0
        %2150 = vmatprep.subr.mxu0 0.0
        %2151 = vmatpush1.msra.mxu0 0.0
        %2152 = vmatprep.subr.mxu0 0.0
        %2153 = vmatpush1.msra.mxu0 0.0
        %2154 = vmatprep.subr.mxu0 0.0
        %2155 = vmatpush1.msra.mxu0 0.0
        %2156 = vmatprep.subr.mxu0 0.0
        %2157 = vmatpush1.msra.mxu0 0.0
        %2158 = vmatprep.subr.mxu0 0.0
        %2159 = vmatpush1.msra.mxu0 0.0
        %2160 = vmatprep.subr.mxu0 0.0
        %2161 = vmatpush1.msra.mxu0 0.0
        %2162 = vmatprep.subr.mxu0 0.0
        %2163 = vmatpush1.msra.mxu0 0.0
        %2164 = vmatprep.subr.mxu0 0.0
        %2165 = vmatpush1.msra.mxu0 0.0
        %2166 = vmatprep.subr.mxu0 0.0
        %2167 = vmatpush1.msra.mxu0 0.0
        %2168 = vmatprep.subr.mxu0 0.0
        %2169 = vmatpush1.msra.mxu0 0.0
        %2170 = vmatprep.subr.mxu0 0.0
        %2171 = vmatpush1.msra.mxu0 0.0
        %2172 = vmatprep.subr.mxu0 0.0
        %2173 = vmatpush1.msra.mxu0 0.0
        %2174 = vmatprep.subr.mxu0 0.0
        %2175 = vmatpush1.msra.mxu0 0.0
        %2176 = vmatprep.subr.mxu0 0.0
        %2177 = vmatpush1.msra.mxu0 0.0
        %2178 = vmatprep.subr.mxu0 0.0
        %2179 = vmatpush1.msra.mxu0 0.0
        %2180 = vmatprep.subr.mxu0 0.0
        %2181 = vmatpush1.msra.mxu0 0.0
        %2182 = vmatprep.subr.mxu0 0.0
        %2183 = vmatpush1.msra.mxu0 0.0
        %2184 = vmatprep.subr.mxu0 0.0
        %2185 = vmatpush1.msra.mxu0 0.0
        %2186 = vmatprep.subr.mxu0 0.0
        %2187 = vmatpush1.msra.mxu0 0.0
        %2188 = vmatprep.subr.mxu0 0.0
        %2189 = vmatpush1.msra.mxu0 0.0
        %2190 = vmatprep.subr.mxu0 0.0
        %2191 = vmatpush1.msra.mxu0 0.0
        %2192 = vmatprep.subr.mxu0 0.0
        %2193 = vmatpush1.msra.mxu0 0.0
        %2194 = vmatprep.subr.mxu0 0.0
        %2195 = vmatpush1.msra.mxu0 0.0
        %2196 = vmatprep.subr.mxu0 0.0
        %2197 = vmatpush1.msra.mxu0 0.0
        %2198 = vmatprep.subr.mxu0 0.0
        %2199 = vmatpush1.msra.mxu0 0.0
        %2200 = vmatprep.subr.mxu0 0.0
        %2201 = vmatpush1.msra.mxu0 0.0
        %2202 = vmatprep.subr.mxu0 0.0
        %2203 = vmatpush1.msra.mxu0 0.0
        %2204 = vmatprep.subr.mxu0 0.0
        %2205 = vmatpush1.msra.mxu0 0.0
        %2206 = vmatprep.subr.mxu0 0.0
        %2207 = vmatpush1.msra.mxu0 0.0
        %2208 = vmatprep.subr.mxu0 0.0
        %2209 = vmatpush1.msra.mxu0 0.0
        %2210 = vmatprep.mubr.f32.mxu0 0.0
        %v2211 = vand.u32 %v2142, 4294901760
        %v2212 = vsub.f32 %v2142, %v2211
        %v2213 = vand.u32 %v2212, 4294901760
        %v2214 = vsub.f32 %v2212, %v2213
        %v2215 = vand.u32 %v2214, 4294901760
        %2216 = vmatmul.mubr.f32.gmra.mrb[0].mxu0 %v2215
        %v2217 = vpop.f32.mrb[0].mxu0
        %v2218 = vadd.f32 %v2137, %v2217
        %v2219 = vpop.f32.mrb[0].mxu0
        %v2220 = vadd.f32 %v2139, %v2219
        %2221 = vdwg.mxu0
        %v2222 = vand.u32 %v944, 4294901760
        %v2223 = vsub.f32 %v944, %v2222
        %v2224 = vand.u32 %v2223, 4294901760
        %v2225 = vsub.f32 %v2223, %v2224
        %v2226 = vand.u32 %v2225, 4294901760
        %2227 = vmatprep.subr.mxu0 %v2226
        %v2228 = vand.u32 %v943, 4294901760
        %v2229 = vsub.f32 %v943, %v2228
        %v2230 = vand.u32 %v2229, 4294901760
        %v2231 = vsub.f32 %v2229, %v2230
        %v2232 = vand.u32 %v2231, 4294901760
        %2233 = vmatpush1.msra.mxu0 %v2232
        %2234 = vmatprep.subr.mxu0 0.0
        %2235 = vmatpush1.msra.mxu0 0.0
        %2236 = vmatprep.subr.mxu0 0.0
        %2237 = vmatpush1.msra.mxu0 0.0
        %2238 = vmatprep.subr.mxu0 0.0
        %2239 = vmatpush1.msra.mxu0 0.0
        %2240 = vmatprep.subr.mxu0 0.0
        %2241 = vmatpush1.msra.mxu0 0.0
        %2242 = vmatprep.subr.mxu0 0.0
        %2243 = vmatpush1.msra.mxu0 0.0
        %2244 = vmatprep.subr.mxu0 0.0
        %2245 = vmatpush1.msra.mxu0 0.0
        %2246 = vmatprep.subr.mxu0 0.0
        %2247 = vmatpush1.msra.mxu0 0.0
        %2248 = vmatprep.subr.mxu0 0.0
        %2249 = vmatpush1.msra.mxu0 0.0
        %2250 = vmatprep.subr.mxu0 0.0
        %2251 = vmatpush1.msra.mxu0 0.0
        %2252 = vmatprep.subr.mxu0 0.0
        %2253 = vmatpush1.msra.mxu0 0.0
        %2254 = vmatprep.subr.mxu0 0.0
        %2255 = vmatpush1.msra.mxu0 0.0
        %2256 = vmatprep.subr.mxu0 0.0
        %2257 = vmatpush1.msra.mxu0 0.0
        %2258 = vmatprep.subr.mxu0 0.0
        %2259 = vmatpush1.msra.mxu0 0.0
        %2260 = vmatprep.subr.mxu0 0.0
        %2261 = vmatpush1.msra.mxu0 0.0
        %2262 = vmatprep.subr.mxu0 0.0
        %2263 = vmatpush1.msra.mxu0 0.0
        %2264 = vmatprep.subr.mxu0 0.0
        %2265 = vmatpush1.msra.mxu0 0.0
        %2266 = vmatprep.subr.mxu0 0.0
        %2267 = vmatpush1.msra.mxu0 0.0
        %2268 = vmatprep.subr.mxu0 0.0
        %2269 = vmatpush1.msra.mxu0 0.0
        %2270 = vmatprep.subr.mxu0 0.0
        %2271 = vmatpush1.msra.mxu0 0.0
        %2272 = vmatprep.subr.mxu0 0.0
        %2273 = vmatpush1.msra.mxu0 0.0
        %2274 = vmatprep.subr.mxu0 0.0
        %2275 = vmatpush1.msra.mxu0 0.0
        %2276 = vmatprep.subr.mxu0 0.0
        %2277 = vmatpush1.msra.mxu0 0.0
        %2278 = vmatprep.subr.mxu0 0.0
        %2279 = vmatpush1.msra.mxu0 0.0
        %2280 = vmatprep.subr.mxu0 0.0
        %2281 = vmatpush1.msra.mxu0 0.0
        %2282 = vmatprep.subr.mxu0 0.0
        %2283 = vmatpush1.msra.mxu0 0.0
        %2284 = vmatprep.subr.mxu0 0.0
        %2285 = vmatpush1.msra.mxu0 0.0
        %2286 = vmatprep.subr.mxu0 0.0
        %2287 = vmatpush1.msra.mxu0 0.0
        %2288 = vmatprep.subr.mxu0 0.0
        %2289 = vmatpush1.msra.mxu0 0.0
        %2290 = vmatprep.subr.mxu0 0.0
        %2291 = vmatpush1.msra.mxu0 0.0
        %2292 = vmatprep.subr.mxu0 0.0
        %2293 = vmatpush1.msra.mxu0 0.0
        %2294 = vmatprep.subr.mxu0 0.0
        %2295 = vmatpush1.msra.mxu0 0.0
        %2296 = vmatprep.mubr.f32.mxu0 0.0
        %v2297 = vand.u32 %v2142, 4294901760
        %2298 = vmatmul.mubr.f32.gmra.mrb[0].mxu0 %v2297
        %v2299 = vpop.f32.mrb[0].mxu0
        %v2300 = vadd.f32 %v2218, %v2299
        %v2301 = vpop.f32.mrb[0].mxu0
        %v2302 = vadd.f32 %v2220, %v2301
        %2303 = vdwg.mxu0
        %v2304 = vand.u32 %v944, 4294901760
        %v2305 = vsub.f32 %v944, %v2304
        %2306 = vmatprep.subr.mxu0 %v2305
        %v2307 = vand.u32 %v943, 4294901760
        %v2308 = vsub.f32 %v943, %v2307
        %2309 = vmatpush1.msra.mxu0 %v2308
        %2310 = vmatprep.subr.mxu0 0.0
        %2311 = vmatpush1.msra.mxu0 0.0
        %2312 = vmatprep.subr.mxu0 0.0
        %2313 = vmatpush1.msra.mxu0 0.0
        %2314 = vmatprep.subr.mxu0 0.0
        %2315 = vmatpush1.msra.mxu0 0.0
        %2316 = vmatprep.subr.mxu0 0.0
        %2317 = vmatpush1.msra.mxu0 0.0
        %2318 = vmatprep.subr.mxu0 0.0
        %2319 = vmatpush1.msra.mxu0 0.0
        %2320 = vmatprep.subr.mxu0 0.0
        %2321 = vmatpush1.msra.mxu0 0.0
        %2322 = vmatprep.subr.mxu0 0.0
        %2323 = vmatpush1.msra.mxu0 0.0
        %2324 = vmatprep.subr.mxu0 0.0
        %2325 = vmatpush1.msra.mxu0 0.0
        %2326 = vmatprep.subr.mxu0 0.0
        %2327 = vmatpush1.msra.mxu0 0.0
        %2328 = vmatprep.subr.mxu0 0.0
        %2329 = vmatpush1.msra.mxu0 0.0
        %2330 = vmatprep.subr.mxu0 0.0
        %2331 = vmatpush1.msra.mxu0 0.0
        %2332 = vmatprep.subr.mxu0 0.0
        %2333 = vmatpush1.msra.mxu0 0.0
        %2334 = vmatprep.subr.mxu0 0.0
        %2335 = vmatpush1.msra.mxu0 0.0
        %2336 = vmatprep.subr.mxu0 0.0
        %2337 = vmatpush1.msra.mxu0 0.0
        %2338 = vmatprep.subr.mxu0 0.0
        %2339 = vmatpush1.msra.mxu0 0.0
        %2340 = vmatprep.subr.mxu0 0.0
        %2341 = vmatpush1.msra.mxu0 0.0
        %2342 = vmatprep.subr.mxu0 0.0
        %2343 = vmatpush1.msra.mxu0 0.0
        %2344 = vmatprep.subr.mxu0 0.0
        %2345 = vmatpush1.msra.mxu0 0.0
        %2346 = vmatprep.subr.mxu0 0.0
        %2347 = vmatpush1.msra.mxu0 0.0
        %2348 = vmatprep.subr.mxu0 0.0
        %2349 = vmatpush1.msra.mxu0 0.0
        %2350 = vmatprep.subr.mxu0 0.0
        %2351 = vmatpush1.msra.mxu0 0.0
        %2352 = vmatprep.subr.mxu0 0.0
        %2353 = vmatpush1.msra.mxu0 0.0
        %2354 = vmatprep.subr.mxu0 0.0
        %2355 = vmatpush1.msra.mxu0 0.0
        %2356 = vmatprep.subr.mxu0 0.0
        %2357 = vmatpush1.msra.mxu0 0.0
        %2358 = vmatprep.subr.mxu0 0.0
        %2359 = vmatpush1.msra.mxu0 0.0
        %2360 = vmatprep.subr.mxu0 0.0
        %2361 = vmatpush1.msra.mxu0 0.0
        %2362 = vmatprep.subr.mxu0 0.0
        %2363 = vmatpush1.msra.mxu0 0.0
        %2364 = vmatprep.subr.mxu0 0.0
        %2365 = vmatpush1.msra.mxu0 0.0
        %2366 = vmatprep.subr.mxu0 0.0
        %2367 = vmatpush1.msra.mxu0 0.0
        %2368 = vmatprep.subr.mxu0 0.0
        %2369 = vmatpush1.msra.mxu0 0.0
        %2370 = vmatprep.subr.mxu0 0.0
        %2371 = vmatpush1.msra.mxu0 0.0
        %2372 = vmatprep.mubr.f32.mxu0 0.0
        %v2373 = vand.u32 %v2142, 4294901760
        %v2374 = vsub.f32 %v2142, %v2373
        %2375 = vmatmul.mubr.f32.gmra.mrb[0].mxu0 %v2374
        %v2376 = vpop.f32.mrb[0].mxu0
        %v2377 = vadd.f32 %v2300, %v2376
        %v2378 = vpop.f32.mrb[0].mxu0
        %v2379 = vadd.f32 %v2302, %v2378
        %2380 = vdwg.mxu0
        %v2381 = vand.u32 %v944, 4294901760
        %2382 = vmatprep.subr.mxu0 %v2381
        %v2383 = vand.u32 %v943, 4294901760
        %2384 = vmatpush1.msra.mxu0 %v2383
        %2385 = vmatprep.subr.mxu0 0.0
        %2386 = vmatpush1.msra.mxu0 0.0
        %2387 = vmatprep.subr.mxu0 0.0
        %2388 = vmatpush1.msra.mxu0 0.0
        %2389 = vmatprep.subr.mxu0 0.0
        %2390 = vmatpush1.msra.mxu0 0.0
        %2391 = vmatprep.subr.mxu0 0.0
        %2392 = vmatpush1.msra.mxu0 0.0
        %2393 = vmatprep.subr.mxu0 0.0
        %2394 = vmatpush1.msra.mxu0 0.0
        %2395 = vmatprep.subr.mxu0 0.0
        %2396 = vmatpush1.msra.mxu0 0.0
        %2397 = vmatprep.subr.mxu0 0.0
        %2398 = vmatpush1.msra.mxu0 0.0
        %2399 = vmatprep.subr.mxu0 0.0
        %2400 = vmatpush1.msra.mxu0 0.0
        %2401 = vmatprep.subr.mxu0 0.0
        %2402 = vmatpush1.msra.mxu0 0.0
        %2403 = vmatprep.subr.mxu0 0.0
        %2404 = vmatpush1.msra.mxu0 0.0
        %2405 = vmatprep.subr.mxu0 0.0
        %2406 = vmatpush1.msra.mxu0 0.0
        %2407 = vmatprep.subr.mxu0 0.0
        %2408 = vmatpush1.msra.mxu0 0.0
        %2409 = vmatprep.subr.mxu0 0.0
        %2410 = vmatpush1.msra.mxu0 0.0
        %2411 = vmatprep.subr.mxu0 0.0
        %2412 = vmatpush1.msra.mxu0 0.0
        %2413 = vmatprep.subr.mxu0 0.0
        %2414 = vmatpush1.msra.mxu0 0.0
        %2415 = vmatprep.subr.mxu0 0.0
        %2416 = vmatpush1.msra.mxu0 0.0
        %2417 = vmatprep.subr.mxu0 0.0
        %2418 = vmatpush1.msra.mxu0 0.0
        %2419 = vmatprep.subr.mxu0 0.0
        %2420 = vmatpush1.msra.mxu0 0.0
        %2421 = vmatprep.subr.mxu0 0.0
        %2422 = vmatpush1.msra.mxu0 0.0
        %2423 = vmatprep.subr.mxu0 0.0
        %2424 = vmatpush1.msra.mxu0 0.0
        %2425 = vmatprep.subr.mxu0 0.0
        %2426 = vmatpush1.msra.mxu0 0.0
        %2427 = vmatprep.subr.mxu0 0.0
        %2428 = vmatpush1.msra.mxu0 0.0
        %2429 = vmatprep.subr.mxu0 0.0
        %2430 = vmatpush1.msra.mxu0 0.0
        %2431 = vmatprep.subr.mxu0 0.0
        %2432 = vmatpush1.msra.mxu0 0.0
        %2433 = vmatprep.subr.mxu0 0.0
        %2434 = vmatpush1.msra.mxu0 0.0
        %2435 = vmatprep.subr.mxu0 0.0
        %2436 = vmatpush1.msra.mxu0 0.0
        %2437 = vmatprep.subr.mxu0 0.0
        %2438 = vmatpush1.msra.mxu0 0.0
        %2439 = vmatprep.subr.mxu0 0.0
        %2440 = vmatpush1.msra.mxu0 0.0
        %2441 = vmatprep.subr.mxu0 0.0
        %2442 = vmatpush1.msra.mxu0 0.0
        %2443 = vmatprep.subr.mxu0 0.0
        %2444 = vmatpush1.msra.mxu0 0.0
        %2445 = vmatprep.subr.mxu0 0.0
        %2446 = vmatpush1.msra.mxu0 0.0
        %2447 = vmatprep.mubr.f32.mxu0 0.0
        %v2448 = vand.u32 %v2142, 4294901760
        %v2449 = vsub.f32 %v2142, %v2448
        %v2450 = vand.u32 %v2449, 4294901760
        %2451 = vmatmul.mubr.f32.gmra.mrb[0].mxu0 %v2450
        %v2452 = vpop.f32.mrb[0].mxu0
        %v2453 = vadd.f32 %v2377, %v2452
        %v2454 = vpop.f32.mrb[0].mxu0
        %v2455 = vadd.f32 %v2379, %v2454
        %2456 = vdwg.mxu0
        %v2457 = vand.u32 %v944, 4294901760
        %v2458 = vsub.f32 %v944, %v2457
        %v2459 = vand.u32 %v2458, 4294901760
        %2460 = vmatprep.subr.mxu0 %v2459
        %v2461 = vand.u32 %v943, 4294901760
        %v2462 = vsub.f32 %v943, %v2461
        %v2463 = vand.u32 %v2462, 4294901760
        %2464 = vmatpush1.msra.mxu0 %v2463
        %2465 = vmatprep.subr.mxu0 0.0
        %2466 = vmatpush1.msra.mxu0 0.0
        %2467 = vmatprep.subr.mxu0 0.0
        %2468 = vmatpush1.msra.mxu0 0.0
        %2469 = vmatprep.subr.mxu0 0.0
        %2470 = vmatpush1.msra.mxu0 0.0
        %2471 = vmatprep.subr.mxu0 0.0
        %2472 = vmatpush1.msra.mxu0 0.0
        %2473 = vmatprep.subr.mxu0 0.0
        %2474 = vmatpush1.msra.mxu0 0.0
        %2475 = vmatprep.subr.mxu0 0.0
        %2476 = vmatpush1.msra.mxu0 0.0
        %2477 = vmatprep.subr.mxu0 0.0
        %2478 = vmatpush1.msra.mxu0 0.0
        %2479 = vmatprep.subr.mxu0 0.0
        %2480 = vmatpush1.msra.mxu0 0.0
        %2481 = vmatprep.subr.mxu0 0.0
        %2482 = vmatpush1.msra.mxu0 0.0
        %2483 = vmatprep.subr.mxu0 0.0
        %2484 = vmatpush1.msra.mxu0 0.0
        %2485 = vmatprep.subr.mxu0 0.0
        %2486 = vmatpush1.msra.mxu0 0.0
        %2487 = vmatprep.subr.mxu0 0.0
        %2488 = vmatpush1.msra.mxu0 0.0
        %2489 = vmatprep.subr.mxu0 0.0
        %2490 = vmatpush1.msra.mxu0 0.0
        %2491 = vmatprep.subr.mxu0 0.0
        %2492 = vmatpush1.msra.mxu0 0.0
        %2493 = vmatprep.subr.mxu0 0.0
        %2494 = vmatpush1.msra.mxu0 0.0
        %2495 = vmatprep.subr.mxu0 0.0
        %2496 = vmatpush1.msra.mxu0 0.0
        %2497 = vmatprep.subr.mxu0 0.0
        %2498 = vmatpush1.msra.mxu0 0.0
        %2499 = vmatprep.subr.mxu0 0.0
        %2500 = vmatpush1.msra.mxu0 0.0
        %2501 = vmatprep.subr.mxu0 0.0
        %2502 = vmatpush1.msra.mxu0 0.0
        %2503 = vmatprep.subr.mxu0 0.0
        %2504 = vmatpush1.msra.mxu0 0.0
        %2505 = vmatprep.subr.mxu0 0.0
        %2506 = vmatpush1.msra.mxu0 0.0
        %2507 = vmatprep.subr.mxu0 0.0
        %2508 = vmatpush1.msra.mxu0 0.0
        %2509 = vmatprep.subr.mxu0 0.0
        %2510 = vmatpush1.msra.mxu0 0.0
        %2511 = vmatprep.subr.mxu0 0.0
        %2512 = vmatpush1.msra.mxu0 0.0
        %2513 = vmatprep.subr.mxu0 0.0
        %2514 = vmatpush1.msra.mxu0 0.0
        %2515 = vmatprep.subr.mxu0 0.0
        %2516 = vmatpush1.msra.mxu0 0.0
        %2517 = vmatprep.subr.mxu0 0.0
        %2518 = vmatpush1.msra.mxu0 0.0
        %2519 = vmatprep.subr.mxu0 0.0
        %2520 = vmatpush1.msra.mxu0 0.0
        %2521 = vmatprep.subr.mxu0 0.0
        %2522 = vmatpush1.msra.mxu0 0.0
        %2523 = vmatprep.subr.mxu0 0.0
        %2524 = vmatpush1.msra.mxu0 0.0
        %2525 = vmatprep.subr.mxu0 0.0
        %2526 = vmatpush1.msra.mxu0 0.0
        %2527 = vmatprep.mubr.f32.mxu0 0.0
        %v2528 = vand.u32 %v2142, 4294901760
        %2529 = vmatmul.mubr.f32.gmra.mrb[0].mxu0 %v2528
        %v2530 = vpop.f32.mrb[0].mxu0
        %v2531 = vadd.f32 %v2453, %v2530
        %v2532 = vpop.f32.mrb[0].mxu0
        %v2533 = vadd.f32 %v2455, %v2532
        %2534 = vdwg.mxu0
        %v2535 = vand.u32 %v944, 4294901760
        %2536 = vmatprep.subr.mxu0 %v2535
        %v2537 = vand.u32 %v943, 4294901760
        %2538 = vmatpush1.msra.mxu0 %v2537
        %2539 = vmatprep.subr.mxu0 0.0
        %2540 = vmatpush1.msra.mxu0 0.0
        %2541 = vmatprep.subr.mxu0 0.0
        %2542 = vmatpush1.msra.mxu0 0.0
        %2543 = vmatprep.subr.mxu0 0.0
        %2544 = vmatpush1.msra.mxu0 0.0
        %2545 = vmatprep.subr.mxu0 0.0
        %2546 = vmatpush1.msra.mxu0 0.0
        %2547 = vmatprep.subr.mxu0 0.0
        %2548 = vmatpush1.msra.mxu0 0.0
        %2549 = vmatprep.subr.mxu0 0.0
        %2550 = vmatpush1.msra.mxu0 0.0
        %2551 = vmatprep.subr.mxu0 0.0
        %2552 = vmatpush1.msra.mxu0 0.0
        %2553 = vmatprep.subr.mxu0 0.0
        %2554 = vmatpush1.msra.mxu0 0.0
        %2555 = vmatprep.subr.mxu0 0.0
        %2556 = vmatpush1.msra.mxu0 0.0
        %2557 = vmatprep.subr.mxu0 0.0
        %2558 = vmatpush1.msra.mxu0 0.0
        %2559 = vmatprep.subr.mxu0 0.0
        %2560 = vmatpush1.msra.mxu0 0.0
        %2561 = vmatprep.subr.mxu0 0.0
        %2562 = vmatpush1.msra.mxu0 0.0
        %2563 = vmatprep.subr.mxu0 0.0
        %2564 = vmatpush1.msra.mxu0 0.0
        %2565 = vmatprep.subr.mxu0 0.0
        %2566 = vmatpush1.msra.mxu0 0.0
        %2567 = vmatprep.subr.mxu0 0.0
        %2568 = vmatpush1.msra.mxu0 0.0
        %2569 = vmatprep.subr.mxu0 0.0
        %2570 = vmatpush1.msra.mxu0 0.0
        %2571 = vmatprep.subr.mxu0 0.0
        %2572 = vmatpush1.msra.mxu0 0.0
        %2573 = vmatprep.subr.mxu0 0.0
        %2574 = vmatpush1.msra.mxu0 0.0
        %2575 = vmatprep.subr.mxu0 0.0
        %2576 = vmatpush1.msra.mxu0 0.0
        %2577 = vmatprep.subr.mxu0 0.0
        %2578 = vmatpush1.msra.mxu0 0.0
        %2579 = vmatprep.subr.mxu0 0.0
        %2580 = vmatpush1.msra.mxu0 0.0
        %2581 = vmatprep.subr.mxu0 0.0
        %2582 = vmatpush1.msra.mxu0 0.0
        %2583 = vmatprep.subr.mxu0 0.0
        %2584 = vmatpush1.msra.mxu0 0.0
        %2585 = vmatprep.subr.mxu0 0.0
        %2586 = vmatpush1.msra.mxu0 0.0
        %2587 = vmatprep.subr.mxu0 0.0
        %2588 = vmatpush1.msra.mxu0 0.0
        %2589 = vmatprep.subr.mxu0 0.0
        %2590 = vmatpush1.msra.mxu0 0.0
        %2591 = vmatprep.subr.mxu0 0.0
        %2592 = vmatpush1.msra.mxu0 0.0
        %2593 = vmatprep.subr.mxu0 0.0
        %2594 = vmatpush1.msra.mxu0 0.0
        %2595 = vmatprep.subr.mxu0 0.0
        %2596 = vmatpush1.msra.mxu0 0.0
        %2597 = vmatprep.subr.mxu0 0.0
        %2598 = vmatpush1.msra.mxu0 0.0
        %2599 = vmatprep.subr.mxu0 0.0
        %2600 = vmatpush1.msra.mxu0 0.0
        %2601 = vmatprep.mubr.f32.mxu0 0.0
        %v2602 = vand.u32 %v2142, 4294901760
        %2603 = vmatmul.mubr.f32.gmra.mrb[0].mxu0 %v2602
        %v2604 = vpop.f32.mrb[0].mxu0
        %v2605 = vadd.f32 %v2531, %v2604
        %v2606 = vpop.f32.mrb[0].mxu0
        %v2607 = vadd.f32 %v2533, %v2606
        %2608 = vdwg.mxu0
        %s2609 = scalar_lea.vmem %s5, 16
        %v2610 = vld [vmem:[%s2609] sm:$0xff]
        %v2612 = vsel %vm1672, %v2610, 0
        %v2614 = vand.u32 %v1668, 4294901760
        %2615 = vmatprep.subr.mxu0 %v2614
        %v2616 = vand.u32 %v1667, 4294901760
        %2617 = vmatpush1.msra.mxu0 %v2616
        %2618 = vmatprep.subr.mxu0 0.0
        %2619 = vmatpush1.msra.mxu0 0.0
        %2620 = vmatprep.subr.mxu0 0.0
        %2621 = vmatpush1.msra.mxu0 0.0
        %2622 = vmatprep.subr.mxu0 0.0
        %2623 = vmatpush1.msra.mxu0 0.0
        %2624 = vmatprep.subr.mxu0 0.0
        %2625 = vmatpush1.msra.mxu0 0.0
        %2626 = vmatprep.subr.mxu0 0.0
        %2627 = vmatpush1.msra.mxu0 0.0
        %2628 = vmatprep.subr.mxu0 0.0
        %2629 = vmatpush1.msra.mxu0 0.0
        %2630 = vmatprep.subr.mxu0 0.0
        %2631 = vmatpush1.msra.mxu0 0.0
        %2632 = vmatprep.subr.mxu0 0.0
        %2633 = vmatpush1.msra.mxu0 0.0
        %2634 = vmatprep.subr.mxu0 0.0
        %2635 = vmatpush1.msra.mxu0 0.0
        %2636 = vmatprep.subr.mxu0 0.0
        %2637 = vmatpush1.msra.mxu0 0.0
        %2638 = vmatprep.subr.mxu0 0.0
        %2639 = vmatpush1.msra.mxu0 0.0
        %2640 = vmatprep.subr.mxu0 0.0
        %2641 = vmatpush1.msra.mxu0 0.0
        %2642 = vmatprep.subr.mxu0 0.0
        %2643 = vmatpush1.msra.mxu0 0.0
        %2644 = vmatprep.subr.mxu0 0.0
        %2645 = vmatpush1.msra.mxu0 0.0
        %2646 = vmatprep.subr.mxu0 0.0
        %2647 = vmatpush1.msra.mxu0 0.0
        %2648 = vmatprep.subr.mxu0 0.0
        %2649 = vmatpush1.msra.mxu0 0.0
        %2650 = vmatprep.subr.mxu0 0.0
        %2651 = vmatpush1.msra.mxu0 0.0
        %2652 = vmatprep.subr.mxu0 0.0
        %2653 = vmatpush1.msra.mxu0 0.0
        %2654 = vmatprep.subr.mxu0 0.0
        %2655 = vmatpush1.msra.mxu0 0.0
        %2656 = vmatprep.subr.mxu0 0.0
        %2657 = vmatpush1.msra.mxu0 0.0
        %2658 = vmatprep.subr.mxu0 0.0
        %2659 = vmatpush1.msra.mxu0 0.0
        %2660 = vmatprep.subr.mxu0 0.0
        %2661 = vmatpush1.msra.mxu0 0.0
        %2662 = vmatprep.subr.mxu0 0.0
        %2663 = vmatpush1.msra.mxu0 0.0
        %2664 = vmatprep.subr.mxu0 0.0
        %2665 = vmatpush1.msra.mxu0 0.0
        %2666 = vmatprep.subr.mxu0 0.0
        %2667 = vmatpush1.msra.mxu0 0.0
        %2668 = vmatprep.subr.mxu0 0.0
        %2669 = vmatpush1.msra.mxu0 0.0
        %2670 = vmatprep.subr.mxu0 0.0
        %2671 = vmatpush1.msra.mxu0 0.0
        %2672 = vmatprep.subr.mxu0 0.0
        %2673 = vmatpush1.msra.mxu0 0.0
        %2674 = vmatprep.subr.mxu0 0.0
        %2675 = vmatpush1.msra.mxu0 0.0
        %2676 = vmatprep.subr.mxu0 0.0
        %2677 = vmatpush1.msra.mxu0 0.0
        %2678 = vmatprep.subr.mxu0 0.0
        %2679 = vmatpush1.msra.mxu0 0.0
        %2680 = vmatprep.mubr.f32.mxu0 0.0
        %v2681 = vand.u32 %v2612, 4294901760
        %v2682 = vsub.f32 %v2612, %v2681
        %v2683 = vand.u32 %v2682, 4294901760
        %v2684 = vsub.f32 %v2682, %v2683
        %v2685 = vand.u32 %v2684, 4294901760
        %2686 = vmatmul.mubr.f32.gmra.mrb[0].mxu0 %v2685
        %v2687 = vpop.f32.mrb[0].mxu0
        %v2688 = vadd.f32 0.0, %v2687
        %v2689 = vpop.f32.mrb[0].mxu0
        %v2690 = vadd.f32 0.0, %v2689
        %2691 = vdwg.mxu0
        %v2692 = vand.u32 %v1668, 4294901760
        %v2693 = vsub.f32 %v1668, %v2692
        %v2694 = vand.u32 %v2693, 4294901760
        %v2695 = vsub.f32 %v2693, %v2694
        %v2696 = vand.u32 %v2695, 4294901760
        %2697 = vmatprep.subr.mxu0 %v2696
        %v2698 = vand.u32 %v1667, 4294901760
        %v2699 = vsub.f32 %v1667, %v2698
        %v2700 = vand.u32 %v2699, 4294901760
        %v2701 = vsub.f32 %v2699, %v2700
        %v2702 = vand.u32 %v2701, 4294901760
        %2703 = vmatpush1.msra.mxu0 %v2702
        %2704 = vmatprep.subr.mxu0 0.0
        %2705 = vmatpush1.msra.mxu0 0.0
        %2706 = vmatprep.subr.mxu0 0.0
        %2707 = vmatpush1.msra.mxu0 0.0
        %2708 = vmatprep.subr.mxu0 0.0
        %2709 = vmatpush1.msra.mxu0 0.0
        %2710 = vmatprep.subr.mxu0 0.0
        %2711 = vmatpush1.msra.mxu0 0.0
        %2712 = vmatprep.subr.mxu0 0.0
        %2713 = vmatpush1.msra.mxu0 0.0
        %2714 = vmatprep.subr.mxu0 0.0
        %2715 = vmatpush1.msra.mxu0 0.0
        %2716 = vmatprep.subr.mxu0 0.0
        %2717 = vmatpush1.msra.mxu0 0.0
        %2718 = vmatprep.subr.mxu0 0.0
        %2719 = vmatpush1.msra.mxu0 0.0
        %2720 = vmatprep.subr.mxu0 0.0
        %2721 = vmatpush1.msra.mxu0 0.0
        %2722 = vmatprep.subr.mxu0 0.0
        %2723 = vmatpush1.msra.mxu0 0.0
        %2724 = vmatprep.subr.mxu0 0.0
        %2725 = vmatpush1.msra.mxu0 0.0
        %2726 = vmatprep.subr.mxu0 0.0
        %2727 = vmatpush1.msra.mxu0 0.0
        %2728 = vmatprep.subr.mxu0 0.0
        %2729 = vmatpush1.msra.mxu0 0.0
        %2730 = vmatprep.subr.mxu0 0.0
        %2731 = vmatpush1.msra.mxu0 0.0
        %2732 = vmatprep.subr.mxu0 0.0
        %2733 = vmatpush1.msra.mxu0 0.0
        %2734 = vmatprep.subr.mxu0 0.0
        %2735 = vmatpush1.msra.mxu0 0.0
        %2736 = vmatprep.subr.mxu0 0.0
        %2737 = vmatpush1.msra.mxu0 0.0
        %2738 = vmatprep.subr.mxu0 0.0
        %2739 = vmatpush1.msra.mxu0 0.0
        %2740 = vmatprep.subr.mxu0 0.0
        %2741 = vmatpush1.msra.mxu0 0.0
        %2742 = vmatprep.subr.mxu0 0.0
        %2743 = vmatpush1.msra.mxu0 0.0
        %2744 = vmatprep.subr.mxu0 0.0
        %2745 = vmatpush1.msra.mxu0 0.0
        %2746 = vmatprep.subr.mxu0 0.0
        %2747 = vmatpush1.msra.mxu0 0.0
        %2748 = vmatprep.subr.mxu0 0.0
        %2749 = vmatpush1.msra.mxu0 0.0
        %2750 = vmatprep.subr.mxu0 0.0
        %2751 = vmatpush1.msra.mxu0 0.0
        %2752 = vmatprep.subr.mxu0 0.0
        %2753 = vmatpush1.msra.mxu0 0.0
        %2754 = vmatprep.subr.mxu0 0.0
        %2755 = vmatpush1.msra.mxu0 0.0
        %2756 = vmatprep.subr.mxu0 0.0
        %2757 = vmatpush1.msra.mxu0 0.0
        %2758 = vmatprep.subr.mxu0 0.0
        %2759 = vmatpush1.msra.mxu0 0.0
        %2760 = vmatprep.subr.mxu0 0.0
        %2761 = vmatpush1.msra.mxu0 0.0
        %2762 = vmatprep.subr.mxu0 0.0
        %2763 = vmatpush1.msra.mxu0 0.0
        %2764 = vmatprep.subr.mxu0 0.0
        %2765 = vmatpush1.msra.mxu0 0.0
        %2766 = vmatprep.mubr.f32.mxu0 0.0
        %v2767 = vand.u32 %v2612, 4294901760
        %2768 = vmatmul.mubr.f32.gmra.mrb[0].mxu0 %v2767
        %v2769 = vpop.f32.mrb[0].mxu0
        %v2770 = vadd.f32 %v2688, %v2769
        %v2771 = vpop.f32.mrb[0].mxu0
        %v2772 = vadd.f32 %v2690, %v2771
        %2773 = vdwg.mxu0
        %v2774 = vand.u32 %v1668, 4294901760
        %v2775 = vsub.f32 %v1668, %v2774
        %2776 = vmatprep.subr.mxu0 %v2775
        %v2777 = vand.u32 %v1667, 4294901760
        %v2778 = vsub.f32 %v1667, %v2777
        %2779 = vmatpush1.msra.mxu0 %v2778
        %2780 = vmatprep.subr.mxu0 0.0
        %2781 = vmatpush1.msra.mxu0 0.0
        %2782 = vmatprep.subr.mxu0 0.0
        %2783 = vmatpush1.msra.mxu0 0.0
        %2784 = vmatprep.subr.mxu0 0.0
        %2785 = vmatpush1.msra.mxu0 0.0
        %2786 = vmatprep.subr.mxu0 0.0
        %2787 = vmatpush1.msra.mxu0 0.0
        %2788 = vmatprep.subr.mxu0 0.0
        %2789 = vmatpush1.msra.mxu0 0.0
        %2790 = vmatprep.subr.mxu0 0.0
        %2791 = vmatpush1.msra.mxu0 0.0
        %2792 = vmatprep.subr.mxu0 0.0
        %2793 = vmatpush1.msra.mxu0 0.0
        %2794 = vmatprep.subr.mxu0 0.0
        %2795 = vmatpush1.msra.mxu0 0.0
        %2796 = vmatprep.subr.mxu0 0.0
        %2797 = vmatpush1.msra.mxu0 0.0
        %2798 = vmatprep.subr.mxu0 0.0
        %2799 = vmatpush1.msra.mxu0 0.0
        %2800 = vmatprep.subr.mxu0 0.0
        %2801 = vmatpush1.msra.mxu0 0.0
        %2802 = vmatprep.subr.mxu0 0.0
        %2803 = vmatpush1.msra.mxu0 0.0
        %2804 = vmatprep.subr.mxu0 0.0
        %2805 = vmatpush1.msra.mxu0 0.0
        %2806 = vmatprep.subr.mxu0 0.0
        %2807 = vmatpush1.msra.mxu0 0.0
        %2808 = vmatprep.subr.mxu0 0.0
        %2809 = vmatpush1.msra.mxu0 0.0
        %2810 = vmatprep.subr.mxu0 0.0
        %2811 = vmatpush1.msra.mxu0 0.0
        %2812 = vmatprep.subr.mxu0 0.0
        %2813 = vmatpush1.msra.mxu0 0.0
        %2814 = vmatprep.subr.mxu0 0.0
        %2815 = vmatpush1.msra.mxu0 0.0
        %2816 = vmatprep.subr.mxu0 0.0
        %2817 = vmatpush1.msra.mxu0 0.0
        %2818 = vmatprep.subr.mxu0 0.0
        %2819 = vmatpush1.msra.mxu0 0.0
        %2820 = vmatprep.subr.mxu0 0.0
        %2821 = vmatpush1.msra.mxu0 0.0
        %2822 = vmatprep.subr.mxu0 0.0
        %2823 = vmatpush1.msra.mxu0 0.0
        %2824 = vmatprep.subr.mxu0 0.0
        %2825 = vmatpush1.msra.mxu0 0.0
        %2826 = vmatprep.subr.mxu0 0.0
        %2827 = vmatpush1.msra.mxu0 0.0
        %2828 = vmatprep.subr.mxu0 0.0
        %2829 = vmatpush1.msra.mxu0 0.0
        %2830 = vmatprep.subr.mxu0 0.0
        %2831 = vmatpush1.msra.mxu0 0.0
        %2832 = vmatprep.subr.mxu0 0.0
        %2833 = vmatpush1.msra.mxu0 0.0
        %2834 = vmatprep.subr.mxu0 0.0
        %2835 = vmatpush1.msra.mxu0 0.0
        %2836 = vmatprep.subr.mxu0 0.0
        %2837 = vmatpush1.msra.mxu0 0.0
        %2838 = vmatprep.subr.mxu0 0.0
        %2839 = vmatpush1.msra.mxu0 0.0
        %2840 = vmatprep.subr.mxu0 0.0
        %2841 = vmatpush1.msra.mxu0 0.0
        %2842 = vmatprep.mubr.f32.mxu0 0.0
        %v2843 = vand.u32 %v2612, 4294901760
        %v2844 = vsub.f32 %v2612, %v2843
        %2845 = vmatmul.mubr.f32.gmra.mrb[0].mxu0 %v2844
        %v2846 = vpop.f32.mrb[0].mxu0
        %v2847 = vadd.f32 %v2770, %v2846
        %v2848 = vpop.f32.mrb[0].mxu0
        %v2849 = vadd.f32 %v2772, %v2848
        %2850 = vdwg.mxu0
        %v2851 = vand.u32 %v1668, 4294901760
        %2852 = vmatprep.subr.mxu0 %v2851
        %v2853 = vand.u32 %v1667, 4294901760
        %2854 = vmatpush1.msra.mxu0 %v2853
        %2855 = vmatprep.subr.mxu0 0.0
        %2856 = vmatpush1.msra.mxu0 0.0
        %2857 = vmatprep.subr.mxu0 0.0
        %2858 = vmatpush1.msra.mxu0 0.0
        %2859 = vmatprep.subr.mxu0 0.0
        %2860 = vmatpush1.msra.mxu0 0.0
        %2861 = vmatprep.subr.mxu0 0.0
        %2862 = vmatpush1.msra.mxu0 0.0
        %2863 = vmatprep.subr.mxu0 0.0
        %2864 = vmatpush1.msra.mxu0 0.0
        %2865 = vmatprep.subr.mxu0 0.0
        %2866 = vmatpush1.msra.mxu0 0.0
        %2867 = vmatprep.subr.mxu0 0.0
        %2868 = vmatpush1.msra.mxu0 0.0
        %2869 = vmatprep.subr.mxu0 0.0
        %2870 = vmatpush1.msra.mxu0 0.0
        %2871 = vmatprep.subr.mxu0 0.0
        %2872 = vmatpush1.msra.mxu0 0.0
        %2873 = vmatprep.subr.mxu0 0.0
        %2874 = vmatpush1.msra.mxu0 0.0
        %2875 = vmatprep.subr.mxu0 0.0
        %2876 = vmatpush1.msra.mxu0 0.0
        %2877 = vmatprep.subr.mxu0 0.0
        %2878 = vmatpush1.msra.mxu0 0.0
        %2879 = vmatprep.subr.mxu0 0.0
        %2880 = vmatpush1.msra.mxu0 0.0
        %2881 = vmatprep.subr.mxu0 0.0
        %2882 = vmatpush1.msra.mxu0 0.0
        %2883 = vmatprep.subr.mxu0 0.0
        %2884 = vmatpush1.msra.mxu0 0.0
        %2885 = vmatprep.subr.mxu0 0.0
        %2886 = vmatpush1.msra.mxu0 0.0
        %2887 = vmatprep.subr.mxu0 0.0
        %2888 = vmatpush1.msra.mxu0 0.0
        %2889 = vmatprep.subr.mxu0 0.0
        %2890 = vmatpush1.msra.mxu0 0.0
        %2891 = vmatprep.subr.mxu0 0.0
        %2892 = vmatpush1.msra.mxu0 0.0
        %2893 = vmatprep.subr.mxu0 0.0
        %2894 = vmatpush1.msra.mxu0 0.0
        %2895 = vmatprep.subr.mxu0 0.0
        %2896 = vmatpush1.msra.mxu0 0.0
        %2897 = vmatprep.subr.mxu0 0.0
        %2898 = vmatpush1.msra.mxu0 0.0
        %2899 = vmatprep.subr.mxu0 0.0
        %2900 = vmatpush1.msra.mxu0 0.0
        %2901 = vmatprep.subr.mxu0 0.0
        %2902 = vmatpush1.msra.mxu0 0.0
        %2903 = vmatprep.subr.mxu0 0.0
        %2904 = vmatpush1.msra.mxu0 0.0
        %2905 = vmatprep.subr.mxu0 0.0
        %2906 = vmatpush1.msra.mxu0 0.0
        %2907 = vmatprep.subr.mxu0 0.0
        %2908 = vmatpush1.msra.mxu0 0.0
        %2909 = vmatprep.subr.mxu0 0.0
        %2910 = vmatpush1.msra.mxu0 0.0
        %2911 = vmatprep.subr.mxu0 0.0
        %2912 = vmatpush1.msra.mxu0 0.0
        %2913 = vmatprep.subr.mxu0 0.0
        %2914 = vmatpush1.msra.mxu0 0.0
        %2915 = vmatprep.subr.mxu0 0.0
        %2916 = vmatpush1.msra.mxu0 0.0
        %2917 = vmatprep.mubr.f32.mxu0 0.0
        %v2918 = vand.u32 %v2612, 4294901760
        %v2919 = vsub.f32 %v2612, %v2918
        %v2920 = vand.u32 %v2919, 4294901760
        %2921 = vmatmul.mubr.f32.gmra.mrb[0].mxu0 %v2920
        %v2922 = vpop.f32.mrb[0].mxu0
        %v2923 = vadd.f32 %v2847, %v2922
        %v2924 = vpop.f32.mrb[0].mxu0
        %v2925 = vadd.f32 %v2849, %v2924
        %2926 = vdwg.mxu0
        %v2927 = vand.u32 %v1668, 4294901760
        %v2928 = vsub.f32 %v1668, %v2927
        %v2929 = vand.u32 %v2928, 4294901760
        %2930 = vmatprep.subr.mxu0 %v2929
        %v2931 = vand.u32 %v1667, 4294901760
        %v2932 = vsub.f32 %v1667, %v2931
        %v2933 = vand.u32 %v2932, 4294901760
        %2934 = vmatpush1.msra.mxu0 %v2933
        %2935 = vmatprep.subr.mxu0 0.0
        %2936 = vmatpush1.msra.mxu0 0.0
        %2937 = vmatprep.subr.mxu0 0.0
        %2938 = vmatpush1.msra.mxu0 0.0
        %2939 = vmatprep.subr.mxu0 0.0
        %2940 = vmatpush1.msra.mxu0 0.0
        %2941 = vmatprep.subr.mxu0 0.0
        %2942 = vmatpush1.msra.mxu0 0.0
        %2943 = vmatprep.subr.mxu0 0.0
        %2944 = vmatpush1.msra.mxu0 0.0
        %2945 = vmatprep.subr.mxu0 0.0
        %2946 = vmatpush1.msra.mxu0 0.0
        %2947 = vmatprep.subr.mxu0 0.0
        %2948 = vmatpush1.msra.mxu0 0.0
        %2949 = vmatprep.subr.mxu0 0.0
        %2950 = vmatpush1.msra.mxu0 0.0
        %2951 = vmatprep.subr.mxu0 0.0
        %2952 = vmatpush1.msra.mxu0 0.0
        %2953 = vmatprep.subr.mxu0 0.0
        %2954 = vmatpush1.msra.mxu0 0.0
        %2955 = vmatprep.subr.mxu0 0.0
        %2956 = vmatpush1.msra.mxu0 0.0
        %2957 = vmatprep.subr.mxu0 0.0
        %2958 = vmatpush1.msra.mxu0 0.0
        %2959 = vmatprep.subr.mxu0 0.0
        %2960 = vmatpush1.msra.mxu0 0.0
        %2961 = vmatprep.subr.mxu0 0.0
        %2962 = vmatpush1.msra.mxu0 0.0
        %2963 = vmatprep.subr.mxu0 0.0
        %2964 = vmatpush1.msra.mxu0 0.0
        %2965 = vmatprep.subr.mxu0 0.0
        %2966 = vmatpush1.msra.mxu0 0.0
        %2967 = vmatprep.subr.mxu0 0.0
        %2968 = vmatpush1.msra.mxu0 0.0
        %2969 = vmatprep.subr.mxu0 0.0
        %2970 = vmatpush1.msra.mxu0 0.0
        %2971 = vmatprep.subr.mxu0 0.0
        %2972 = vmatpush1.msra.mxu0 0.0
        %2973 = vmatprep.subr.mxu0 0.0
        %2974 = vmatpush1.msra.mxu0 0.0
        %2975 = vmatprep.subr.mxu0 0.0
        %2976 = vmatpush1.msra.mxu0 0.0
        %2977 = vmatprep.subr.mxu0 0.0
        %2978 = vmatpush1.msra.mxu0 0.0
        %2979 = vmatprep.subr.mxu0 0.0
        %2980 = vmatpush1.msra.mxu0 0.0
        %2981 = vmatprep.subr.mxu0 0.0
        %2982 = vmatpush1.msra.mxu0 0.0
        %2983 = vmatprep.subr.mxu0 0.0
        %2984 = vmatpush1.msra.mxu0 0.0
        %2985 = vmatprep.subr.mxu0 0.0
        %2986 = vmatpush1.msra.mxu0 0.0
        %2987 = vmatprep.subr.mxu0 0.0
        %2988 = vmatpush1.msra.mxu0 0.0
        %2989 = vmatprep.subr.mxu0 0.0
        %2990 = vmatpush1.msra.mxu0 0.0
        %2991 = vmatprep.subr.mxu0 0.0
        %2992 = vmatpush1.msra.mxu0 0.0
        %2993 = vmatprep.subr.mxu0 0.0
        %2994 = vmatpush1.msra.mxu0 0.0
        %2995 = vmatprep.subr.mxu0 0.0
        %2996 = vmatpush1.msra.mxu0 0.0
        %2997 = vmatprep.mubr.f32.mxu0 0.0
        %v2998 = vand.u32 %v2612, 4294901760
        %2999 = vmatmul.mubr.f32.gmra.mrb[0].mxu0 %v2998
        %v3000 = vpop.f32.mrb[0].mxu0
        %v3001 = vadd.f32 %v2923, %v3000
        %v3002 = vpop.f32.mrb[0].mxu0
        %v3003 = vadd.f32 %v2925, %v3002
        %3004 = vdwg.mxu0
        %v3005 = vand.u32 %v1668, 4294901760
        %3006 = vmatprep.subr.mxu0 %v3005
        %v3007 = vand.u32 %v1667, 4294901760
        %3008 = vmatpush1.msra.mxu0 %v3007
        %3009 = vmatprep.subr.mxu0 0.0
        %3010 = vmatpush1.msra.mxu0 0.0
        %3011 = vmatprep.subr.mxu0 0.0
        %3012 = vmatpush1.msra.mxu0 0.0
        %3013 = vmatprep.subr.mxu0 0.0
        %3014 = vmatpush1.msra.mxu0 0.0
        %3015 = vmatprep.subr.mxu0 0.0
        %3016 = vmatpush1.msra.mxu0 0.0
        %3017 = vmatprep.subr.mxu0 0.0
        %3018 = vmatpush1.msra.mxu0 0.0
        %3019 = vmatprep.subr.mxu0 0.0
        %3020 = vmatpush1.msra.mxu0 0.0
        %3021 = vmatprep.subr.mxu0 0.0
        %3022 = vmatpush1.msra.mxu0 0.0
        %3023 = vmatprep.subr.mxu0 0.0
        %3024 = vmatpush1.msra.mxu0 0.0
        %3025 = vmatprep.subr.mxu0 0.0
        %3026 = vmatpush1.msra.mxu0 0.0
        %3027 = vmatprep.subr.mxu0 0.0
        %3028 = vmatpush1.msra.mxu0 0.0
        %3029 = vmatprep.subr.mxu0 0.0
        %3030 = vmatpush1.msra.mxu0 0.0
        %3031 = vmatprep.subr.mxu0 0.0
        %3032 = vmatpush1.msra.mxu0 0.0
        %3033 = vmatprep.subr.mxu0 0.0
        %3034 = vmatpush1.msra.mxu0 0.0
        %3035 = vmatprep.subr.mxu0 0.0
        %3036 = vmatpush1.msra.mxu0 0.0
        %3037 = vmatprep.subr.mxu0 0.0
        %3038 = vmatpush1.msra.mxu0 0.0
        %3039 = vmatprep.subr.mxu0 0.0
        %3040 = vmatpush1.msra.mxu0 0.0
        %3041 = vmatprep.subr.mxu0 0.0
        %3042 = vmatpush1.msra.mxu0 0.0
        %3043 = vmatprep.subr.mxu0 0.0
        %3044 = vmatpush1.msra.mxu0 0.0
        %3045 = vmatprep.subr.mxu0 0.0
        %3046 = vmatpush1.msra.mxu0 0.0
        %3047 = vmatprep.subr.mxu0 0.0
        %3048 = vmatpush1.msra.mxu0 0.0
        %3049 = vmatprep.subr.mxu0 0.0
        %3050 = vmatpush1.msra.mxu0 0.0
        %3051 = vmatprep.subr.mxu0 0.0
        %3052 = vmatpush1.msra.mxu0 0.0
        %3053 = vmatprep.subr.mxu0 0.0
        %3054 = vmatpush1.msra.mxu0 0.0
        %3055 = vmatprep.subr.mxu0 0.0
        %3056 = vmatpush1.msra.mxu0 0.0
        %3057 = vmatprep.subr.mxu0 0.0
        %3058 = vmatpush1.msra.mxu0 0.0
        %3059 = vmatprep.subr.mxu0 0.0
        %3060 = vmatpush1.msra.mxu0 0.0
        %3061 = vmatprep.subr.mxu0 0.0
        %3062 = vmatpush1.msra.mxu0 0.0
        %3063 = vmatprep.subr.mxu0 0.0
        %3064 = vmatpush1.msra.mxu0 0.0
        %3065 = vmatprep.subr.mxu0 0.0
        %3066 = vmatpush1.msra.mxu0 0.0
        %3067 = vmatprep.subr.mxu0 0.0
        %3068 = vmatpush1.msra.mxu0 0.0
        %3069 = vmatprep.subr.mxu0 0.0
        %3070 = vmatpush1.msra.mxu0 0.0
        %3071 = vmatprep.mubr.f32.mxu0 0.0
        %v3072 = vand.u32 %v2612, 4294901760
        %3073 = vmatmul.mubr.f32.gmra.mrb[0].mxu0 %v3072
        %v3074 = vpop.f32.mrb[0].mxu0
        %v3075 = vadd.f32 %v3001, %v3074
        %v3076 = vpop.f32.mrb[0].mxu0
        %v3077 = vadd.f32 %v3003, %v3076
        %3078 = vdwg.mxu0
        %v3079 = vadd.f32 %v2605, %v3075
        %v3080 = vadd.f32 %v2607, %v3077
        %3081 = vset.pattern.permute.xlu0 9
        %3082 = vperm.xlu0 %3081, %v931
        %v3083 = vpop.permute.xlu0 %3082
        %v3085 = vadd.f32 %v3079, %v3083
        %v3086 = vadd.f32 %v3080, %v3083
        %3087 = vset.pattern.permute.xlu0 10
        %3088 = vperm.xlu0 %3087, %v931
        %v3089 = vpop.permute.xlu0 %3088
        %v3091 = vmul.f32 %v3085, %v3089
        %v3092 = vmul.f32 %v3086, %v3089
        %3093 = vset.pattern.permute.xlu0 11
        %3094 = vperm.xlu0 %3093, %v931
        %v3095 = vpop.permute.xlu0 %3094
        %v3097 = vadd.f32 %v3091, %v3095
        %v3098 = vadd.f32 %v3092, %v3095
        %v3099 = vmax.f32 %v3097, 0.0
        %v3100 = vmax.f32 %v3098, 0.0
        %3101 = vrot.lane.b32.xlu0 %v3099, 17
        %v3102 = vpop.permute.xlu0 %3101
        %3103 = vrot.lane.b32.xlu0 %v3100, 17
        %v3104 = vpop.permute.xlu0 %3103
        %v3105 = vsel %vm585, %v3102, %v3104
        %v3106 = vsel %vm585, %v3104, %v3102
        %v3107 = vld [vmem:[%s7] sm:$0x3]
        %v3109 = vlaneseq
        %v3110 = vshrl.u32 %v3109, 7
        %v3111 = vsub.s32 0, %v3110
        %v3112 = vrot.slane %v3107, %v3111
        %v3113 = vlaneseq
        %v3114 = vshrl.u32 %v3113, 7
        %v3115 = vsub.s32 1, %v3114
        %v3116 = vrot.slane %v3107, %v3115
        %v3119 = vmul.f32 %v3106, %v3112
        %v3120 = vmul.f32 %v3105, %v3116
        %v3121 = vld [vmem:[%s6] sm:$0xff]
        %3122 = vrot.lane.b32.xlu0 %v3099, 16
        %v3123 = vpop.permute.xlu0 %3122
        %3124 = vrot.lane.b32.xlu0 %v3100, 16
        %v3125 = vpop.permute.xlu0 %3124
        %v3126 = vsel %vm601, %v3123, %v3125
        %v3127 = vsel %vm601, %v3125, %v3123
        %s3128 = scalar_lea.vmem %s7, 2
        %v3129 = vld [vmem:[%s3128] sm:$0x3]
        %v3131 = vlaneseq
        %v3132 = vshrl.u32 %v3131, 7
        %v3133 = vsub.s32 0, %v3132
        %v3134 = vrot.slane %v3129, %v3133
        %v3135 = vlaneseq
        %v3136 = vshrl.u32 %v3135, 7
        %v3137 = vsub.s32 1, %v3136
        %v3138 = vrot.slane %v3129, %v3137
        %v3141 = vmul.f32 %v3127, %v3134
        %v3142 = vmul.f32 %v3126, %v3138
        %s3143 = scalar_lea.vmem %s6, 8
        %v3144 = vld [vmem:[%s3143] sm:$0xff]
        %v3146 = vsel %vm1672, %v3144, 0
        %v3148 = vand.u32 %v3142, 4294901760
        %3149 = vmatprep.subr.mxu0 %v3148
        %v3150 = vand.u32 %v3141, 4294901760
        %3151 = vmatpush1.msra.mxu0 %v3150
        %3152 = vmatprep.subr.mxu0 0.0
        %3153 = vmatpush1.msra.mxu0 0.0
        %3154 = vmatprep.subr.mxu0 0.0
        %3155 = vmatpush1.msra.mxu0 0.0
        %3156 = vmatprep.subr.mxu0 0.0
        %3157 = vmatpush1.msra.mxu0 0.0
        %3158 = vmatprep.subr.mxu0 0.0
        %3159 = vmatpush1.msra.mxu0 0.0
        %3160 = vmatprep.subr.mxu0 0.0
        %3161 = vmatpush1.msra.mxu0 0.0
        %3162 = vmatprep.subr.mxu0 0.0
        %3163 = vmatpush1.msra.mxu0 0.0
        %3164 = vmatprep.subr.mxu0 0.0
        %3165 = vmatpush1.msra.mxu0 0.0
        %3166 = vmatprep.subr.mxu0 0.0
        %3167 = vmatpush1.msra.mxu0 0.0
        %3168 = vmatprep.subr.mxu0 0.0
        %3169 = vmatpush1.msra.mxu0 0.0
        %3170 = vmatprep.subr.mxu0 0.0
        %3171 = vmatpush1.msra.mxu0 0.0
        %3172 = vmatprep.subr.mxu0 0.0
        %3173 = vmatpush1.msra.mxu0 0.0
        %3174 = vmatprep.subr.mxu0 0.0
        %3175 = vmatpush1.msra.mxu0 0.0
        %3176 = vmatprep.subr.mxu0 0.0
        %3177 = vmatpush1.msra.mxu0 0.0
        %3178 = vmatprep.subr.mxu0 0.0
        %3179 = vmatpush1.msra.mxu0 0.0
        %3180 = vmatprep.subr.mxu0 0.0
        %3181 = vmatpush1.msra.mxu0 0.0
        %3182 = vmatprep.subr.mxu0 0.0
        %3183 = vmatpush1.msra.mxu0 0.0
        %3184 = vmatprep.subr.mxu0 0.0
        %3185 = vmatpush1.msra.mxu0 0.0
        %3186 = vmatprep.subr.mxu0 0.0
        %3187 = vmatpush1.msra.mxu0 0.0
        %3188 = vmatprep.subr.mxu0 0.0
        %3189 = vmatpush1.msra.mxu0 0.0
        %3190 = vmatprep.subr.mxu0 0.0
        %3191 = vmatpush1.msra.mxu0 0.0
        %3192 = vmatprep.subr.mxu0 0.0
        %3193 = vmatpush1.msra.mxu0 0.0
        %3194 = vmatprep.subr.mxu0 0.0
        %3195 = vmatpush1.msra.mxu0 0.0
        %3196 = vmatprep.subr.mxu0 0.0
        %3197 = vmatpush1.msra.mxu0 0.0
        %3198 = vmatprep.subr.mxu0 0.0
        %3199 = vmatpush1.msra.mxu0 0.0
        %3200 = vmatprep.subr.mxu0 0.0
        %3201 = vmatpush1.msra.mxu0 0.0
        %3202 = vmatprep.subr.mxu0 0.0
        %3203 = vmatpush1.msra.mxu0 0.0
        %3204 = vmatprep.subr.mxu0 0.0
        %3205 = vmatpush1.msra.mxu0 0.0
        %3206 = vmatprep.subr.mxu0 0.0
        %3207 = vmatpush1.msra.mxu0 0.0
        %3208 = vmatprep.subr.mxu0 0.0
        %3209 = vmatpush1.msra.mxu0 0.0
        %3210 = vmatprep.subr.mxu0 0.0
        %3211 = vmatpush1.msra.mxu0 0.0
        %3212 = vmatprep.subr.mxu0 0.0
        %3213 = vmatpush1.msra.mxu0 0.0
        %3214 = vmatprep.mubr.f32.mxu0 0.0
        %v3215 = vand.u32 %v3146, 4294901760
        %v3216 = vsub.f32 %v3146, %v3215
        %v3217 = vand.u32 %v3216, 4294901760
        %v3218 = vsub.f32 %v3216, %v3217
        %v3219 = vand.u32 %v3218, 4294901760
        %3220 = vmatmul.mubr.f32.gmra.mrb[0].mxu0 %v3219
        %v3221 = vpop.f32.mrb[0].mxu0
        %v3222 = vadd.f32 0.0, %v3221
        %v3223 = vpop.f32.mrb[0].mxu0
        %v3224 = vadd.f32 0.0, %v3223
        %3225 = vdwg.mxu0
        %v3226 = vand.u32 %v3142, 4294901760
        %v3227 = vsub.f32 %v3142, %v3226
        %v3228 = vand.u32 %v3227, 4294901760
        %v3229 = vsub.f32 %v3227, %v3228
        %v3230 = vand.u32 %v3229, 4294901760
        %3231 = vmatprep.subr.mxu0 %v3230
        %v3232 = vand.u32 %v3141, 4294901760
        %v3233 = vsub.f32 %v3141, %v3232
        %v3234 = vand.u32 %v3233, 4294901760
        %v3235 = vsub.f32 %v3233, %v3234
        %v3236 = vand.u32 %v3235, 4294901760
        %3237 = vmatpush1.msra.mxu0 %v3236
        %3238 = vmatprep.subr.mxu0 0.0
        %3239 = vmatpush1.msra.mxu0 0.0
        %3240 = vmatprep.subr.mxu0 0.0
        %3241 = vmatpush1.msra.mxu0 0.0
        %3242 = vmatprep.subr.mxu0 0.0
        %3243 = vmatpush1.msra.mxu0 0.0
        %3244 = vmatprep.subr.mxu0 0.0
        %3245 = vmatpush1.msra.mxu0 0.0
        %3246 = vmatprep.subr.mxu0 0.0
        %3247 = vmatpush1.msra.mxu0 0.0
        %3248 = vmatprep.subr.mxu0 0.0
        %3249 = vmatpush1.msra.mxu0 0.0
        %3250 = vmatprep.subr.mxu0 0.0
        %3251 = vmatpush1.msra.mxu0 0.0
        %3252 = vmatprep.subr.mxu0 0.0
        %3253 = vmatpush1.msra.mxu0 0.0
        %3254 = vmatprep.subr.mxu0 0.0
        %3255 = vmatpush1.msra.mxu0 0.0
        %3256 = vmatprep.subr.mxu0 0.0
        %3257 = vmatpush1.msra.mxu0 0.0
        %3258 = vmatprep.subr.mxu0 0.0
        %3259 = vmatpush1.msra.mxu0 0.0
        %3260 = vmatprep.subr.mxu0 0.0
        %3261 = vmatpush1.msra.mxu0 0.0
        %3262 = vmatprep.subr.mxu0 0.0
        %3263 = vmatpush1.msra.mxu0 0.0
        %3264 = vmatprep.subr.mxu0 0.0
        %3265 = vmatpush1.msra.mxu0 0.0
        %3266 = vmatprep.subr.mxu0 0.0
        %3267 = vmatpush1.msra.mxu0 0.0
        %3268 = vmatprep.subr.mxu0 0.0
        %3269 = vmatpush1.msra.mxu0 0.0
        %3270 = vmatprep.subr.mxu0 0.0
        %3271 = vmatpush1.msra.mxu0 0.0
        %3272 = vmatprep.subr.mxu0 0.0
        %3273 = vmatpush1.msra.mxu0 0.0
        %3274 = vmatprep.subr.mxu0 0.0
        %3275 = vmatpush1.msra.mxu0 0.0
        %3276 = vmatprep.subr.mxu0 0.0
        %3277 = vmatpush1.msra.mxu0 0.0
        %3278 = vmatprep.subr.mxu0 0.0
        %3279 = vmatpush1.msra.mxu0 0.0
        %3280 = vmatprep.subr.mxu0 0.0
        %3281 = vmatpush1.msra.mxu0 0.0
        %3282 = vmatprep.subr.mxu0 0.0
        %3283 = vmatpush1.msra.mxu0 0.0
        %3284 = vmatprep.subr.mxu0 0.0
        %3285 = vmatpush1.msra.mxu0 0.0
        %3286 = vmatprep.subr.mxu0 0.0
        %3287 = vmatpush1.msra.mxu0 0.0
        %3288 = vmatprep.subr.mxu0 0.0
        %3289 = vmatpush1.msra.mxu0 0.0
        %3290 = vmatprep.subr.mxu0 0.0
        %3291 = vmatpush1.msra.mxu0 0.0
        %3292 = vmatprep.subr.mxu0 0.0
        %3293 = vmatpush1.msra.mxu0 0.0
        %3294 = vmatprep.subr.mxu0 0.0
        %3295 = vmatpush1.msra.mxu0 0.0
        %3296 = vmatprep.subr.mxu0 0.0
        %3297 = vmatpush1.msra.mxu0 0.0
        %3298 = vmatprep.subr.mxu0 0.0
        %3299 = vmatpush1.msra.mxu0 0.0
        %3300 = vmatprep.mubr.f32.mxu0 0.0
        %v3301 = vand.u32 %v3146, 4294901760
        %3302 = vmatmul.mubr.f32.gmra.mrb[0].mxu0 %v3301
        %v3303 = vpop.f32.mrb[0].mxu0
        %v3304 = vadd.f32 %v3222, %v3303
        %v3305 = vpop.f32.mrb[0].mxu0
        %v3306 = vadd.f32 %v3224, %v3305
        %3307 = vdwg.mxu0
        %v3308 = vand.u32 %v3142, 4294901760
        %v3309 = vsub.f32 %v3142, %v3308
        %3310 = vmatprep.subr.mxu0 %v3309
        %v3311 = vand.u32 %v3141, 4294901760
        %v3312 = vsub.f32 %v3141, %v3311
        %3313 = vmatpush1.msra.mxu0 %v3312
        %3314 = vmatprep.subr.mxu0 0.0
        %3315 = vmatpush1.msra.mxu0 0.0
        %3316 = vmatprep.subr.mxu0 0.0
        %3317 = vmatpush1.msra.mxu0 0.0
        %3318 = vmatprep.subr.mxu0 0.0
        %3319 = vmatpush1.msra.mxu0 0.0
        %3320 = vmatprep.subr.mxu0 0.0
        %3321 = vmatpush1.msra.mxu0 0.0
        %3322 = vmatprep.subr.mxu0 0.0
        %3323 = vmatpush1.msra.mxu0 0.0
        %3324 = vmatprep.subr.mxu0 0.0
        %3325 = vmatpush1.msra.mxu0 0.0
        %3326 = vmatprep.subr.mxu0 0.0
        %3327 = vmatpush1.msra.mxu0 0.0
        %3328 = vmatprep.subr.mxu0 0.0
        %3329 = vmatpush1.msra.mxu0 0.0
        %3330 = vmatprep.subr.mxu0 0.0
        %3331 = vmatpush1.msra.mxu0 0.0
        %3332 = vmatprep.subr.mxu0 0.0
        %3333 = vmatpush1.msra.mxu0 0.0
        %3334 = vmatprep.subr.mxu0 0.0
        %3335 = vmatpush1.msra.mxu0 0.0
        %3336 = vmatprep.subr.mxu0 0.0
        %3337 = vmatpush1.msra.mxu0 0.0
        %3338 = vmatprep.subr.mxu0 0.0
        %3339 = vmatpush1.msra.mxu0 0.0
        %3340 = vmatprep.subr.mxu0 0.0
        %3341 = vmatpush1.msra.mxu0 0.0
        %3342 = vmatprep.subr.mxu0 0.0
        %3343 = vmatpush1.msra.mxu0 0.0
        %3344 = vmatprep.subr.mxu0 0.0
        %3345 = vmatpush1.msra.mxu0 0.0
        %3346 = vmatprep.subr.mxu0 0.0
        %3347 = vmatpush1.msra.mxu0 0.0
        %3348 = vmatprep.subr.mxu0 0.0
        %3349 = vmatpush1.msra.mxu0 0.0
        %3350 = vmatprep.subr.mxu0 0.0
        %3351 = vmatpush1.msra.mxu0 0.0
        %3352 = vmatprep.subr.mxu0 0.0
        %3353 = vmatpush1.msra.mxu0 0.0
        %3354 = vmatprep.subr.mxu0 0.0
        %3355 = vmatpush1.msra.mxu0 0.0
        %3356 = vmatprep.subr.mxu0 0.0
        %3357 = vmatpush1.msra.mxu0 0.0
        %3358 = vmatprep.subr.mxu0 0.0
        %3359 = vmatpush1.msra.mxu0 0.0
        %3360 = vmatprep.subr.mxu0 0.0
        %3361 = vmatpush1.msra.mxu0 0.0
        %3362 = vmatprep.subr.mxu0 0.0
        %3363 = vmatpush1.msra.mxu0 0.0
        %3364 = vmatprep.subr.mxu0 0.0
        %3365 = vmatpush1.msra.mxu0 0.0
        %3366 = vmatprep.subr.mxu0 0.0
        %3367 = vmatpush1.msra.mxu0 0.0
        %3368 = vmatprep.subr.mxu0 0.0
        %3369 = vmatpush1.msra.mxu0 0.0
        %3370 = vmatprep.subr.mxu0 0.0
        %3371 = vmatpush1.msra.mxu0 0.0
        %3372 = vmatprep.subr.mxu0 0.0
        %3373 = vmatpush1.msra.mxu0 0.0
        %3374 = vmatprep.subr.mxu0 0.0
        %3375 = vmatpush1.msra.mxu0 0.0
        %3376 = vmatprep.mubr.f32.mxu0 0.0
        %v3377 = vand.u32 %v3146, 4294901760
        %v3378 = vsub.f32 %v3146, %v3377
        %3379 = vmatmul.mubr.f32.gmra.mrb[0].mxu0 %v3378
        %v3380 = vpop.f32.mrb[0].mxu0
        %v3381 = vadd.f32 %v3304, %v3380
        %v3382 = vpop.f32.mrb[0].mxu0
        %v3383 = vadd.f32 %v3306, %v3382
        %3384 = vdwg.mxu0
        %v3385 = vand.u32 %v3142, 4294901760
        %3386 = vmatprep.subr.mxu0 %v3385
        %v3387 = vand.u32 %v3141, 4294901760
        %3388 = vmatpush1.msra.mxu0 %v3387
        %3389 = vmatprep.subr.mxu0 0.0
        %3390 = vmatpush1.msra.mxu0 0.0
        %3391 = vmatprep.subr.mxu0 0.0
        %3392 = vmatpush1.msra.mxu0 0.0
        %3393 = vmatprep.subr.mxu0 0.0
        %3394 = vmatpush1.msra.mxu0 0.0
        %3395 = vmatprep.subr.mxu0 0.0
        %3396 = vmatpush1.msra.mxu0 0.0
        %3397 = vmatprep.subr.mxu0 0.0
        %3398 = vmatpush1.msra.mxu0 0.0
        %3399 = vmatprep.subr.mxu0 0.0
        %3400 = vmatpush1.msra.mxu0 0.0
        %3401 = vmatprep.subr.mxu0 0.0
        %3402 = vmatpush1.msra.mxu0 0.0
        %3403 = vmatprep.subr.mxu0 0.0
        %3404 = vmatpush1.msra.mxu0 0.0
        %3405 = vmatprep.subr.mxu0 0.0
        %3406 = vmatpush1.msra.mxu0 0.0
        %3407 = vmatprep.subr.mxu0 0.0
        %3408 = vmatpush1.msra.mxu0 0.0
        %3409 = vmatprep.subr.mxu0 0.0
        %3410 = vmatpush1.msra.mxu0 0.0
        %3411 = vmatprep.subr.mxu0 0.0
        %3412 = vmatpush1.msra.mxu0 0.0
        %3413 = vmatprep.subr.mxu0 0.0
        %3414 = vmatpush1.msra.mxu0 0.0
        %3415 = vmatprep.subr.mxu0 0.0
        %3416 = vmatpush1.msra.mxu0 0.0
        %3417 = vmatprep.subr.mxu0 0.0
        %3418 = vmatpush1.msra.mxu0 0.0
        %3419 = vmatprep.subr.mxu0 0.0
        %3420 = vmatpush1.msra.mxu0 0.0
        %3421 = vmatprep.subr.mxu0 0.0
        %3422 = vmatpush1.msra.mxu0 0.0
        %3423 = vmatprep.subr.mxu0 0.0
        %3424 = vmatpush1.msra.mxu0 0.0
        %3425 = vmatprep.subr.mxu0 0.0
        %3426 = vmatpush1.msra.mxu0 0.0
        %3427 = vmatprep.subr.mxu0 0.0
        %3428 = vmatpush1.msra.mxu0 0.0
        %3429 = vmatprep.subr.mxu0 0.0
        %3430 = vmatpush1.msra.mxu0 0.0
        %3431 = vmatprep.subr.mxu0 0.0
        %3432 = vmatpush1.msra.mxu0 0.0
        %3433 = vmatprep.subr.mxu0 0.0
        %3434 = vmatpush1.msra.mxu0 0.0
        %3435 = vmatprep.subr.mxu0 0.0
        %3436 = vmatpush1.msra.mxu0 0.0
        %3437 = vmatprep.subr.mxu0 0.0
        %3438 = vmatpush1.msra.mxu0 0.0
        %3439 = vmatprep.subr.mxu0 0.0
        %3440 = vmatpush1.msra.mxu0 0.0
        %3441 = vmatprep.subr.mxu0 0.0
        %3442 = vmatpush1.msra.mxu0 0.0
        %3443 = vmatprep.subr.mxu0 0.0
        %3444 = vmatpush1.msra.mxu0 0.0
        %3445 = vmatprep.subr.mxu0 0.0
        %3446 = vmatpush1.msra.mxu0 0.0
        %3447 = vmatprep.subr.mxu0 0.0
        %3448 = vmatpush1.msra.mxu0 0.0
        %3449 = vmatprep.subr.mxu0 0.0
        %3450 = vmatpush1.msra.mxu0 0.0
        %3451 = vmatprep.mubr.f32.mxu0 0.0
        %v3452 = vand.u32 %v3146, 4294901760
        %v3453 = vsub.f32 %v3146, %v3452
        %v3454 = vand.u32 %v3453, 4294901760
        %3455 = vmatmul.mubr.f32.gmra.mrb[0].mxu0 %v3454
        %v3456 = vpop.f32.mrb[0].mxu0
        %v3457 = vadd.f32 %v3381, %v3456
        %v3458 = vpop.f32.mrb[0].mxu0
        %v3459 = vadd.f32 %v3383, %v3458
        %3460 = vdwg.mxu0
        %v3461 = vand.u32 %v3142, 4294901760
        %v3462 = vsub.f32 %v3142, %v3461
        %v3463 = vand.u32 %v3462, 4294901760
        %3464 = vmatprep.subr.mxu0 %v3463
        %v3465 = vand.u32 %v3141, 4294901760
        %v3466 = vsub.f32 %v3141, %v3465
        %v3467 = vand.u32 %v3466, 4294901760
        %3468 = vmatpush1.msra.mxu0 %v3467
        %3469 = vmatprep.subr.mxu0 0.0
        %3470 = vmatpush1.msra.mxu0 0.0
        %3471 = vmatprep.subr.mxu0 0.0
        %3472 = vmatpush1.msra.mxu0 0.0
        %3473 = vmatprep.subr.mxu0 0.0
        %3474 = vmatpush1.msra.mxu0 0.0
        %3475 = vmatprep.subr.mxu0 0.0
        %3476 = vmatpush1.msra.mxu0 0.0
        %3477 = vmatprep.subr.mxu0 0.0
        %3478 = vmatpush1.msra.mxu0 0.0
        %3479 = vmatprep.subr.mxu0 0.0
        %3480 = vmatpush1.msra.mxu0 0.0
        %3481 = vmatprep.subr.mxu0 0.0
        %3482 = vmatpush1.msra.mxu0 0.0
        %3483 = vmatprep.subr.mxu0 0.0
        %3484 = vmatpush1.msra.mxu0 0.0
        %3485 = vmatprep.subr.mxu0 0.0
        %3486 = vmatpush1.msra.mxu0 0.0
        %3487 = vmatprep.subr.mxu0 0.0
        %3488 = vmatpush1.msra.mxu0 0.0
        %3489 = vmatprep.subr.mxu0 0.0
        %3490 = vmatpush1.msra.mxu0 0.0
        %3491 = vmatprep.subr.mxu0 0.0
        %3492 = vmatpush1.msra.mxu0 0.0
        %3493 = vmatprep.subr.mxu0 0.0
        %3494 = vmatpush1.msra.mxu0 0.0
        %3495 = vmatprep.subr.mxu0 0.0
        %3496 = vmatpush1.msra.mxu0 0.0
        %3497 = vmatprep.subr.mxu0 0.0
        %3498 = vmatpush1.msra.mxu0 0.0
        %3499 = vmatprep.subr.mxu0 0.0
        %3500 = vmatpush1.msra.mxu0 0.0
        %3501 = vmatprep.subr.mxu0 0.0
        %3502 = vmatpush1.msra.mxu0 0.0
        %3503 = vmatprep.subr.mxu0 0.0
        %3504 = vmatpush1.msra.mxu0 0.0
        %3505 = vmatprep.subr.mxu0 0.0
        %3506 = vmatpush1.msra.mxu0 0.0
        %3507 = vmatprep.subr.mxu0 0.0
        %3508 = vmatpush1.msra.mxu0 0.0
        %3509 = vmatprep.subr.mxu0 0.0
        %3510 = vmatpush1.msra.mxu0 0.0
        %3511 = vmatprep.subr.mxu0 0.0
        %3512 = vmatpush1.msra.mxu0 0.0
        %3513 = vmatprep.subr.mxu0 0.0
        %3514 = vmatpush1.msra.mxu0 0.0
        %3515 = vmatprep.subr.mxu0 0.0
        %3516 = vmatpush1.msra.mxu0 0.0
        %3517 = vmatprep.subr.mxu0 0.0
        %3518 = vmatpush1.msra.mxu0 0.0
        %3519 = vmatprep.subr.mxu0 0.0
        %3520 = vmatpush1.msra.mxu0 0.0
        %3521 = vmatprep.subr.mxu0 0.0
        %3522 = vmatpush1.msra.mxu0 0.0
        %3523 = vmatprep.subr.mxu0 0.0
        %3524 = vmatpush1.msra.mxu0 0.0
        %3525 = vmatprep.subr.mxu0 0.0
        %3526 = vmatpush1.msra.mxu0 0.0
        %3527 = vmatprep.subr.mxu0 0.0
        %3528 = vmatpush1.msra.mxu0 0.0
        %3529 = vmatprep.subr.mxu0 0.0
        %3530 = vmatpush1.msra.mxu0 0.0
        %3531 = vmatprep.mubr.f32.mxu0 0.0
        %v3532 = vand.u32 %v3146, 4294901760
        %3533 = vmatmul.mubr.f32.gmra.mrb[0].mxu0 %v3532
        %v3534 = vpop.f32.mrb[0].mxu0
        %v3535 = vadd.f32 %v3457, %v3534
        %v3536 = vpop.f32.mrb[0].mxu0
        %v3537 = vadd.f32 %v3459, %v3536
        %3538 = vdwg.mxu0
        %v3539 = vand.u32 %v3142, 4294901760
        %3540 = vmatprep.subr.mxu0 %v3539
        %v3541 = vand.u32 %v3141, 4294901760
        %3542 = vmatpush1.msra.mxu0 %v3541
        %3543 = vmatprep.subr.mxu0 0.0
        %3544 = vmatpush1.msra.mxu0 0.0
        %3545 = vmatprep.subr.mxu0 0.0
        %3546 = vmatpush1.msra.mxu0 0.0
        %3547 = vmatprep.subr.mxu0 0.0
        %3548 = vmatpush1.msra.mxu0 0.0
        %3549 = vmatprep.subr.mxu0 0.0
        %3550 = vmatpush1.msra.mxu0 0.0
        %3551 = vmatprep.subr.mxu0 0.0
        %3552 = vmatpush1.msra.mxu0 0.0
        %3553 = vmatprep.subr.mxu0 0.0
        %3554 = vmatpush1.msra.mxu0 0.0
        %3555 = vmatprep.subr.mxu0 0.0
        %3556 = vmatpush1.msra.mxu0 0.0
        %3557 = vmatprep.subr.mxu0 0.0
        %3558 = vmatpush1.msra.mxu0 0.0
        %3559 = vmatprep.subr.mxu0 0.0
        %3560 = vmatpush1.msra.mxu0 0.0
        %3561 = vmatprep.subr.mxu0 0.0
        %3562 = vmatpush1.msra.mxu0 0.0
        %3563 = vmatprep.subr.mxu0 0.0
        %3564 = vmatpush1.msra.mxu0 0.0
        %3565 = vmatprep.subr.mxu0 0.0
        %3566 = vmatpush1.msra.mxu0 0.0
        %3567 = vmatprep.subr.mxu0 0.0
        %3568 = vmatpush1.msra.mxu0 0.0
        %3569 = vmatprep.subr.mxu0 0.0
        %3570 = vmatpush1.msra.mxu0 0.0
        %3571 = vmatprep.subr.mxu0 0.0
        %3572 = vmatpush1.msra.mxu0 0.0
        %3573 = vmatprep.subr.mxu0 0.0
        %3574 = vmatpush1.msra.mxu0 0.0
        %3575 = vmatprep.subr.mxu0 0.0
        %3576 = vmatpush1.msra.mxu0 0.0
        %3577 = vmatprep.subr.mxu0 0.0
        %3578 = vmatpush1.msra.mxu0 0.0
        %3579 = vmatprep.subr.mxu0 0.0
        %3580 = vmatpush1.msra.mxu0 0.0
        %3581 = vmatprep.subr.mxu0 0.0
        %3582 = vmatpush1.msra.mxu0 0.0
        %3583 = vmatprep.subr.mxu0 0.0
        %3584 = vmatpush1.msra.mxu0 0.0
        %3585 = vmatprep.subr.mxu0 0.0
        %3586 = vmatpush1.msra.mxu0 0.0
        %3587 = vmatprep.subr.mxu0 0.0
        %3588 = vmatpush1.msra.mxu0 0.0
        %3589 = vmatprep.subr.mxu0 0.0
        %3590 = vmatpush1.msra.mxu0 0.0
        %3591 = vmatprep.subr.mxu0 0.0
        %3592 = vmatpush1.msra.mxu0 0.0
        %3593 = vmatprep.subr.mxu0 0.0
        %3594 = vmatpush1.msra.mxu0 0.0
        %3595 = vmatprep.subr.mxu0 0.0
        %3596 = vmatpush1.msra.mxu0 0.0
        %3597 = vmatprep.subr.mxu0 0.0
        %3598 = vmatpush1.msra.mxu0 0.0
        %3599 = vmatprep.subr.mxu0 0.0
        %3600 = vmatpush1.msra.mxu0 0.0
        %3601 = vmatprep.subr.mxu0 0.0
        %3602 = vmatpush1.msra.mxu0 0.0
        %3603 = vmatprep.subr.mxu0 0.0
        %3604 = vmatpush1.msra.mxu0 0.0
        %3605 = vmatprep.mubr.f32.mxu0 0.0
        %v3606 = vand.u32 %v3146, 4294901760
        %3607 = vmatmul.mubr.f32.gmra.mrb[0].mxu0 %v3606
        %v3608 = vpop.f32.mrb[0].mxu0
        %v3609 = vadd.f32 %v3535, %v3608
        %v3610 = vpop.f32.mrb[0].mxu0
        %v3611 = vadd.f32 %v3537, %v3610
        %3612 = vdwg.mxu0
        %v3614 = vsel %vm1672, %v3121, 0
        %v3616 = vand.u32 %v3120, 4294901760
        %3617 = vmatprep.subr.mxu0 %v3616
        %v3618 = vand.u32 %v3119, 4294901760
        %3619 = vmatpush1.msra.mxu0 %v3618
        %3620 = vmatprep.subr.mxu0 0.0
        %3621 = vmatpush1.msra.mxu0 0.0
        %3622 = vmatprep.subr.mxu0 0.0
        %3623 = vmatpush1.msra.mxu0 0.0
        %3624 = vmatprep.subr.mxu0 0.0
        %3625 = vmatpush1.msra.mxu0 0.0
        %3626 = vmatprep.subr.mxu0 0.0
        %3627 = vmatpush1.msra.mxu0 0.0
        %3628 = vmatprep.subr.mxu0 0.0
        %3629 = vmatpush1.msra.mxu0 0.0
        %3630 = vmatprep.subr.mxu0 0.0
        %3631 = vmatpush1.msra.mxu0 0.0
        %3632 = vmatprep.subr.mxu0 0.0
        %3633 = vmatpush1.msra.mxu0 0.0
        %3634 = vmatprep.subr.mxu0 0.0
        %3635 = vmatpush1.msra.mxu0 0.0
        %3636 = vmatprep.subr.mxu0 0.0
        %3637 = vmatpush1.msra.mxu0 0.0
        %3638 = vmatprep.subr.mxu0 0.0
        %3639 = vmatpush1.msra.mxu0 0.0
        %3640 = vmatprep.subr.mxu0 0.0
        %3641 = vmatpush1.msra.mxu0 0.0
        %3642 = vmatprep.subr.mxu0 0.0
        %3643 = vmatpush1.msra.mxu0 0.0
        %3644 = vmatprep.subr.mxu0 0.0
        %3645 = vmatpush1.msra.mxu0 0.0
        %3646 = vmatprep.subr.mxu0 0.0
        %3647 = vmatpush1.msra.mxu0 0.0
        %3648 = vmatprep.subr.mxu0 0.0
        %3649 = vmatpush1.msra.mxu0 0.0
        %3650 = vmatprep.subr.mxu0 0.0
        %3651 = vmatpush1.msra.mxu0 0.0
        %3652 = vmatprep.subr.mxu0 0.0
        %3653 = vmatpush1.msra.mxu0 0.0
        %3654 = vmatprep.subr.mxu0 0.0
        %3655 = vmatpush1.msra.mxu0 0.0
        %3656 = vmatprep.subr.mxu0 0.0
        %3657 = vmatpush1.msra.mxu0 0.0
        %3658 = vmatprep.subr.mxu0 0.0
        %3659 = vmatpush1.msra.mxu0 0.0
        %3660 = vmatprep.subr.mxu0 0.0
        %3661 = vmatpush1.msra.mxu0 0.0
        %3662 = vmatprep.subr.mxu0 0.0
        %3663 = vmatpush1.msra.mxu0 0.0
        %3664 = vmatprep.subr.mxu0 0.0
        %3665 = vmatpush1.msra.mxu0 0.0
        %3666 = vmatprep.subr.mxu0 0.0
        %3667 = vmatpush1.msra.mxu0 0.0
        %3668 = vmatprep.subr.mxu0 0.0
        %3669 = vmatpush1.msra.mxu0 0.0
        %3670 = vmatprep.subr.mxu0 0.0
        %3671 = vmatpush1.msra.mxu0 0.0
        %3672 = vmatprep.subr.mxu0 0.0
        %3673 = vmatpush1.msra.mxu0 0.0
        %3674 = vmatprep.subr.mxu0 0.0
        %3675 = vmatpush1.msra.mxu0 0.0
        %3676 = vmatprep.subr.mxu0 0.0
        %3677 = vmatpush1.msra.mxu0 0.0
        %3678 = vmatprep.subr.mxu0 0.0
        %3679 = vmatpush1.msra.mxu0 0.0
        %3680 = vmatprep.subr.mxu0 0.0
        %3681 = vmatpush1.msra.mxu0 0.0
        %3682 = vmatprep.mubr.f32.mxu0 0.0
        %v3683 = vand.u32 %v3614, 4294901760
        %v3684 = vsub.f32 %v3614, %v3683
        %v3685 = vand.u32 %v3684, 4294901760
        %v3686 = vsub.f32 %v3684, %v3685
        %v3687 = vand.u32 %v3686, 4294901760
        %3688 = vmatmul.mubr.f32.gmra.mrb[0].mxu0 %v3687
        %v3689 = vpop.f32.mrb[0].mxu0
        %v3690 = vadd.f32 %v3609, %v3689
        %v3691 = vpop.f32.mrb[0].mxu0
        %v3692 = vadd.f32 %v3611, %v3691
        %3693 = vdwg.mxu0
        %v3694 = vand.u32 %v3120, 4294901760
        %v3695 = vsub.f32 %v3120, %v3694
        %v3696 = vand.u32 %v3695, 4294901760
        %v3697 = vsub.f32 %v3695, %v3696
        %v3698 = vand.u32 %v3697, 4294901760
        %3699 = vmatprep.subr.mxu0 %v3698
        %v3700 = vand.u32 %v3119, 4294901760
        %v3701 = vsub.f32 %v3119, %v3700
        %v3702 = vand.u32 %v3701, 4294901760
        %v3703 = vsub.f32 %v3701, %v3702
        %v3704 = vand.u32 %v3703, 4294901760
        %3705 = vmatpush1.msra.mxu0 %v3704
        %3706 = vmatprep.subr.mxu0 0.0
        %3707 = vmatpush1.msra.mxu0 0.0
        %3708 = vmatprep.subr.mxu0 0.0
        %3709 = vmatpush1.msra.mxu0 0.0
        %3710 = vmatprep.subr.mxu0 0.0
        %3711 = vmatpush1.msra.mxu0 0.0
        %3712 = vmatprep.subr.mxu0 0.0
        %3713 = vmatpush1.msra.mxu0 0.0
        %3714 = vmatprep.subr.mxu0 0.0
        %3715 = vmatpush1.msra.mxu0 0.0
        %3716 = vmatprep.subr.mxu0 0.0
        %3717 = vmatpush1.msra.mxu0 0.0
        %3718 = vmatprep.subr.mxu0 0.0
        %3719 = vmatpush1.msra.mxu0 0.0
        %3720 = vmatprep.subr.mxu0 0.0
        %3721 = vmatpush1.msra.mxu0 0.0
        %3722 = vmatprep.subr.mxu0 0.0
        %3723 = vmatpush1.msra.mxu0 0.0
        %3724 = vmatprep.subr.mxu0 0.0
        %3725 = vmatpush1.msra.mxu0 0.0
        %3726 = vmatprep.subr.mxu0 0.0
        %3727 = vmatpush1.msra.mxu0 0.0
        %3728 = vmatprep.subr.mxu0 0.0
        %3729 = vmatpush1.msra.mxu0 0.0
        %3730 = vmatprep.subr.mxu0 0.0
        %3731 = vmatpush1.msra.mxu0 0.0
        %3732 = vmatprep.subr.mxu0 0.0
        %3733 = vmatpush1.msra.mxu0 0.0
        %3734 = vmatprep.subr.mxu0 0.0
        %3735 = vmatpush1.msra.mxu0 0.0
        %3736 = vmatprep.subr.mxu0 0.0
        %3737 = vmatpush1.msra.mxu0 0.0
        %3738 = vmatprep.subr.mxu0 0.0
        %3739 = vmatpush1.msra.mxu0 0.0
        %3740 = vmatprep.subr.mxu0 0.0
        %3741 = vmatpush1.msra.mxu0 0.0
        %3742 = vmatprep.subr.mxu0 0.0
        %3743 = vmatpush1.msra.mxu0 0.0
        %3744 = vmatprep.subr.mxu0 0.0
        %3745 = vmatpush1.msra.mxu0 0.0
        %3746 = vmatprep.subr.mxu0 0.0
        %3747 = vmatpush1.msra.mxu0 0.0
        %3748 = vmatprep.subr.mxu0 0.0
        %3749 = vmatpush1.msra.mxu0 0.0
        %3750 = vmatprep.subr.mxu0 0.0
        %3751 = vmatpush1.msra.mxu0 0.0
        %3752 = vmatprep.subr.mxu0 0.0
        %3753 = vmatpush1.msra.mxu0 0.0
        %3754 = vmatprep.subr.mxu0 0.0
        %3755 = vmatpush1.msra.mxu0 0.0
        %3756 = vmatprep.subr.mxu0 0.0
        %3757 = vmatpush1.msra.mxu0 0.0
        %3758 = vmatprep.subr.mxu0 0.0
        %3759 = vmatpush1.msra.mxu0 0.0
        %3760 = vmatprep.subr.mxu0 0.0
        %3761 = vmatpush1.msra.mxu0 0.0
        %3762 = vmatprep.subr.mxu0 0.0
        %3763 = vmatpush1.msra.mxu0 0.0
        %3764 = vmatprep.subr.mxu0 0.0
        %3765 = vmatpush1.msra.mxu0 0.0
        %3766 = vmatprep.subr.mxu0 0.0
        %3767 = vmatpush1.msra.mxu0 0.0
        %3768 = vmatprep.mubr.f32.mxu0 0.0
        %v3769 = vand.u32 %v3614, 4294901760
        %3770 = vmatmul.mubr.f32.gmra.mrb[0].mxu0 %v3769
        %v3771 = vpop.f32.mrb[0].mxu0
        %v3772 = vadd.f32 %v3690, %v3771
        %v3773 = vpop.f32.mrb[0].mxu0
        %v3774 = vadd.f32 %v3692, %v3773
        %3775 = vdwg.mxu0
        %v3776 = vand.u32 %v3120, 4294901760
        %v3777 = vsub.f32 %v3120, %v3776
        %3778 = vmatprep.subr.mxu0 %v3777
        %v3779 = vand.u32 %v3119, 4294901760
        %v3780 = vsub.f32 %v3119, %v3779
        %3781 = vmatpush1.msra.mxu0 %v3780
        %3782 = vmatprep.subr.mxu0 0.0
        %3783 = vmatpush1.msra.mxu0 0.0
        %3784 = vmatprep.subr.mxu0 0.0
        %3785 = vmatpush1.msra.mxu0 0.0
        %3786 = vmatprep.subr.mxu0 0.0
        %3787 = vmatpush1.msra.mxu0 0.0
        %3788 = vmatprep.subr.mxu0 0.0
        %3789 = vmatpush1.msra.mxu0 0.0
        %3790 = vmatprep.subr.mxu0 0.0
        %3791 = vmatpush1.msra.mxu0 0.0
        %3792 = vmatprep.subr.mxu0 0.0
        %3793 = vmatpush1.msra.mxu0 0.0
        %3794 = vmatprep.subr.mxu0 0.0
        %3795 = vmatpush1.msra.mxu0 0.0
        %3796 = vmatprep.subr.mxu0 0.0
        %3797 = vmatpush1.msra.mxu0 0.0
        %3798 = vmatprep.subr.mxu0 0.0
        %3799 = vmatpush1.msra.mxu0 0.0
        %3800 = vmatprep.subr.mxu0 0.0
        %3801 = vmatpush1.msra.mxu0 0.0
        %3802 = vmatprep.subr.mxu0 0.0
        %3803 = vmatpush1.msra.mxu0 0.0
        %3804 = vmatprep.subr.mxu0 0.0
        %3805 = vmatpush1.msra.mxu0 0.0
        %3806 = vmatprep.subr.mxu0 0.0
        %3807 = vmatpush1.msra.mxu0 0.0
        %3808 = vmatprep.subr.mxu0 0.0
        %3809 = vmatpush1.msra.mxu0 0.0
        %3810 = vmatprep.subr.mxu0 0.0
        %3811 = vmatpush1.msra.mxu0 0.0
        %3812 = vmatprep.subr.mxu0 0.0
        %3813 = vmatpush1.msra.mxu0 0.0
        %3814 = vmatprep.subr.mxu0 0.0
        %3815 = vmatpush1.msra.mxu0 0.0
        %3816 = vmatprep.subr.mxu0 0.0
        %3817 = vmatpush1.msra.mxu0 0.0
        %3818 = vmatprep.subr.mxu0 0.0
        %3819 = vmatpush1.msra.mxu0 0.0
        %3820 = vmatprep.subr.mxu0 0.0
        %3821 = vmatpush1.msra.mxu0 0.0
        %3822 = vmatprep.subr.mxu0 0.0
        %3823 = vmatpush1.msra.mxu0 0.0
        %3824 = vmatprep.subr.mxu0 0.0
        %3825 = vmatpush1.msra.mxu0 0.0
        %3826 = vmatprep.subr.mxu0 0.0
        %3827 = vmatpush1.msra.mxu0 0.0
        %3828 = vmatprep.subr.mxu0 0.0
        %3829 = vmatpush1.msra.mxu0 0.0
        %3830 = vmatprep.subr.mxu0 0.0
        %3831 = vmatpush1.msra.mxu0 0.0
        %3832 = vmatprep.subr.mxu0 0.0
        %3833 = vmatpush1.msra.mxu0 0.0
        %3834 = vmatprep.subr.mxu0 0.0
        %3835 = vmatpush1.msra.mxu0 0.0
        %3836 = vmatprep.subr.mxu0 0.0
        %3837 = vmatpush1.msra.mxu0 0.0
        %3838 = vmatprep.subr.mxu0 0.0
        %3839 = vmatpush1.msra.mxu0 0.0
        %3840 = vmatprep.subr.mxu0 0.0
        %3841 = vmatpush1.msra.mxu0 0.0
        %3842 = vmatprep.subr.mxu0 0.0
        %3843 = vmatpush1.msra.mxu0 0.0
        %3844 = vmatprep.mubr.f32.mxu0 0.0
        %v3845 = vand.u32 %v3614, 4294901760
        %v3846 = vsub.f32 %v3614, %v3845
        %3847 = vmatmul.mubr.f32.gmra.mrb[0].mxu0 %v3846
        %v3848 = vpop.f32.mrb[0].mxu0
        %v3849 = vadd.f32 %v3772, %v3848
        %v3850 = vpop.f32.mrb[0].mxu0
        %v3851 = vadd.f32 %v3774, %v3850
        %3852 = vdwg.mxu0
        %v3853 = vand.u32 %v3120, 4294901760
        %3854 = vmatprep.subr.mxu0 %v3853
        %v3855 = vand.u32 %v3119, 4294901760
        %3856 = vmatpush1.msra.mxu0 %v3855
        %3857 = vmatprep.subr.mxu0 0.0
        %3858 = vmatpush1.msra.mxu0 0.0
        %3859 = vmatprep.subr.mxu0 0.0
        %3860 = vmatpush1.msra.mxu0 0.0
        %3861 = vmatprep.subr.mxu0 0.0
        %3862 = vmatpush1.msra.mxu0 0.0
        %3863 = vmatprep.subr.mxu0 0.0
        %3864 = vmatpush1.msra.mxu0 0.0
        %3865 = vmatprep.subr.mxu0 0.0
        %3866 = vmatpush1.msra.mxu0 0.0
        %3867 = vmatprep.subr.mxu0 0.0
        %3868 = vmatpush1.msra.mxu0 0.0
        %3869 = vmatprep.subr.mxu0 0.0
        %3870 = vmatpush1.msra.mxu0 0.0
        %3871 = vmatprep.subr.mxu0 0.0
        %3872 = vmatpush1.msra.mxu0 0.0
        %3873 = vmatprep.subr.mxu0 0.0
        %3874 = vmatpush1.msra.mxu0 0.0
        %3875 = vmatprep.subr.mxu0 0.0
        %3876 = vmatpush1.msra.mxu0 0.0
        %3877 = vmatprep.subr.mxu0 0.0
        %3878 = vmatpush1.msra.mxu0 0.0
        %3879 = vmatprep.subr.mxu0 0.0
        %3880 = vmatpush1.msra.mxu0 0.0
        %3881 = vmatprep.subr.mxu0 0.0
        %3882 = vmatpush1.msra.mxu0 0.0
        %3883 = vmatprep.subr.mxu0 0.0
        %3884 = vmatpush1.msra.mxu0 0.0
        %3885 = vmatprep.subr.mxu0 0.0
        %3886 = vmatpush1.msra.mxu0 0.0
        %3887 = vmatprep.subr.mxu0 0.0
        %3888 = vmatpush1.msra.mxu0 0.0
        %3889 = vmatprep.subr.mxu0 0.0
        %3890 = vmatpush1.msra.mxu0 0.0
        %3891 = vmatprep.subr.mxu0 0.0
        %3892 = vmatpush1.msra.mxu0 0.0
        %3893 = vmatprep.subr.mxu0 0.0
        %3894 = vmatpush1.msra.mxu0 0.0
        %3895 = vmatprep.subr.mxu0 0.0
        %3896 = vmatpush1.msra.mxu0 0.0
        %3897 = vmatprep.subr.mxu0 0.0
        %3898 = vmatpush1.msra.mxu0 0.0
        %3899 = vmatprep.subr.mxu0 0.0
        %3900 = vmatpush1.msra.mxu0 0.0
        %3901 = vmatprep.subr.mxu0 0.0
        %3902 = vmatpush1.msra.mxu0 0.0
        %3903 = vmatprep.subr.mxu0 0.0
        %3904 = vmatpush1.msra.mxu0 0.0
        %3905 = vmatprep.subr.mxu0 0.0
        %3906 = vmatpush1.msra.mxu0 0.0
        %3907 = vmatprep.subr.mxu0 0.0
        %3908 = vmatpush1.msra.mxu0 0.0
        %3909 = vmatprep.subr.mxu0 0.0
        %3910 = vmatpush1.msra.mxu0 0.0
        %3911 = vmatprep.subr.mxu0 0.0
        %3912 = vmatpush1.msra.mxu0 0.0
        %3913 = vmatprep.subr.mxu0 0.0
        %3914 = vmatpush1.msra.mxu0 0.0
        %3915 = vmatprep.subr.mxu0 0.0
        %3916 = vmatpush1.msra.mxu0 0.0
        %3917 = vmatprep.subr.mxu0 0.0
        %3918 = vmatpush1.msra.mxu0 0.0
        %3919 = vmatprep.mubr.f32.mxu0 0.0
        %v3920 = vand.u32 %v3614, 4294901760
        %v3921 = vsub.f32 %v3614, %v3920
        %v3922 = vand.u32 %v3921, 4294901760
        %3923 = vmatmul.mubr.f32.gmra.mrb[0].mxu0 %v3922
        %v3924 = vpop.f32.mrb[0].mxu0
        %v3925 = vadd.f32 %v3849, %v3924
        %v3926 = vpop.f32.mrb[0].mxu0
        %v3927 = vadd.f32 %v3851, %v3926
        %3928 = vdwg.mxu0
        %v3929 = vand.u32 %v3120, 4294901760
        %v3930 = vsub.f32 %v3120, %v3929
        %v3931 = vand.u32 %v3930, 4294901760
        %3932 = vmatprep.subr.mxu0 %v3931
        %v3933 = vand.u32 %v3119, 4294901760
        %v3934 = vsub.f32 %v3119, %v3933
        %v3935 = vand.u32 %v3934, 4294901760
        %3936 = vmatpush1.msra.mxu0 %v3935
        %3937 = vmatprep.subr.mxu0 0.0
        %3938 = vmatpush1.msra.mxu0 0.0
        %3939 = vmatprep.subr.mxu0 0.0
        %3940 = vmatpush1.msra.mxu0 0.0
        %3941 = vmatprep.subr.mxu0 0.0
        %3942 = vmatpush1.msra.mxu0 0.0
        %3943 = vmatprep.subr.mxu0 0.0
        %3944 = vmatpush1.msra.mxu0 0.0
        %3945 = vmatprep.subr.mxu0 0.0
        %3946 = vmatpush1.msra.mxu0 0.0
        %3947 = vmatprep.subr.mxu0 0.0
        %3948 = vmatpush1.msra.mxu0 0.0
        %3949 = vmatprep.subr.mxu0 0.0
        %3950 = vmatpush1.msra.mxu0 0.0
        %3951 = vmatprep.subr.mxu0 0.0
        %3952 = vmatpush1.msra.mxu0 0.0
        %3953 = vmatprep.subr.mxu0 0.0
        %3954 = vmatpush1.msra.mxu0 0.0
        %3955 = vmatprep.subr.mxu0 0.0
        %3956 = vmatpush1.msra.mxu0 0.0
        %3957 = vmatprep.subr.mxu0 0.0
        %3958 = vmatpush1.msra.mxu0 0.0
        %3959 = vmatprep.subr.mxu0 0.0
        %3960 = vmatpush1.msra.mxu0 0.0
        %3961 = vmatprep.subr.mxu0 0.0
        %3962 = vmatpush1.msra.mxu0 0.0
        %3963 = vmatprep.subr.mxu0 0.0
        %3964 = vmatpush1.msra.mxu0 0.0
        %3965 = vmatprep.subr.mxu0 0.0
        %3966 = vmatpush1.msra.mxu0 0.0
        %3967 = vmatprep.subr.mxu0 0.0
        %3968 = vmatpush1.msra.mxu0 0.0
        %3969 = vmatprep.subr.mxu0 0.0
        %3970 = vmatpush1.msra.mxu0 0.0
        %3971 = vmatprep.subr.mxu0 0.0
        %3972 = vmatpush1.msra.mxu0 0.0
        %3973 = vmatprep.subr.mxu0 0.0
        %3974 = vmatpush1.msra.mxu0 0.0
        %3975 = vmatprep.subr.mxu0 0.0
        %3976 = vmatpush1.msra.mxu0 0.0
        %3977 = vmatprep.subr.mxu0 0.0
        %3978 = vmatpush1.msra.mxu0 0.0
        %3979 = vmatprep.subr.mxu0 0.0
        %3980 = vmatpush1.msra.mxu0 0.0
        %3981 = vmatprep.subr.mxu0 0.0
        %3982 = vmatpush1.msra.mxu0 0.0
        %3983 = vmatprep.subr.mxu0 0.0
        %3984 = vmatpush1.msra.mxu0 0.0
        %3985 = vmatprep.subr.mxu0 0.0
        %3986 = vmatpush1.msra.mxu0 0.0
        %3987 = vmatprep.subr.mxu0 0.0
        %3988 = vmatpush1.msra.mxu0 0.0
        %3989 = vmatprep.subr.mxu0 0.0
        %3990 = vmatpush1.msra.mxu0 0.0
        %3991 = vmatprep.subr.mxu0 0.0
        %3992 = vmatpush1.msra.mxu0 0.0
        %3993 = vmatprep.subr.mxu0 0.0
        %3994 = vmatpush1.msra.mxu0 0.0
        %3995 = vmatprep.subr.mxu0 0.0
        %3996 = vmatpush1.msra.mxu0 0.0
        %3997 = vmatprep.subr.mxu0 0.0
        %3998 = vmatpush1.msra.mxu0 0.0
        %3999 = vmatprep.mubr.f32.mxu0 0.0
        %v4000 = vand.u32 %v3614, 4294901760
        %4001 = vmatmul.mubr.f32.gmra.mrb[0].mxu0 %v4000
        %v4002 = vpop.f32.mrb[0].mxu0
        %v4003 = vadd.f32 %v3925, %v4002
        %v4004 = vpop.f32.mrb[0].mxu0
        %v4005 = vadd.f32 %v3927, %v4004
        %4006 = vdwg.mxu0
        %v4007 = vand.u32 %v3120, 4294901760
        %4008 = vmatprep.subr.mxu0 %v4007
        %v4009 = vand.u32 %v3119, 4294901760
        %4010 = vmatpush1.msra.mxu0 %v4009
        %4011 = vmatprep.subr.mxu0 0.0
        %4012 = vmatpush1.msra.mxu0 0.0
        %4013 = vmatprep.subr.mxu0 0.0
        %4014 = vmatpush1.msra.mxu0 0.0
        %4015 = vmatprep.subr.mxu0 0.0
        %4016 = vmatpush1.msra.mxu0 0.0
        %4017 = vmatprep.subr.mxu0 0.0
        %4018 = vmatpush1.msra.mxu0 0.0
        %4019 = vmatprep.subr.mxu0 0.0
        %4020 = vmatpush1.msra.mxu0 0.0
        %4021 = vmatprep.subr.mxu0 0.0
        %4022 = vmatpush1.msra.mxu0 0.0
        %4023 = vmatprep.subr.mxu0 0.0
        %4024 = vmatpush1.msra.mxu0 0.0
        %4025 = vmatprep.subr.mxu0 0.0
        %4026 = vmatpush1.msra.mxu0 0.0
        %4027 = vmatprep.subr.mxu0 0.0
        %4028 = vmatpush1.msra.mxu0 0.0
        %4029 = vmatprep.subr.mxu0 0.0
        %4030 = vmatpush1.msra.mxu0 0.0
        %4031 = vmatprep.subr.mxu0 0.0
        %4032 = vmatpush1.msra.mxu0 0.0
        %4033 = vmatprep.subr.mxu0 0.0
        %4034 = vmatpush1.msra.mxu0 0.0
        %4035 = vmatprep.subr.mxu0 0.0
        %4036 = vmatpush1.msra.mxu0 0.0
        %4037 = vmatprep.subr.mxu0 0.0
        %4038 = vmatpush1.msra.mxu0 0.0
        %4039 = vmatprep.subr.mxu0 0.0
        %4040 = vmatpush1.msra.mxu0 0.0
        %4041 = vmatprep.subr.mxu0 0.0
        %4042 = vmatpush1.msra.mxu0 0.0
        %4043 = vmatprep.subr.mxu0 0.0
        %4044 = vmatpush1.msra.mxu0 0.0
        %4045 = vmatprep.subr.mxu0 0.0
        %4046 = vmatpush1.msra.mxu0 0.0
        %4047 = vmatprep.subr.mxu0 0.0
        %4048 = vmatpush1.msra.mxu0 0.0
        %4049 = vmatprep.subr.mxu0 0.0
        %4050 = vmatpush1.msra.mxu0 0.0
        %4051 = vmatprep.subr.mxu0 0.0
        %4052 = vmatpush1.msra.mxu0 0.0
        %4053 = vmatprep.subr.mxu0 0.0
        %4054 = vmatpush1.msra.mxu0 0.0
        %4055 = vmatprep.subr.mxu0 0.0
        %4056 = vmatpush1.msra.mxu0 0.0
        %4057 = vmatprep.subr.mxu0 0.0
        %4058 = vmatpush1.msra.mxu0 0.0
        %4059 = vmatprep.subr.mxu0 0.0
        %4060 = vmatpush1.msra.mxu0 0.0
        %4061 = vmatprep.subr.mxu0 0.0
        %4062 = vmatpush1.msra.mxu0 0.0
        %4063 = vmatprep.subr.mxu0 0.0
        %4064 = vmatpush1.msra.mxu0 0.0
        %4065 = vmatprep.subr.mxu0 0.0
        %4066 = vmatpush1.msra.mxu0 0.0
        %4067 = vmatprep.subr.mxu0 0.0
        %4068 = vmatpush1.msra.mxu0 0.0
        %4069 = vmatprep.subr.mxu0 0.0
        %4070 = vmatpush1.msra.mxu0 0.0
        %4071 = vmatprep.subr.mxu0 0.0
        %4072 = vmatpush1.msra.mxu0 0.0
        %4073 = vmatprep.mubr.f32.mxu0 0.0
        %v4074 = vand.u32 %v3614, 4294901760
        %4075 = vmatmul.mubr.f32.gmra.mrb[0].mxu0 %v4074
        %v4076 = vpop.f32.mrb[0].mxu0
        %v4077 = vadd.f32 %v4003, %v4076
        %v4078 = vpop.f32.mrb[0].mxu0
        %v4079 = vadd.f32 %v4005, %v4078
        %4080 = vdwg.mxu0
        %4081 = vrot.lane.b32.xlu0 %v3099, 15
        %v4082 = vpop.permute.xlu0 %4081
        %4083 = vrot.lane.b32.xlu0 %v3100, 15
        %v4084 = vpop.permute.xlu0 %4083
        %v4085 = vsel %vm617, %v4082, %v4084
        %v4086 = vsel %vm617, %v4084, %v4082
        %s4087 = scalar_lea.vmem %s7, 4
        %v4088 = vld [vmem:[%s4087] sm:$0x3]
        %v4090 = vlaneseq
        %v4091 = vshrl.u32 %v4090, 7
        %v4092 = vsub.s32 0, %v4091
        %v4093 = vrot.slane %v4088, %v4092
        %v4094 = vlaneseq
        %v4095 = vshrl.u32 %v4094, 7
        %v4096 = vsub.s32 1, %v4095
        %v4097 = vrot.slane %v4088, %v4096
        %v4100 = vmul.f32 %v4086, %v4093
        %v4101 = vmul.f32 %v4085, %v4097
        %s4102 = scalar_lea.vmem %s6, 16
        %v4103 = vld [vmem:[%s4102] sm:$0xff]
        %v4105 = vsel %vm1672, %v4103, 0
        %v4107 = vand.u32 %v4101, 4294901760
        %4108 = vmatprep.subr.mxu0 %v4107
        %v4109 = vand.u32 %v4100, 4294901760
        %4110 = vmatpush1.msra.mxu0 %v4109
        %4111 = vmatprep.subr.mxu0 0.0
        %4112 = vmatpush1.msra.mxu0 0.0
        %4113 = vmatprep.subr.mxu0 0.0
        %4114 = vmatpush1.msra.mxu0 0.0
        %4115 = vmatprep.subr.mxu0 0.0
        %4116 = vmatpush1.msra.mxu0 0.0
        %4117 = vmatprep.subr.mxu0 0.0
        %4118 = vmatpush1.msra.mxu0 0.0
        %4119 = vmatprep.subr.mxu0 0.0
        %4120 = vmatpush1.msra.mxu0 0.0
        %4121 = vmatprep.subr.mxu0 0.0
        %4122 = vmatpush1.msra.mxu0 0.0
        %4123 = vmatprep.subr.mxu0 0.0
        %4124 = vmatpush1.msra.mxu0 0.0
        %4125 = vmatprep.subr.mxu0 0.0
        %4126 = vmatpush1.msra.mxu0 0.0
        %4127 = vmatprep.subr.mxu0 0.0
        %4128 = vmatpush1.msra.mxu0 0.0
        %4129 = vmatprep.subr.mxu0 0.0
        %4130 = vmatpush1.msra.mxu0 0.0
        %4131 = vmatprep.subr.mxu0 0.0
        %4132 = vmatpush1.msra.mxu0 0.0
        %4133 = vmatprep.subr.mxu0 0.0
        %4134 = vmatpush1.msra.mxu0 0.0
        %4135 = vmatprep.subr.mxu0 0.0
        %4136 = vmatpush1.msra.mxu0 0.0
        %4137 = vmatprep.subr.mxu0 0.0
        %4138 = vmatpush1.msra.mxu0 0.0
        %4139 = vmatprep.subr.mxu0 0.0
        %4140 = vmatpush1.msra.mxu0 0.0
        %4141 = vmatprep.subr.mxu0 0.0
        %4142 = vmatpush1.msra.mxu0 0.0
        %4143 = vmatprep.subr.mxu0 0.0
        %4144 = vmatpush1.msra.mxu0 0.0
        %4145 = vmatprep.subr.mxu0 0.0
        %4146 = vmatpush1.msra.mxu0 0.0
        %4147 = vmatprep.subr.mxu0 0.0
        %4148 = vmatpush1.msra.mxu0 0.0
        %4149 = vmatprep.subr.mxu0 0.0
        %4150 = vmatpush1.msra.mxu0 0.0
        %4151 = vmatprep.subr.mxu0 0.0
        %4152 = vmatpush1.msra.mxu0 0.0
        %4153 = vmatprep.subr.mxu0 0.0
        %4154 = vmatpush1.msra.mxu0 0.0
        %4155 = vmatprep.subr.mxu0 0.0
        %4156 = vmatpush1.msra.mxu0 0.0
        %4157 = vmatprep.subr.mxu0 0.0
        %4158 = vmatpush1.msra.mxu0 0.0
        %4159 = vmatprep.subr.mxu0 0.0
        %4160 = vmatpush1.msra.mxu0 0.0
        %4161 = vmatprep.subr.mxu0 0.0
        %4162 = vmatpush1.msra.mxu0 0.0
        %4163 = vmatprep.subr.mxu0 0.0
        %4164 = vmatpush1.msra.mxu0 0.0
        %4165 = vmatprep.subr.mxu0 0.0
        %4166 = vmatpush1.msra.mxu0 0.0
        %4167 = vmatprep.subr.mxu0 0.0
        %4168 = vmatpush1.msra.mxu0 0.0
        %4169 = vmatprep.subr.mxu0 0.0
        %4170 = vmatpush1.msra.mxu0 0.0
        %4171 = vmatprep.subr.mxu0 0.0
        %4172 = vmatpush1.msra.mxu0 0.0
        %4173 = vmatprep.mubr.f32.mxu0 0.0
        %v4174 = vand.u32 %v4105, 4294901760
        %v4175 = vsub.f32 %v4105, %v4174
        %v4176 = vand.u32 %v4175, 4294901760
        %v4177 = vsub.f32 %v4175, %v4176
        %v4178 = vand.u32 %v4177, 4294901760
        %4179 = vmatmul.mubr.f32.gmra.mrb[0].mxu0 %v4178
        %v4180 = vpop.f32.mrb[0].mxu0
        %v4181 = vadd.f32 0.0, %v4180
        %v4182 = vpop.f32.mrb[0].mxu0
        %v4183 = vadd.f32 0.0, %v4182
        %4184 = vdwg.mxu0
        %v4185 = vand.u32 %v4101, 4294901760
        %v4186 = vsub.f32 %v4101, %v4185
        %v4187 = vand.u32 %v4186, 4294901760
        %v4188 = vsub.f32 %v4186, %v4187
        %v4189 = vand.u32 %v4188, 4294901760
        %4190 = vmatprep.subr.mxu0 %v4189
        %v4191 = vand.u32 %v4100, 4294901760
        %v4192 = vsub.f32 %v4100, %v4191
        %v4193 = vand.u32 %v4192, 4294901760
        %v4194 = vsub.f32 %v4192, %v4193
        %v4195 = vand.u32 %v4194, 4294901760
        %4196 = vmatpush1.msra.mxu0 %v4195
        %4197 = vmatprep.subr.mxu0 0.0
        %4198 = vmatpush1.msra.mxu0 0.0
        %4199 = vmatprep.subr.mxu0 0.0
        %4200 = vmatpush1.msra.mxu0 0.0
        %4201 = vmatprep.subr.mxu0 0.0
        %4202 = vmatpush1.msra.mxu0 0.0
        %4203 = vmatprep.subr.mxu0 0.0
        %4204 = vmatpush1.msra.mxu0 0.0
        %4205 = vmatprep.subr.mxu0 0.0
        %4206 = vmatpush1.msra.mxu0 0.0
        %4207 = vmatprep.subr.mxu0 0.0
        %4208 = vmatpush1.msra.mxu0 0.0
        %4209 = vmatprep.subr.mxu0 0.0
        %4210 = vmatpush1.msra.mxu0 0.0
        %4211 = vmatprep.subr.mxu0 0.0
        %4212 = vmatpush1.msra.mxu0 0.0
        %4213 = vmatprep.subr.mxu0 0.0
        %4214 = vmatpush1.msra.mxu0 0.0
        %4215 = vmatprep.subr.mxu0 0.0
        %4216 = vmatpush1.msra.mxu0 0.0
        %4217 = vmatprep.subr.mxu0 0.0
        %4218 = vmatpush1.msra.mxu0 0.0
        %4219 = vmatprep.subr.mxu0 0.0
        %4220 = vmatpush1.msra.mxu0 0.0
        %4221 = vmatprep.subr.mxu0 0.0
        %4222 = vmatpush1.msra.mxu0 0.0
        %4223 = vmatprep.subr.mxu0 0.0
        %4224 = vmatpush1.msra.mxu0 0.0
        %4225 = vmatprep.subr.mxu0 0.0
        %4226 = vmatpush1.msra.mxu0 0.0
        %4227 = vmatprep.subr.mxu0 0.0
        %4228 = vmatpush1.msra.mxu0 0.0
        %4229 = vmatprep.subr.mxu0 0.0
        %4230 = vmatpush1.msra.mxu0 0.0
        %4231 = vmatprep.subr.mxu0 0.0
        %4232 = vmatpush1.msra.mxu0 0.0
        %4233 = vmatprep.subr.mxu0 0.0
        %4234 = vmatpush1.msra.mxu0 0.0
        %4235 = vmatprep.subr.mxu0 0.0
        %4236 = vmatpush1.msra.mxu0 0.0
        %4237 = vmatprep.subr.mxu0 0.0
        %4238 = vmatpush1.msra.mxu0 0.0
        %4239 = vmatprep.subr.mxu0 0.0
        %4240 = vmatpush1.msra.mxu0 0.0
        %4241 = vmatprep.subr.mxu0 0.0
        %4242 = vmatpush1.msra.mxu0 0.0
        %4243 = vmatprep.subr.mxu0 0.0
        %4244 = vmatpush1.msra.mxu0 0.0
        %4245 = vmatprep.subr.mxu0 0.0
        %4246 = vmatpush1.msra.mxu0 0.0
        %4247 = vmatprep.subr.mxu0 0.0
        %4248 = vmatpush1.msra.mxu0 0.0
        %4249 = vmatprep.subr.mxu0 0.0
        %4250 = vmatpush1.msra.mxu0 0.0
        %4251 = vmatprep.subr.mxu0 0.0
        %4252 = vmatpush1.msra.mxu0 0.0
        %4253 = vmatprep.subr.mxu0 0.0
        %4254 = vmatpush1.msra.mxu0 0.0
        %4255 = vmatprep.subr.mxu0 0.0
        %4256 = vmatpush1.msra.mxu0 0.0
        %4257 = vmatprep.subr.mxu0 0.0
        %4258 = vmatpush1.msra.mxu0 0.0
        %4259 = vmatprep.mubr.f32.mxu0 0.0
        %v4260 = vand.u32 %v4105, 4294901760
        %4261 = vmatmul.mubr.f32.gmra.mrb[0].mxu0 %v4260
        %v4262 = vpop.f32.mrb[0].mxu0
        %v4263 = vadd.f32 %v4181, %v4262
        %v4264 = vpop.f32.mrb[0].mxu0
        %v4265 = vadd.f32 %v4183, %v4264
        %4266 = vdwg.mxu0
        %v4267 = vand.u32 %v4101, 4294901760
        %v4268 = vsub.f32 %v4101, %v4267
        %4269 = vmatprep.subr.mxu0 %v4268
        %v4270 = vand.u32 %v4100, 4294901760
        %v4271 = vsub.f32 %v4100, %v4270
        %4272 = vmatpush1.msra.mxu0 %v4271
        %4273 = vmatprep.subr.mxu0 0.0
        %4274 = vmatpush1.msra.mxu0 0.0
        %4275 = vmatprep.subr.mxu0 0.0
        %4276 = vmatpush1.msra.mxu0 0.0
        %4277 = vmatprep.subr.mxu0 0.0
        %4278 = vmatpush1.msra.mxu0 0.0
        %4279 = vmatprep.subr.mxu0 0.0
        %4280 = vmatpush1.msra.mxu0 0.0
        %4281 = vmatprep.subr.mxu0 0.0
        %4282 = vmatpush1.msra.mxu0 0.0
        %4283 = vmatprep.subr.mxu0 0.0
        %4284 = vmatpush1.msra.mxu0 0.0
        %4285 = vmatprep.subr.mxu0 0.0
        %4286 = vmatpush1.msra.mxu0 0.0
        %4287 = vmatprep.subr.mxu0 0.0
        %4288 = vmatpush1.msra.mxu0 0.0
        %4289 = vmatprep.subr.mxu0 0.0
        %4290 = vmatpush1.msra.mxu0 0.0
        %4291 = vmatprep.subr.mxu0 0.0
        %4292 = vmatpush1.msra.mxu0 0.0
        %4293 = vmatprep.subr.mxu0 0.0
        %4294 = vmatpush1.msra.mxu0 0.0
        %4295 = vmatprep.subr.mxu0 0.0
        %4296 = vmatpush1.msra.mxu0 0.0
        %4297 = vmatprep.subr.mxu0 0.0
        %4298 = vmatpush1.msra.mxu0 0.0
        %4299 = vmatprep.subr.mxu0 0.0
        %4300 = vmatpush1.msra.mxu0 0.0
        %4301 = vmatprep.subr.mxu0 0.0
        %4302 = vmatpush1.msra.mxu0 0.0
        %4303 = vmatprep.subr.mxu0 0.0
        %4304 = vmatpush1.msra.mxu0 0.0
        %4305 = vmatprep.subr.mxu0 0.0
        %4306 = vmatpush1.msra.mxu0 0.0
        %4307 = vmatprep.subr.mxu0 0.0
        %4308 = vmatpush1.msra.mxu0 0.0
        %4309 = vmatprep.subr.mxu0 0.0
        %4310 = vmatpush1.msra.mxu0 0.0
        %4311 = vmatprep.subr.mxu0 0.0
        %4312 = vmatpush1.msra.mxu0 0.0
        %4313 = vmatprep.subr.mxu0 0.0
        %4314 = vmatpush1.msra.mxu0 0.0
        %4315 = vmatprep.subr.mxu0 0.0
        %4316 = vmatpush1.msra.mxu0 0.0
        %4317 = vmatprep.subr.mxu0 0.0
        %4318 = vmatpush1.msra.mxu0 0.0
        %4319 = vmatprep.subr.mxu0 0.0
        %4320 = vmatpush1.msra.mxu0 0.0
        %4321 = vmatprep.subr.mxu0 0.0
        %4322 = vmatpush1.msra.mxu0 0.0
        %4323 = vmatprep.subr.mxu0 0.0
        %4324 = vmatpush1.msra.mxu0 0.0
        %4325 = vmatprep.subr.mxu0 0.0
        %4326 = vmatpush1.msra.mxu0 0.0
        %4327 = vmatprep.subr.mxu0 0.0
        %4328 = vmatpush1.msra.mxu0 0.0
        %4329 = vmatprep.subr.mxu0 0.0
        %4330 = vmatpush1.msra.mxu0 0.0
        %4331 = vmatprep.subr.mxu0 0.0
        %4332 = vmatpush1.msra.mxu0 0.0
        %4333 = vmatprep.subr.mxu0 0.0
        %4334 = vmatpush1.msra.mxu0 0.0
        %4335 = vmatprep.mubr.f32.mxu0 0.0
        %v4336 = vand.u32 %v4105, 4294901760
        %v4337 = vsub.f32 %v4105, %v4336
        %4338 = vmatmul.mubr.f32.gmra.mrb[0].mxu0 %v4337
        %v4339 = vpop.f32.mrb[0].mxu0
        %v4340 = vadd.f32 %v4263, %v4339
        %v4341 = vpop.f32.mrb[0].mxu0
        %v4342 = vadd.f32 %v4265, %v4341
        %4343 = vdwg.mxu0
        %v4344 = vand.u32 %v4101, 4294901760
        %4345 = vmatprep.subr.mxu0 %v4344
        %v4346 = vand.u32 %v4100, 4294901760
        %4347 = vmatpush1.msra.mxu0 %v4346
        %4348 = vmatprep.subr.mxu0 0.0
        %4349 = vmatpush1.msra.mxu0 0.0
        %4350 = vmatprep.subr.mxu0 0.0
        %4351 = vmatpush1.msra.mxu0 0.0
        %4352 = vmatprep.subr.mxu0 0.0
        %4353 = vmatpush1.msra.mxu0 0.0
        %4354 = vmatprep.subr.mxu0 0.0
        %4355 = vmatpush1.msra.mxu0 0.0
        %4356 = vmatprep.subr.mxu0 0.0
        %4357 = vmatpush1.msra.mxu0 0.0
        %4358 = vmatprep.subr.mxu0 0.0
        %4359 = vmatpush1.msra.mxu0 0.0
        %4360 = vmatprep.subr.mxu0 0.0
        %4361 = vmatpush1.msra.mxu0 0.0
        %4362 = vmatprep.subr.mxu0 0.0
        %4363 = vmatpush1.msra.mxu0 0.0
        %4364 = vmatprep.subr.mxu0 0.0
        %4365 = vmatpush1.msra.mxu0 0.0
        %4366 = vmatprep.subr.mxu0 0.0
        %4367 = vmatpush1.msra.mxu0 0.0
        %4368 = vmatprep.subr.mxu0 0.0
        %4369 = vmatpush1.msra.mxu0 0.0
        %4370 = vmatprep.subr.mxu0 0.0
        %4371 = vmatpush1.msra.mxu0 0.0
        %4372 = vmatprep.subr.mxu0 0.0
        %4373 = vmatpush1.msra.mxu0 0.0
        %4374 = vmatprep.subr.mxu0 0.0
        %4375 = vmatpush1.msra.mxu0 0.0
        %4376 = vmatprep.subr.mxu0 0.0
        %4377 = vmatpush1.msra.mxu0 0.0
        %4378 = vmatprep.subr.mxu0 0.0
        %4379 = vmatpush1.msra.mxu0 0.0
        %4380 = vmatprep.subr.mxu0 0.0
        %4381 = vmatpush1.msra.mxu0 0.0
        %4382 = vmatprep.subr.mxu0 0.0
        %4383 = vmatpush1.msra.mxu0 0.0
        %4384 = vmatprep.subr.mxu0 0.0
        %4385 = vmatpush1.msra.mxu0 0.0
        %4386 = vmatprep.subr.mxu0 0.0
        %4387 = vmatpush1.msra.mxu0 0.0
        %4388 = vmatprep.subr.mxu0 0.0
        %4389 = vmatpush1.msra.mxu0 0.0
        %4390 = vmatprep.subr.mxu0 0.0
        %4391 = vmatpush1.msra.mxu0 0.0
        %4392 = vmatprep.subr.mxu0 0.0
        %4393 = vmatpush1.msra.mxu0 0.0
        %4394 = vmatprep.subr.mxu0 0.0
        %4395 = vmatpush1.msra.mxu0 0.0
        %4396 = vmatprep.subr.mxu0 0.0
        %4397 = vmatpush1.msra.mxu0 0.0
        %4398 = vmatprep.subr.mxu0 0.0
        %4399 = vmatpush1.msra.mxu0 0.0
        %4400 = vmatprep.subr.mxu0 0.0
        %4401 = vmatpush1.msra.mxu0 0.0
        %4402 = vmatprep.subr.mxu0 0.0
        %4403 = vmatpush1.msra.mxu0 0.0
        %4404 = vmatprep.subr.mxu0 0.0
        %4405 = vmatpush1.msra.mxu0 0.0
        %4406 = vmatprep.subr.mxu0 0.0
        %4407 = vmatpush1.msra.mxu0 0.0
        %4408 = vmatprep.subr.mxu0 0.0
        %4409 = vmatpush1.msra.mxu0 0.0
        %4410 = vmatprep.mubr.f32.mxu0 0.0
        %v4411 = vand.u32 %v4105, 4294901760
        %v4412 = vsub.f32 %v4105, %v4411
        %v4413 = vand.u32 %v4412, 4294901760
        %4414 = vmatmul.mubr.f32.gmra.mrb[0].mxu0 %v4413
        %v4415 = vpop.f32.mrb[0].mxu0
        %v4416 = vadd.f32 %v4340, %v4415
        %v4417 = vpop.f32.mrb[0].mxu0
        %v4418 = vadd.f32 %v4342, %v4417
        %4419 = vdwg.mxu0
        %v4420 = vand.u32 %v4101, 4294901760
        %v4421 = vsub.f32 %v4101, %v4420
        %v4422 = vand.u32 %v4421, 4294901760
        %4423 = vmatprep.subr.mxu0 %v4422
        %v4424 = vand.u32 %v4100, 4294901760
        %v4425 = vsub.f32 %v4100, %v4424
        %v4426 = vand.u32 %v4425, 4294901760
        %4427 = vmatpush1.msra.mxu0 %v4426
        %4428 = vmatprep.subr.mxu0 0.0
        %4429 = vmatpush1.msra.mxu0 0.0
        %4430 = vmatprep.subr.mxu0 0.0
        %4431 = vmatpush1.msra.mxu0 0.0
        %4432 = vmatprep.subr.mxu0 0.0
        %4433 = vmatpush1.msra.mxu0 0.0
        %4434 = vmatprep.subr.mxu0 0.0
        %4435 = vmatpush1.msra.mxu0 0.0
        %4436 = vmatprep.subr.mxu0 0.0
        %4437 = vmatpush1.msra.mxu0 0.0
        %4438 = vmatprep.subr.mxu0 0.0
        %4439 = vmatpush1.msra.mxu0 0.0
        %4440 = vmatprep.subr.mxu0 0.0
        %4441 = vmatpush1.msra.mxu0 0.0
        %4442 = vmatprep.subr.mxu0 0.0
        %4443 = vmatpush1.msra.mxu0 0.0
        %4444 = vmatprep.subr.mxu0 0.0
        %4445 = vmatpush1.msra.mxu0 0.0
        %4446 = vmatprep.subr.mxu0 0.0
        %4447 = vmatpush1.msra.mxu0 0.0
        %4448 = vmatprep.subr.mxu0 0.0
        %4449 = vmatpush1.msra.mxu0 0.0
        %4450 = vmatprep.subr.mxu0 0.0
        %4451 = vmatpush1.msra.mxu0 0.0
        %4452 = vmatprep.subr.mxu0 0.0
        %4453 = vmatpush1.msra.mxu0 0.0
        %4454 = vmatprep.subr.mxu0 0.0
        %4455 = vmatpush1.msra.mxu0 0.0
        %4456 = vmatprep.subr.mxu0 0.0
        %4457 = vmatpush1.msra.mxu0 0.0
        %4458 = vmatprep.subr.mxu0 0.0
        %4459 = vmatpush1.msra.mxu0 0.0
        %4460 = vmatprep.subr.mxu0 0.0
        %4461 = vmatpush1.msra.mxu0 0.0
        %4462 = vmatprep.subr.mxu0 0.0
        %4463 = vmatpush1.msra.mxu0 0.0
        %4464 = vmatprep.subr.mxu0 0.0
        %4465 = vmatpush1.msra.mxu0 0.0
        %4466 = vmatprep.subr.mxu0 0.0
        %4467 = vmatpush1.msra.mxu0 0.0
        %4468 = vmatprep.subr.mxu0 0.0
        %4469 = vmatpush1.msra.mxu0 0.0
        %4470 = vmatprep.subr.mxu0 0.0
        %4471 = vmatpush1.msra.mxu0 0.0
        %4472 = vmatprep.subr.mxu0 0.0
        %4473 = vmatpush1.msra.mxu0 0.0
        %4474 = vmatprep.subr.mxu0 0.0
        %4475 = vmatpush1.msra.mxu0 0.0
        %4476 = vmatprep.subr.mxu0 0.0
        %4477 = vmatpush1.msra.mxu0 0.0
        %4478 = vmatprep.subr.mxu0 0.0
        %4479 = vmatpush1.msra.mxu0 0.0
        %4480 = vmatprep.subr.mxu0 0.0
        %4481 = vmatpush1.msra.mxu0 0.0
        %4482 = vmatprep.subr.mxu0 0.0
        %4483 = vmatpush1.msra.mxu0 0.0
        %4484 = vmatprep.subr.mxu0 0.0
        %4485 = vmatpush1.msra.mxu0 0.0
        %4486 = vmatprep.subr.mxu0 0.0
        %4487 = vmatpush1.msra.mxu0 0.0
        %4488 = vmatprep.subr.mxu0 0.0
        %4489 = vmatpush1.msra.mxu0 0.0
        %4490 = vmatprep.mubr.f32.mxu0 0.0
        %v4491 = vand.u32 %v4105, 4294901760
        %4492 = vmatmul.mubr.f32.gmra.mrb[0].mxu0 %v4491
        %v4493 = vpop.f32.mrb[0].mxu0
        %v4494 = vadd.f32 %v4416, %v4493
        %v4495 = vpop.f32.mrb[0].mxu0
        %v4496 = vadd.f32 %v4418, %v4495
        %4497 = vdwg.mxu0
        %v4498 = vand.u32 %v4101, 4294901760
        %4499 = vmatprep.subr.mxu0 %v4498
        %v4500 = vand.u32 %v4100, 4294901760
        %4501 = vmatpush1.msra.mxu0 %v4500
        %4502 = vmatprep.subr.mxu0 0.0
        %4503 = vmatpush1.msra.mxu0 0.0
        %4504 = vmatprep.subr.mxu0 0.0
        %4505 = vmatpush1.msra.mxu0 0.0
        %4506 = vmatprep.subr.mxu0 0.0
        %4507 = vmatpush1.msra.mxu0 0.0
        %4508 = vmatprep.subr.mxu0 0.0
        %4509 = vmatpush1.msra.mxu0 0.0
        %4510 = vmatprep.subr.mxu0 0.0
        %4511 = vmatpush1.msra.mxu0 0.0
        %4512 = vmatprep.subr.mxu0 0.0
        %4513 = vmatpush1.msra.mxu0 0.0
        %4514 = vmatprep.subr.mxu0 0.0
        %4515 = vmatpush1.msra.mxu0 0.0
        %4516 = vmatprep.subr.mxu0 0.0
        %4517 = vmatpush1.msra.mxu0 0.0
        %4518 = vmatprep.subr.mxu0 0.0
        %4519 = vmatpush1.msra.mxu0 0.0
        %4520 = vmatprep.subr.mxu0 0.0
        %4521 = vmatpush1.msra.mxu0 0.0
        %4522 = vmatprep.subr.mxu0 0.0
        %4523 = vmatpush1.msra.mxu0 0.0
        %4524 = vmatprep.subr.mxu0 0.0
        %4525 = vmatpush1.msra.mxu0 0.0
        %4526 = vmatprep.subr.mxu0 0.0
        %4527 = vmatpush1.msra.mxu0 0.0
        %4528 = vmatprep.subr.mxu0 0.0
        %4529 = vmatpush1.msra.mxu0 0.0
        %4530 = vmatprep.subr.mxu0 0.0
        %4531 = vmatpush1.msra.mxu0 0.0
        %4532 = vmatprep.subr.mxu0 0.0
        %4533 = vmatpush1.msra.mxu0 0.0
        %4534 = vmatprep.subr.mxu0 0.0
        %4535 = vmatpush1.msra.mxu0 0.0
        %4536 = vmatprep.subr.mxu0 0.0
        %4537 = vmatpush1.msra.mxu0 0.0
        %4538 = vmatprep.subr.mxu0 0.0
        %4539 = vmatpush1.msra.mxu0 0.0
        %4540 = vmatprep.subr.mxu0 0.0
        %4541 = vmatpush1.msra.mxu0 0.0
        %4542 = vmatprep.subr.mxu0 0.0
        %4543 = vmatpush1.msra.mxu0 0.0
        %4544 = vmatprep.subr.mxu0 0.0
        %4545 = vmatpush1.msra.mxu0 0.0
        %4546 = vmatprep.subr.mxu0 0.0
        %4547 = vmatpush1.msra.mxu0 0.0
        %4548 = vmatprep.subr.mxu0 0.0
        %4549 = vmatpush1.msra.mxu0 0.0
        %4550 = vmatprep.subr.mxu0 0.0
        %4551 = vmatpush1.msra.mxu0 0.0
        %4552 = vmatprep.subr.mxu0 0.0
        %4553 = vmatpush1.msra.mxu0 0.0
        %4554 = vmatprep.subr.mxu0 0.0
        %4555 = vmatpush1.msra.mxu0 0.0
        %4556 = vmatprep.subr.mxu0 0.0
        %4557 = vmatpush1.msra.mxu0 0.0
        %4558 = vmatprep.subr.mxu0 0.0
        %4559 = vmatpush1.msra.mxu0 0.0
        %4560 = vmatprep.subr.mxu0 0.0
        %4561 = vmatpush1.msra.mxu0 0.0
        %4562 = vmatprep.subr.mxu0 0.0
        %4563 = vmatpush1.msra.mxu0 0.0
        %4564 = vmatprep.mubr.f32.mxu0 0.0
        %v4565 = vand.u32 %v4105, 4294901760
        %4566 = vmatmul.mubr.f32.gmra.mrb[0].mxu0 %v4565
        %v4567 = vpop.f32.mrb[0].mxu0
        %v4568 = vadd.f32 %v4494, %v4567
        %v4569 = vpop.f32.mrb[0].mxu0
        %v4570 = vadd.f32 %v4496, %v4569
        %4571 = vdwg.mxu0
        %v4572 = vadd.f32 %v4077, %v4568
        %v4573 = vadd.f32 %v4079, %v4570
        %4574 = vrot.lane.b32.xlu0 %v3099, 1
        %v4575 = vpop.permute.xlu0 %4574
        %4576 = vrot.lane.b32.xlu0 %v3100, 1
        %v4577 = vpop.permute.xlu0 %4576
        %v4578 = vsel %vm665, %v4575, %v4577
        %v4579 = vsel %vm665, %v4577, %v4575
        %s4580 = scalar_lea.vmem %s7, 6
        %v4581 = vld [vmem:[%s4580] sm:$0x3]
        %v4583 = vlaneseq
        %v4584 = vshrl.u32 %v4583, 7
        %v4585 = vsub.s32 0, %v4584
        %v4586 = vrot.slane %v4581, %v4585
        %v4587 = vlaneseq
        %v4588 = vshrl.u32 %v4587, 7
        %v4589 = vsub.s32 1, %v4588
        %v4590 = vrot.slane %v4581, %v4589
        %v4593 = vmul.f32 %v4579, %v4586
        %v4594 = vmul.f32 %v4578, %v4590
        %s4595 = scalar_lea.vmem %s6, 24
        %v4596 = vld [vmem:[%s4595] sm:$0xff]
        %v4598 = vsel %vm1672, %v4596, 0
        %v4600 = vand.u32 %v4594, 4294901760
        %4601 = vmatprep.subr.mxu0 %v4600
        %v4602 = vand.u32 %v4593, 4294901760
        %4603 = vmatpush1.msra.mxu0 %v4602
        %4604 = vmatprep.subr.mxu0 0.0
        %4605 = vmatpush1.msra.mxu0 0.0
        %4606 = vmatprep.subr.mxu0 0.0
        %4607 = vmatpush1.msra.mxu0 0.0
        %4608 = vmatprep.subr.mxu0 0.0
        %4609 = vmatpush1.msra.mxu0 0.0
        %4610 = vmatprep.subr.mxu0 0.0
        %4611 = vmatpush1.msra.mxu0 0.0
        %4612 = vmatprep.subr.mxu0 0.0
        %4613 = vmatpush1.msra.mxu0 0.0
        %4614 = vmatprep.subr.mxu0 0.0
        %4615 = vmatpush1.msra.mxu0 0.0
        %4616 = vmatprep.subr.mxu0 0.0
        %4617 = vmatpush1.msra.mxu0 0.0
        %4618 = vmatprep.subr.mxu0 0.0
        %4619 = vmatpush1.msra.mxu0 0.0
        %4620 = vmatprep.subr.mxu0 0.0
        %4621 = vmatpush1.msra.mxu0 0.0
        %4622 = vmatprep.subr.mxu0 0.0
        %4623 = vmatpush1.msra.mxu0 0.0
        %4624 = vmatprep.subr.mxu0 0.0
        %4625 = vmatpush1.msra.mxu0 0.0
        %4626 = vmatprep.subr.mxu0 0.0
        %4627 = vmatpush1.msra.mxu0 0.0
        %4628 = vmatprep.subr.mxu0 0.0
        %4629 = vmatpush1.msra.mxu0 0.0
        %4630 = vmatprep.subr.mxu0 0.0
        %4631 = vmatpush1.msra.mxu0 0.0
        %4632 = vmatprep.subr.mxu0 0.0
        %4633 = vmatpush1.msra.mxu0 0.0
        %4634 = vmatprep.subr.mxu0 0.0
        %4635 = vmatpush1.msra.mxu0 0.0
        %4636 = vmatprep.subr.mxu0 0.0
        %4637 = vmatpush1.msra.mxu0 0.0
        %4638 = vmatprep.subr.mxu0 0.0
        %4639 = vmatpush1.msra.mxu0 0.0
        %4640 = vmatprep.subr.mxu0 0.0
        %4641 = vmatpush1.msra.mxu0 0.0
        %4642 = vmatprep.subr.mxu0 0.0
        %4643 = vmatpush1.msra.mxu0 0.0
        %4644 = vmatprep.subr.mxu0 0.0
        %4645 = vmatpush1.msra.mxu0 0.0
        %4646 = vmatprep.subr.mxu0 0.0
        %4647 = vmatpush1.msra.mxu0 0.0
        %4648 = vmatprep.subr.mxu0 0.0
        %4649 = vmatpush1.msra.mxu0 0.0
        %4650 = vmatprep.subr.mxu0 0.0
        %4651 = vmatpush1.msra.mxu0 0.0
        %4652 = vmatprep.subr.mxu0 0.0
        %4653 = vmatpush1.msra.mxu0 0.0
        %4654 = vmatprep.subr.mxu0 0.0
        %4655 = vmatpush1.msra.mxu0 0.0
        %4656 = vmatprep.subr.mxu0 0.0
        %4657 = vmatpush1.msra.mxu0 0.0
        %4658 = vmatprep.subr.mxu0 0.0
        %4659 = vmatpush1.msra.mxu0 0.0
        %4660 = vmatprep.subr.mxu0 0.0
        %4661 = vmatpush1.msra.mxu0 0.0
        %4662 = vmatprep.subr.mxu0 0.0
        %4663 = vmatpush1.msra.mxu0 0.0
        %4664 = vmatprep.subr.mxu0 0.0
        %4665 = vmatpush1.msra.mxu0 0.0
        %4666 = vmatprep.mubr.f32.mxu0 0.0
        %v4667 = vand.u32 %v4598, 4294901760
        %v4668 = vsub.f32 %v4598, %v4667
        %v4669 = vand.u32 %v4668, 4294901760
        %v4670 = vsub.f32 %v4668, %v4669
        %v4671 = vand.u32 %v4670, 4294901760
        %4672 = vmatmul.mubr.f32.gmra.mrb[0].mxu0 %v4671
        %v4673 = vpop.f32.mrb[0].mxu0
        %v4674 = vadd.f32 0.0, %v4673
        %v4675 = vpop.f32.mrb[0].mxu0
        %v4676 = vadd.f32 0.0, %v4675
        %4677 = vdwg.mxu0
        %v4678 = vand.u32 %v4594, 4294901760
        %v4679 = vsub.f32 %v4594, %v4678
        %v4680 = vand.u32 %v4679, 4294901760
        %v4681 = vsub.f32 %v4679, %v4680
        %v4682 = vand.u32 %v4681, 4294901760
        %4683 = vmatprep.subr.mxu0 %v4682
        %v4684 = vand.u32 %v4593, 4294901760
        %v4685 = vsub.f32 %v4593, %v4684
        %v4686 = vand.u32 %v4685, 4294901760
        %v4687 = vsub.f32 %v4685, %v4686
        %v4688 = vand.u32 %v4687, 4294901760
        %4689 = vmatpush1.msra.mxu0 %v4688
        %4690 = vmatprep.subr.mxu0 0.0
        %4691 = vmatpush1.msra.mxu0 0.0
        %4692 = vmatprep.subr.mxu0 0.0
        %4693 = vmatpush1.msra.mxu0 0.0
        %4694 = vmatprep.subr.mxu0 0.0
        %4695 = vmatpush1.msra.mxu0 0.0
        %4696 = vmatprep.subr.mxu0 0.0
        %4697 = vmatpush1.msra.mxu0 0.0
        %4698 = vmatprep.subr.mxu0 0.0
        %4699 = vmatpush1.msra.mxu0 0.0
        %4700 = vmatprep.subr.mxu0 0.0
        %4701 = vmatpush1.msra.mxu0 0.0
        %4702 = vmatprep.subr.mxu0 0.0
        %4703 = vmatpush1.msra.mxu0 0.0
        %4704 = vmatprep.subr.mxu0 0.0
        %4705 = vmatpush1.msra.mxu0 0.0
        %4706 = vmatprep.subr.mxu0 0.0
        %4707 = vmatpush1.msra.mxu0 0.0
        %4708 = vmatprep.subr.mxu0 0.0
        %4709 = vmatpush1.msra.mxu0 0.0
        %4710 = vmatprep.subr.mxu0 0.0
        %4711 = vmatpush1.msra.mxu0 0.0
        %4712 = vmatprep.subr.mxu0 0.0
        %4713 = vmatpush1.msra.mxu0 0.0
        %4714 = vmatprep.subr.mxu0 0.0
        %4715 = vmatpush1.msra.mxu0 0.0
        %4716 = vmatprep.subr.mxu0 0.0
        %4717 = vmatpush1.msra.mxu0 0.0
        %4718 = vmatprep.subr.mxu0 0.0
        %4719 = vmatpush1.msra.mxu0 0.0
        %4720 = vmatprep.subr.mxu0 0.0
        %4721 = vmatpush1.msra.mxu0 0.0
        %4722 = vmatprep.subr.mxu0 0.0
        %4723 = vmatpush1.msra.mxu0 0.0
        %4724 = vmatprep.subr.mxu0 0.0
        %4725 = vmatpush1.msra.mxu0 0.0
        %4726 = vmatprep.subr.mxu0 0.0
        %4727 = vmatpush1.msra.mxu0 0.0
        %4728 = vmatprep.subr.mxu0 0.0
        %4729 = vmatpush1.msra.mxu0 0.0
        %4730 = vmatprep.subr.mxu0 0.0
        %4731 = vmatpush1.msra.mxu0 0.0
        %4732 = vmatprep.subr.mxu0 0.0
        %4733 = vmatpush1.msra.mxu0 0.0
        %4734 = vmatprep.subr.mxu0 0.0
        %4735 = vmatpush1.msra.mxu0 0.0
        %4736 = vmatprep.subr.mxu0 0.0
        %4737 = vmatpush1.msra.mxu0 0.0
        %4738 = vmatprep.subr.mxu0 0.0
        %4739 = vmatpush1.msra.mxu0 0.0
        %4740 = vmatprep.subr.mxu0 0.0
        %4741 = vmatpush1.msra.mxu0 0.0
        %4742 = vmatprep.subr.mxu0 0.0
        %4743 = vmatpush1.msra.mxu0 0.0
        %4744 = vmatprep.subr.mxu0 0.0
        %4745 = vmatpush1.msra.mxu0 0.0
        %4746 = vmatprep.subr.mxu0 0.0
        %4747 = vmatpush1.msra.mxu0 0.0
        %4748 = vmatprep.subr.mxu0 0.0
        %4749 = vmatpush1.msra.mxu0 0.0
        %4750 = vmatprep.subr.mxu0 0.0
        %4751 = vmatpush1.msra.mxu0 0.0
        %4752 = vmatprep.mubr.f32.mxu0 0.0
        %v4753 = vand.u32 %v4598, 4294901760
        %4754 = vmatmul.mubr.f32.gmra.mrb[0].mxu0 %v4753
        %v4755 = vpop.f32.mrb[0].mxu0
        %v4756 = vadd.f32 %v4674, %v4755
        %v4757 = vpop.f32.mrb[0].mxu0
        %v4758 = vadd.f32 %v4676, %v4757
        %4759 = vdwg.mxu0
        %v4760 = vand.u32 %v4594, 4294901760
        %v4761 = vsub.f32 %v4594, %v4760
        %4762 = vmatprep.subr.mxu0 %v4761
        %v4763 = vand.u32 %v4593, 4294901760
        %v4764 = vsub.f32 %v4593, %v4763
        %4765 = vmatpush1.msra.mxu0 %v4764
        %4766 = vmatprep.subr.mxu0 0.0
        %4767 = vmatpush1.msra.mxu0 0.0
        %4768 = vmatprep.subr.mxu0 0.0
        %4769 = vmatpush1.msra.mxu0 0.0
        %4770 = vmatprep.subr.mxu0 0.0
        %4771 = vmatpush1.msra.mxu0 0.0
        %4772 = vmatprep.subr.mxu0 0.0
        %4773 = vmatpush1.msra.mxu0 0.0
        %4774 = vmatprep.subr.mxu0 0.0
        %4775 = vmatpush1.msra.mxu0 0.0
        %4776 = vmatprep.subr.mxu0 0.0
        %4777 = vmatpush1.msra.mxu0 0.0
        %4778 = vmatprep.subr.mxu0 0.0
        %4779 = vmatpush1.msra.mxu0 0.0
        %4780 = vmatprep.subr.mxu0 0.0
        %4781 = vmatpush1.msra.mxu0 0.0
        %4782 = vmatprep.subr.mxu0 0.0
        %4783 = vmatpush1.msra.mxu0 0.0
        %4784 = vmatprep.subr.mxu0 0.0
        %4785 = vmatpush1.msra.mxu0 0.0
        %4786 = vmatprep.subr.mxu0 0.0
        %4787 = vmatpush1.msra.mxu0 0.0
        %4788 = vmatprep.subr.mxu0 0.0
        %4789 = vmatpush1.msra.mxu0 0.0
        %4790 = vmatprep.subr.mxu0 0.0
        %4791 = vmatpush1.msra.mxu0 0.0
        %4792 = vmatprep.subr.mxu0 0.0
        %4793 = vmatpush1.msra.mxu0 0.0
        %4794 = vmatprep.subr.mxu0 0.0
        %4795 = vmatpush1.msra.mxu0 0.0
        %4796 = vmatprep.subr.mxu0 0.0
        %4797 = vmatpush1.msra.mxu0 0.0
        %4798 = vmatprep.subr.mxu0 0.0
        %4799 = vmatpush1.msra.mxu0 0.0
        %4800 = vmatprep.subr.mxu0 0.0
        %4801 = vmatpush1.msra.mxu0 0.0
        %4802 = vmatprep.subr.mxu0 0.0
        %4803 = vmatpush1.msra.mxu0 0.0
        %4804 = vmatprep.subr.mxu0 0.0
        %4805 = vmatpush1.msra.mxu0 0.0
        %4806 = vmatprep.subr.mxu0 0.0
        %4807 = vmatpush1.msra.mxu0 0.0
        %4808 = vmatprep.subr.mxu0 0.0
        %4809 = vmatpush1.msra.mxu0 0.0
        %4810 = vmatprep.subr.mxu0 0.0
        %4811 = vmatpush1.msra.mxu0 0.0
        %4812 = vmatprep.subr.mxu0 0.0
        %4813 = vmatpush1.msra.mxu0 0.0
        %4814 = vmatprep.subr.mxu0 0.0
        %4815 = vmatpush1.msra.mxu0 0.0
        %4816 = vmatprep.subr.mxu0 0.0
        %4817 = vmatpush1.msra.mxu0 0.0
        %4818 = vmatprep.subr.mxu0 0.0
        %4819 = vmatpush1.msra.mxu0 0.0
        %4820 = vmatprep.subr.mxu0 0.0
        %4821 = vmatpush1.msra.mxu0 0.0
        %4822 = vmatprep.subr.mxu0 0.0
        %4823 = vmatpush1.msra.mxu0 0.0
        %4824 = vmatprep.subr.mxu0 0.0
        %4825 = vmatpush1.msra.mxu0 0.0
        %4826 = vmatprep.subr.mxu0 0.0
        %4827 = vmatpush1.msra.mxu0 0.0
        %4828 = vmatprep.mubr.f32.mxu0 0.0
        %v4829 = vand.u32 %v4598, 4294901760
        %v4830 = vsub.f32 %v4598, %v4829
        %4831 = vmatmul.mubr.f32.gmra.mrb[0].mxu0 %v4830
        %v4832 = vpop.f32.mrb[0].mxu0
        %v4833 = vadd.f32 %v4756, %v4832
        %v4834 = vpop.f32.mrb[0].mxu0
        %v4835 = vadd.f32 %v4758, %v4834
        %4836 = vdwg.mxu0
        %v4837 = vand.u32 %v4594, 4294901760
        %4838 = vmatprep.subr.mxu0 %v4837
        %v4839 = vand.u32 %v4593, 4294901760
        %4840 = vmatpush1.msra.mxu0 %v4839
        %4841 = vmatprep.subr.mxu0 0.0
        %4842 = vmatpush1.msra.mxu0 0.0
        %4843 = vmatprep.subr.mxu0 0.0
        %4844 = vmatpush1.msra.mxu0 0.0
        %4845 = vmatprep.subr.mxu0 0.0
        %4846 = vmatpush1.msra.mxu0 0.0
        %4847 = vmatprep.subr.mxu0 0.0
        %4848 = vmatpush1.msra.mxu0 0.0
        %4849 = vmatprep.subr.mxu0 0.0
        %4850 = vmatpush1.msra.mxu0 0.0
        %4851 = vmatprep.subr.mxu0 0.0
        %4852 = vmatpush1.msra.mxu0 0.0
        %4853 = vmatprep.subr.mxu0 0.0
        %4854 = vmatpush1.msra.mxu0 0.0
        %4855 = vmatprep.subr.mxu0 0.0
        %4856 = vmatpush1.msra.mxu0 0.0
        %4857 = vmatprep.subr.mxu0 0.0
        %4858 = vmatpush1.msra.mxu0 0.0
        %4859 = vmatprep.subr.mxu0 0.0
        %4860 = vmatpush1.msra.mxu0 0.0
        %4861 = vmatprep.subr.mxu0 0.0
        %4862 = vmatpush1.msra.mxu0 0.0
        %4863 = vmatprep.subr.mxu0 0.0
        %4864 = vmatpush1.msra.mxu0 0.0
        %4865 = vmatprep.subr.mxu0 0.0
        %4866 = vmatpush1.msra.mxu0 0.0
        %4867 = vmatprep.subr.mxu0 0.0
        %4868 = vmatpush1.msra.mxu0 0.0
        %4869 = vmatprep.subr.mxu0 0.0
        %4870 = vmatpush1.msra.mxu0 0.0
        %4871 = vmatprep.subr.mxu0 0.0
        %4872 = vmatpush1.msra.mxu0 0.0
        %4873 = vmatprep.subr.mxu0 0.0
        %4874 = vmatpush1.msra.mxu0 0.0
        %4875 = vmatprep.subr.mxu0 0.0
        %4876 = vmatpush1.msra.mxu0 0.0
        %4877 = vmatprep.subr.mxu0 0.0
        %4878 = vmatpush1.msra.mxu0 0.0
        %4879 = vmatprep.subr.mxu0 0.0
        %4880 = vmatpush1.msra.mxu0 0.0
        %4881 = vmatprep.subr.mxu0 0.0
        %4882 = vmatpush1.msra.mxu0 0.0
        %4883 = vmatprep.subr.mxu0 0.0
        %4884 = vmatpush1.msra.mxu0 0.0
        %4885 = vmatprep.subr.mxu0 0.0
        %4886 = vmatpush1.msra.mxu0 0.0
        %4887 = vmatprep.subr.mxu0 0.0
        %4888 = vmatpush1.msra.mxu0 0.0
        %4889 = vmatprep.subr.mxu0 0.0
        %4890 = vmatpush1.msra.mxu0 0.0
        %4891 = vmatprep.subr.mxu0 0.0
        %4892 = vmatpush1.msra.mxu0 0.0
        %4893 = vmatprep.subr.mxu0 0.0
        %4894 = vmatpush1.msra.mxu0 0.0
        %4895 = vmatprep.subr.mxu0 0.0
        %4896 = vmatpush1.msra.mxu0 0.0
        %4897 = vmatprep.subr.mxu0 0.0
        %4898 = vmatpush1.msra.mxu0 0.0
        %4899 = vmatprep.subr.mxu0 0.0
        %4900 = vmatpush1.msra.mxu0 0.0
        %4901 = vmatprep.subr.mxu0 0.0
        %4902 = vmatpush1.msra.mxu0 0.0
        %4903 = vmatprep.mubr.f32.mxu0 0.0
        %v4904 = vand.u32 %v4598, 4294901760
        %v4905 = vsub.f32 %v4598, %v4904
        %v4906 = vand.u32 %v4905, 4294901760
        %4907 = vmatmul.mubr.f32.gmra.mrb[0].mxu0 %v4906
        %v4908 = vpop.f32.mrb[0].mxu0
        %v4909 = vadd.f32 %v4833, %v4908
        %v4910 = vpop.f32.mrb[0].mxu0
        %v4911 = vadd.f32 %v4835, %v4910
        %4912 = vdwg.mxu0
        %v4913 = vand.u32 %v4594, 4294901760
        %v4914 = vsub.f32 %v4594, %v4913
        %v4915 = vand.u32 %v4914, 4294901760
        %4916 = vmatprep.subr.mxu0 %v4915
        %v4917 = vand.u32 %v4593, 4294901760
        %v4918 = vsub.f32 %v4593, %v4917
        %v4919 = vand.u32 %v4918, 4294901760
        %4920 = vmatpush1.msra.mxu0 %v4919
        %4921 = vmatprep.subr.mxu0 0.0
        %4922 = vmatpush1.msra.mxu0 0.0
        %4923 = vmatprep.subr.mxu0 0.0
        %4924 = vmatpush1.msra.mxu0 0.0
        %4925 = vmatprep.subr.mxu0 0.0
        %4926 = vmatpush1.msra.mxu0 0.0
        %4927 = vmatprep.subr.mxu0 0.0
        %4928 = vmatpush1.msra.mxu0 0.0
        %4929 = vmatprep.subr.mxu0 0.0
        %4930 = vmatpush1.msra.mxu0 0.0
        %4931 = vmatprep.subr.mxu0 0.0
        %4932 = vmatpush1.msra.mxu0 0.0
        %4933 = vmatprep.subr.mxu0 0.0
        %4934 = vmatpush1.msra.mxu0 0.0
        %4935 = vmatprep.subr.mxu0 0.0
        %4936 = vmatpush1.msra.mxu0 0.0
        %4937 = vmatprep.subr.mxu0 0.0
        %4938 = vmatpush1.msra.mxu0 0.0
        %4939 = vmatprep.subr.mxu0 0.0
        %4940 = vmatpush1.msra.mxu0 0.0
        %4941 = vmatprep.subr.mxu0 0.0
        %4942 = vmatpush1.msra.mxu0 0.0
        %4943 = vmatprep.subr.mxu0 0.0
        %4944 = vmatpush1.msra.mxu0 0.0
        %4945 = vmatprep.subr.mxu0 0.0
        %4946 = vmatpush1.msra.mxu0 0.0
        %4947 = vmatprep.subr.mxu0 0.0
        %4948 = vmatpush1.msra.mxu0 0.0
        %4949 = vmatprep.subr.mxu0 0.0
        %4950 = vmatpush1.msra.mxu0 0.0
        %4951 = vmatprep.subr.mxu0 0.0
        %4952 = vmatpush1.msra.mxu0 0.0
        %4953 = vmatprep.subr.mxu0 0.0
        %4954 = vmatpush1.msra.mxu0 0.0
        %4955 = vmatprep.subr.mxu0 0.0
        %4956 = vmatpush1.msra.mxu0 0.0
        %4957 = vmatprep.subr.mxu0 0.0
        %4958 = vmatpush1.msra.mxu0 0.0
        %4959 = vmatprep.subr.mxu0 0.0
        %4960 = vmatpush1.msra.mxu0 0.0
        %4961 = vmatprep.subr.mxu0 0.0
        %4962 = vmatpush1.msra.mxu0 0.0
        %4963 = vmatprep.subr.mxu0 0.0
        %4964 = vmatpush1.msra.mxu0 0.0
        %4965 = vmatprep.subr.mxu0 0.0
        %4966 = vmatpush1.msra.mxu0 0.0
        %4967 = vmatprep.subr.mxu0 0.0
        %4968 = vmatpush1.msra.mxu0 0.0
        %4969 = vmatprep.subr.mxu0 0.0
        %4970 = vmatpush1.msra.mxu0 0.0
        %4971 = vmatprep.subr.mxu0 0.0
        %4972 = vmatpush1.msra.mxu0 0.0
        %4973 = vmatprep.subr.mxu0 0.0
        %4974 = vmatpush1.msra.mxu0 0.0
        %4975 = vmatprep.subr.mxu0 0.0
        %4976 = vmatpush1.msra.mxu0 0.0
        %4977 = vmatprep.subr.mxu0 0.0
        %4978 = vmatpush1.msra.mxu0 0.0
        %4979 = vmatprep.subr.mxu0 0.0
        %4980 = vmatpush1.msra.mxu0 0.0
        %4981 = vmatprep.subr.mxu0 0.0
        %4982 = vmatpush1.msra.mxu0 0.0
        %4983 = vmatprep.mubr.f32.mxu0 0.0
        %v4984 = vand.u32 %v4598, 4294901760
        %4985 = vmatmul.mubr.f32.gmra.mrb[0].mxu0 %v4984
        %v4986 = vpop.f32.mrb[0].mxu0
        %v4987 = vadd.f32 %v4909, %v4986
        %v4988 = vpop.f32.mrb[0].mxu0
        %v4989 = vadd.f32 %v4911, %v4988
        %4990 = vdwg.mxu0
        %v4991 = vand.u32 %v4594, 4294901760
        %4992 = vmatprep.subr.mxu0 %v4991
        %v4993 = vand.u32 %v4593, 4294901760
        %4994 = vmatpush1.msra.mxu0 %v4993
        %4995 = vmatprep.subr.mxu0 0.0
        %4996 = vmatpush1.msra.mxu0 0.0
        %4997 = vmatprep.subr.mxu0 0.0
        %4998 = vmatpush1.msra.mxu0 0.0
        %4999 = vmatprep.subr.mxu0 0.0
        %5000 = vmatpush1.msra.mxu0 0.0
        %5001 = vmatprep.subr.mxu0 0.0
        %5002 = vmatpush1.msra.mxu0 0.0
        %5003 = vmatprep.subr.mxu0 0.0
        %5004 = vmatpush1.msra.mxu0 0.0
        %5005 = vmatprep.subr.mxu0 0.0
        %5006 = vmatpush1.msra.mxu0 0.0
        %5007 = vmatprep.subr.mxu0 0.0
        %5008 = vmatpush1.msra.mxu0 0.0
        %5009 = vmatprep.subr.mxu0 0.0
        %5010 = vmatpush1.msra.mxu0 0.0
        %5011 = vmatprep.subr.mxu0 0.0
        %5012 = vmatpush1.msra.mxu0 0.0
        %5013 = vmatprep.subr.mxu0 0.0
        %5014 = vmatpush1.msra.mxu0 0.0
        %5015 = vmatprep.subr.mxu0 0.0
        %5016 = vmatpush1.msra.mxu0 0.0
        %5017 = vmatprep.subr.mxu0 0.0
        %5018 = vmatpush1.msra.mxu0 0.0
        %5019 = vmatprep.subr.mxu0 0.0
        %5020 = vmatpush1.msra.mxu0 0.0
        %5021 = vmatprep.subr.mxu0 0.0
        %5022 = vmatpush1.msra.mxu0 0.0
        %5023 = vmatprep.subr.mxu0 0.0
        %5024 = vmatpush1.msra.mxu0 0.0
        %5025 = vmatprep.subr.mxu0 0.0
        %5026 = vmatpush1.msra.mxu0 0.0
        %5027 = vmatprep.subr.mxu0 0.0
        %5028 = vmatpush1.msra.mxu0 0.0
        %5029 = vmatprep.subr.mxu0 0.0
        %5030 = vmatpush1.msra.mxu0 0.0
        %5031 = vmatprep.subr.mxu0 0.0
        %5032 = vmatpush1.msra.mxu0 0.0
        %5033 = vmatprep.subr.mxu0 0.0
        %5034 = vmatpush1.msra.mxu0 0.0
        %5035 = vmatprep.subr.mxu0 0.0
        %5036 = vmatpush1.msra.mxu0 0.0
        %5037 = vmatprep.subr.mxu0 0.0
        %5038 = vmatpush1.msra.mxu0 0.0
        %5039 = vmatprep.subr.mxu0 0.0
        %5040 = vmatpush1.msra.mxu0 0.0
        %5041 = vmatprep.subr.mxu0 0.0
        %5042 = vmatpush1.msra.mxu0 0.0
        %5043 = vmatprep.subr.mxu0 0.0
        %5044 = vmatpush1.msra.mxu0 0.0
        %5045 = vmatprep.subr.mxu0 0.0
        %5046 = vmatpush1.msra.mxu0 0.0
        %5047 = vmatprep.subr.mxu0 0.0
        %5048 = vmatpush1.msra.mxu0 0.0
        %5049 = vmatprep.subr.mxu0 0.0
        %5050 = vmatpush1.msra.mxu0 0.0
        %5051 = vmatprep.subr.mxu0 0.0
        %5052 = vmatpush1.msra.mxu0 0.0
        %5053 = vmatprep.subr.mxu0 0.0
        %5054 = vmatpush1.msra.mxu0 0.0
        %5055 = vmatprep.subr.mxu0 0.0
        %5056 = vmatpush1.msra.mxu0 0.0
        %5057 = vmatprep.mubr.f32.mxu0 0.0
        %v5058 = vand.u32 %v4598, 4294901760
        %5059 = vmatmul.mubr.f32.gmra.mrb[0].mxu0 %v5058
        %v5060 = vpop.f32.mrb[0].mxu0
        %v5061 = vadd.f32 %v4987, %v5060
        %v5062 = vpop.f32.mrb[0].mxu0
        %v5063 = vadd.f32 %v4989, %v5062
        %5064 = vdwg.mxu0
        %v5065 = vadd.f32 %v4572, %v5061
        %v5066 = vadd.f32 %v4573, %v5063
        %s5067 = scalar_lea.vmem %s6, 32
        %v5068 = vld [vmem:[%s5067] sm:$0xff]
        %v5070 = vsel %vm1672, %v5068, 0
        %v5072 = vand.u32 %v3100, 4294901760
        %5073 = vmatprep.subr.mxu0 %v5072
        %v5074 = vand.u32 %v3099, 4294901760
        %5075 = vmatpush1.msra.mxu0 %v5074
        %5076 = vmatprep.subr.mxu0 0.0
        %5077 = vmatpush1.msra.mxu0 0.0
        %5078 = vmatprep.subr.mxu0 0.0
        %5079 = vmatpush1.msra.mxu0 0.0
        %5080 = vmatprep.subr.mxu0 0.0
        %5081 = vmatpush1.msra.mxu0 0.0
        %5082 = vmatprep.subr.mxu0 0.0
        %5083 = vmatpush1.msra.mxu0 0.0
        %5084 = vmatprep.subr.mxu0 0.0
        %5085 = vmatpush1.msra.mxu0 0.0
        %5086 = vmatprep.subr.mxu0 0.0
        %5087 = vmatpush1.msra.mxu0 0.0
        %5088 = vmatprep.subr.mxu0 0.0
        %5089 = vmatpush1.msra.mxu0 0.0
        %5090 = vmatprep.subr.mxu0 0.0
        %5091 = vmatpush1.msra.mxu0 0.0
        %5092 = vmatprep.subr.mxu0 0.0
        %5093 = vmatpush1.msra.mxu0 0.0
        %5094 = vmatprep.subr.mxu0 0.0
        %5095 = vmatpush1.msra.mxu0 0.0
        %5096 = vmatprep.subr.mxu0 0.0
        %5097 = vmatpush1.msra.mxu0 0.0
        %5098 = vmatprep.subr.mxu0 0.0
        %5099 = vmatpush1.msra.mxu0 0.0
        %5100 = vmatprep.subr.mxu0 0.0
        %5101 = vmatpush1.msra.mxu0 0.0
        %5102 = vmatprep.subr.mxu0 0.0
        %5103 = vmatpush1.msra.mxu0 0.0
        %5104 = vmatprep.subr.mxu0 0.0
        %5105 = vmatpush1.msra.mxu0 0.0
        %5106 = vmatprep.subr.mxu0 0.0
        %5107 = vmatpush1.msra.mxu0 0.0
        %5108 = vmatprep.subr.mxu0 0.0
        %5109 = vmatpush1.msra.mxu0 0.0
        %5110 = vmatprep.subr.mxu0 0.0
        %5111 = vmatpush1.msra.mxu0 0.0
        %5112 = vmatprep.subr.mxu0 0.0
        %5113 = vmatpush1.msra.mxu0 0.0
        %5114 = vmatprep.subr.mxu0 0.0
        %5115 = vmatpush1.msra.mxu0 0.0
        %5116 = vmatprep.subr.mxu0 0.0
        %5117 = vmatpush1.msra.mxu0 0.0
        %5118 = vmatprep.subr.mxu0 0.0
        %5119 = vmatpush1.msra.mxu0 0.0
        %5120 = vmatprep.subr.mxu0 0.0
        %5121 = vmatpush1.msra.mxu0 0.0
        %5122 = vmatprep.subr.mxu0 0.0
        %5123 = vmatpush1.msra.mxu0 0.0
        %5124 = vmatprep.subr.mxu0 0.0
        %5125 = vmatpush1.msra.mxu0 0.0
        %5126 = vmatprep.subr.mxu0 0.0
        %5127 = vmatpush1.msra.mxu0 0.0
        %5128 = vmatprep.subr.mxu0 0.0
        %5129 = vmatpush1.msra.mxu0 0.0
        %5130 = vmatprep.subr.mxu0 0.0
        %5131 = vmatpush1.msra.mxu0 0.0
        %5132 = vmatprep.subr.mxu0 0.0
        %5133 = vmatpush1.msra.mxu0 0.0
        %5134 = vmatprep.subr.mxu0 0.0
        %5135 = vmatpush1.msra.mxu0 0.0
        %5136 = vmatprep.subr.mxu0 0.0
        %5137 = vmatpush1.msra.mxu0 0.0
        %5138 = vmatprep.mubr.f32.mxu0 0.0
        %v5139 = vand.u32 %v5070, 4294901760
        %v5140 = vsub.f32 %v5070, %v5139
        %v5141 = vand.u32 %v5140, 4294901760
        %v5142 = vsub.f32 %v5140, %v5141
        %v5143 = vand.u32 %v5142, 4294901760
        %5144 = vmatmul.mubr.f32.gmra.mrb[0].mxu0 %v5143
        %v5145 = vpop.f32.mrb[0].mxu0
        %v5146 = vadd.f32 0.0, %v5145
        %v5147 = vpop.f32.mrb[0].mxu0
        %v5148 = vadd.f32 0.0, %v5147
        %5149 = vdwg.mxu0
        %v5150 = vand.u32 %v3100, 4294901760
        %v5151 = vsub.f32 %v3100, %v5150
        %v5152 = vand.u32 %v5151, 4294901760
        %v5153 = vsub.f32 %v5151, %v5152
        %v5154 = vand.u32 %v5153, 4294901760
        %5155 = vmatprep.subr.mxu0 %v5154
        %v5156 = vand.u32 %v3099, 4294901760
        %v5157 = vsub.f32 %v3099, %v5156
        %v5158 = vand.u32 %v5157, 4294901760
        %v5159 = vsub.f32 %v5157, %v5158
        %v5160 = vand.u32 %v5159, 4294901760
        %5161 = vmatpush1.msra.mxu0 %v5160
        %5162 = vmatprep.subr.mxu0 0.0
        %5163 = vmatpush1.msra.mxu0 0.0
        %5164 = vmatprep.subr.mxu0 0.0
        %5165 = vmatpush1.msra.mxu0 0.0
        %5166 = vmatprep.subr.mxu0 0.0
        %5167 = vmatpush1.msra.mxu0 0.0
        %5168 = vmatprep.subr.mxu0 0.0
        %5169 = vmatpush1.msra.mxu0 0.0
        %5170 = vmatprep.subr.mxu0 0.0
        %5171 = vmatpush1.msra.mxu0 0.0
        %5172 = vmatprep.subr.mxu0 0.0
        %5173 = vmatpush1.msra.mxu0 0.0
        %5174 = vmatprep.subr.mxu0 0.0
        %5175 = vmatpush1.msra.mxu0 0.0
        %5176 = vmatprep.subr.mxu0 0.0
        %5177 = vmatpush1.msra.mxu0 0.0
        %5178 = vmatprep.subr.mxu0 0.0
        %5179 = vmatpush1.msra.mxu0 0.0
        %5180 = vmatprep.subr.mxu0 0.0
        %5181 = vmatpush1.msra.mxu0 0.0
        %5182 = vmatprep.subr.mxu0 0.0
        %5183 = vmatpush1.msra.mxu0 0.0
        %5184 = vmatprep.subr.mxu0 0.0
        %5185 = vmatpush1.msra.mxu0 0.0
        %5186 = vmatprep.subr.mxu0 0.0
        %5187 = vmatpush1.msra.mxu0 0.0
        %5188 = vmatprep.subr.mxu0 0.0
        %5189 = vmatpush1.msra.mxu0 0.0
        %5190 = vmatprep.subr.mxu0 0.0
        %5191 = vmatpush1.msra.mxu0 0.0
        %5192 = vmatprep.subr.mxu0 0.0
        %5193 = vmatpush1.msra.mxu0 0.0
        %5194 = vmatprep.subr.mxu0 0.0
        %5195 = vmatpush1.msra.mxu0 0.0
        %5196 = vmatprep.subr.mxu0 0.0
        %5197 = vmatpush1.msra.mxu0 0.0
        %5198 = vmatprep.subr.mxu0 0.0
        %5199 = vmatpush1.msra.mxu0 0.0
        %5200 = vmatprep.subr.mxu0 0.0
        %5201 = vmatpush1.msra.mxu0 0.0
        %5202 = vmatprep.subr.mxu0 0.0
        %5203 = vmatpush1.msra.mxu0 0.0
        %5204 = vmatprep.subr.mxu0 0.0
        %5205 = vmatpush1.msra.mxu0 0.0
        %5206 = vmatprep.subr.mxu0 0.0
        %5207 = vmatpush1.msra.mxu0 0.0
        %5208 = vmatprep.subr.mxu0 0.0
        %5209 = vmatpush1.msra.mxu0 0.0
        %5210 = vmatprep.subr.mxu0 0.0
        %5211 = vmatpush1.msra.mxu0 0.0
        %5212 = vmatprep.subr.mxu0 0.0
        %5213 = vmatpush1.msra.mxu0 0.0
        %5214 = vmatprep.subr.mxu0 0.0
        %5215 = vmatpush1.msra.mxu0 0.0
        %5216 = vmatprep.subr.mxu0 0.0
        %5217 = vmatpush1.msra.mxu0 0.0
        %5218 = vmatprep.subr.mxu0 0.0
        %5219 = vmatpush1.msra.mxu0 0.0
        %5220 = vmatprep.subr.mxu0 0.0
        %5221 = vmatpush1.msra.mxu0 0.0
        %5222 = vmatprep.subr.mxu0 0.0
        %5223 = vmatpush1.msra.mxu0 0.0
        %5224 = vmatprep.mubr.f32.mxu0 0.0
        %v5225 = vand.u32 %v5070, 4294901760
        %5226 = vmatmul.mubr.f32.gmra.mrb[0].mxu0 %v5225
        %v5227 = vpop.f32.mrb[0].mxu0
        %v5228 = vadd.f32 %v5146, %v5227
        %v5229 = vpop.f32.mrb[0].mxu0
        %v5230 = vadd.f32 %v5148, %v5229
        %5231 = vdwg.mxu0
        %v5232 = vand.u32 %v3100, 4294901760
        %v5233 = vsub.f32 %v3100, %v5232
        %5234 = vmatprep.subr.mxu0 %v5233
        %v5235 = vand.u32 %v3099, 4294901760
        %v5236 = vsub.f32 %v3099, %v5235
        %5237 = vmatpush1.msra.mxu0 %v5236
        %5238 = vmatprep.subr.mxu0 0.0
        %5239 = vmatpush1.msra.mxu0 0.0
        %5240 = vmatprep.subr.mxu0 0.0
        %5241 = vmatpush1.msra.mxu0 0.0
        %5242 = vmatprep.subr.mxu0 0.0
        %5243 = vmatpush1.msra.mxu0 0.0
        %5244 = vmatprep.subr.mxu0 0.0
        %5245 = vmatpush1.msra.mxu0 0.0
        %5246 = vmatprep.subr.mxu0 0.0
        %5247 = vmatpush1.msra.mxu0 0.0
        %5248 = vmatprep.subr.mxu0 0.0
        %5249 = vmatpush1.msra.mxu0 0.0
        %5250 = vmatprep.subr.mxu0 0.0
        %5251 = vmatpush1.msra.mxu0 0.0
        %5252 = vmatprep.subr.mxu0 0.0
        %5253 = vmatpush1.msra.mxu0 0.0
        %5254 = vmatprep.subr.mxu0 0.0
        %5255 = vmatpush1.msra.mxu0 0.0
        %5256 = vmatprep.subr.mxu0 0.0
        %5257 = vmatpush1.msra.mxu0 0.0
        %5258 = vmatprep.subr.mxu0 0.0
        %5259 = vmatpush1.msra.mxu0 0.0
        %5260 = vmatprep.subr.mxu0 0.0
        %5261 = vmatpush1.msra.mxu0 0.0
        %5262 = vmatprep.subr.mxu0 0.0
        %5263 = vmatpush1.msra.mxu0 0.0
        %5264 = vmatprep.subr.mxu0 0.0
        %5265 = vmatpush1.msra.mxu0 0.0
        %5266 = vmatprep.subr.mxu0 0.0
        %5267 = vmatpush1.msra.mxu0 0.0
        %5268 = vmatprep.subr.mxu0 0.0
        %5269 = vmatpush1.msra.mxu0 0.0
        %5270 = vmatprep.subr.mxu0 0.0
        %5271 = vmatpush1.msra.mxu0 0.0
        %5272 = vmatprep.subr.mxu0 0.0
        %5273 = vmatpush1.msra.mxu0 0.0
        %5274 = vmatprep.subr.mxu0 0.0
        %5275 = vmatpush1.msra.mxu0 0.0
        %5276 = vmatprep.subr.mxu0 0.0
        %5277 = vmatpush1.msra.mxu0 0.0
        %5278 = vmatprep.subr.mxu0 0.0
        %5279 = vmatpush1.msra.mxu0 0.0
        %5280 = vmatprep.subr.mxu0 0.0
        %5281 = vmatpush1.msra.mxu0 0.0
        %5282 = vmatprep.subr.mxu0 0.0
        %5283 = vmatpush1.msra.mxu0 0.0
        %5284 = vmatprep.subr.mxu0 0.0
        %5285 = vmatpush1.msra.mxu0 0.0
        %5286 = vmatprep.subr.mxu0 0.0
        %5287 = vmatpush1.msra.mxu0 0.0
        %5288 = vmatprep.subr.mxu0 0.0
        %5289 = vmatpush1.msra.mxu0 0.0
        %5290 = vmatprep.subr.mxu0 0.0
        %5291 = vmatpush1.msra.mxu0 0.0
        %5292 = vmatprep.subr.mxu0 0.0
        %5293 = vmatpush1.msra.mxu0 0.0
        %5294 = vmatprep.subr.mxu0 0.0
        %5295 = vmatpush1.msra.mxu0 0.0
        %5296 = vmatprep.subr.mxu0 0.0
        %5297 = vmatpush1.msra.mxu0 0.0
        %5298 = vmatprep.subr.mxu0 0.0
        %5299 = vmatpush1.msra.mxu0 0.0
        %5300 = vmatprep.mubr.f32.mxu0 0.0
        %v5301 = vand.u32 %v5070, 4294901760
        %v5302 = vsub.f32 %v5070, %v5301
        %5303 = vmatmul.mubr.f32.gmra.mrb[0].mxu0 %v5302
        %v5304 = vpop.f32.mrb[0].mxu0
        %v5305 = vadd.f32 %v5228, %v5304
        %v5306 = vpop.f32.mrb[0].mxu0
        %v5307 = vadd.f32 %v5230, %v5306
        %5308 = vdwg.mxu0
        %v5309 = vand.u32 %v3100, 4294901760
        %5310 = vmatprep.subr.mxu0 %v5309
        %v5311 = vand.u32 %v3099, 4294901760
        %5312 = vmatpush1.msra.mxu0 %v5311
        %5313 = vmatprep.subr.mxu0 0.0
        %5314 = vmatpush1.msra.mxu0 0.0
        %5315 = vmatprep.subr.mxu0 0.0
        %5316 = vmatpush1.msra.mxu0 0.0
        %5317 = vmatprep.subr.mxu0 0.0
        %5318 = vmatpush1.msra.mxu0 0.0
        %5319 = vmatprep.subr.mxu0 0.0
        %5320 = vmatpush1.msra.mxu0 0.0
        %5321 = vmatprep.subr.mxu0 0.0
        %5322 = vmatpush1.msra.mxu0 0.0
        %5323 = vmatprep.subr.mxu0 0.0
        %5324 = vmatpush1.msra.mxu0 0.0
        %5325 = vmatprep.subr.mxu0 0.0
        %5326 = vmatpush1.msra.mxu0 0.0
        %5327 = vmatprep.subr.mxu0 0.0
        %5328 = vmatpush1.msra.mxu0 0.0
        %5329 = vmatprep.subr.mxu0 0.0
        %5330 = vmatpush1.msra.mxu0 0.0
        %5331 = vmatprep.subr.mxu0 0.0
        %5332 = vmatpush1.msra.mxu0 0.0
        %5333 = vmatprep.subr.mxu0 0.0
        %5334 = vmatpush1.msra.mxu0 0.0
        %5335 = vmatprep.subr.mxu0 0.0
        %5336 = vmatpush1.msra.mxu0 0.0
        %5337 = vmatprep.subr.mxu0 0.0
        %5338 = vmatpush1.msra.mxu0 0.0
        %5339 = vmatprep.subr.mxu0 0.0
        %5340 = vmatpush1.msra.mxu0 0.0
        %5341 = vmatprep.subr.mxu0 0.0
        %5342 = vmatpush1.msra.mxu0 0.0
        %5343 = vmatprep.subr.mxu0 0.0
        %5344 = vmatpush1.msra.mxu0 0.0
        %5345 = vmatprep.subr.mxu0 0.0
        %5346 = vmatpush1.msra.mxu0 0.0
        %5347 = vmatprep.subr.mxu0 0.0
        %5348 = vmatpush1.msra.mxu0 0.0
        %5349 = vmatprep.subr.mxu0 0.0
        %5350 = vmatpush1.msra.mxu0 0.0
        %5351 = vmatprep.subr.mxu0 0.0
        %5352 = vmatpush1.msra.mxu0 0.0
        %5353 = vmatprep.subr.mxu0 0.0
        %5354 = vmatpush1.msra.mxu0 0.0
        %5355 = vmatprep.subr.mxu0 0.0
        %5356 = vmatpush1.msra.mxu0 0.0
        %5357 = vmatprep.subr.mxu0 0.0
        %5358 = vmatpush1.msra.mxu0 0.0
        %5359 = vmatprep.subr.mxu0 0.0
        %5360 = vmatpush1.msra.mxu0 0.0
        %5361 = vmatprep.subr.mxu0 0.0
        %5362 = vmatpush1.msra.mxu0 0.0
        %5363 = vmatprep.subr.mxu0 0.0
        %5364 = vmatpush1.msra.mxu0 0.0
        %5365 = vmatprep.subr.mxu0 0.0
        %5366 = vmatpush1.msra.mxu0 0.0
        %5367 = vmatprep.subr.mxu0 0.0
        %5368 = vmatpush1.msra.mxu0 0.0
        %5369 = vmatprep.subr.mxu0 0.0
        %5370 = vmatpush1.msra.mxu0 0.0
        %5371 = vmatprep.subr.mxu0 0.0
        %5372 = vmatpush1.msra.mxu0 0.0
        %5373 = vmatprep.subr.mxu0 0.0
        %5374 = vmatpush1.msra.mxu0 0.0
        %5375 = vmatprep.mubr.f32.mxu0 0.0
        %v5376 = vand.u32 %v5070, 4294901760
        %v5377 = vsub.f32 %v5070, %v5376
        %v5378 = vand.u32 %v5377, 4294901760
        %5379 = vmatmul.mubr.f32.gmra.mrb[0].mxu0 %v5378
        %v5380 = vpop.f32.mrb[0].mxu0
        %v5381 = vadd.f32 %v5305, %v5380
        %v5382 = vpop.f32.mrb[0].mxu0
        %v5383 = vadd.f32 %v5307, %v5382
        %5384 = vdwg.mxu0
        %v5385 = vand.u32 %v3100, 4294901760
        %v5386 = vsub.f32 %v3100, %v5385
        %v5387 = vand.u32 %v5386, 4294901760
        %5388 = vmatprep.subr.mxu0 %v5387
        %v5389 = vand.u32 %v3099, 4294901760
        %v5390 = vsub.f32 %v3099, %v5389
        %v5391 = vand.u32 %v5390, 4294901760
        %5392 = vmatpush1.msra.mxu0 %v5391
        %5393 = vmatprep.subr.mxu0 0.0
        %5394 = vmatpush1.msra.mxu0 0.0
        %5395 = vmatprep.subr.mxu0 0.0
        %5396 = vmatpush1.msra.mxu0 0.0
        %5397 = vmatprep.subr.mxu0 0.0
        %5398 = vmatpush1.msra.mxu0 0.0
        %5399 = vmatprep.subr.mxu0 0.0
        %5400 = vmatpush1.msra.mxu0 0.0
        %5401 = vmatprep.subr.mxu0 0.0
        %5402 = vmatpush1.msra.mxu0 0.0
        %5403 = vmatprep.subr.mxu0 0.0
        %5404 = vmatpush1.msra.mxu0 0.0
        %5405 = vmatprep.subr.mxu0 0.0
        %5406 = vmatpush1.msra.mxu0 0.0
        %5407 = vmatprep.subr.mxu0 0.0
        %5408 = vmatpush1.msra.mxu0 0.0
        %5409 = vmatprep.subr.mxu0 0.0
        %5410 = vmatpush1.msra.mxu0 0.0
        %5411 = vmatprep.subr.mxu0 0.0
        %5412 = vmatpush1.msra.mxu0 0.0
        %5413 = vmatprep.subr.mxu0 0.0
        %5414 = vmatpush1.msra.mxu0 0.0
        %5415 = vmatprep.subr.mxu0 0.0
        %5416 = vmatpush1.msra.mxu0 0.0
        %5417 = vmatprep.subr.mxu0 0.0
        %5418 = vmatpush1.msra.mxu0 0.0
        %5419 = vmatprep.subr.mxu0 0.0
        %5420 = vmatpush1.msra.mxu0 0.0
        %5421 = vmatprep.subr.mxu0 0.0
        %5422 = vmatpush1.msra.mxu0 0.0
        %5423 = vmatprep.subr.mxu0 0.0
        %5424 = vmatpush1.msra.mxu0 0.0
        %5425 = vmatprep.subr.mxu0 0.0
        %5426 = vmatpush1.msra.mxu0 0.0
        %5427 = vmatprep.subr.mxu0 0.0
        %5428 = vmatpush1.msra.mxu0 0.0
        %5429 = vmatprep.subr.mxu0 0.0
        %5430 = vmatpush1.msra.mxu0 0.0
        %5431 = vmatprep.subr.mxu0 0.0
        %5432 = vmatpush1.msra.mxu0 0.0
        %5433 = vmatprep.subr.mxu0 0.0
        %5434 = vmatpush1.msra.mxu0 0.0
        %5435 = vmatprep.subr.mxu0 0.0
        %5436 = vmatpush1.msra.mxu0 0.0
        %5437 = vmatprep.subr.mxu0 0.0
        %5438 = vmatpush1.msra.mxu0 0.0
        %5439 = vmatprep.subr.mxu0 0.0
        %5440 = vmatpush1.msra.mxu0 0.0
        %5441 = vmatprep.subr.mxu0 0.0
        %5442 = vmatpush1.msra.mxu0 0.0
        %5443 = vmatprep.subr.mxu0 0.0
        %5444 = vmatpush1.msra.mxu0 0.0
        %5445 = vmatprep.subr.mxu0 0.0
        %5446 = vmatpush1.msra.mxu0 0.0
        %5447 = vmatprep.subr.mxu0 0.0
        %5448 = vmatpush1.msra.mxu0 0.0
        %5449 = vmatprep.subr.mxu0 0.0
        %5450 = vmatpush1.msra.mxu0 0.0
        %5451 = vmatprep.subr.mxu0 0.0
        %5452 = vmatpush1.msra.mxu0 0.0
        %5453 = vmatprep.subr.mxu0 0.0
        %5454 = vmatpush1.msra.mxu0 0.0
        %5455 = vmatprep.mubr.f32.mxu0 0.0
        %v5456 = vand.u32 %v5070, 4294901760
        %5457 = vmatmul.mubr.f32.gmra.mrb[0].mxu0 %v5456
        %v5458 = vpop.f32.mrb[0].mxu0
        %v5459 = vadd.f32 %v5381, %v5458
        %v5460 = vpop.f32.mrb[0].mxu0
        %v5461 = vadd.f32 %v5383, %v5460
        %5462 = vdwg.mxu0
        %v5463 = vand.u32 %v3100, 4294901760
        %5464 = vmatprep.subr.mxu0 %v5463
        %v5465 = vand.u32 %v3099, 4294901760
        %5466 = vmatpush1.msra.mxu0 %v5465
        %5467 = vmatprep.subr.mxu0 0.0
        %5468 = vmatpush1.msra.mxu0 0.0
        %5469 = vmatprep.subr.mxu0 0.0
        %5470 = vmatpush1.msra.mxu0 0.0
        %5471 = vmatprep.subr.mxu0 0.0
        %5472 = vmatpush1.msra.mxu0 0.0
        %5473 = vmatprep.subr.mxu0 0.0
        %5474 = vmatpush1.msra.mxu0 0.0
        %5475 = vmatprep.subr.mxu0 0.0
        %5476 = vmatpush1.msra.mxu0 0.0
        %5477 = vmatprep.subr.mxu0 0.0
        %5478 = vmatpush1.msra.mxu0 0.0
        %5479 = vmatprep.subr.mxu0 0.0
        %5480 = vmatpush1.msra.mxu0 0.0
        %5481 = vmatprep.subr.mxu0 0.0
        %5482 = vmatpush1.msra.mxu0 0.0
        %5483 = vmatprep.subr.mxu0 0.0
        %5484 = vmatpush1.msra.mxu0 0.0
        %5485 = vmatprep.subr.mxu0 0.0
        %5486 = vmatpush1.msra.mxu0 0.0
        %5487 = vmatprep.subr.mxu0 0.0
        %5488 = vmatpush1.msra.mxu0 0.0
        %5489 = vmatprep.subr.mxu0 0.0
        %5490 = vmatpush1.msra.mxu0 0.0
        %5491 = vmatprep.subr.mxu0 0.0
        %5492 = vmatpush1.msra.mxu0 0.0
        %5493 = vmatprep.subr.mxu0 0.0
        %5494 = vmatpush1.msra.mxu0 0.0
        %5495 = vmatprep.subr.mxu0 0.0
        %5496 = vmatpush1.msra.mxu0 0.0
        %5497 = vmatprep.subr.mxu0 0.0
        %5498 = vmatpush1.msra.mxu0 0.0
        %5499 = vmatprep.subr.mxu0 0.0
        %5500 = vmatpush1.msra.mxu0 0.0
        %5501 = vmatprep.subr.mxu0 0.0
        %5502 = vmatpush1.msra.mxu0 0.0
        %5503 = vmatprep.subr.mxu0 0.0
        %5504 = vmatpush1.msra.mxu0 0.0
        %5505 = vmatprep.subr.mxu0 0.0
        %5506 = vmatpush1.msra.mxu0 0.0
        %5507 = vmatprep.subr.mxu0 0.0
        %5508 = vmatpush1.msra.mxu0 0.0
        %5509 = vmatprep.subr.mxu0 0.0
        %5510 = vmatpush1.msra.mxu0 0.0
        %5511 = vmatprep.subr.mxu0 0.0
        %5512 = vmatpush1.msra.mxu0 0.0
        %5513 = vmatprep.subr.mxu0 0.0
        %5514 = vmatpush1.msra.mxu0 0.0
        %5515 = vmatprep.subr.mxu0 0.0
        %5516 = vmatpush1.msra.mxu0 0.0
        %5517 = vmatprep.subr.mxu0 0.0
        %5518 = vmatpush1.msra.mxu0 0.0
        %5519 = vmatprep.subr.mxu0 0.0
        %5520 = vmatpush1.msra.mxu0 0.0
        %5521 = vmatprep.subr.mxu0 0.0
        %5522 = vmatpush1.msra.mxu0 0.0
        %5523 = vmatprep.subr.mxu0 0.0
        %5524 = vmatpush1.msra.mxu0 0.0
        %5525 = vmatprep.subr.mxu0 0.0
        %5526 = vmatpush1.msra.mxu0 0.0
        %5527 = vmatprep.subr.mxu0 0.0
        %5528 = vmatpush1.msra.mxu0 0.0
        %5529 = vmatprep.mubr.f32.mxu0 0.0
        %v5530 = vand.u32 %v5070, 4294901760
        %5531 = vmatmul.mubr.f32.gmra.mrb[0].mxu0 %v5530
        %v5532 = vpop.f32.mrb[0].mxu0
        %v5533 = vadd.f32 %v5459, %v5532
        %v5534 = vpop.f32.mrb[0].mxu0
        %v5535 = vadd.f32 %v5461, %v5534
        %5536 = vdwg.mxu0
        %v5537 = vadd.f32 %v5065, %v5533
        %v5538 = vadd.f32 %v5066, %v5535
        %5539 = vrot.lane.b32.xlu0 %v3099, 127
        %v5540 = vpop.permute.xlu0 %5539
        %5541 = vrot.lane.b32.xlu0 %v3100, 127
        %v5542 = vpop.permute.xlu0 %5541
        %v5543 = vsel %vm690, %v5540, %v5542
        %v5544 = vsel %vm690, %v5542, %v5540
        %s5545 = scalar_lea.vmem %s7, 10
        %v5546 = vld [vmem:[%s5545] sm:$0x3]
        %v5548 = vlaneseq
        %v5549 = vshrl.u32 %v5548, 7
        %v5550 = vsub.s32 0, %v5549
        %v5551 = vrot.slane %v5546, %v5550
        %v5552 = vlaneseq
        %v5553 = vshrl.u32 %v5552, 7
        %v5554 = vsub.s32 1, %v5553
        %v5555 = vrot.slane %v5546, %v5554
        %v5558 = vmul.f32 %v5543, %v5551
        %v5559 = vmul.f32 %v5544, %v5555
        %s5560 = scalar_lea.vmem %s6, 40
        %v5561 = vld [vmem:[%s5560] sm:$0xff]
        %v5563 = vsel %vm1672, %v5561, 0
        %v5565 = vand.u32 %v5559, 4294901760
        %5566 = vmatprep.subr.mxu0 %v5565
        %v5567 = vand.u32 %v5558, 4294901760
        %5568 = vmatpush1.msra.mxu0 %v5567
        %5569 = vmatprep.subr.mxu0 0.0
        %5570 = vmatpush1.msra.mxu0 0.0
        %5571 = vmatprep.subr.mxu0 0.0
        %5572 = vmatpush1.msra.mxu0 0.0
        %5573 = vmatprep.subr.mxu0 0.0
        %5574 = vmatpush1.msra.mxu0 0.0
        %5575 = vmatprep.subr.mxu0 0.0
        %5576 = vmatpush1.msra.mxu0 0.0
        %5577 = vmatprep.subr.mxu0 0.0
        %5578 = vmatpush1.msra.mxu0 0.0
        %5579 = vmatprep.subr.mxu0 0.0
        %5580 = vmatpush1.msra.mxu0 0.0
        %5581 = vmatprep.subr.mxu0 0.0
        %5582 = vmatpush1.msra.mxu0 0.0
        %5583 = vmatprep.subr.mxu0 0.0
        %5584 = vmatpush1.msra.mxu0 0.0
        %5585 = vmatprep.subr.mxu0 0.0
        %5586 = vmatpush1.msra.mxu0 0.0
        %5587 = vmatprep.subr.mxu0 0.0
        %5588 = vmatpush1.msra.mxu0 0.0
        %5589 = vmatprep.subr.mxu0 0.0
        %5590 = vmatpush1.msra.mxu0 0.0
        %5591 = vmatprep.subr.mxu0 0.0
        %5592 = vmatpush1.msra.mxu0 0.0
        %5593 = vmatprep.subr.mxu0 0.0
        %5594 = vmatpush1.msra.mxu0 0.0
        %5595 = vmatprep.subr.mxu0 0.0
        %5596 = vmatpush1.msra.mxu0 0.0
        %5597 = vmatprep.subr.mxu0 0.0
        %5598 = vmatpush1.msra.mxu0 0.0
        %5599 = vmatprep.subr.mxu0 0.0
        %5600 = vmatpush1.msra.mxu0 0.0
        %5601 = vmatprep.subr.mxu0 0.0
        %5602 = vmatpush1.msra.mxu0 0.0
        %5603 = vmatprep.subr.mxu0 0.0
        %5604 = vmatpush1.msra.mxu0 0.0
        %5605 = vmatprep.subr.mxu0 0.0
        %5606 = vmatpush1.msra.mxu0 0.0
        %5607 = vmatprep.subr.mxu0 0.0
        %5608 = vmatpush1.msra.mxu0 0.0
        %5609 = vmatprep.subr.mxu0 0.0
        %5610 = vmatpush1.msra.mxu0 0.0
        %5611 = vmatprep.subr.mxu0 0.0
        %5612 = vmatpush1.msra.mxu0 0.0
        %5613 = vmatprep.subr.mxu0 0.0
        %5614 = vmatpush1.msra.mxu0 0.0
        %5615 = vmatprep.subr.mxu0 0.0
        %5616 = vmatpush1.msra.mxu0 0.0
        %5617 = vmatprep.subr.mxu0 0.0
        %5618 = vmatpush1.msra.mxu0 0.0
        %5619 = vmatprep.subr.mxu0 0.0
        %5620 = vmatpush1.msra.mxu0 0.0
        %5621 = vmatprep.subr.mxu0 0.0
        %5622 = vmatpush1.msra.mxu0 0.0
        %5623 = vmatprep.subr.mxu0 0.0
        %5624 = vmatpush1.msra.mxu0 0.0
        %5625 = vmatprep.subr.mxu0 0.0
        %5626 = vmatpush1.msra.mxu0 0.0
        %5627 = vmatprep.subr.mxu0 0.0
        %5628 = vmatpush1.msra.mxu0 0.0
        %5629 = vmatprep.subr.mxu0 0.0
        %5630 = vmatpush1.msra.mxu0 0.0
        %5631 = vmatprep.mubr.f32.mxu0 0.0
        %v5632 = vand.u32 %v5563, 4294901760
        %v5633 = vsub.f32 %v5563, %v5632
        %v5634 = vand.u32 %v5633, 4294901760
        %v5635 = vsub.f32 %v5633, %v5634
        %v5636 = vand.u32 %v5635, 4294901760
        %5637 = vmatmul.mubr.f32.gmra.mrb[0].mxu0 %v5636
        %v5638 = vpop.f32.mrb[0].mxu0
        %v5639 = vadd.f32 0.0, %v5638
        %v5640 = vpop.f32.mrb[0].mxu0
        %v5641 = vadd.f32 0.0, %v5640
        %5642 = vdwg.mxu0
        %v5643 = vand.u32 %v5559, 4294901760
        %v5644 = vsub.f32 %v5559, %v5643
        %v5645 = vand.u32 %v5644, 4294901760
        %v5646 = vsub.f32 %v5644, %v5645
        %v5647 = vand.u32 %v5646, 4294901760
        %5648 = vmatprep.subr.mxu0 %v5647
        %v5649 = vand.u32 %v5558, 4294901760
        %v5650 = vsub.f32 %v5558, %v5649
        %v5651 = vand.u32 %v5650, 4294901760
        %v5652 = vsub.f32 %v5650, %v5651
        %v5653 = vand.u32 %v5652, 4294901760
        %5654 = vmatpush1.msra.mxu0 %v5653
        %5655 = vmatprep.subr.mxu0 0.0
        %5656 = vmatpush1.msra.mxu0 0.0
        %5657 = vmatprep.subr.mxu0 0.0
        %5658 = vmatpush1.msra.mxu0 0.0
        %5659 = vmatprep.subr.mxu0 0.0
        %5660 = vmatpush1.msra.mxu0 0.0
        %5661 = vmatprep.subr.mxu0 0.0
        %5662 = vmatpush1.msra.mxu0 0.0
        %5663 = vmatprep.subr.mxu0 0.0
        %5664 = vmatpush1.msra.mxu0 0.0
        %5665 = vmatprep.subr.mxu0 0.0
        %5666 = vmatpush1.msra.mxu0 0.0
        %5667 = vmatprep.subr.mxu0 0.0
        %5668 = vmatpush1.msra.mxu0 0.0
        %5669 = vmatprep.subr.mxu0 0.0
        %5670 = vmatpush1.msra.mxu0 0.0
        %5671 = vmatprep.subr.mxu0 0.0
        %5672 = vmatpush1.msra.mxu0 0.0
        %5673 = vmatprep.subr.mxu0 0.0
        %5674 = vmatpush1.msra.mxu0 0.0
        %5675 = vmatprep.subr.mxu0 0.0
        %5676 = vmatpush1.msra.mxu0 0.0
        %5677 = vmatprep.subr.mxu0 0.0
        %5678 = vmatpush1.msra.mxu0 0.0
        %5679 = vmatprep.subr.mxu0 0.0
        %5680 = vmatpush1.msra.mxu0 0.0
        %5681 = vmatprep.subr.mxu0 0.0
        %5682 = vmatpush1.msra.mxu0 0.0
        %5683 = vmatprep.subr.mxu0 0.0
        %5684 = vmatpush1.msra.mxu0 0.0
        %5685 = vmatprep.subr.mxu0 0.0
        %5686 = vmatpush1.msra.mxu0 0.0
        %5687 = vmatprep.subr.mxu0 0.0
        %5688 = vmatpush1.msra.mxu0 0.0
        %5689 = vmatprep.subr.mxu0 0.0
        %5690 = vmatpush1.msra.mxu0 0.0
        %5691 = vmatprep.subr.mxu0 0.0
        %5692 = vmatpush1.msra.mxu0 0.0
        %5693 = vmatprep.subr.mxu0 0.0
        %5694 = vmatpush1.msra.mxu0 0.0
        %5695 = vmatprep.subr.mxu0 0.0
        %5696 = vmatpush1.msra.mxu0 0.0
        %5697 = vmatprep.subr.mxu0 0.0
        %5698 = vmatpush1.msra.mxu0 0.0
        %5699 = vmatprep.subr.mxu0 0.0
        %5700 = vmatpush1.msra.mxu0 0.0
        %5701 = vmatprep.subr.mxu0 0.0
        %5702 = vmatpush1.msra.mxu0 0.0
        %5703 = vmatprep.subr.mxu0 0.0
        %5704 = vmatpush1.msra.mxu0 0.0
        %5705 = vmatprep.subr.mxu0 0.0
        %5706 = vmatpush1.msra.mxu0 0.0
        %5707 = vmatprep.subr.mxu0 0.0
        %5708 = vmatpush1.msra.mxu0 0.0
        %5709 = vmatprep.subr.mxu0 0.0
        %5710 = vmatpush1.msra.mxu0 0.0
        %5711 = vmatprep.subr.mxu0 0.0
        %5712 = vmatpush1.msra.mxu0 0.0
        %5713 = vmatprep.subr.mxu0 0.0
        %5714 = vmatpush1.msra.mxu0 0.0
        %5715 = vmatprep.subr.mxu0 0.0
        %5716 = vmatpush1.msra.mxu0 0.0
        %5717 = vmatprep.mubr.f32.mxu0 0.0
        %v5718 = vand.u32 %v5563, 4294901760
        %5719 = vmatmul.mubr.f32.gmra.mrb[0].mxu0 %v5718
        %v5720 = vpop.f32.mrb[0].mxu0
        %v5721 = vadd.f32 %v5639, %v5720
        %v5722 = vpop.f32.mrb[0].mxu0
        %v5723 = vadd.f32 %v5641, %v5722
        %5724 = vdwg.mxu0
        %v5725 = vand.u32 %v5559, 4294901760
        %v5726 = vsub.f32 %v5559, %v5725
        %5727 = vmatprep.subr.mxu0 %v5726
        %v5728 = vand.u32 %v5558, 4294901760
        %v5729 = vsub.f32 %v5558, %v5728
        %5730 = vmatpush1.msra.mxu0 %v5729
        %5731 = vmatprep.subr.mxu0 0.0
        %5732 = vmatpush1.msra.mxu0 0.0
        %5733 = vmatprep.subr.mxu0 0.0
        %5734 = vmatpush1.msra.mxu0 0.0
        %5735 = vmatprep.subr.mxu0 0.0
        %5736 = vmatpush1.msra.mxu0 0.0
        %5737 = vmatprep.subr.mxu0 0.0
        %5738 = vmatpush1.msra.mxu0 0.0
        %5739 = vmatprep.subr.mxu0 0.0
        %5740 = vmatpush1.msra.mxu0 0.0
        %5741 = vmatprep.subr.mxu0 0.0
        %5742 = vmatpush1.msra.mxu0 0.0
        %5743 = vmatprep.subr.mxu0 0.0
        %5744 = vmatpush1.msra.mxu0 0.0
        %5745 = vmatprep.subr.mxu0 0.0
        %5746 = vmatpush1.msra.mxu0 0.0
        %5747 = vmatprep.subr.mxu0 0.0
        %5748 = vmatpush1.msra.mxu0 0.0
        %5749 = vmatprep.subr.mxu0 0.0
        %5750 = vmatpush1.msra.mxu0 0.0
        %5751 = vmatprep.subr.mxu0 0.0
        %5752 = vmatpush1.msra.mxu0 0.0
        %5753 = vmatprep.subr.mxu0 0.0
        %5754 = vmatpush1.msra.mxu0 0.0
        %5755 = vmatprep.subr.mxu0 0.0
        %5756 = vmatpush1.msra.mxu0 0.0
        %5757 = vmatprep.subr.mxu0 0.0
        %5758 = vmatpush1.msra.mxu0 0.0
        %5759 = vmatprep.subr.mxu0 0.0
        %5760 = vmatpush1.msra.mxu0 0.0
        %5761 = vmatprep.subr.mxu0 0.0
        %5762 = vmatpush1.msra.mxu0 0.0
        %5763 = vmatprep.subr.mxu0 0.0
        %5764 = vmatpush1.msra.mxu0 0.0
        %5765 = vmatprep.subr.mxu0 0.0
        %5766 = vmatpush1.msra.mxu0 0.0
        %5767 = vmatprep.subr.mxu0 0.0
        %5768 = vmatpush1.msra.mxu0 0.0
        %5769 = vmatprep.subr.mxu0 0.0
        %5770 = vmatpush1.msra.mxu0 0.0
        %5771 = vmatprep.subr.mxu0 0.0
        %5772 = vmatpush1.msra.mxu0 0.0
        %5773 = vmatprep.subr.mxu0 0.0
        %5774 = vmatpush1.msra.mxu0 0.0
        %5775 = vmatprep.subr.mxu0 0.0
        %5776 = vmatpush1.msra.mxu0 0.0
        %5777 = vmatprep.subr.mxu0 0.0
        %5778 = vmatpush1.msra.mxu0 0.0
        %5779 = vmatprep.subr.mxu0 0.0
        %5780 = vmatpush1.msra.mxu0 0.0
        %5781 = vmatprep.subr.mxu0 0.0
        %5782 = vmatpush1.msra.mxu0 0.0
        %5783 = vmatprep.subr.mxu0 0.0
        %5784 = vmatpush1.msra.mxu0 0.0
        %5785 = vmatprep.subr.mxu0 0.0
        %5786 = vmatpush1.msra.mxu0 0.0
        %5787 = vmatprep.subr.mxu0 0.0
        %5788 = vmatpush1.msra.mxu0 0.0
        %5789 = vmatprep.subr.mxu0 0.0
        %5790 = vmatpush1.msra.mxu0 0.0
        %5791 = vmatprep.subr.mxu0 0.0
        %5792 = vmatpush1.msra.mxu0 0.0
        %5793 = vmatprep.mubr.f32.mxu0 0.0
        %v5794 = vand.u32 %v5563, 4294901760
        %v5795 = vsub.f32 %v5563, %v5794
        %5796 = vmatmul.mubr.f32.gmra.mrb[0].mxu0 %v5795
        %v5797 = vpop.f32.mrb[0].mxu0
        %v5798 = vadd.f32 %v5721, %v5797
        %v5799 = vpop.f32.mrb[0].mxu0
        %v5800 = vadd.f32 %v5723, %v5799
        %5801 = vdwg.mxu0
        %v5802 = vand.u32 %v5559, 4294901760
        %5803 = vmatprep.subr.mxu0 %v5802
        %v5804 = vand.u32 %v5558, 4294901760
        %5805 = vmatpush1.msra.mxu0 %v5804
        %5806 = vmatprep.subr.mxu0 0.0
        %5807 = vmatpush1.msra.mxu0 0.0
        %5808 = vmatprep.subr.mxu0 0.0
        %5809 = vmatpush1.msra.mxu0 0.0
        %5810 = vmatprep.subr.mxu0 0.0
        %5811 = vmatpush1.msra.mxu0 0.0
        %5812 = vmatprep.subr.mxu0 0.0
        %5813 = vmatpush1.msra.mxu0 0.0
        %5814 = vmatprep.subr.mxu0 0.0
        %5815 = vmatpush1.msra.mxu0 0.0
        %5816 = vmatprep.subr.mxu0 0.0
        %5817 = vmatpush1.msra.mxu0 0.0
        %5818 = vmatprep.subr.mxu0 0.0
        %5819 = vmatpush1.msra.mxu0 0.0
        %5820 = vmatprep.subr.mxu0 0.0
        %5821 = vmatpush1.msra.mxu0 0.0
        %5822 = vmatprep.subr.mxu0 0.0
        %5823 = vmatpush1.msra.mxu0 0.0
        %5824 = vmatprep.subr.mxu0 0.0
        %5825 = vmatpush1.msra.mxu0 0.0
        %5826 = vmatprep.subr.mxu0 0.0
        %5827 = vmatpush1.msra.mxu0 0.0
        %5828 = vmatprep.subr.mxu0 0.0
        %5829 = vmatpush1.msra.mxu0 0.0
        %5830 = vmatprep.subr.mxu0 0.0
        %5831 = vmatpush1.msra.mxu0 0.0
        %5832 = vmatprep.subr.mxu0 0.0
        %5833 = vmatpush1.msra.mxu0 0.0
        %5834 = vmatprep.subr.mxu0 0.0
        %5835 = vmatpush1.msra.mxu0 0.0
        %5836 = vmatprep.subr.mxu0 0.0
        %5837 = vmatpush1.msra.mxu0 0.0
        %5838 = vmatprep.subr.mxu0 0.0
        %5839 = vmatpush1.msra.mxu0 0.0
        %5840 = vmatprep.subr.mxu0 0.0
        %5841 = vmatpush1.msra.mxu0 0.0
        %5842 = vmatprep.subr.mxu0 0.0
        %5843 = vmatpush1.msra.mxu0 0.0
        %5844 = vmatprep.subr.mxu0 0.0
        %5845 = vmatpush1.msra.mxu0 0.0
        %5846 = vmatprep.subr.mxu0 0.0
        %5847 = vmatpush1.msra.mxu0 0.0
        %5848 = vmatprep.subr.mxu0 0.0
        %5849 = vmatpush1.msra.mxu0 0.0
        %5850 = vmatprep.subr.mxu0 0.0
        %5851 = vmatpush1.msra.mxu0 0.0
        %5852 = vmatprep.subr.mxu0 0.0
        %5853 = vmatpush1.msra.mxu0 0.0
        %5854 = vmatprep.subr.mxu0 0.0
        %5855 = vmatpush1.msra.mxu0 0.0
        %5856 = vmatprep.subr.mxu0 0.0
        %5857 = vmatpush1.msra.mxu0 0.0
        %5858 = vmatprep.subr.mxu0 0.0
        %5859 = vmatpush1.msra.mxu0 0.0
        %5860 = vmatprep.subr.mxu0 0.0
        %5861 = vmatpush1.msra.mxu0 0.0
        %5862 = vmatprep.subr.mxu0 0.0
        %5863 = vmatpush1.msra.mxu0 0.0
        %5864 = vmatprep.subr.mxu0 0.0
        %5865 = vmatpush1.msra.mxu0 0.0
        %5866 = vmatprep.subr.mxu0 0.0
        %5867 = vmatpush1.msra.mxu0 0.0
        %5868 = vmatprep.mubr.f32.mxu0 0.0
        %v5869 = vand.u32 %v5563, 4294901760
        %v5870 = vsub.f32 %v5563, %v5869
        %v5871 = vand.u32 %v5870, 4294901760
        %5872 = vmatmul.mubr.f32.gmra.mrb[0].mxu0 %v5871
        %v5873 = vpop.f32.mrb[0].mxu0
        %v5874 = vadd.f32 %v5798, %v5873
        %v5875 = vpop.f32.mrb[0].mxu0
        %v5876 = vadd.f32 %v5800, %v5875
        %5877 = vdwg.mxu0
        %v5878 = vand.u32 %v5559, 4294901760
        %v5879 = vsub.f32 %v5559, %v5878
        %v5880 = vand.u32 %v5879, 4294901760
        %5881 = vmatprep.subr.mxu0 %v5880
        %v5882 = vand.u32 %v5558, 4294901760
        %v5883 = vsub.f32 %v5558, %v5882
        %v5884 = vand.u32 %v5883, 4294901760
        %5885 = vmatpush1.msra.mxu0 %v5884
        %5886 = vmatprep.subr.mxu0 0.0
        %5887 = vmatpush1.msra.mxu0 0.0
        %5888 = vmatprep.subr.mxu0 0.0
        %5889 = vmatpush1.msra.mxu0 0.0
        %5890 = vmatprep.subr.mxu0 0.0
        %5891 = vmatpush1.msra.mxu0 0.0
        %5892 = vmatprep.subr.mxu0 0.0
        %5893 = vmatpush1.msra.mxu0 0.0
        %5894 = vmatprep.subr.mxu0 0.0
        %5895 = vmatpush1.msra.mxu0 0.0
        %5896 = vmatprep.subr.mxu0 0.0
        %5897 = vmatpush1.msra.mxu0 0.0
        %5898 = vmatprep.subr.mxu0 0.0
        %5899 = vmatpush1.msra.mxu0 0.0
        %5900 = vmatprep.subr.mxu0 0.0
        %5901 = vmatpush1.msra.mxu0 0.0
        %5902 = vmatprep.subr.mxu0 0.0
        %5903 = vmatpush1.msra.mxu0 0.0
        %5904 = vmatprep.subr.mxu0 0.0
        %5905 = vmatpush1.msra.mxu0 0.0
        %5906 = vmatprep.subr.mxu0 0.0
        %5907 = vmatpush1.msra.mxu0 0.0
        %5908 = vmatprep.subr.mxu0 0.0
        %5909 = vmatpush1.msra.mxu0 0.0
        %5910 = vmatprep.subr.mxu0 0.0
        %5911 = vmatpush1.msra.mxu0 0.0
        %5912 = vmatprep.subr.mxu0 0.0
        %5913 = vmatpush1.msra.mxu0 0.0
        %5914 = vmatprep.subr.mxu0 0.0
        %5915 = vmatpush1.msra.mxu0 0.0
        %5916 = vmatprep.subr.mxu0 0.0
        %5917 = vmatpush1.msra.mxu0 0.0
        %5918 = vmatprep.subr.mxu0 0.0
        %5919 = vmatpush1.msra.mxu0 0.0
        %5920 = vmatprep.subr.mxu0 0.0
        %5921 = vmatpush1.msra.mxu0 0.0
        %5922 = vmatprep.subr.mxu0 0.0
        %5923 = vmatpush1.msra.mxu0 0.0
        %5924 = vmatprep.subr.mxu0 0.0
        %5925 = vmatpush1.msra.mxu0 0.0
        %5926 = vmatprep.subr.mxu0 0.0
        %5927 = vmatpush1.msra.mxu0 0.0
        %5928 = vmatprep.subr.mxu0 0.0
        %5929 = vmatpush1.msra.mxu0 0.0
        %5930 = vmatprep.subr.mxu0 0.0
        %5931 = vmatpush1.msra.mxu0 0.0
        %5932 = vmatprep.subr.mxu0 0.0
        %5933 = vmatpush1.msra.mxu0 0.0
        %5934 = vmatprep.subr.mxu0 0.0
        %5935 = vmatpush1.msra.mxu0 0.0
        %5936 = vmatprep.subr.mxu0 0.0
        %5937 = vmatpush1.msra.mxu0 0.0
        %5938 = vmatprep.subr.mxu0 0.0
        %5939 = vmatpush1.msra.mxu0 0.0
        %5940 = vmatprep.subr.mxu0 0.0
        %5941 = vmatpush1.msra.mxu0 0.0
        %5942 = vmatprep.subr.mxu0 0.0
        %5943 = vmatpush1.msra.mxu0 0.0
        %5944 = vmatprep.subr.mxu0 0.0
        %5945 = vmatpush1.msra.mxu0 0.0
        %5946 = vmatprep.subr.mxu0 0.0
        %5947 = vmatpush1.msra.mxu0 0.0
        %5948 = vmatprep.mubr.f32.mxu0 0.0
        %v5949 = vand.u32 %v5563, 4294901760
        %5950 = vmatmul.mubr.f32.gmra.mrb[0].mxu0 %v5949
        %v5951 = vpop.f32.mrb[0].mxu0
        %v5952 = vadd.f32 %v5874, %v5951
        %v5953 = vpop.f32.mrb[0].mxu0
        %v5954 = vadd.f32 %v5876, %v5953
        %5955 = vdwg.mxu0
        %v5956 = vand.u32 %v5559, 4294901760
        %5957 = vmatprep.subr.mxu0 %v5956
        %v5958 = vand.u32 %v5558, 4294901760
        %5959 = vmatpush1.msra.mxu0 %v5958
        %5960 = vmatprep.subr.mxu0 0.0
        %5961 = vmatpush1.msra.mxu0 0.0
        %5962 = vmatprep.subr.mxu0 0.0
        %5963 = vmatpush1.msra.mxu0 0.0
        %5964 = vmatprep.subr.mxu0 0.0
        %5965 = vmatpush1.msra.mxu0 0.0
        %5966 = vmatprep.subr.mxu0 0.0
        %5967 = vmatpush1.msra.mxu0 0.0
        %5968 = vmatprep.subr.mxu0 0.0
        %5969 = vmatpush1.msra.mxu0 0.0
        %5970 = vmatprep.subr.mxu0 0.0
        %5971 = vmatpush1.msra.mxu0 0.0
        %5972 = vmatprep.subr.mxu0 0.0
        %5973 = vmatpush1.msra.mxu0 0.0
        %5974 = vmatprep.subr.mxu0 0.0
        %5975 = vmatpush1.msra.mxu0 0.0
        %5976 = vmatprep.subr.mxu0 0.0
        %5977 = vmatpush1.msra.mxu0 0.0
        %5978 = vmatprep.subr.mxu0 0.0
        %5979 = vmatpush1.msra.mxu0 0.0
        %5980 = vmatprep.subr.mxu0 0.0
        %5981 = vmatpush1.msra.mxu0 0.0
        %5982 = vmatprep.subr.mxu0 0.0
        %5983 = vmatpush1.msra.mxu0 0.0
        %5984 = vmatprep.subr.mxu0 0.0
        %5985 = vmatpush1.msra.mxu0 0.0
        %5986 = vmatprep.subr.mxu0 0.0
        %5987 = vmatpush1.msra.mxu0 0.0
        %5988 = vmatprep.subr.mxu0 0.0
        %5989 = vmatpush1.msra.mxu0 0.0
        %5990 = vmatprep.subr.mxu0 0.0
        %5991 = vmatpush1.msra.mxu0 0.0
        %5992 = vmatprep.subr.mxu0 0.0
        %5993 = vmatpush1.msra.mxu0 0.0
        %5994 = vmatprep.subr.mxu0 0.0
        %5995 = vmatpush1.msra.mxu0 0.0
        %5996 = vmatprep.subr.mxu0 0.0
        %5997 = vmatpush1.msra.mxu0 0.0
        %5998 = vmatprep.subr.mxu0 0.0
        %5999 = vmatpush1.msra.mxu0 0.0
        %6000 = vmatprep.subr.mxu0 0.0
        %6001 = vmatpush1.msra.mxu0 0.0
        %6002 = vmatprep.subr.mxu0 0.0
        %6003 = vmatpush1.msra.mxu0 0.0
        %6004 = vmatprep.subr.mxu0 0.0
        %6005 = vmatpush1.msra.mxu0 0.0
        %6006 = vmatprep.subr.mxu0 0.0
        %6007 = vmatpush1.msra.mxu0 0.0
        %6008 = vmatprep.subr.mxu0 0.0
        %6009 = vmatpush1.msra.mxu0 0.0
        %6010 = vmatprep.subr.mxu0 0.0
        %6011 = vmatpush1.msra.mxu0 0.0
        %6012 = vmatprep.subr.mxu0 0.0
        %6013 = vmatpush1.msra.mxu0 0.0
        %6014 = vmatprep.subr.mxu0 0.0
        %6015 = vmatpush1.msra.mxu0 0.0
        %6016 = vmatprep.subr.mxu0 0.0
        %6017 = vmatpush1.msra.mxu0 0.0
        %6018 = vmatprep.subr.mxu0 0.0
        %6019 = vmatpush1.msra.mxu0 0.0
        %6020 = vmatprep.subr.mxu0 0.0
        %6021 = vmatpush1.msra.mxu0 0.0
        %6022 = vmatprep.mubr.f32.mxu0 0.0
        %v6023 = vand.u32 %v5563, 4294901760
        %6024 = vmatmul.mubr.f32.gmra.mrb[0].mxu0 %v6023
        %v6025 = vpop.f32.mrb[0].mxu0
        %v6026 = vadd.f32 %v5952, %v6025
        %v6027 = vpop.f32.mrb[0].mxu0
        %v6028 = vadd.f32 %v5954, %v6027
        %6029 = vdwg.mxu0
        %v6030 = vadd.f32 %v5537, %v6026
        %v6031 = vadd.f32 %v5538, %v6028
        %6032 = vrot.lane.b32.xlu0 %v3099, 113
        %v6033 = vpop.permute.xlu0 %6032
        %6034 = vrot.lane.b32.xlu0 %v3100, 113
        %v6035 = vpop.permute.xlu0 %6034
        %v6036 = vsel %vm738, %v6033, %v6035
        %v6037 = vsel %vm738, %v6035, %v6033
        %s6038 = scalar_lea.vmem %s7, 12
        %v6039 = vld [vmem:[%s6038] sm:$0x3]
        %v6041 = vlaneseq
        %v6042 = vshrl.u32 %v6041, 7
        %v6043 = vsub.s32 0, %v6042
        %v6044 = vrot.slane %v6039, %v6043
        %v6045 = vlaneseq
        %v6046 = vshrl.u32 %v6045, 7
        %v6047 = vsub.s32 1, %v6046
        %v6048 = vrot.slane %v6039, %v6047
        %v6051 = vmul.f32 %v6036, %v6044
        %v6052 = vmul.f32 %v6037, %v6048
        %s6053 = scalar_lea.vmem %s6, 48
        %v6054 = vld [vmem:[%s6053] sm:$0xff]
        %v6056 = vsel %vm1672, %v6054, 0
        %v6058 = vand.u32 %v6052, 4294901760
        %6059 = vmatprep.subr.mxu0 %v6058
        %v6060 = vand.u32 %v6051, 4294901760
        %6061 = vmatpush1.msra.mxu0 %v6060
        %6062 = vmatprep.subr.mxu0 0.0
        %6063 = vmatpush1.msra.mxu0 0.0
        %6064 = vmatprep.subr.mxu0 0.0
        %6065 = vmatpush1.msra.mxu0 0.0
        %6066 = vmatprep.subr.mxu0 0.0
        %6067 = vmatpush1.msra.mxu0 0.0
        %6068 = vmatprep.subr.mxu0 0.0
        %6069 = vmatpush1.msra.mxu0 0.0
        %6070 = vmatprep.subr.mxu0 0.0
        %6071 = vmatpush1.msra.mxu0 0.0
        %6072 = vmatprep.subr.mxu0 0.0
        %6073 = vmatpush1.msra.mxu0 0.0
        %6074 = vmatprep.subr.mxu0 0.0
        %6075 = vmatpush1.msra.mxu0 0.0
        %6076 = vmatprep.subr.mxu0 0.0
        %6077 = vmatpush1.msra.mxu0 0.0
        %6078 = vmatprep.subr.mxu0 0.0
        %6079 = vmatpush1.msra.mxu0 0.0
        %6080 = vmatprep.subr.mxu0 0.0
        %6081 = vmatpush1.msra.mxu0 0.0
        %6082 = vmatprep.subr.mxu0 0.0
        %6083 = vmatpush1.msra.mxu0 0.0
        %6084 = vmatprep.subr.mxu0 0.0
        %6085 = vmatpush1.msra.mxu0 0.0
        %6086 = vmatprep.subr.mxu0 0.0
        %6087 = vmatpush1.msra.mxu0 0.0
        %6088 = vmatprep.subr.mxu0 0.0
        %6089 = vmatpush1.msra.mxu0 0.0
        %6090 = vmatprep.subr.mxu0 0.0
        %6091 = vmatpush1.msra.mxu0 0.0
        %6092 = vmatprep.subr.mxu0 0.0
        %6093 = vmatpush1.msra.mxu0 0.0
        %6094 = vmatprep.subr.mxu0 0.0
        %6095 = vmatpush1.msra.mxu0 0.0
        %6096 = vmatprep.subr.mxu0 0.0
        %6097 = vmatpush1.msra.mxu0 0.0
        %6098 = vmatprep.subr.mxu0 0.0
        %6099 = vmatpush1.msra.mxu0 0.0
        %6100 = vmatprep.subr.mxu0 0.0
        %6101 = vmatpush1.msra.mxu0 0.0
        %6102 = vmatprep.subr.mxu0 0.0
        %6103 = vmatpush1.msra.mxu0 0.0
        %6104 = vmatprep.subr.mxu0 0.0
        %6105 = vmatpush1.msra.mxu0 0.0
        %6106 = vmatprep.subr.mxu0 0.0
        %6107 = vmatpush1.msra.mxu0 0.0
        %6108 = vmatprep.subr.mxu0 0.0
        %6109 = vmatpush1.msra.mxu0 0.0
        %6110 = vmatprep.subr.mxu0 0.0
        %6111 = vmatpush1.msra.mxu0 0.0
        %6112 = vmatprep.subr.mxu0 0.0
        %6113 = vmatpush1.msra.mxu0 0.0
        %6114 = vmatprep.subr.mxu0 0.0
        %6115 = vmatpush1.msra.mxu0 0.0
        %6116 = vmatprep.subr.mxu0 0.0
        %6117 = vmatpush1.msra.mxu0 0.0
        %6118 = vmatprep.subr.mxu0 0.0
        %6119 = vmatpush1.msra.mxu0 0.0
        %6120 = vmatprep.subr.mxu0 0.0
        %6121 = vmatpush1.msra.mxu0 0.0
        %6122 = vmatprep.subr.mxu0 0.0
        %6123 = vmatpush1.msra.mxu0 0.0
        %6124 = vmatprep.mubr.f32.mxu0 0.0
        %v6125 = vand.u32 %v6056, 4294901760
        %v6126 = vsub.f32 %v6056, %v6125
        %v6127 = vand.u32 %v6126, 4294901760
        %v6128 = vsub.f32 %v6126, %v6127
        %v6129 = vand.u32 %v6128, 4294901760
        %6130 = vmatmul.mubr.f32.gmra.mrb[0].mxu0 %v6129
        %v6131 = vpop.f32.mrb[0].mxu0
        %v6132 = vadd.f32 0.0, %v6131
        %v6133 = vpop.f32.mrb[0].mxu0
        %v6134 = vadd.f32 0.0, %v6133
        %6135 = vdwg.mxu0
        %v6136 = vand.u32 %v6052, 4294901760
        %v6137 = vsub.f32 %v6052, %v6136
        %v6138 = vand.u32 %v6137, 4294901760
        %v6139 = vsub.f32 %v6137, %v6138
        %v6140 = vand.u32 %v6139, 4294901760
        %6141 = vmatprep.subr.mxu0 %v6140
        %v6142 = vand.u32 %v6051, 4294901760
        %v6143 = vsub.f32 %v6051, %v6142
        %v6144 = vand.u32 %v6143, 4294901760
        %v6145 = vsub.f32 %v6143, %v6144
        %v6146 = vand.u32 %v6145, 4294901760
        %6147 = vmatpush1.msra.mxu0 %v6146
        %6148 = vmatprep.subr.mxu0 0.0
        %6149 = vmatpush1.msra.mxu0 0.0
        %6150 = vmatprep.subr.mxu0 0.0
        %6151 = vmatpush1.msra.mxu0 0.0
        %6152 = vmatprep.subr.mxu0 0.0
        %6153 = vmatpush1.msra.mxu0 0.0
        %6154 = vmatprep.subr.mxu0 0.0
        %6155 = vmatpush1.msra.mxu0 0.0
        %6156 = vmatprep.subr.mxu0 0.0
        %6157 = vmatpush1.msra.mxu0 0.0
        %6158 = vmatprep.subr.mxu0 0.0
        %6159 = vmatpush1.msra.mxu0 0.0
        %6160 = vmatprep.subr.mxu0 0.0
        %6161 = vmatpush1.msra.mxu0 0.0
        %6162 = vmatprep.subr.mxu0 0.0
        %6163 = vmatpush1.msra.mxu0 0.0
        %6164 = vmatprep.subr.mxu0 0.0
        %6165 = vmatpush1.msra.mxu0 0.0
        %6166 = vmatprep.subr.mxu0 0.0
        %6167 = vmatpush1.msra.mxu0 0.0
        %6168 = vmatprep.subr.mxu0 0.0
        %6169 = vmatpush1.msra.mxu0 0.0
        %6170 = vmatprep.subr.mxu0 0.0
        %6171 = vmatpush1.msra.mxu0 0.0
        %6172 = vmatprep.subr.mxu0 0.0
        %6173 = vmatpush1.msra.mxu0 0.0
        %6174 = vmatprep.subr.mxu0 0.0
        %6175 = vmatpush1.msra.mxu0 0.0
        %6176 = vmatprep.subr.mxu0 0.0
        %6177 = vmatpush1.msra.mxu0 0.0
        %6178 = vmatprep.subr.mxu0 0.0
        %6179 = vmatpush1.msra.mxu0 0.0
        %6180 = vmatprep.subr.mxu0 0.0
        %6181 = vmatpush1.msra.mxu0 0.0
        %6182 = vmatprep.subr.mxu0 0.0
        %6183 = vmatpush1.msra.mxu0 0.0
        %6184 = vmatprep.subr.mxu0 0.0
        %6185 = vmatpush1.msra.mxu0 0.0
        %6186 = vmatprep.subr.mxu0 0.0
        %6187 = vmatpush1.msra.mxu0 0.0
        %6188 = vmatprep.subr.mxu0 0.0
        %6189 = vmatpush1.msra.mxu0 0.0
        %6190 = vmatprep.subr.mxu0 0.0
        %6191 = vmatpush1.msra.mxu0 0.0
        %6192 = vmatprep.subr.mxu0 0.0
        %6193 = vmatpush1.msra.mxu0 0.0
        %6194 = vmatprep.subr.mxu0 0.0
        %6195 = vmatpush1.msra.mxu0 0.0
        %6196 = vmatprep.subr.mxu0 0.0
        %6197 = vmatpush1.msra.mxu0 0.0
        %6198 = vmatprep.subr.mxu0 0.0
        %6199 = vmatpush1.msra.mxu0 0.0
        %6200 = vmatprep.subr.mxu0 0.0
        %6201 = vmatpush1.msra.mxu0 0.0
        %6202 = vmatprep.subr.mxu0 0.0
        %6203 = vmatpush1.msra.mxu0 0.0
        %6204 = vmatprep.subr.mxu0 0.0
        %6205 = vmatpush1.msra.mxu0 0.0
        %6206 = vmatprep.subr.mxu0 0.0
        %6207 = vmatpush1.msra.mxu0 0.0
        %6208 = vmatprep.subr.mxu0 0.0
        %6209 = vmatpush1.msra.mxu0 0.0
        %6210 = vmatprep.mubr.f32.mxu0 0.0
        %v6211 = vand.u32 %v6056, 4294901760
        %6212 = vmatmul.mubr.f32.gmra.mrb[0].mxu0 %v6211
        %v6213 = vpop.f32.mrb[0].mxu0
        %v6214 = vadd.f32 %v6132, %v6213
        %v6215 = vpop.f32.mrb[0].mxu0
        %v6216 = vadd.f32 %v6134, %v6215
        %6217 = vdwg.mxu0
        %v6218 = vand.u32 %v6052, 4294901760
        %v6219 = vsub.f32 %v6052, %v6218
        %6220 = vmatprep.subr.mxu0 %v6219
        %v6221 = vand.u32 %v6051, 4294901760
        %v6222 = vsub.f32 %v6051, %v6221
        %6223 = vmatpush1.msra.mxu0 %v6222
        %6224 = vmatprep.subr.mxu0 0.0
        %6225 = vmatpush1.msra.mxu0 0.0
        %6226 = vmatprep.subr.mxu0 0.0
        %6227 = vmatpush1.msra.mxu0 0.0
        %6228 = vmatprep.subr.mxu0 0.0
        %6229 = vmatpush1.msra.mxu0 0.0
        %6230 = vmatprep.subr.mxu0 0.0
        %6231 = vmatpush1.msra.mxu0 0.0
        %6232 = vmatprep.subr.mxu0 0.0
        %6233 = vmatpush1.msra.mxu0 0.0
        %6234 = vmatprep.subr.mxu0 0.0
        %6235 = vmatpush1.msra.mxu0 0.0
        %6236 = vmatprep.subr.mxu0 0.0
        %6237 = vmatpush1.msra.mxu0 0.0
        %6238 = vmatprep.subr.mxu0 0.0
        %6239 = vmatpush1.msra.mxu0 0.0
        %6240 = vmatprep.subr.mxu0 0.0
        %6241 = vmatpush1.msra.mxu0 0.0
        %6242 = vmatprep.subr.mxu0 0.0
        %6243 = vmatpush1.msra.mxu0 0.0
        %6244 = vmatprep.subr.mxu0 0.0
        %6245 = vmatpush1.msra.mxu0 0.0
        %6246 = vmatprep.subr.mxu0 0.0
        %6247 = vmatpush1.msra.mxu0 0.0
        %6248 = vmatprep.subr.mxu0 0.0
        %6249 = vmatpush1.msra.mxu0 0.0
        %6250 = vmatprep.subr.mxu0 0.0
        %6251 = vmatpush1.msra.mxu0 0.0
        %6252 = vmatprep.subr.mxu0 0.0
        %6253 = vmatpush1.msra.mxu0 0.0
        %6254 = vmatprep.subr.mxu0 0.0
        %6255 = vmatpush1.msra.mxu0 0.0
        %6256 = vmatprep.subr.mxu0 0.0
        %6257 = vmatpush1.msra.mxu0 0.0
        %6258 = vmatprep.subr.mxu0 0.0
        %6259 = vmatpush1.msra.mxu0 0.0
        %6260 = vmatprep.subr.mxu0 0.0
        %6261 = vmatpush1.msra.mxu0 0.0
        %6262 = vmatprep.subr.mxu0 0.0
        %6263 = vmatpush1.msra.mxu0 0.0
        %6264 = vmatprep.subr.mxu0 0.0
        %6265 = vmatpush1.msra.mxu0 0.0
        %6266 = vmatprep.subr.mxu0 0.0
        %6267 = vmatpush1.msra.mxu0 0.0
        %6268 = vmatprep.subr.mxu0 0.0
        %6269 = vmatpush1.msra.mxu0 0.0
        %6270 = vmatprep.subr.mxu0 0.0
        %6271 = vmatpush1.msra.mxu0 0.0
        %6272 = vmatprep.subr.mxu0 0.0
        %6273 = vmatpush1.msra.mxu0 0.0
        %6274 = vmatprep.subr.mxu0 0.0
        %6275 = vmatpush1.msra.mxu0 0.0
        %6276 = vmatprep.subr.mxu0 0.0
        %6277 = vmatpush1.msra.mxu0 0.0
        %6278 = vmatprep.subr.mxu0 0.0
        %6279 = vmatpush1.msra.mxu0 0.0
        %6280 = vmatprep.subr.mxu0 0.0
        %6281 = vmatpush1.msra.mxu0 0.0
        %6282 = vmatprep.subr.mxu0 0.0
        %6283 = vmatpush1.msra.mxu0 0.0
        %6284 = vmatprep.subr.mxu0 0.0
        %6285 = vmatpush1.msra.mxu0 0.0
        %6286 = vmatprep.mubr.f32.mxu0 0.0
        %v6287 = vand.u32 %v6056, 4294901760
        %v6288 = vsub.f32 %v6056, %v6287
        %6289 = vmatmul.mubr.f32.gmra.mrb[0].mxu0 %v6288
        %v6290 = vpop.f32.mrb[0].mxu0
        %v6291 = vadd.f32 %v6214, %v6290
        %v6292 = vpop.f32.mrb[0].mxu0
        %v6293 = vadd.f32 %v6216, %v6292
        %6294 = vdwg.mxu0
        %v6295 = vand.u32 %v6052, 4294901760
        %6296 = vmatprep.subr.mxu0 %v6295
        %v6297 = vand.u32 %v6051, 4294901760
        %6298 = vmatpush1.msra.mxu0 %v6297
        %6299 = vmatprep.subr.mxu0 0.0
        %6300 = vmatpush1.msra.mxu0 0.0
        %6301 = vmatprep.subr.mxu0 0.0
        %6302 = vmatpush1.msra.mxu0 0.0
        %6303 = vmatprep.subr.mxu0 0.0
        %6304 = vmatpush1.msra.mxu0 0.0
        %6305 = vmatprep.subr.mxu0 0.0
        %6306 = vmatpush1.msra.mxu0 0.0
        %6307 = vmatprep.subr.mxu0 0.0
        %6308 = vmatpush1.msra.mxu0 0.0
        %6309 = vmatprep.subr.mxu0 0.0
        %6310 = vmatpush1.msra.mxu0 0.0
        %6311 = vmatprep.subr.mxu0 0.0
        %6312 = vmatpush1.msra.mxu0 0.0
        %6313 = vmatprep.subr.mxu0 0.0
        %6314 = vmatpush1.msra.mxu0 0.0
        %6315 = vmatprep.subr.mxu0 0.0
        %6316 = vmatpush1.msra.mxu0 0.0
        %6317 = vmatprep.subr.mxu0 0.0
        %6318 = vmatpush1.msra.mxu0 0.0
        %6319 = vmatprep.subr.mxu0 0.0
        %6320 = vmatpush1.msra.mxu0 0.0
        %6321 = vmatprep.subr.mxu0 0.0
        %6322 = vmatpush1.msra.mxu0 0.0
        %6323 = vmatprep.subr.mxu0 0.0
        %6324 = vmatpush1.msra.mxu0 0.0
        %6325 = vmatprep.subr.mxu0 0.0
        %6326 = vmatpush1.msra.mxu0 0.0
        %6327 = vmatprep.subr.mxu0 0.0
        %6328 = vmatpush1.msra.mxu0 0.0
        %6329 = vmatprep.subr.mxu0 0.0
        %6330 = vmatpush1.msra.mxu0 0.0
        %6331 = vmatprep.subr.mxu0 0.0
        %6332 = vmatpush1.msra.mxu0 0.0
        %6333 = vmatprep.subr.mxu0 0.0
        %6334 = vmatpush1.msra.mxu0 0.0
        %6335 = vmatprep.subr.mxu0 0.0
        %6336 = vmatpush1.msra.mxu0 0.0
        %6337 = vmatprep.subr.mxu0 0.0
        %6338 = vmatpush1.msra.mxu0 0.0
        %6339 = vmatprep.subr.mxu0 0.0
        %6340 = vmatpush1.msra.mxu0 0.0
        %6341 = vmatprep.subr.mxu0 0.0
        %6342 = vmatpush1.msra.mxu0 0.0
        %6343 = vmatprep.subr.mxu0 0.0
        %6344 = vmatpush1.msra.mxu0 0.0
        %6345 = vmatprep.subr.mxu0 0.0
        %6346 = vmatpush1.msra.mxu0 0.0
        %6347 = vmatprep.subr.mxu0 0.0
        %6348 = vmatpush1.msra.mxu0 0.0
        %6349 = vmatprep.subr.mxu0 0.0
        %6350 = vmatpush1.msra.mxu0 0.0
        %6351 = vmatprep.subr.mxu0 0.0
        %6352 = vmatpush1.msra.mxu0 0.0
        %6353 = vmatprep.subr.mxu0 0.0
        %6354 = vmatpush1.msra.mxu0 0.0
        %6355 = vmatprep.subr.mxu0 0.0
        %6356 = vmatpush1.msra.mxu0 0.0
        %6357 = vmatprep.subr.mxu0 0.0
        %6358 = vmatpush1.msra.mxu0 0.0
        %6359 = vmatprep.subr.mxu0 0.0
        %6360 = vmatpush1.msra.mxu0 0.0
        %6361 = vmatprep.mubr.f32.mxu0 0.0
        %v6362 = vand.u32 %v6056, 4294901760
        %v6363 = vsub.f32 %v6056, %v6362
        %v6364 = vand.u32 %v6363, 4294901760
        %6365 = vmatmul.mubr.f32.gmra.mrb[0].mxu0 %v6364
        %v6366 = vpop.f32.mrb[0].mxu0
        %v6367 = vadd.f32 %v6291, %v6366
        %v6368 = vpop.f32.mrb[0].mxu0
        %v6369 = vadd.f32 %v6293, %v6368
        %6370 = vdwg.mxu0
        %v6371 = vand.u32 %v6052, 4294901760
        %v6372 = vsub.f32 %v6052, %v6371
        %v6373 = vand.u32 %v6372, 4294901760
        %6374 = vmatprep.subr.mxu0 %v6373
        %v6375 = vand.u32 %v6051, 4294901760
        %v6376 = vsub.f32 %v6051, %v6375
        %v6377 = vand.u32 %v6376, 4294901760
        %6378 = vmatpush1.msra.mxu0 %v6377
        %6379 = vmatprep.subr.mxu0 0.0
        %6380 = vmatpush1.msra.mxu0 0.0
        %6381 = vmatprep.subr.mxu0 0.0
        %6382 = vmatpush1.msra.mxu0 0.0
        %6383 = vmatprep.subr.mxu0 0.0
        %6384 = vmatpush1.msra.mxu0 0.0
        %6385 = vmatprep.subr.mxu0 0.0
        %6386 = vmatpush1.msra.mxu0 0.0
        %6387 = vmatprep.subr.mxu0 0.0
        %6388 = vmatpush1.msra.mxu0 0.0
        %6389 = vmatprep.subr.mxu0 0.0
        %6390 = vmatpush1.msra.mxu0 0.0
        %6391 = vmatprep.subr.mxu0 0.0
        %6392 = vmatpush1.msra.mxu0 0.0
        %6393 = vmatprep.subr.mxu0 0.0
        %6394 = vmatpush1.msra.mxu0 0.0
        %6395 = vmatprep.subr.mxu0 0.0
        %6396 = vmatpush1.msra.mxu0 0.0
        %6397 = vmatprep.subr.mxu0 0.0
        %6398 = vmatpush1.msra.mxu0 0.0
        %6399 = vmatprep.subr.mxu0 0.0
        %6400 = vmatpush1.msra.mxu0 0.0
        %6401 = vmatprep.subr.mxu0 0.0
        %6402 = vmatpush1.msra.mxu0 0.0
        %6403 = vmatprep.subr.mxu0 0.0
        %6404 = vmatpush1.msra.mxu0 0.0
        %6405 = vmatprep.subr.mxu0 0.0
        %6406 = vmatpush1.msra.mxu0 0.0
        %6407 = vmatprep.subr.mxu0 0.0
        %6408 = vmatpush1.msra.mxu0 0.0
        %6409 = vmatprep.subr.mxu0 0.0
        %6410 = vmatpush1.msra.mxu0 0.0
        %6411 = vmatprep.subr.mxu0 0.0
        %6412 = vmatpush1.msra.mxu0 0.0
        %6413 = vmatprep.subr.mxu0 0.0
        %6414 = vmatpush1.msra.mxu0 0.0
        %6415 = vmatprep.subr.mxu0 0.0
        %6416 = vmatpush1.msra.mxu0 0.0
        %6417 = vmatprep.subr.mxu0 0.0
        %6418 = vmatpush1.msra.mxu0 0.0
        %6419 = vmatprep.subr.mxu0 0.0
        %6420 = vmatpush1.msra.mxu0 0.0
        %6421 = vmatprep.subr.mxu0 0.0
        %6422 = vmatpush1.msra.mxu0 0.0
        %6423 = vmatprep.subr.mxu0 0.0
        %6424 = vmatpush1.msra.mxu0 0.0
        %6425 = vmatprep.subr.mxu0 0.0
        %6426 = vmatpush1.msra.mxu0 0.0
        %6427 = vmatprep.subr.mxu0 0.0
        %6428 = vmatpush1.msra.mxu0 0.0
        %6429 = vmatprep.subr.mxu0 0.0
        %6430 = vmatpush1.msra.mxu0 0.0
        %6431 = vmatprep.subr.mxu0 0.0
        %6432 = vmatpush1.msra.mxu0 0.0
        %6433 = vmatprep.subr.mxu0 0.0
        %6434 = vmatpush1.msra.mxu0 0.0
        %6435 = vmatprep.subr.mxu0 0.0
        %6436 = vmatpush1.msra.mxu0 0.0
        %6437 = vmatprep.subr.mxu0 0.0
        %6438 = vmatpush1.msra.mxu0 0.0
        %6439 = vmatprep.subr.mxu0 0.0
        %6440 = vmatpush1.msra.mxu0 0.0
        %6441 = vmatprep.mubr.f32.mxu0 0.0
        %v6442 = vand.u32 %v6056, 4294901760
        %6443 = vmatmul.mubr.f32.gmra.mrb[0].mxu0 %v6442
        %v6444 = vpop.f32.mrb[0].mxu0
        %v6445 = vadd.f32 %v6367, %v6444
        %v6446 = vpop.f32.mrb[0].mxu0
        %v6447 = vadd.f32 %v6369, %v6446
        %6448 = vdwg.mxu0
        %v6449 = vand.u32 %v6052, 4294901760
        %6450 = vmatprep.subr.mxu0 %v6449
        %v6451 = vand.u32 %v6051, 4294901760
        %6452 = vmatpush1.msra.mxu0 %v6451
        %6453 = vmatprep.subr.mxu0 0.0
        %6454 = vmatpush1.msra.mxu0 0.0
        %6455 = vmatprep.subr.mxu0 0.0
        %6456 = vmatpush1.msra.mxu0 0.0
        %6457 = vmatprep.subr.mxu0 0.0
        %6458 = vmatpush1.msra.mxu0 0.0
        %6459 = vmatprep.subr.mxu0 0.0
        %6460 = vmatpush1.msra.mxu0 0.0
        %6461 = vmatprep.subr.mxu0 0.0
        %6462 = vmatpush1.msra.mxu0 0.0
        %6463 = vmatprep.subr.mxu0 0.0
        %6464 = vmatpush1.msra.mxu0 0.0
        %6465 = vmatprep.subr.mxu0 0.0
        %6466 = vmatpush1.msra.mxu0 0.0
        %6467 = vmatprep.subr.mxu0 0.0
        %6468 = vmatpush1.msra.mxu0 0.0
        %6469 = vmatprep.subr.mxu0 0.0
        %6470 = vmatpush1.msra.mxu0 0.0
        %6471 = vmatprep.subr.mxu0 0.0
        %6472 = vmatpush1.msra.mxu0 0.0
        %6473 = vmatprep.subr.mxu0 0.0
        %6474 = vmatpush1.msra.mxu0 0.0
        %6475 = vmatprep.subr.mxu0 0.0
        %6476 = vmatpush1.msra.mxu0 0.0
        %6477 = vmatprep.subr.mxu0 0.0
        %6478 = vmatpush1.msra.mxu0 0.0
        %6479 = vmatprep.subr.mxu0 0.0
        %6480 = vmatpush1.msra.mxu0 0.0
        %6481 = vmatprep.subr.mxu0 0.0
        %6482 = vmatpush1.msra.mxu0 0.0
        %6483 = vmatprep.subr.mxu0 0.0
        %6484 = vmatpush1.msra.mxu0 0.0
        %6485 = vmatprep.subr.mxu0 0.0
        %6486 = vmatpush1.msra.mxu0 0.0
        %6487 = vmatprep.subr.mxu0 0.0
        %6488 = vmatpush1.msra.mxu0 0.0
        %6489 = vmatprep.subr.mxu0 0.0
        %6490 = vmatpush1.msra.mxu0 0.0
        %6491 = vmatprep.subr.mxu0 0.0
        %6492 = vmatpush1.msra.mxu0 0.0
        %6493 = vmatprep.subr.mxu0 0.0
        %6494 = vmatpush1.msra.mxu0 0.0
        %6495 = vmatprep.subr.mxu0 0.0
        %6496 = vmatpush1.msra.mxu0 0.0
        %6497 = vmatprep.subr.mxu0 0.0
        %6498 = vmatpush1.msra.mxu0 0.0
        %6499 = vmatprep.subr.mxu0 0.0
        %6500 = vmatpush1.msra.mxu0 0.0
        %6501 = vmatprep.subr.mxu0 0.0
        %6502 = vmatpush1.msra.mxu0 0.0
        %6503 = vmatprep.subr.mxu0 0.0
        %6504 = vmatpush1.msra.mxu0 0.0
        %6505 = vmatprep.subr.mxu0 0.0
        %6506 = vmatpush1.msra.mxu0 0.0
        %6507 = vmatprep.subr.mxu0 0.0
        %6508 = vmatpush1.msra.mxu0 0.0
        %6509 = vmatprep.subr.mxu0 0.0
        %6510 = vmatpush1.msra.mxu0 0.0
        %6511 = vmatprep.subr.mxu0 0.0
        %6512 = vmatpush1.msra.mxu0 0.0
        %6513 = vmatprep.subr.mxu0 0.0
        %6514 = vmatpush1.msra.mxu0 0.0
        %6515 = vmatprep.mubr.f32.mxu0 0.0
        %v6516 = vand.u32 %v6056, 4294901760
        %6517 = vmatmul.mubr.f32.gmra.mrb[0].mxu0 %v6516
        %v6518 = vpop.f32.mrb[0].mxu0
        %v6519 = vadd.f32 %v6445, %v6518
        %v6520 = vpop.f32.mrb[0].mxu0
        %v6521 = vadd.f32 %v6447, %v6520
        %6522 = vdwg.mxu0
        %v6523 = vadd.f32 %v6030, %v6519
        %v6524 = vadd.f32 %v6031, %v6521
        %6525 = vrot.lane.b32.xlu0 %v3099, 112
        %v6526 = vpop.permute.xlu0 %6525
        %6527 = vrot.lane.b32.xlu0 %v3100, 112
        %v6528 = vpop.permute.xlu0 %6527
        %v6529 = vsel %vm754, %v6526, %v6528
        %v6530 = vsel %vm754, %v6528, %v6526
        %s6531 = scalar_lea.vmem %s7, 14
        %v6532 = vld [vmem:[%s6531] sm:$0x3]
        %v6534 = vlaneseq
        %v6535 = vshrl.u32 %v6534, 7
        %v6536 = vsub.s32 0, %v6535
        %v6537 = vrot.slane %v6532, %v6536
        %v6538 = vlaneseq
        %v6539 = vshrl.u32 %v6538, 7
        %v6540 = vsub.s32 1, %v6539
        %v6541 = vrot.slane %v6532, %v6540
        %v6544 = vmul.f32 %v6529, %v6537
        %v6545 = vmul.f32 %v6530, %v6541
        %s6546 = scalar_lea.vmem %s6, 56
        %v6547 = vld [vmem:[%s6546] sm:$0xff]
        %v6549 = vsel %vm1672, %v6547, 0
        %v6551 = vand.u32 %v6545, 4294901760
        %6552 = vmatprep.subr.mxu0 %v6551
        %v6553 = vand.u32 %v6544, 4294901760
        %6554 = vmatpush1.msra.mxu0 %v6553
        %6555 = vmatprep.subr.mxu0 0.0
        %6556 = vmatpush1.msra.mxu0 0.0
        %6557 = vmatprep.subr.mxu0 0.0
        %6558 = vmatpush1.msra.mxu0 0.0
        %6559 = vmatprep.subr.mxu0 0.0
        %6560 = vmatpush1.msra.mxu0 0.0
        %6561 = vmatprep.subr.mxu0 0.0
        %6562 = vmatpush1.msra.mxu0 0.0
        %6563 = vmatprep.subr.mxu0 0.0
        %6564 = vmatpush1.msra.mxu0 0.0
        %6565 = vmatprep.subr.mxu0 0.0
        %6566 = vmatpush1.msra.mxu0 0.0
        %6567 = vmatprep.subr.mxu0 0.0
        %6568 = vmatpush1.msra.mxu0 0.0
        %6569 = vmatprep.subr.mxu0 0.0
        %6570 = vmatpush1.msra.mxu0 0.0
        %6571 = vmatprep.subr.mxu0 0.0
        %6572 = vmatpush1.msra.mxu0 0.0
        %6573 = vmatprep.subr.mxu0 0.0
        %6574 = vmatpush1.msra.mxu0 0.0
        %6575 = vmatprep.subr.mxu0 0.0
        %6576 = vmatpush1.msra.mxu0 0.0
        %6577 = vmatprep.subr.mxu0 0.0
        %6578 = vmatpush1.msra.mxu0 0.0
        %6579 = vmatprep.subr.mxu0 0.0
        %6580 = vmatpush1.msra.mxu0 0.0
        %6581 = vmatprep.subr.mxu0 0.0
        %6582 = vmatpush1.msra.mxu0 0.0
        %6583 = vmatprep.subr.mxu0 0.0
        %6584 = vmatpush1.msra.mxu0 0.0
        %6585 = vmatprep.subr.mxu0 0.0
        %6586 = vmatpush1.msra.mxu0 0.0
        %6587 = vmatprep.subr.mxu0 0.0
        %6588 = vmatpush1.msra.mxu0 0.0
        %6589 = vmatprep.subr.mxu0 0.0
        %6590 = vmatpush1.msra.mxu0 0.0
        %6591 = vmatprep.subr.mxu0 0.0
        %6592 = vmatpush1.msra.mxu0 0.0
        %6593 = vmatprep.subr.mxu0 0.0
        %6594 = vmatpush1.msra.mxu0 0.0
        %6595 = vmatprep.subr.mxu0 0.0
        %6596 = vmatpush1.msra.mxu0 0.0
        %6597 = vmatprep.subr.mxu0 0.0
        %6598 = vmatpush1.msra.mxu0 0.0
        %6599 = vmatprep.subr.mxu0 0.0
        %6600 = vmatpush1.msra.mxu0 0.0
        %6601 = vmatprep.subr.mxu0 0.0
        %6602 = vmatpush1.msra.mxu0 0.0
        %6603 = vmatprep.subr.mxu0 0.0
        %6604 = vmatpush1.msra.mxu0 0.0
        %6605 = vmatprep.subr.mxu0 0.0
        %6606 = vmatpush1.msra.mxu0 0.0
        %6607 = vmatprep.subr.mxu0 0.0
        %6608 = vmatpush1.msra.mxu0 0.0
        %6609 = vmatprep.subr.mxu0 0.0
        %6610 = vmatpush1.msra.mxu0 0.0
        %6611 = vmatprep.subr.mxu0 0.0
        %6612 = vmatpush1.msra.mxu0 0.0
        %6613 = vmatprep.subr.mxu0 0.0
        %6614 = vmatpush1.msra.mxu0 0.0
        %6615 = vmatprep.subr.mxu0 0.0
        %6616 = vmatpush1.msra.mxu0 0.0
        %6617 = vmatprep.mubr.f32.mxu0 0.0
        %v6618 = vand.u32 %v6549, 4294901760
        %v6619 = vsub.f32 %v6549, %v6618
        %v6620 = vand.u32 %v6619, 4294901760
        %v6621 = vsub.f32 %v6619, %v6620
        %v6622 = vand.u32 %v6621, 4294901760
        %6623 = vmatmul.mubr.f32.gmra.mrb[0].mxu0 %v6622
        %v6624 = vpop.f32.mrb[0].mxu0
        %v6625 = vadd.f32 0.0, %v6624
        %v6626 = vpop.f32.mrb[0].mxu0
        %v6627 = vadd.f32 0.0, %v6626
        %6628 = vdwg.mxu0
        %v6629 = vand.u32 %v6545, 4294901760
        %v6630 = vsub.f32 %v6545, %v6629
        %v6631 = vand.u32 %v6630, 4294901760
        %v6632 = vsub.f32 %v6630, %v6631
        %v6633 = vand.u32 %v6632, 4294901760
        %6634 = vmatprep.subr.mxu0 %v6633
        %v6635 = vand.u32 %v6544, 4294901760
        %v6636 = vsub.f32 %v6544, %v6635
        %v6637 = vand.u32 %v6636, 4294901760
        %v6638 = vsub.f32 %v6636, %v6637
        %v6639 = vand.u32 %v6638, 4294901760
        %6640 = vmatpush1.msra.mxu0 %v6639
        %6641 = vmatprep.subr.mxu0 0.0
        %6642 = vmatpush1.msra.mxu0 0.0
        %6643 = vmatprep.subr.mxu0 0.0
        %6644 = vmatpush1.msra.mxu0 0.0
        %6645 = vmatprep.subr.mxu0 0.0
        %6646 = vmatpush1.msra.mxu0 0.0
        %6647 = vmatprep.subr.mxu0 0.0
        %6648 = vmatpush1.msra.mxu0 0.0
        %6649 = vmatprep.subr.mxu0 0.0
        %6650 = vmatpush1.msra.mxu0 0.0
        %6651 = vmatprep.subr.mxu0 0.0
        %6652 = vmatpush1.msra.mxu0 0.0
        %6653 = vmatprep.subr.mxu0 0.0
        %6654 = vmatpush1.msra.mxu0 0.0
        %6655 = vmatprep.subr.mxu0 0.0
        %6656 = vmatpush1.msra.mxu0 0.0
        %6657 = vmatprep.subr.mxu0 0.0
        %6658 = vmatpush1.msra.mxu0 0.0
        %6659 = vmatprep.subr.mxu0 0.0
        %6660 = vmatpush1.msra.mxu0 0.0
        %6661 = vmatprep.subr.mxu0 0.0
        %6662 = vmatpush1.msra.mxu0 0.0
        %6663 = vmatprep.subr.mxu0 0.0
        %6664 = vmatpush1.msra.mxu0 0.0
        %6665 = vmatprep.subr.mxu0 0.0
        %6666 = vmatpush1.msra.mxu0 0.0
        %6667 = vmatprep.subr.mxu0 0.0
        %6668 = vmatpush1.msra.mxu0 0.0
        %6669 = vmatprep.subr.mxu0 0.0
        %6670 = vmatpush1.msra.mxu0 0.0
        %6671 = vmatprep.subr.mxu0 0.0
        %6672 = vmatpush1.msra.mxu0 0.0
        %6673 = vmatprep.subr.mxu0 0.0
        %6674 = vmatpush1.msra.mxu0 0.0
        %6675 = vmatprep.subr.mxu0 0.0
        %6676 = vmatpush1.msra.mxu0 0.0
        %6677 = vmatprep.subr.mxu0 0.0
        %6678 = vmatpush1.msra.mxu0 0.0
        %6679 = vmatprep.subr.mxu0 0.0
        %6680 = vmatpush1.msra.mxu0 0.0
        %6681 = vmatprep.subr.mxu0 0.0
        %6682 = vmatpush1.msra.mxu0 0.0
        %6683 = vmatprep.subr.mxu0 0.0
        %6684 = vmatpush1.msra.mxu0 0.0
        %6685 = vmatprep.subr.mxu0 0.0
        %6686 = vmatpush1.msra.mxu0 0.0
        %6687 = vmatprep.subr.mxu0 0.0
        %6688 = vmatpush1.msra.mxu0 0.0
        %6689 = vmatprep.subr.mxu0 0.0
        %6690 = vmatpush1.msra.mxu0 0.0
        %6691 = vmatprep.subr.mxu0 0.0
        %6692 = vmatpush1.msra.mxu0 0.0
        %6693 = vmatprep.subr.mxu0 0.0
        %6694 = vmatpush1.msra.mxu0 0.0
        %6695 = vmatprep.subr.mxu0 0.0
        %6696 = vmatpush1.msra.mxu0 0.0
        %6697 = vmatprep.subr.mxu0 0.0
        %6698 = vmatpush1.msra.mxu0 0.0
        %6699 = vmatprep.subr.mxu0 0.0
        %6700 = vmatpush1.msra.mxu0 0.0
        %6701 = vmatprep.subr.mxu0 0.0
        %6702 = vmatpush1.msra.mxu0 0.0
        %6703 = vmatprep.mubr.f32.mxu0 0.0
        %v6704 = vand.u32 %v6549, 4294901760
        %6705 = vmatmul.mubr.f32.gmra.mrb[0].mxu0 %v6704
        %v6706 = vpop.f32.mrb[0].mxu0
        %v6707 = vadd.f32 %v6625, %v6706
        %v6708 = vpop.f32.mrb[0].mxu0
        %v6709 = vadd.f32 %v6627, %v6708
        %6710 = vdwg.mxu0
        %v6711 = vand.u32 %v6545, 4294901760
        %v6712 = vsub.f32 %v6545, %v6711
        %6713 = vmatprep.subr.mxu0 %v6712
        %v6714 = vand.u32 %v6544, 4294901760
        %v6715 = vsub.f32 %v6544, %v6714
        %6716 = vmatpush1.msra.mxu0 %v6715
        %6717 = vmatprep.subr.mxu0 0.0
        %6718 = vmatpush1.msra.mxu0 0.0
        %6719 = vmatprep.subr.mxu0 0.0
        %6720 = vmatpush1.msra.mxu0 0.0
        %6721 = vmatprep.subr.mxu0 0.0
        %6722 = vmatpush1.msra.mxu0 0.0
        %6723 = vmatprep.subr.mxu0 0.0
        %6724 = vmatpush1.msra.mxu0 0.0
        %6725 = vmatprep.subr.mxu0 0.0
        %6726 = vmatpush1.msra.mxu0 0.0
        %6727 = vmatprep.subr.mxu0 0.0
        %6728 = vmatpush1.msra.mxu0 0.0
        %6729 = vmatprep.subr.mxu0 0.0
        %6730 = vmatpush1.msra.mxu0 0.0
        %6731 = vmatprep.subr.mxu0 0.0
        %6732 = vmatpush1.msra.mxu0 0.0
        %6733 = vmatprep.subr.mxu0 0.0
        %6734 = vmatpush1.msra.mxu0 0.0
        %6735 = vmatprep.subr.mxu0 0.0
        %6736 = vmatpush1.msra.mxu0 0.0
        %6737 = vmatprep.subr.mxu0 0.0
        %6738 = vmatpush1.msra.mxu0 0.0
        %6739 = vmatprep.subr.mxu0 0.0
        %6740 = vmatpush1.msra.mxu0 0.0
        %6741 = vmatprep.subr.mxu0 0.0
        %6742 = vmatpush1.msra.mxu0 0.0
        %6743 = vmatprep.subr.mxu0 0.0
        %6744 = vmatpush1.msra.mxu0 0.0
        %6745 = vmatprep.subr.mxu0 0.0
        %6746 = vmatpush1.msra.mxu0 0.0
        %6747 = vmatprep.subr.mxu0 0.0
        %6748 = vmatpush1.msra.mxu0 0.0
        %6749 = vmatprep.subr.mxu0 0.0
        %6750 = vmatpush1.msra.mxu0 0.0
        %6751 = vmatprep.subr.mxu0 0.0
        %6752 = vmatpush1.msra.mxu0 0.0
        %6753 = vmatprep.subr.mxu0 0.0
        %6754 = vmatpush1.msra.mxu0 0.0
        %6755 = vmatprep.subr.mxu0 0.0
        %6756 = vmatpush1.msra.mxu0 0.0
        %6757 = vmatprep.subr.mxu0 0.0
        %6758 = vmatpush1.msra.mxu0 0.0
        %6759 = vmatprep.subr.mxu0 0.0
        %6760 = vmatpush1.msra.mxu0 0.0
        %6761 = vmatprep.subr.mxu0 0.0
        %6762 = vmatpush1.msra.mxu0 0.0
        %6763 = vmatprep.subr.mxu0 0.0
        %6764 = vmatpush1.msra.mxu0 0.0
        %6765 = vmatprep.subr.mxu0 0.0
        %6766 = vmatpush1.msra.mxu0 0.0
        %6767 = vmatprep.subr.mxu0 0.0
        %6768 = vmatpush1.msra.mxu0 0.0
        %6769 = vmatprep.subr.mxu0 0.0
        %6770 = vmatpush1.msra.mxu0 0.0
        %6771 = vmatprep.subr.mxu0 0.0
        %6772 = vmatpush1.msra.mxu0 0.0
        %6773 = vmatprep.subr.mxu0 0.0
        %6774 = vmatpush1.msra.mxu0 0.0
        %6775 = vmatprep.subr.mxu0 0.0
        %6776 = vmatpush1.msra.mxu0 0.0
        %6777 = vmatprep.subr.mxu0 0.0
        %6778 = vmatpush1.msra.mxu0 0.0
        %6779 = vmatprep.mubr.f32.mxu0 0.0
        %v6780 = vand.u32 %v6549, 4294901760
        %v6781 = vsub.f32 %v6549, %v6780
        %6782 = vmatmul.mubr.f32.gmra.mrb[0].mxu0 %v6781
        %v6783 = vpop.f32.mrb[0].mxu0
        %v6784 = vadd.f32 %v6707, %v6783
        %v6785 = vpop.f32.mrb[0].mxu0
        %v6786 = vadd.f32 %v6709, %v6785
        %6787 = vdwg.mxu0
        %v6788 = vand.u32 %v6545, 4294901760
        %6789 = vmatprep.subr.mxu0 %v6788
        %v6790 = vand.u32 %v6544, 4294901760
        %6791 = vmatpush1.msra.mxu0 %v6790
        %6792 = vmatprep.subr.mxu0 0.0
        %6793 = vmatpush1.msra.mxu0 0.0
        %6794 = vmatprep.subr.mxu0 0.0
        %6795 = vmatpush1.msra.mxu0 0.0
        %6796 = vmatprep.subr.mxu0 0.0
        %6797 = vmatpush1.msra.mxu0 0.0
        %6798 = vmatprep.subr.mxu0 0.0
        %6799 = vmatpush1.msra.mxu0 0.0
        %6800 = vmatprep.subr.mxu0 0.0
        %6801 = vmatpush1.msra.mxu0 0.0
        %6802 = vmatprep.subr.mxu0 0.0
        %6803 = vmatpush1.msra.mxu0 0.0
        %6804 = vmatprep.subr.mxu0 0.0
        %6805 = vmatpush1.msra.mxu0 0.0
        %6806 = vmatprep.subr.mxu0 0.0
        %6807 = vmatpush1.msra.mxu0 0.0
        %6808 = vmatprep.subr.mxu0 0.0
        %6809 = vmatpush1.msra.mxu0 0.0
        %6810 = vmatprep.subr.mxu0 0.0
        %6811 = vmatpush1.msra.mxu0 0.0
        %6812 = vmatprep.subr.mxu0 0.0
        %6813 = vmatpush1.msra.mxu0 0.0
        %6814 = vmatprep.subr.mxu0 0.0
        %6815 = vmatpush1.msra.mxu0 0.0
        %6816 = vmatprep.subr.mxu0 0.0
        %6817 = vmatpush1.msra.mxu0 0.0
        %6818 = vmatprep.subr.mxu0 0.0
        %6819 = vmatpush1.msra.mxu0 0.0
        %6820 = vmatprep.subr.mxu0 0.0
        %6821 = vmatpush1.msra.mxu0 0.0
        %6822 = vmatprep.subr.mxu0 0.0
        %6823 = vmatpush1.msra.mxu0 0.0
        %6824 = vmatprep.subr.mxu0 0.0
        %6825 = vmatpush1.msra.mxu0 0.0
        %6826 = vmatprep.subr.mxu0 0.0
        %6827 = vmatpush1.msra.mxu0 0.0
        %6828 = vmatprep.subr.mxu0 0.0
        %6829 = vmatpush1.msra.mxu0 0.0
        %6830 = vmatprep.subr.mxu0 0.0
        %6831 = vmatpush1.msra.mxu0 0.0
        %6832 = vmatprep.subr.mxu0 0.0
        %6833 = vmatpush1.msra.mxu0 0.0
        %6834 = vmatprep.subr.mxu0 0.0
        %6835 = vmatpush1.msra.mxu0 0.0
        %6836 = vmatprep.subr.mxu0 0.0
        %6837 = vmatpush1.msra.mxu0 0.0
        %6838 = vmatprep.subr.mxu0 0.0
        %6839 = vmatpush1.msra.mxu0 0.0
        %6840 = vmatprep.subr.mxu0 0.0
        %6841 = vmatpush1.msra.mxu0 0.0
        %6842 = vmatprep.subr.mxu0 0.0
        %6843 = vmatpush1.msra.mxu0 0.0
        %6844 = vmatprep.subr.mxu0 0.0
        %6845 = vmatpush1.msra.mxu0 0.0
        %6846 = vmatprep.subr.mxu0 0.0
        %6847 = vmatpush1.msra.mxu0 0.0
        %6848 = vmatprep.subr.mxu0 0.0
        %6849 = vmatpush1.msra.mxu0 0.0
        %6850 = vmatprep.subr.mxu0 0.0
        %6851 = vmatpush1.msra.mxu0 0.0
        %6852 = vmatprep.subr.mxu0 0.0
        %6853 = vmatpush1.msra.mxu0 0.0
        %6854 = vmatprep.mubr.f32.mxu0 0.0
        %v6855 = vand.u32 %v6549, 4294901760
        %v6856 = vsub.f32 %v6549, %v6855
        %v6857 = vand.u32 %v6856, 4294901760
        %6858 = vmatmul.mubr.f32.gmra.mrb[0].mxu0 %v6857
        %v6859 = vpop.f32.mrb[0].mxu0
        %v6860 = vadd.f32 %v6784, %v6859
        %v6861 = vpop.f32.mrb[0].mxu0
        %v6862 = vadd.f32 %v6786, %v6861
        %6863 = vdwg.mxu0
        %v6864 = vand.u32 %v6545, 4294901760
        %v6865 = vsub.f32 %v6545, %v6864
        %v6866 = vand.u32 %v6865, 4294901760
        %6867 = vmatprep.subr.mxu0 %v6866
        %v6868 = vand.u32 %v6544, 4294901760
        %v6869 = vsub.f32 %v6544, %v6868
        %v6870 = vand.u32 %v6869, 4294901760
        %6871 = vmatpush1.msra.mxu0 %v6870
        %6872 = vmatprep.subr.mxu0 0.0
        %6873 = vmatpush1.msra.mxu0 0.0
        %6874 = vmatprep.subr.mxu0 0.0
        %6875 = vmatpush1.msra.mxu0 0.0
        %6876 = vmatprep.subr.mxu0 0.0
        %6877 = vmatpush1.msra.mxu0 0.0
        %6878 = vmatprep.subr.mxu0 0.0
        %6879 = vmatpush1.msra.mxu0 0.0
        %6880 = vmatprep.subr.mxu0 0.0
        %6881 = vmatpush1.msra.mxu0 0.0
        %6882 = vmatprep.subr.mxu0 0.0
        %6883 = vmatpush1.msra.mxu0 0.0
        %6884 = vmatprep.subr.mxu0 0.0
        %6885 = vmatpush1.msra.mxu0 0.0
        %6886 = vmatprep.subr.mxu0 0.0
        %6887 = vmatpush1.msra.mxu0 0.0
        %6888 = vmatprep.subr.mxu0 0.0
        %6889 = vmatpush1.msra.mxu0 0.0
        %6890 = vmatprep.subr.mxu0 0.0
        %6891 = vmatpush1.msra.mxu0 0.0
        %6892 = vmatprep.subr.mxu0 0.0
        %6893 = vmatpush1.msra.mxu0 0.0
        %6894 = vmatprep.subr.mxu0 0.0
        %6895 = vmatpush1.msra.mxu0 0.0
        %6896 = vmatprep.subr.mxu0 0.0
        %6897 = vmatpush1.msra.mxu0 0.0
        %6898 = vmatprep.subr.mxu0 0.0
        %6899 = vmatpush1.msra.mxu0 0.0
        %6900 = vmatprep.subr.mxu0 0.0
        %6901 = vmatpush1.msra.mxu0 0.0
        %6902 = vmatprep.subr.mxu0 0.0
        %6903 = vmatpush1.msra.mxu0 0.0
        %6904 = vmatprep.subr.mxu0 0.0
        %6905 = vmatpush1.msra.mxu0 0.0
        %6906 = vmatprep.subr.mxu0 0.0
        %6907 = vmatpush1.msra.mxu0 0.0
        %6908 = vmatprep.subr.mxu0 0.0
        %6909 = vmatpush1.msra.mxu0 0.0
        %6910 = vmatprep.subr.mxu0 0.0
        %6911 = vmatpush1.msra.mxu0 0.0
        %6912 = vmatprep.subr.mxu0 0.0
        %6913 = vmatpush1.msra.mxu0 0.0
        %6914 = vmatprep.subr.mxu0 0.0
        %6915 = vmatpush1.msra.mxu0 0.0
        %6916 = vmatprep.subr.mxu0 0.0
        %6917 = vmatpush1.msra.mxu0 0.0
        %6918 = vmatprep.subr.mxu0 0.0
        %6919 = vmatpush1.msra.mxu0 0.0
        %6920 = vmatprep.subr.mxu0 0.0
        %6921 = vmatpush1.msra.mxu0 0.0
        %6922 = vmatprep.subr.mxu0 0.0
        %6923 = vmatpush1.msra.mxu0 0.0
        %6924 = vmatprep.subr.mxu0 0.0
        %6925 = vmatpush1.msra.mxu0 0.0
        %6926 = vmatprep.subr.mxu0 0.0
        %6927 = vmatpush1.msra.mxu0 0.0
        %6928 = vmatprep.subr.mxu0 0.0
        %6929 = vmatpush1.msra.mxu0 0.0
        %6930 = vmatprep.subr.mxu0 0.0
        %6931 = vmatpush1.msra.mxu0 0.0
        %6932 = vmatprep.subr.mxu0 0.0
        %6933 = vmatpush1.msra.mxu0 0.0
        %6934 = vmatprep.mubr.f32.mxu0 0.0
        %v6935 = vand.u32 %v6549, 4294901760
        %6936 = vmatmul.mubr.f32.gmra.mrb[0].mxu0 %v6935
        %v6937 = vpop.f32.mrb[0].mxu0
        %v6938 = vadd.f32 %v6860, %v6937
        %v6939 = vpop.f32.mrb[0].mxu0
        %v6940 = vadd.f32 %v6862, %v6939
        %6941 = vdwg.mxu0
        %v6942 = vand.u32 %v6545, 4294901760
        %6943 = vmatprep.subr.mxu0 %v6942
        %v6944 = vand.u32 %v6544, 4294901760
        %6945 = vmatpush1.msra.mxu0 %v6944
        %6946 = vmatprep.subr.mxu0 0.0
        %6947 = vmatpush1.msra.mxu0 0.0
        %6948 = vmatprep.subr.mxu0 0.0
        %6949 = vmatpush1.msra.mxu0 0.0
        %6950 = vmatprep.subr.mxu0 0.0
        %6951 = vmatpush1.msra.mxu0 0.0
        %6952 = vmatprep.subr.mxu0 0.0
        %6953 = vmatpush1.msra.mxu0 0.0
        %6954 = vmatprep.subr.mxu0 0.0
        %6955 = vmatpush1.msra.mxu0 0.0
        %6956 = vmatprep.subr.mxu0 0.0
        %6957 = vmatpush1.msra.mxu0 0.0
        %6958 = vmatprep.subr.mxu0 0.0
        %6959 = vmatpush1.msra.mxu0 0.0
        %6960 = vmatprep.subr.mxu0 0.0
        %6961 = vmatpush1.msra.mxu0 0.0
        %6962 = vmatprep.subr.mxu0 0.0
        %6963 = vmatpush1.msra.mxu0 0.0
        %6964 = vmatprep.subr.mxu0 0.0
        %6965 = vmatpush1.msra.mxu0 0.0
        %6966 = vmatprep.subr.mxu0 0.0
        %6967 = vmatpush1.msra.mxu0 0.0
        %6968 = vmatprep.subr.mxu0 0.0
        %6969 = vmatpush1.msra.mxu0 0.0
        %6970 = vmatprep.subr.mxu0 0.0
        %6971 = vmatpush1.msra.mxu0 0.0
        %6972 = vmatprep.subr.mxu0 0.0
        %6973 = vmatpush1.msra.mxu0 0.0
        %6974 = vmatprep.subr.mxu0 0.0
        %6975 = vmatpush1.msra.mxu0 0.0
        %6976 = vmatprep.subr.mxu0 0.0
        %6977 = vmatpush1.msra.mxu0 0.0
        %6978 = vmatprep.subr.mxu0 0.0
        %6979 = vmatpush1.msra.mxu0 0.0
        %6980 = vmatprep.subr.mxu0 0.0
        %6981 = vmatpush1.msra.mxu0 0.0
        %6982 = vmatprep.subr.mxu0 0.0
        %6983 = vmatpush1.msra.mxu0 0.0
        %6984 = vmatprep.subr.mxu0 0.0
        %6985 = vmatpush1.msra.mxu0 0.0
        %6986 = vmatprep.subr.mxu0 0.0
        %6987 = vmatpush1.msra.mxu0 0.0
        %6988 = vmatprep.subr.mxu0 0.0
        %6989 = vmatpush1.msra.mxu0 0.0
        %6990 = vmatprep.subr.mxu0 0.0
        %6991 = vmatpush1.msra.mxu0 0.0
        %6992 = vmatprep.subr.mxu0 0.0
        %6993 = vmatpush1.msra.mxu0 0.0
        %6994 = vmatprep.subr.mxu0 0.0
        %6995 = vmatpush1.msra.mxu0 0.0
        %6996 = vmatprep.subr.mxu0 0.0
        %6997 = vmatpush1.msra.mxu0 0.0
        %6998 = vmatprep.subr.mxu0 0.0
        %6999 = vmatpush1.msra.mxu0 0.0
        %7000 = vmatprep.subr.mxu0 0.0
        %7001 = vmatpush1.msra.mxu0 0.0
        %7002 = vmatprep.subr.mxu0 0.0
        %7003 = vmatpush1.msra.mxu0 0.0
        %7004 = vmatprep.subr.mxu0 0.0
        %7005 = vmatpush1.msra.mxu0 0.0
        %7006 = vmatprep.subr.mxu0 0.0
        %7007 = vmatpush1.msra.mxu0 0.0
        %7008 = vmatprep.mubr.f32.mxu0 0.0
        %v7009 = vand.u32 %v6549, 4294901760
        %7010 = vmatmul.mubr.f32.gmra.mrb[0].mxu0 %v7009
        %v7011 = vpop.f32.mrb[0].mxu0
        %v7012 = vadd.f32 %v6938, %v7011
        %v7013 = vpop.f32.mrb[0].mxu0
        %v7014 = vadd.f32 %v6940, %v7013
        %7015 = vdwg.mxu0
        %v7016 = vadd.f32 %v6523, %v7012
        %v7017 = vadd.f32 %v6524, %v7014
        %7018 = vrot.lane.b32.xlu0 %v3099, 111
        %v7019 = vpop.permute.xlu0 %7018
        %7020 = vrot.lane.b32.xlu0 %v3100, 111
        %v7021 = vpop.permute.xlu0 %7020
        %v7022 = vsel %vm770, %v7019, %v7021
        %v7023 = vsel %vm770, %v7021, %v7019
        %s7024 = scalar_lea.vmem %s7, 16
        %v7025 = vld [vmem:[%s7024] sm:$0x3]
        %v7027 = vlaneseq
        %v7028 = vshrl.u32 %v7027, 7
        %v7029 = vsub.s32 0, %v7028
        %v7030 = vrot.slane %v7025, %v7029
        %v7031 = vlaneseq
        %v7032 = vshrl.u32 %v7031, 7
        %v7033 = vsub.s32 1, %v7032
        %v7034 = vrot.slane %v7025, %v7033
        %v7037 = vmul.f32 %v7022, %v7030
        %v7038 = vmul.f32 %v7023, %v7034
        %s7039 = scalar_lea.vmem %s6, 64
        %v7040 = vld [vmem:[%s7039] sm:$0xff]
        %v7042 = vsel %vm1672, %v7040, 0
        %v7044 = vand.u32 %v7038, 4294901760
        %7045 = vmatprep.subr.mxu0 %v7044
        %v7046 = vand.u32 %v7037, 4294901760
        %7047 = vmatpush1.msra.mxu0 %v7046
        %7048 = vmatprep.subr.mxu0 0.0
        %7049 = vmatpush1.msra.mxu0 0.0
        %7050 = vmatprep.subr.mxu0 0.0
        %7051 = vmatpush1.msra.mxu0 0.0
        %7052 = vmatprep.subr.mxu0 0.0
        %7053 = vmatpush1.msra.mxu0 0.0
        %7054 = vmatprep.subr.mxu0 0.0
        %7055 = vmatpush1.msra.mxu0 0.0
        %7056 = vmatprep.subr.mxu0 0.0
        %7057 = vmatpush1.msra.mxu0 0.0
        %7058 = vmatprep.subr.mxu0 0.0
        %7059 = vmatpush1.msra.mxu0 0.0
        %7060 = vmatprep.subr.mxu0 0.0
        %7061 = vmatpush1.msra.mxu0 0.0
        %7062 = vmatprep.subr.mxu0 0.0
        %7063 = vmatpush1.msra.mxu0 0.0
        %7064 = vmatprep.subr.mxu0 0.0
        %7065 = vmatpush1.msra.mxu0 0.0
        %7066 = vmatprep.subr.mxu0 0.0
        %7067 = vmatpush1.msra.mxu0 0.0
        %7068 = vmatprep.subr.mxu0 0.0
        %7069 = vmatpush1.msra.mxu0 0.0
        %7070 = vmatprep.subr.mxu0 0.0
        %7071 = vmatpush1.msra.mxu0 0.0
        %7072 = vmatprep.subr.mxu0 0.0
        %7073 = vmatpush1.msra.mxu0 0.0
        %7074 = vmatprep.subr.mxu0 0.0
        %7075 = vmatpush1.msra.mxu0 0.0
        %7076 = vmatprep.subr.mxu0 0.0
        %7077 = vmatpush1.msra.mxu0 0.0
        %7078 = vmatprep.subr.mxu0 0.0
        %7079 = vmatpush1.msra.mxu0 0.0
        %7080 = vmatprep.subr.mxu0 0.0
        %7081 = vmatpush1.msra.mxu0 0.0
        %7082 = vmatprep.subr.mxu0 0.0
        %7083 = vmatpush1.msra.mxu0 0.0
        %7084 = vmatprep.subr.mxu0 0.0
        %7085 = vmatpush1.msra.mxu0 0.0
        %7086 = vmatprep.subr.mxu0 0.0
        %7087 = vmatpush1.msra.mxu0 0.0
        %7088 = vmatprep.subr.mxu0 0.0
        %7089 = vmatpush1.msra.mxu0 0.0
        %7090 = vmatprep.subr.mxu0 0.0
        %7091 = vmatpush1.msra.mxu0 0.0
        %7092 = vmatprep.subr.mxu0 0.0
        %7093 = vmatpush1.msra.mxu0 0.0
        %7094 = vmatprep.subr.mxu0 0.0
        %7095 = vmatpush1.msra.mxu0 0.0
        %7096 = vmatprep.subr.mxu0 0.0
        %7097 = vmatpush1.msra.mxu0 0.0
        %7098 = vmatprep.subr.mxu0 0.0
        %7099 = vmatpush1.msra.mxu0 0.0
        %7100 = vmatprep.subr.mxu0 0.0
        %7101 = vmatpush1.msra.mxu0 0.0
        %7102 = vmatprep.subr.mxu0 0.0
        %7103 = vmatpush1.msra.mxu0 0.0
        %7104 = vmatprep.subr.mxu0 0.0
        %7105 = vmatpush1.msra.mxu0 0.0
        %7106 = vmatprep.subr.mxu0 0.0
        %7107 = vmatpush1.msra.mxu0 0.0
        %7108 = vmatprep.subr.mxu0 0.0
        %7109 = vmatpush1.msra.mxu0 0.0
        %7110 = vmatprep.mubr.f32.mxu0 0.0
        %v7111 = vand.u32 %v7042, 4294901760
        %v7112 = vsub.f32 %v7042, %v7111
        %v7113 = vand.u32 %v7112, 4294901760
        %v7114 = vsub.f32 %v7112, %v7113
        %v7115 = vand.u32 %v7114, 4294901760
        %7116 = vmatmul.mubr.f32.gmra.mrb[0].mxu0 %v7115
        %v7117 = vpop.f32.mrb[0].mxu0
        %v7118 = vadd.f32 0.0, %v7117
        %v7119 = vpop.f32.mrb[0].mxu0
        %v7120 = vadd.f32 0.0, %v7119
        %7121 = vdwg.mxu0
        %v7122 = vand.u32 %v7038, 4294901760
        %v7123 = vsub.f32 %v7038, %v7122
        %v7124 = vand.u32 %v7123, 4294901760
        %v7125 = vsub.f32 %v7123, %v7124
        %v7126 = vand.u32 %v7125, 4294901760
        %7127 = vmatprep.subr.mxu0 %v7126
        %v7128 = vand.u32 %v7037, 4294901760
        %v7129 = vsub.f32 %v7037, %v7128
        %v7130 = vand.u32 %v7129, 4294901760
        %v7131 = vsub.f32 %v7129, %v7130
        %v7132 = vand.u32 %v7131, 4294901760
        %7133 = vmatpush1.msra.mxu0 %v7132
        %7134 = vmatprep.subr.mxu0 0.0
        %7135 = vmatpush1.msra.mxu0 0.0
        %7136 = vmatprep.subr.mxu0 0.0
        %7137 = vmatpush1.msra.mxu0 0.0
        %7138 = vmatprep.subr.mxu0 0.0
        %7139 = vmatpush1.msra.mxu0 0.0
        %7140 = vmatprep.subr.mxu0 0.0
        %7141 = vmatpush1.msra.mxu0 0.0
        %7142 = vmatprep.subr.mxu0 0.0
        %7143 = vmatpush1.msra.mxu0 0.0
        %7144 = vmatprep.subr.mxu0 0.0
        %7145 = vmatpush1.msra.mxu0 0.0
        %7146 = vmatprep.subr.mxu0 0.0
        %7147 = vmatpush1.msra.mxu0 0.0
        %7148 = vmatprep.subr.mxu0 0.0
        %7149 = vmatpush1.msra.mxu0 0.0
        %7150 = vmatprep.subr.mxu0 0.0
        %7151 = vmatpush1.msra.mxu0 0.0
        %7152 = vmatprep.subr.mxu0 0.0
        %7153 = vmatpush1.msra.mxu0 0.0
        %7154 = vmatprep.subr.mxu0 0.0
        %7155 = vmatpush1.msra.mxu0 0.0
        %7156 = vmatprep.subr.mxu0 0.0
        %7157 = vmatpush1.msra.mxu0 0.0
        %7158 = vmatprep.subr.mxu0 0.0
        %7159 = vmatpush1.msra.mxu0 0.0
        %7160 = vmatprep.subr.mxu0 0.0
        %7161 = vmatpush1.msra.mxu0 0.0
        %7162 = vmatprep.subr.mxu0 0.0
        %7163 = vmatpush1.msra.mxu0 0.0
        %7164 = vmatprep.subr.mxu0 0.0
        %7165 = vmatpush1.msra.mxu0 0.0
        %7166 = vmatprep.subr.mxu0 0.0
        %7167 = vmatpush1.msra.mxu0 0.0
        %7168 = vmatprep.subr.mxu0 0.0
        %7169 = vmatpush1.msra.mxu0 0.0
        %7170 = vmatprep.subr.mxu0 0.0
        %7171 = vmatpush1.msra.mxu0 0.0
        %7172 = vmatprep.subr.mxu0 0.0
        %7173 = vmatpush1.msra.mxu0 0.0
        %7174 = vmatprep.subr.mxu0 0.0
        %7175 = vmatpush1.msra.mxu0 0.0
        %7176 = vmatprep.subr.mxu0 0.0
        %7177 = vmatpush1.msra.mxu0 0.0
        %7178 = vmatprep.subr.mxu0 0.0
        %7179 = vmatpush1.msra.mxu0 0.0
        %7180 = vmatprep.subr.mxu0 0.0
        %7181 = vmatpush1.msra.mxu0 0.0
        %7182 = vmatprep.subr.mxu0 0.0
        %7183 = vmatpush1.msra.mxu0 0.0
        %7184 = vmatprep.subr.mxu0 0.0
        %7185 = vmatpush1.msra.mxu0 0.0
        %7186 = vmatprep.subr.mxu0 0.0
        %7187 = vmatpush1.msra.mxu0 0.0
        %7188 = vmatprep.subr.mxu0 0.0
        %7189 = vmatpush1.msra.mxu0 0.0
        %7190 = vmatprep.subr.mxu0 0.0
        %7191 = vmatpush1.msra.mxu0 0.0
        %7192 = vmatprep.subr.mxu0 0.0
        %7193 = vmatpush1.msra.mxu0 0.0
        %7194 = vmatprep.subr.mxu0 0.0
        %7195 = vmatpush1.msra.mxu0 0.0
        %7196 = vmatprep.mubr.f32.mxu0 0.0
        %v7197 = vand.u32 %v7042, 4294901760
        %7198 = vmatmul.mubr.f32.gmra.mrb[0].mxu0 %v7197
        %v7199 = vpop.f32.mrb[0].mxu0
        %v7200 = vadd.f32 %v7118, %v7199
        %v7201 = vpop.f32.mrb[0].mxu0
        %v7202 = vadd.f32 %v7120, %v7201
        %7203 = vdwg.mxu0
        %v7204 = vand.u32 %v7038, 4294901760
        %v7205 = vsub.f32 %v7038, %v7204
        %7206 = vmatprep.subr.mxu0 %v7205
        %v7207 = vand.u32 %v7037, 4294901760
        %v7208 = vsub.f32 %v7037, %v7207
        %7209 = vmatpush1.msra.mxu0 %v7208
        %7210 = vmatprep.subr.mxu0 0.0
        %7211 = vmatpush1.msra.mxu0 0.0
        %7212 = vmatprep.subr.mxu0 0.0
        %7213 = vmatpush1.msra.mxu0 0.0
        %7214 = vmatprep.subr.mxu0 0.0
        %7215 = vmatpush1.msra.mxu0 0.0
        %7216 = vmatprep.subr.mxu0 0.0
        %7217 = vmatpush1.msra.mxu0 0.0
        %7218 = vmatprep.subr.mxu0 0.0
        %7219 = vmatpush1.msra.mxu0 0.0
        %7220 = vmatprep.subr.mxu0 0.0
        %7221 = vmatpush1.msra.mxu0 0.0
        %7222 = vmatprep.subr.mxu0 0.0
        %7223 = vmatpush1.msra.mxu0 0.0
        %7224 = vmatprep.subr.mxu0 0.0
        %7225 = vmatpush1.msra.mxu0 0.0
        %7226 = vmatprep.subr.mxu0 0.0
        %7227 = vmatpush1.msra.mxu0 0.0
        %7228 = vmatprep.subr.mxu0 0.0
        %7229 = vmatpush1.msra.mxu0 0.0
        %7230 = vmatprep.subr.mxu0 0.0
        %7231 = vmatpush1.msra.mxu0 0.0
        %7232 = vmatprep.subr.mxu0 0.0
        %7233 = vmatpush1.msra.mxu0 0.0
        %7234 = vmatprep.subr.mxu0 0.0
        %7235 = vmatpush1.msra.mxu0 0.0
        %7236 = vmatprep.subr.mxu0 0.0
        %7237 = vmatpush1.msra.mxu0 0.0
        %7238 = vmatprep.subr.mxu0 0.0
        %7239 = vmatpush1.msra.mxu0 0.0
        %7240 = vmatprep.subr.mxu0 0.0
        %7241 = vmatpush1.msra.mxu0 0.0
        %7242 = vmatprep.subr.mxu0 0.0
        %7243 = vmatpush1.msra.mxu0 0.0
        %7244 = vmatprep.subr.mxu0 0.0
        %7245 = vmatpush1.msra.mxu0 0.0
        %7246 = vmatprep.subr.mxu0 0.0
        %7247 = vmatpush1.msra.mxu0 0.0
        %7248 = vmatprep.subr.mxu0 0.0
        %7249 = vmatpush1.msra.mxu0 0.0
        %7250 = vmatprep.subr.mxu0 0.0
        %7251 = vmatpush1.msra.mxu0 0.0
        %7252 = vmatprep.subr.mxu0 0.0
        %7253 = vmatpush1.msra.mxu0 0.0
        %7254 = vmatprep.subr.mxu0 0.0
        %7255 = vmatpush1.msra.mxu0 0.0
        %7256 = vmatprep.subr.mxu0 0.0
        %7257 = vmatpush1.msra.mxu0 0.0
        %7258 = vmatprep.subr.mxu0 0.0
        %7259 = vmatpush1.msra.mxu0 0.0
        %7260 = vmatprep.subr.mxu0 0.0
        %7261 = vmatpush1.msra.mxu0 0.0
        %7262 = vmatprep.subr.mxu0 0.0
        %7263 = vmatpush1.msra.mxu0 0.0
        %7264 = vmatprep.subr.mxu0 0.0
        %7265 = vmatpush1.msra.mxu0 0.0
        %7266 = vmatprep.subr.mxu0 0.0
        %7267 = vmatpush1.msra.mxu0 0.0
        %7268 = vmatprep.subr.mxu0 0.0
        %7269 = vmatpush1.msra.mxu0 0.0
        %7270 = vmatprep.subr.mxu0 0.0
        %7271 = vmatpush1.msra.mxu0 0.0
        %7272 = vmatprep.mubr.f32.mxu0 0.0
        %v7273 = vand.u32 %v7042, 4294901760
        %v7274 = vsub.f32 %v7042, %v7273
        %7275 = vmatmul.mubr.f32.gmra.mrb[0].mxu0 %v7274
        %v7276 = vpop.f32.mrb[0].mxu0
        %v7277 = vadd.f32 %v7200, %v7276
        %v7278 = vpop.f32.mrb[0].mxu0
        %v7279 = vadd.f32 %v7202, %v7278
        %7280 = vdwg.mxu0
        %v7281 = vand.u32 %v7038, 4294901760
        %7282 = vmatprep.subr.mxu0 %v7281
        %v7283 = vand.u32 %v7037, 4294901760
        %7284 = vmatpush1.msra.mxu0 %v7283
        %7285 = vmatprep.subr.mxu0 0.0
        %7286 = vmatpush1.msra.mxu0 0.0
        %7287 = vmatprep.subr.mxu0 0.0
        %7288 = vmatpush1.msra.mxu0 0.0
        %7289 = vmatprep.subr.mxu0 0.0
        %7290 = vmatpush1.msra.mxu0 0.0
        %7291 = vmatprep.subr.mxu0 0.0
        %7292 = vmatpush1.msra.mxu0 0.0
        %7293 = vmatprep.subr.mxu0 0.0
        %7294 = vmatpush1.msra.mxu0 0.0
        %7295 = vmatprep.subr.mxu0 0.0
        %7296 = vmatpush1.msra.mxu0 0.0
        %7297 = vmatprep.subr.mxu0 0.0
        %7298 = vmatpush1.msra.mxu0 0.0
        %7299 = vmatprep.subr.mxu0 0.0
        %7300 = vmatpush1.msra.mxu0 0.0
        %7301 = vmatprep.subr.mxu0 0.0
        %7302 = vmatpush1.msra.mxu0 0.0
        %7303 = vmatprep.subr.mxu0 0.0
        %7304 = vmatpush1.msra.mxu0 0.0
        %7305 = vmatprep.subr.mxu0 0.0
        %7306 = vmatpush1.msra.mxu0 0.0
        %7307 = vmatprep.subr.mxu0 0.0
        %7308 = vmatpush1.msra.mxu0 0.0
        %7309 = vmatprep.subr.mxu0 0.0
        %7310 = vmatpush1.msra.mxu0 0.0
        %7311 = vmatprep.subr.mxu0 0.0
        %7312 = vmatpush1.msra.mxu0 0.0
        %7313 = vmatprep.subr.mxu0 0.0
        %7314 = vmatpush1.msra.mxu0 0.0
        %7315 = vmatprep.subr.mxu0 0.0
        %7316 = vmatpush1.msra.mxu0 0.0
        %7317 = vmatprep.subr.mxu0 0.0
        %7318 = vmatpush1.msra.mxu0 0.0
        %7319 = vmatprep.subr.mxu0 0.0
        %7320 = vmatpush1.msra.mxu0 0.0
        %7321 = vmatprep.subr.mxu0 0.0
        %7322 = vmatpush1.msra.mxu0 0.0
        %7323 = vmatprep.subr.mxu0 0.0
        %7324 = vmatpush1.msra.mxu0 0.0
        %7325 = vmatprep.subr.mxu0 0.0
        %7326 = vmatpush1.msra.mxu0 0.0
        %7327 = vmatprep.subr.mxu0 0.0
        %7328 = vmatpush1.msra.mxu0 0.0
        %7329 = vmatprep.subr.mxu0 0.0
        %7330 = vmatpush1.msra.mxu0 0.0
        %7331 = vmatprep.subr.mxu0 0.0
        %7332 = vmatpush1.msra.mxu0 0.0
        %7333 = vmatprep.subr.mxu0 0.0
        %7334 = vmatpush1.msra.mxu0 0.0
        %7335 = vmatprep.subr.mxu0 0.0
        %7336 = vmatpush1.msra.mxu0 0.0
        %7337 = vmatprep.subr.mxu0 0.0
        %7338 = vmatpush1.msra.mxu0 0.0
        %7339 = vmatprep.subr.mxu0 0.0
        %7340 = vmatpush1.msra.mxu0 0.0
        %7341 = vmatprep.subr.mxu0 0.0
        %7342 = vmatpush1.msra.mxu0 0.0
        %7343 = vmatprep.subr.mxu0 0.0
        %7344 = vmatpush1.msra.mxu0 0.0
        %7345 = vmatprep.subr.mxu0 0.0
        %7346 = vmatpush1.msra.mxu0 0.0
        %7347 = vmatprep.mubr.f32.mxu0 0.0
        %v7348 = vand.u32 %v7042, 4294901760
        %v7349 = vsub.f32 %v7042, %v7348
        %v7350 = vand.u32 %v7349, 4294901760
        %7351 = vmatmul.mubr.f32.gmra.mrb[0].mxu0 %v7350
        %v7352 = vpop.f32.mrb[0].mxu0
        %v7353 = vadd.f32 %v7277, %v7352
        %v7354 = vpop.f32.mrb[0].mxu0
        %v7355 = vadd.f32 %v7279, %v7354
        %7356 = vdwg.mxu0
        %v7357 = vand.u32 %v7038, 4294901760
        %v7358 = vsub.f32 %v7038, %v7357
        %v7359 = vand.u32 %v7358, 4294901760
        %7360 = vmatprep.subr.mxu0 %v7359
        %v7361 = vand.u32 %v7037, 4294901760
        %v7362 = vsub.f32 %v7037, %v7361
        %v7363 = vand.u32 %v7362, 4294901760
        %7364 = vmatpush1.msra.mxu0 %v7363
        %7365 = vmatprep.subr.mxu0 0.0
        %7366 = vmatpush1.msra.mxu0 0.0
        %7367 = vmatprep.subr.mxu0 0.0
        %7368 = vmatpush1.msra.mxu0 0.0
        %7369 = vmatprep.subr.mxu0 0.0
        %7370 = vmatpush1.msra.mxu0 0.0
        %7371 = vmatprep.subr.mxu0 0.0
        %7372 = vmatpush1.msra.mxu0 0.0
        %7373 = vmatprep.subr.mxu0 0.0
        %7374 = vmatpush1.msra.mxu0 0.0
        %7375 = vmatprep.subr.mxu0 0.0
        %7376 = vmatpush1.msra.mxu0 0.0
        %7377 = vmatprep.subr.mxu0 0.0
        %7378 = vmatpush1.msra.mxu0 0.0
        %7379 = vmatprep.subr.mxu0 0.0
        %7380 = vmatpush1.msra.mxu0 0.0
        %7381 = vmatprep.subr.mxu0 0.0
        %7382 = vmatpush1.msra.mxu0 0.0
        %7383 = vmatprep.subr.mxu0 0.0
        %7384 = vmatpush1.msra.mxu0 0.0
        %7385 = vmatprep.subr.mxu0 0.0
        %7386 = vmatpush1.msra.mxu0 0.0
        %7387 = vmatprep.subr.mxu0 0.0
        %7388 = vmatpush1.msra.mxu0 0.0
        %7389 = vmatprep.subr.mxu0 0.0
        %7390 = vmatpush1.msra.mxu0 0.0
        %7391 = vmatprep.subr.mxu0 0.0
        %7392 = vmatpush1.msra.mxu0 0.0
        %7393 = vmatprep.subr.mxu0 0.0
        %7394 = vmatpush1.msra.mxu0 0.0
        %7395 = vmatprep.subr.mxu0 0.0
        %7396 = vmatpush1.msra.mxu0 0.0
        %7397 = vmatprep.subr.mxu0 0.0
        %7398 = vmatpush1.msra.mxu0 0.0
        %7399 = vmatprep.subr.mxu0 0.0
        %7400 = vmatpush1.msra.mxu0 0.0
        %7401 = vmatprep.subr.mxu0 0.0
        %7402 = vmatpush1.msra.mxu0 0.0
        %7403 = vmatprep.subr.mxu0 0.0
        %7404 = vmatpush1.msra.mxu0 0.0
        %7405 = vmatprep.subr.mxu0 0.0
        %7406 = vmatpush1.msra.mxu0 0.0
        %7407 = vmatprep.subr.mxu0 0.0
        %7408 = vmatpush1.msra.mxu0 0.0
        %7409 = vmatprep.subr.mxu0 0.0
        %7410 = vmatpush1.msra.mxu0 0.0
        %7411 = vmatprep.subr.mxu0 0.0
        %7412 = vmatpush1.msra.mxu0 0.0
        %7413 = vmatprep.subr.mxu0 0.0
        %7414 = vmatpush1.msra.mxu0 0.0
        %7415 = vmatprep.subr.mxu0 0.0
        %7416 = vmatpush1.msra.mxu0 0.0
        %7417 = vmatprep.subr.mxu0 0.0
        %7418 = vmatpush1.msra.mxu0 0.0
        %7419 = vmatprep.subr.mxu0 0.0
        %7420 = vmatpush1.msra.mxu0 0.0
        %7421 = vmatprep.subr.mxu0 0.0
        %7422 = vmatpush1.msra.mxu0 0.0
        %7423 = vmatprep.subr.mxu0 0.0
        %7424 = vmatpush1.msra.mxu0 0.0
        %7425 = vmatprep.subr.mxu0 0.0
        %7426 = vmatpush1.msra.mxu0 0.0
        %7427 = vmatprep.mubr.f32.mxu0 0.0
        %v7428 = vand.u32 %v7042, 4294901760
        %7429 = vmatmul.mubr.f32.gmra.mrb[0].mxu0 %v7428
        %v7430 = vpop.f32.mrb[0].mxu0
        %v7431 = vadd.f32 %v7353, %v7430
        %v7432 = vpop.f32.mrb[0].mxu0
        %v7433 = vadd.f32 %v7355, %v7432
        %7434 = vdwg.mxu0
        %v7435 = vand.u32 %v7038, 4294901760
        %7436 = vmatprep.subr.mxu0 %v7435
        %v7437 = vand.u32 %v7037, 4294901760
        %7438 = vmatpush1.msra.mxu0 %v7437
        %7439 = vmatprep.subr.mxu0 0.0
        %7440 = vmatpush1.msra.mxu0 0.0
        %7441 = vmatprep.subr.mxu0 0.0
        %7442 = vmatpush1.msra.mxu0 0.0
        %7443 = vmatprep.subr.mxu0 0.0
        %7444 = vmatpush1.msra.mxu0 0.0
        %7445 = vmatprep.subr.mxu0 0.0
        %7446 = vmatpush1.msra.mxu0 0.0
        %7447 = vmatprep.subr.mxu0 0.0
        %7448 = vmatpush1.msra.mxu0 0.0
        %7449 = vmatprep.subr.mxu0 0.0
        %7450 = vmatpush1.msra.mxu0 0.0
        %7451 = vmatprep.subr.mxu0 0.0
        %7452 = vmatpush1.msra.mxu0 0.0
        %7453 = vmatprep.subr.mxu0 0.0
        %7454 = vmatpush1.msra.mxu0 0.0
        %7455 = vmatprep.subr.mxu0 0.0
        %7456 = vmatpush1.msra.mxu0 0.0
        %7457 = vmatprep.subr.mxu0 0.0
        %7458 = vmatpush1.msra.mxu0 0.0
        %7459 = vmatprep.subr.mxu0 0.0
        %7460 = vmatpush1.msra.mxu0 0.0
        %7461 = vmatprep.subr.mxu0 0.0
        %7462 = vmatpush1.msra.mxu0 0.0
        %7463 = vmatprep.subr.mxu0 0.0
        %7464 = vmatpush1.msra.mxu0 0.0
        %7465 = vmatprep.subr.mxu0 0.0
        %7466 = vmatpush1.msra.mxu0 0.0
        %7467 = vmatprep.subr.mxu0 0.0
        %7468 = vmatpush1.msra.mxu0 0.0
        %7469 = vmatprep.subr.mxu0 0.0
        %7470 = vmatpush1.msra.mxu0 0.0
        %7471 = vmatprep.subr.mxu0 0.0
        %7472 = vmatpush1.msra.mxu0 0.0
        %7473 = vmatprep.subr.mxu0 0.0
        %7474 = vmatpush1.msra.mxu0 0.0
        %7475 = vmatprep.subr.mxu0 0.0
        %7476 = vmatpush1.msra.mxu0 0.0
        %7477 = vmatprep.subr.mxu0 0.0
        %7478 = vmatpush1.msra.mxu0 0.0
        %7479 = vmatprep.subr.mxu0 0.0
        %7480 = vmatpush1.msra.mxu0 0.0
        %7481 = vmatprep.subr.mxu0 0.0
        %7482 = vmatpush1.msra.mxu0 0.0
        %7483 = vmatprep.subr.mxu0 0.0
        %7484 = vmatpush1.msra.mxu0 0.0
        %7485 = vmatprep.subr.mxu0 0.0
        %7486 = vmatpush1.msra.mxu0 0.0
        %7487 = vmatprep.subr.mxu0 0.0
        %7488 = vmatpush1.msra.mxu0 0.0
        %7489 = vmatprep.subr.mxu0 0.0
        %7490 = vmatpush1.msra.mxu0 0.0
        %7491 = vmatprep.subr.mxu0 0.0
        %7492 = vmatpush1.msra.mxu0 0.0
        %7493 = vmatprep.subr.mxu0 0.0
        %7494 = vmatpush1.msra.mxu0 0.0
        %7495 = vmatprep.subr.mxu0 0.0
        %7496 = vmatpush1.msra.mxu0 0.0
        %7497 = vmatprep.subr.mxu0 0.0
        %7498 = vmatpush1.msra.mxu0 0.0
        %7499 = vmatprep.subr.mxu0 0.0
        %7500 = vmatpush1.msra.mxu0 0.0
        %7501 = vmatprep.mubr.f32.mxu0 0.0
        %v7502 = vand.u32 %v7042, 4294901760
        %7503 = vmatmul.mubr.f32.gmra.mrb[0].mxu0 %v7502
        %v7504 = vpop.f32.mrb[0].mxu0
        %v7505 = vadd.f32 %v7431, %v7504
        %v7506 = vpop.f32.mrb[0].mxu0
        %v7507 = vadd.f32 %v7433, %v7506
        %7508 = vdwg.mxu0
        %v7509 = vadd.f32 %v7016, %v7505
        %v7510 = vadd.f32 %v7017, %v7507
        %7511 = vset.pattern.permute.xlu0 12
        %7512 = vperm.xlu0 %7511, %v931
        %v7513 = vpop.permute.xlu0 %7512
        %v7515 = vadd.f32 %v7509, %v7513
        %v7516 = vadd.f32 %v7510, %v7513
        %v7517 = vadd.f32 %v929, %v7515
        %v7518 = vadd.f32 %v930, %v7516
        %7519 = vst [vmem:[%s375] sm:$0xff] %v7517
        %7520 = vst [vmem:[%s375 + $0x8] sm:$0xff] %v7518
        %p7521 = scmp.lt.s32.totalorder %s23, 1
        %s7522 = scalar_select %p7521, %s23, 1
        %s7523 = smul.addr %s7522, 2
        %s7524 = smul.addr %s7523, 8
        %s7525 = scalar_lea.vmem %s9, %s7524
        // Predicated region
        $region69: #{forward.1} parent=55 // pred_check
          %p7526 = pneg %p235
        $region70: #{forward.1} parent=55 // pred_check_branch
          %7528 = sbr.rel (%p7526) target = $region72
        $region71: #{forward.1} parent=55 // pred_region
          _
        $region72: #{forward.1} parent=55 // pred_fallthru
          _
      $region56: #{forward.1} parent=5 // pred_fallthru
        _
      %p7529 = scmp.le.s32.totalorder 2, %s18
      // Predicated region
      $region73: #{forward.1} parent=5 // pred_check
        %p7530 = pneg %p7529
      $region74: #{forward.1} parent=5 // pred_check_branch
        %7532 = sbr.rel (%p7530) target = $region76
      $region75: #{forward.1} parent=5 // pred_region
        %s7533 = ssub.s32 %s18, 2
        // Predicated region
        $region77: #{forward.1} parent=75 // pred_check
          %p7534 = pneg %p241
        $region78: #{forward.1} parent=75 // pred_check_branch
          %7536 = sbr.rel (%p7534) target = $region80
        $region79: #{forward.1} parent=75 // pred_region
          %p7537 = scmp.lt.s32.totalorder %s24, 1
          %s7538 = scalar_select %p7537, %s24, 1
          %s7539 = smul.addr %s7538, 2
          %s7540 = smul.addr %s7539, 8
          %s7541 = scalar_lea.vmem %s9, %s7540
        $region80: #{forward.1} parent=75 // pred_fallthru
          _
      $region76: #{forward.1} parent=5 // pred_fallthru
        _
    $region6: #{forward.1} parent=1 // loop_footer
      %s22 = sadd.s32 1, %s18
    $region7: #{forward.1} parent=1 // loop_footer_branch
      %17 = sbr.rel target = $region3
    $region8: #{forward.1} parent=1 // loop_exit
      _
    %7542 = vsyncpa [#allocation4], 1
    %s7543 = scalar_lea.sflag [#allocation4], 1
    %7544 = vsyncpa %s7543, 1
    %7545 = vsyncpa [#allocation6], 1

</llo_original>
